<compile_context>
chip_gen: v6e
topology: v6e:2x2x1
jax: 0.10.0
libtpu: 0.0.40
codegen_flags: <defaults>
</compile_context>

<pallas_src>
import functools

import jax
import jax.numpy as jnp
import numpy as np
from jax.experimental import pallas as pl
from jax.experimental.pallas import tpu as pltpu

LANE = 128
SUBLANE = 8


def _round_up(x, m):
    return ((x + m - 1) // m) * m


def _pad_to(a, shape):
    return jnp.pad(a, [(0, t - s) for s, t in zip(a.shape, shape)])


# ----------------------------------------------------------------------------
# Fused forward kernel: GIN stack + GCN stack + mean-pool + fc head.
# ----------------------------------------------------------------------------
def fused_forward_kernel(ope_ref,                     # SMEM (L,)   1 + eps per GIN layer
                         adj_ref,                     # (bt, Np, Np) raw adjacency
                         x_ref,                       # (bt, Np, P)  zero-padded features
                         gin_w1_ref, gin_b1_ref,      # (L, P, P), (L, 1, P)
                         gin_w2_ref, gin_b2_ref,      # (L, P, P), (L, 1, P)
                         gcn_w_ref, gcn_b_ref,        # (L, P, P), (L, 1, P)
                         wf_gin_ref, wf_gcn_ref,      # (P, Op), (P, Op)
                         bf_ref,                      # (1, Op)
                         o_ref,                       # (1, bt, Op)
                         *, n_real):
    bt, n_pad, p = x_ref.shape
    num_layers = gin_w1_ref.shape[0]
    m = bt * n_pad                                    # batched GEMM rows (>=128 by design)

    def mm(a, w):
        # f32 accumulation always; bf16 MXU inputs only if weights were pre-cast
        # in the wrapper (no per-call weight casts inside the kernel).
        if w.dtype == jnp.bfloat16:
            a = a.astype(jnp.bfloat16)
        return jnp.dot(a, w, preferred_element_type=jnp.float32)

    # Casts hoisted: once per block, not per layer.
    adj = adj_ref[...].astype(jnp.float32)            # (bt, Np, Np)
    x = x_ref[...].astype(jnp.float32)                # (bt, Np, P)

    # GCN symmetric normalization without materializing eye or adj_norm:
    # adjacency is symmetric, deg = rowsum(A) + 1 (self-loop), and
    #   A_hat @ g = dinv * (A @ (dinv*g) + dinv*g).
    deg = jnp.sum(adj, axis=-1, keepdims=True) + 1.0  # (bt, Np, 1)
    dinv = jax.lax.rsqrt(jnp.maximum(deg, 1e-12))     # (bt, Np, 1)

    def neighbor_sum(h3):                             # per-graph A @ h
        return jnp.einsum("bij,bjd->bid", adj, h3,
                          preferred_element_type=jnp.float32)

    # --- GIN branch: all weight GEMMs run on the flat (bt*Np, P) matrix ---
    h = x.reshape(m, p)
    for l in range(num_layers):
        one_plus_eps = ope_ref[l]                     # SMEM scalar read
        agg = neighbor_sum(h.reshape(bt, n_pad, p)).reshape(m, p) + one_plus_eps * h
        z = jnp.maximum(mm(agg, gin_w1_ref[l]) + gin_b1_ref[l], 0.0)
        h = jnp.maximum(mm(z, gin_w2_ref[l]) + gin_b2_ref[l], 0.0)

    # --- GCN branch ---
    g = x.reshape(m, p)
    for l in range(num_layers):
        g3 = dinv * g.reshape(bt, n_pad, p)
        agg = (dinv * (neighbor_sum(g3) + g3)).reshape(m, p)
        g = jnp.maximum(mm(agg, gcn_w_ref[l]) + gcn_b_ref[l], 0.0)

    # --- head: mean-pool over real nodes, batched concat-free fc, one store ---
    if n_pad == n_real:
        hg = jnp.sum(h.reshape(bt, n_pad, p), axis=1) * (1.0 / n_real)   # (bt, P)
        hc = jnp.sum(g.reshape(bt, n_pad, p), axis=1) * (1.0 / n_real)
    else:
        node = jax.lax.broadcasted_iota(jnp.int32, (n_pad, 1), 0)
        mask = (node < n_real).astype(jnp.float32)                       # (Np, 1)
        hg = jnp.sum(h.reshape(bt, n_pad, p) * mask, axis=1) * (1.0 / n_real)
        hc = jnp.sum(g.reshape(bt, n_pad, p) * mask, axis=1) * (1.0 / n_real)

    out = mm(hg, wf_gin_ref[...]) + mm(hc, wf_gcn_ref[...]) + bf_ref[...]  # (bt, Op)
    o_ref[...] = out[None].astype(o_ref.dtype)


# ----------------------------------------------------------------------------
# Wrapper: pad / stack params, single fused pallas_call over the batch grid.
# ----------------------------------------------------------------------------
def _choose_block_b(batch, n_pad):
    # Largest block with block_b*N >= 128 (full MXU rows) while keeping
    # grid = B // block_b >= 2 so v7x can shard the batch axis over both TCs.
    max_bb = max(batch // 2, 1) if batch >= 2 else 1
    target = max(1, -(-LANE // n_pad))                # ceil(128 / N)
    bb = min(max_bb, target)
    while batch % bb:
        bb -= 1
    return max(bb, 1)


def gin_gcn_hybrid_forward(params, x, adj, *, block_b=None, use_bf16_matmul=False):
    B, N, Fin = x.shape
    H = params["gin"][0]["w1"].shape[1]
    O = params["fc_w"].shape[1]
    L = len(params["gin"])

    P = _round_up(max(Fin, H), LANE)     # lane-dense feature width
    Op = _round_up(O, LANE)              # lane-dense output width
    Np = _round_up(N, SUBLANE)           # sublane-aligned node count (reshape-safe)

    if block_b is None:
        block_b = _choose_block_b(B, Np)
    assert B % block_b == 0
    num_blocks = B // block_b

    wdt = jnp.bfloat16 if use_bf16_matmul else jnp.float32

    x_p = _pad_to(x.astype(jnp.float32), (B, Np, P))
    adj_p = _pad_to(adj.astype(jnp.float32), (B, Np, Np))
    gin_w1 = jnp.stack([_pad_to(lp["w1"], (P, P)) for lp in params["gin"]]).astype(wdt)
    gin_b1 = jnp.stack([_pad_to(lp["b1"], (1, P)) for lp in params["gin"]])
    gin_w2 = jnp.stack([_pad_to(lp["w2"], (P, P)) for lp in params["gin"]]).astype(wdt)
    gin_b2 = jnp.stack([_pad_to(lp["b2"], (1, P)) for lp in params["gin"]])
    gcn_w = jnp.stack([_pad_to(lp["w"], (P, P)) for lp in params["gcn"]]).astype(wdt)
    gcn_b = jnp.stack([_pad_to(lp["b"], (1, P)) for lp in params["gcn"]])
    wf_gin = _pad_to(params["fc_w"][:H], (P, Op)).astype(wdt)
    wf_gcn = _pad_to(params["fc_w"][H:], (P, Op)).astype(wdt)
    bf = _pad_to(params["fc_b"], (1, Op))
    ope = jnp.stack([jnp.asarray(1.0 + lp["eps"], jnp.float32)
                     for lp in params["gin"]])        # (L,) scalar-prefetch arg

    kern = functools.partial(fused_forward_kernel, n_real=N)
    const3 = lambda b, ope: (0, 0, 0)                 # weights stay resident in VMEM
    const2 = lambda b, ope: (0, 0)

    # VMEM budget from the actual footprint (double-buffered per-step inputs,
    # resident weight stacks, headroom for f32 intermediates) instead of a
    # flat 32 MiB.
    w_item = 2 if use_bf16_matmul else 4
    w_bytes = (3 * L * P * P + 2 * P * Op) * w_item + (3 * L * P + Op) * 4
    step_bytes = block_b * (Np * Np + Np * P + Op) * 4
    interm_bytes = 10 * block_b * Np * P * 4
    vmem_limit = int(2 * step_bytes + 2 * w_bytes + interm_bytes) + (4 << 20)
    vmem_limit = min(max(vmem_limit, 16 << 20), 100 << 20)

    out_padded = pl.pallas_call(
        kern,
        out_shape=jax.ShapeDtypeStruct((num_blocks, block_b, Op), jnp.float32),
        grid_spec=pltpu.PrefetchScalarGridSpec(
            num_scalar_prefetch=1,
            grid=(num_blocks,),
            in_specs=[
                pl.BlockSpec((block_b, Np, Np), lambda b, ope: (b, 0, 0)),
                pl.BlockSpec((block_b, Np, P), lambda b, ope: (b, 0, 0)),
                pl.BlockSpec((L, P, P), const3),
                pl.BlockSpec((L, 1, P), const3),
                pl.BlockSpec((L, P, P), const3),
                pl.BlockSpec((L, 1, P), const3),
                pl.BlockSpec((L, P, P), const3),
                pl.BlockSpec((L, 1, P), const3),
                pl.BlockSpec((P, Op), const2),
                pl.BlockSpec((P, Op), const2),
                pl.BlockSpec((1, Op), const2),
            ],
            out_specs=pl.BlockSpec((1, block_b, Op), lambda b, ope: (b, 0, 0)),
        ),
        compiler_params=pltpu.CompilerParams(
            dimension_semantics=("parallel",),          # megacore sharding on batch
            vmem_limit_bytes=vmem_limit,
        ),
    )(ope, adj_p, x_p,
      gin_w1, gin_b1, gin_w2, gin_b2, gcn_w, gcn_b, wf_gin, wf_gcn, bf)

    return out_padded.reshape(B, Op)[:, :O]


# ----------------------------------------------------------------------------
# Parameter init (deterministic) and pure-jnp reference
# ----------------------------------------------------------------------------
def glorot(key, shape):
    lim = np.sqrt(6.0 / (shape[0] + shape[1]))
    return jax.random.uniform(key, shape, jnp.float32, -lim, lim)


def init_params(key, input_dim, hidden_dim, output_dim, num_layers):
    params = {"gin": [], "gcn": []}
    for i in range(num_layers):
        d_in = input_dim if i == 0 else hidden_dim
        key, k1, k2, k3 = jax.random.split(key, 4)
        params["gin"].append(dict(
            w1=glorot(k1, (d_in, hidden_dim)),
            b1=jnp.zeros((1, hidden_dim), jnp.float32),
            w2=glorot(k2, (hidden_dim, hidden_dim)),
            b2=jnp.zeros((1, hidden_dim), jnp.float32),
            eps=0.0,  # nn.Parameter eps, initialized to 0
        ))
        params["gcn"].append(dict(
            w=glorot(k3, (d_in, hidden_dim)),
            b=jnp.zeros((1, hidden_dim), jnp.float32),
        ))
    key, kf = jax.random.split(key)
    params["fc_w"] = glorot(kf, (2 * hidden_dim, output_dim))
    params["fc_b"] = jnp.zeros((1, output_dim), jnp.float32)
    return params


def normalize_adjacency(adj):
    B, N, _ = adj.shape
    a = adj + jnp.eye(N, dtype=adj.dtype)[None]
    deg = jnp.sum(a, axis=-1)
    dinv = 1.0 / jnp.sqrt(jnp.maximum(deg, 1e-12))
    return a * dinv[:, :, None] * dinv[:, None, :]


def reference_forward(params, x, adj):
    adj_norm = normalize_adjacency(adj)
    h_gin = x
    for lp in params["gin"]:
        agg = jnp.einsum("bij,bjd->bid", adj, h_gin) + (1.0 + lp["eps"]) * h_gin
        z = jnp.maximum(agg @ lp["w1"] + lp["b1"], 0.0)
        h_gin = jnp.maximum(z @ lp["w2"] + lp["b2"], 0.0)
    h_gcn = x
    for lp in params["gcn"]:
        agg = jnp.einsum("bij,bjd->bid", adj_norm, h_gcn)
        h_gcn = jnp.maximum(agg @ lp["w"] + lp["b"], 0.0)
    cat = jnp.concatenate([h_gin.mean(axis=1), h_gcn.mean(axis=1)], axis=-1)
    return cat @ params["fc_w"] + params["fc_b"]


if __name__ == "__main__":
    B, N = 16, 16
    input_dim, hidden_dim, output_dim, num_layers = 8, 32, 8, 3

    key = jax.random.PRNGKey(0)
    key, kx, ka = jax.random.split(key, 3)
    x = jax.random.normal(kx, (B, N, input_dim), jnp.float32)
    # symmetric 0/1 adjacency without self loops
    a = (jax.random.uniform(ka, (B, N, N)) > 0.7).astype(jnp.float32)
    adj = jnp.maximum(a, jnp.swapaxes(a, 1, 2)) * (1.0 - jnp.eye(N)[None])

    params = init_params(key, input_dim, hidden_dim, output_dim, num_layers)

    out = gin_gcn_hybrid_forward(params, x, adj)
    out = jax.block_until_ready(out)

    ref = reference_forward(params, x, adj)
    assert out.shape == (B, output_dim)
    np.testing.assert_allclose(np.asarray(out), np.asarray(ref), rtol=1e-4, atol=1e-4)

    print("KERNEL_OK")
</pallas_src>

<mosaic_0001>
module attributes {stable_mosaic.version = 11 : i64} {
  func.func @fused_forward_kernel(%arg0: i32, %arg1: memref<3xf32, #tpu.memory_space<smem>>, %arg2: memref<8x16x16xf32, #tpu.memory_space<vmem>>, %arg3: memref<8x16x128xf32, #tpu.memory_space<vmem>>, %arg4: memref<3x128x128xf32, #tpu.memory_space<vmem>>, %arg5: memref<3x1x128xf32, #tpu.memory_space<vmem>>, %arg6: memref<3x128x128xf32, #tpu.memory_space<vmem>>, %arg7: memref<3x1x128xf32, #tpu.memory_space<vmem>>, %arg8: memref<3x128x128xf32, #tpu.memory_space<vmem>>, %arg9: memref<3x1x128xf32, #tpu.memory_space<vmem>>, %arg10: memref<128x128xf32, #tpu.memory_space<vmem>>, %arg11: memref<128x128xf32, #tpu.memory_space<vmem>>, %arg12: memref<1x128xf32, #tpu.memory_space<vmem>>, %arg13: memref<1x8x128xf32, #tpu.memory_space<vmem>>) attributes {dimension_semantics = [#tpu.dimension_semantics<parallel>], iteration_bounds = array<i64: 2>, scalar_prefetch = 1 : i64, scratch_operands = 0 : i64, tpu.core_type = #tpu.core_type<tc>, window_params = [{transform_indices = @transform_0, window_bounds = array<i64: 8, 16, 16>}, {transform_indices = @transform_1, window_bounds = array<i64: 8, 16, 128>}, {pipeline_mode = #tpu.pipeline_mode<synchronous>, transform_indices = @transform_2, window_bounds = array<i64: 3, 128, 128>}, {pipeline_mode = #tpu.pipeline_mode<synchronous>, transform_indices = @transform_3, window_bounds = array<i64: 3, 1, 128>}, {pipeline_mode = #tpu.pipeline_mode<synchronous>, transform_indices = @transform_4, window_bounds = array<i64: 3, 128, 128>}, {pipeline_mode = #tpu.pipeline_mode<synchronous>, transform_indices = @transform_5, window_bounds = array<i64: 3, 1, 128>}, {pipeline_mode = #tpu.pipeline_mode<synchronous>, transform_indices = @transform_6, window_bounds = array<i64: 3, 128, 128>}, {pipeline_mode = #tpu.pipeline_mode<synchronous>, transform_indices = @transform_7, window_bounds = array<i64: 3, 1, 128>}, {pipeline_mode = #tpu.pipeline_mode<synchronous>, transform_indices = @transform_8, window_bounds = array<i64: 128, 128>}, {pipeline_mode = #tpu.pipeline_mode<synchronous>, transform_indices = @transform_9, window_bounds = array<i64: 128, 128>}, {pipeline_mode = #tpu.pipeline_mode<synchronous>, transform_indices = @transform_10, window_bounds = array<i64: 1, 128>}, {transform_indices = @transform_11, window_bounds = array<i64: 1, 8, 128>}]} {
    %c0 = arith.constant 0 : index
    %c0_0 = arith.constant 0 : index
    %c0_1 = arith.constant 0 : index
    %0 = vector.load %arg2[%c0, %c0_0, %c0_1] : memref<8x16x16xf32, #tpu.memory_space<vmem>>, vector<8x16x16xf32>
    %c0_2 = arith.constant 0 : index
    %c0_3 = arith.constant 0 : index
    %c0_4 = arith.constant 0 : index
    %1 = vector.load %arg3[%c0_2, %c0_3, %c0_4] : memref<8x16x128xf32, #tpu.memory_space<vmem>>, vector<8x16x128xf32>
    %cst = arith.constant dense<0.000000e+00> : vector<8x16xf32>
    %2 = vector.multi_reduction <add>, %0, %cst [2] : vector<8x16x16xf32> to vector<8x16xf32>
    %3 = vector.shape_cast %2 : vector<8x16xf32> to vector<8x16x1xf32>
    %cst_5 = arith.constant 1.000000e+00 : f32
    %4 = vector.broadcast %cst_5 : f32 to vector<8x16x1xf32>
    %5 = arith.addf %3, %4 : vector<8x16x1xf32>
    %cst_6 = arith.constant 9.99999996E-13 : f32
    %6 = vector.broadcast %cst_6 : f32 to vector<8x16x1xf32>
    %7 = arith.maximumf %5, %6 : vector<8x16x1xf32>
    %8 = math.rsqrt %7 : vector<8x16x1xf32>
    %9 = vector.shape_cast %1 : vector<8x16x128xf32> to vector<128x128xf32>
    %c0_7 = arith.constant 0 : index
    %10 = memref.load %arg1[%c0_7] : memref<3xf32, #tpu.memory_space<smem>>
    %11 = vector.shape_cast %9 : vector<128x128xf32> to vector<8x16x128xf32>
    "tpu.trace_start"() <{level = 10 : i32, message = "bij,bjd->bid"}> : () -> ()
    %cst_8 = arith.constant dense<0.000000e+00> : vector<8x16x128xf32>
    %12 = tpu.matmul %0, %11, %cst_8 {dimension_numbers = #tpu.dot_dimension_numbers<[2], [1], [1], [2], [0, 0, 0, 1, 1, 2], [0], [0]>} : vector<8x16x16xf32>, vector<8x16x128xf32>, vector<8x16x128xf32> -> vector<8x16x128xf32>
    "tpu.trace_stop"() : () -> ()
    %13 = vector.shape_cast %12 : vector<8x16x128xf32> to vector<128x128xf32>
    %14 = vector.broadcast %10 : f32 to vector<128x128xf32>
    %15 = arith.mulf %14, %9 : vector<128x128xf32>
    %16 = arith.addf %13, %15 : vector<128x128xf32>
    %c0_9 = arith.constant 0 : index
    %c0_10 = arith.constant 0 : index
    %c0_11 = arith.constant 0 : index
    %17 = vector.load %arg4[%c0_9, %c0_10, %c0_11] : memref<3x128x128xf32, #tpu.memory_space<vmem>>, vector<1x128x128xf32>
    %18 = vector.shape_cast %17 : vector<1x128x128xf32> to vector<128x128xf32>
    %cst_12 = arith.constant dense<0.000000e+00> : vector<128x128xf32>
    %19 = tpu.matmul %16, %18, %cst_12 {dimension_numbers = #tpu.dot_dimension_numbers<[1], [0], [0], [1], [0, 0, 1, 1], [], []>} : vector<128x128xf32>, vector<128x128xf32>, vector<128x128xf32> -> vector<128x128xf32>
    %c0_13 = arith.constant 0 : index
    %c0_14 = arith.constant 0 : index
    %c0_15 = arith.constant 0 : index
    %20 = vector.load %arg5[%c0_13, %c0_14, %c0_15] : memref<3x1x128xf32, #tpu.memory_space<vmem>>, vector<1x1x128xf32>
    %21 = vector.shape_cast %20 : vector<1x1x128xf32> to vector<1x128xf32>
    %22 = vector.broadcast %21 : vector<1x128xf32> to vector<128x128xf32>
    %23 = arith.addf %19, %22 : vector<128x128xf32>
    %cst_16 = arith.constant 0.000000e+00 : f32
    %24 = vector.broadcast %cst_16 : f32 to vector<128x128xf32>
    %25 = arith.maximumf %23, %24 : vector<128x128xf32>
    %c0_17 = arith.constant 0 : index
    %c0_18 = arith.constant 0 : index
    %c0_19 = arith.constant 0 : index
    %26 = vector.load %arg6[%c0_17, %c0_18, %c0_19] : memref<3x128x128xf32, #tpu.memory_space<vmem>>, vector<1x128x128xf32>
    %27 = vector.shape_cast %26 : vector<1x128x128xf32> to vector<128x128xf32>
    %cst_20 = arith.constant dense<0.000000e+00> : vector<128x128xf32>
    %28 = tpu.matmul %25, %27, %cst_20 {dimension_numbers = #tpu.dot_dimension_numbers<[1], [0], [0], [1], [0, 0, 1, 1], [], []>} : vector<128x128xf32>, vector<128x128xf32>, vector<128x128xf32> -> vector<128x128xf32>
    %c0_21 = arith.constant 0 : index
    %c0_22 = arith.constant 0 : index
    %c0_23 = arith.constant 0 : index
    %29 = vector.load %arg7[%c0_21, %c0_22, %c0_23] : memref<3x1x128xf32, #tpu.memory_space<vmem>>, vector<1x1x128xf32>
    %30 = vector.shape_cast %29 : vector<1x1x128xf32> to vector<1x128xf32>
    %31 = vector.broadcast %30 : vector<1x128xf32> to vector<128x128xf32>
    %32 = arith.addf %28, %31 : vector<128x128xf32>
    %cst_24 = arith.constant 0.000000e+00 : f32
    %33 = vector.broadcast %cst_24 : f32 to vector<128x128xf32>
    %34 = arith.maximumf %32, %33 : vector<128x128xf32>
    %c1 = arith.constant 1 : index
    %35 = memref.load %arg1[%c1] : memref<3xf32, #tpu.memory_space<smem>>
    %36 = vector.shape_cast %34 : vector<128x128xf32> to vector<8x16x128xf32>
    "tpu.trace_start"() <{level = 10 : i32, message = "bij,bjd->bid"}> : () -> ()
    %cst_25 = arith.constant dense<0.000000e+00> : vector<8x16x128xf32>
    %37 = tpu.matmul %0, %36, %cst_25 {dimension_numbers = #tpu.dot_dimension_numbers<[2], [1], [1], [2], [0, 0, 0, 1, 1, 2], [0], [0]>} : vector<8x16x16xf32>, vector<8x16x128xf32>, vector<8x16x128xf32> -> vector<8x16x128xf32>
    "tpu.trace_stop"() : () -> ()
    %38 = vector.shape_cast %37 : vector<8x16x128xf32> to vector<128x128xf32>
    %39 = vector.broadcast %35 : f32 to vector<128x128xf32>
    %40 = arith.mulf %39, %34 : vector<128x128xf32>
    %41 = arith.addf %38, %40 : vector<128x128xf32>
    %c1_26 = arith.constant 1 : index
    %c0_27 = arith.constant 0 : index
    %c0_28 = arith.constant 0 : index
    %42 = vector.load %arg4[%c1_26, %c0_27, %c0_28] : memref<3x128x128xf32, #tpu.memory_space<vmem>>, vector<1x128x128xf32>
    %43 = vector.shape_cast %42 : vector<1x128x128xf32> to vector<128x128xf32>
    %cst_29 = arith.constant dense<0.000000e+00> : vector<128x128xf32>
    %44 = tpu.matmul %41, %43, %cst_29 {dimension_numbers = #tpu.dot_dimension_numbers<[1], [0], [0], [1], [0, 0, 1, 1], [], []>} : vector<128x128xf32>, vector<128x128xf32>, vector<128x128xf32> -> vector<128x128xf32>
    %c1_30 = arith.constant 1 : index
    %c0_31 = arith.constant 0 : index
    %c0_32 = arith.constant 0 : index
    %45 = vector.load %arg5[%c1_30, %c0_31, %c0_32] : memref<3x1x128xf32, #tpu.memory_space<vmem>>, vector<1x1x128xf32>
    %46 = vector.shape_cast %45 : vector<1x1x128xf32> to vector<1x128xf32>
    %47 = vector.broadcast %46 : vector<1x128xf32> to vector<128x128xf32>
    %48 = arith.addf %44, %47 : vector<128x128xf32>
    %cst_33 = arith.constant 0.000000e+00 : f32
    %49 = vector.broadcast %cst_33 : f32 to vector<128x128xf32>
    %50 = arith.maximumf %48, %49 : vector<128x128xf32>
    %c1_34 = arith.constant 1 : index
    %c0_35 = arith.constant 0 : index
    %c0_36 = arith.constant 0 : index
    %51 = vector.load %arg6[%c1_34, %c0_35, %c0_36] : memref<3x128x128xf32, #tpu.memory_space<vmem>>, vector<1x128x128xf32>
    %52 = vector.shape_cast %51 : vector<1x128x128xf32> to vector<128x128xf32>
    %cst_37 = arith.constant dense<0.000000e+00> : vector<128x128xf32>
    %53 = tpu.matmul %50, %52, %cst_37 {dimension_numbers = #tpu.dot_dimension_numbers<[1], [0], [0], [1], [0, 0, 1, 1], [], []>} : vector<128x128xf32>, vector<128x128xf32>, vector<128x128xf32> -> vector<128x128xf32>
    %c1_38 = arith.constant 1 : index
    %c0_39 = arith.constant 0 : index
    %c0_40 = arith.constant 0 : index
    %54 = vector.load %arg7[%c1_38, %c0_39, %c0_40] : memref<3x1x128xf32, #tpu.memory_space<vmem>>, vector<1x1x128xf32>
    %55 = vector.shape_cast %54 : vector<1x1x128xf32> to vector<1x128xf32>
    %56 = vector.broadcast %55 : vector<1x128xf32> to vector<128x128xf32>
    %57 = arith.addf %53, %56 : vector<128x128xf32>
    %cst_41 = arith.constant 0.000000e+00 : f32
    %58 = vector.broadcast %cst_41 : f32 to vector<128x128xf32>
    %59 = arith.maximumf %57, %58 : vector<128x128xf32>
    %c2 = arith.constant 2 : index
    %60 = memref.load %arg1[%c2] : memref<3xf32, #tpu.memory_space<smem>>
    %61 = vector.shape_cast %59 : vector<128x128xf32> to vector<8x16x128xf32>
    "tpu.trace_start"() <{level = 10 : i32, message = "bij,bjd->bid"}> : () -> ()
    %cst_42 = arith.constant dense<0.000000e+00> : vector<8x16x128xf32>
    %62 = tpu.matmul %0, %61, %cst_42 {dimension_numbers = #tpu.dot_dimension_numbers<[2], [1], [1], [2], [0, 0, 0, 1, 1, 2], [0], [0]>} : vector<8x16x16xf32>, vector<8x16x128xf32>, vector<8x16x128xf32> -> vector<8x16x128xf32>
    "tpu.trace_stop"() : () -> ()
    %63 = vector.shape_cast %62 : vector<8x16x128xf32> to vector<128x128xf32>
    %64 = vector.broadcast %60 : f32 to vector<128x128xf32>
    %65 = arith.mulf %64, %59 : vector<128x128xf32>
    %66 = arith.addf %63, %65 : vector<128x128xf32>
    %c2_43 = arith.constant 2 : index
    %c0_44 = arith.constant 0 : index
    %c0_45 = arith.constant 0 : index
    %67 = vector.load %arg4[%c2_43, %c0_44, %c0_45] : memref<3x128x128xf32, #tpu.memory_space<vmem>>, vector<1x128x128xf32>
    %68 = vector.shape_cast %67 : vector<1x128x128xf32> to vector<128x128xf32>
    %cst_46 = arith.constant dense<0.000000e+00> : vector<128x128xf32>
    %69 = tpu.matmul %66, %68, %cst_46 {dimension_numbers = #tpu.dot_dimension_numbers<[1], [0], [0], [1], [0, 0, 1, 1], [], []>} : vector<128x128xf32>, vector<128x128xf32>, vector<128x128xf32> -> vector<128x128xf32>
    %c2_47 = arith.constant 2 : index
    %c0_48 = arith.constant 0 : index
    %c0_49 = arith.constant 0 : index
    %70 = vector.load %arg5[%c2_47, %c0_48, %c0_49] : memref<3x1x128xf32, #tpu.memory_space<vmem>>, vector<1x1x128xf32>
    %71 = vector.shape_cast %70 : vector<1x1x128xf32> to vector<1x128xf32>
    %72 = vector.broadcast %71 : vector<1x128xf32> to vector<128x128xf32>
    %73 = arith.addf %69, %72 : vector<128x128xf32>
    %cst_50 = arith.constant 0.000000e+00 : f32
    %74 = vector.broadcast %cst_50 : f32 to vector<128x128xf32>
    %75 = arith.maximumf %73, %74 : vector<128x128xf32>
    %c2_51 = arith.constant 2 : index
    %c0_52 = arith.constant 0 : index
    %c0_53 = arith.constant 0 : index
    %76 = vector.load %arg6[%c2_51, %c0_52, %c0_53] : memref<3x128x128xf32, #tpu.memory_space<vmem>>, vector<1x128x128xf32>
    %77 = vector.shape_cast %76 : vector<1x128x128xf32> to vector<128x128xf32>
    %cst_54 = arith.constant dense<0.000000e+00> : vector<128x128xf32>
    %78 = tpu.matmul %75, %77, %cst_54 {dimension_numbers = #tpu.dot_dimension_numbers<[1], [0], [0], [1], [0, 0, 1, 1], [], []>} : vector<128x128xf32>, vector<128x128xf32>, vector<128x128xf32> -> vector<128x128xf32>
    %c2_55 = arith.constant 2 : index
    %c0_56 = arith.constant 0 : index
    %c0_57 = arith.constant 0 : index
    %79 = vector.load %arg7[%c2_55, %c0_56, %c0_57] : memref<3x1x128xf32, #tpu.memory_space<vmem>>, vector<1x1x128xf32>
    %80 = vector.shape_cast %79 : vector<1x1x128xf32> to vector<1x128xf32>
    %81 = vector.broadcast %80 : vector<1x128xf32> to vector<128x128xf32>
    %82 = arith.addf %78, %81 : vector<128x128xf32>
    %cst_58 = arith.constant 0.000000e+00 : f32
    %83 = vector.broadcast %cst_58 : f32 to vector<128x128xf32>
    %84 = arith.maximumf %82, %83 : vector<128x128xf32>
    %85 = vector.shape_cast %1 : vector<8x16x128xf32> to vector<128x128xf32>
    %86 = vector.shape_cast %85 : vector<128x128xf32> to vector<8x16x128xf32>
    %87 = vector.broadcast %8 : vector<8x16x1xf32> to vector<8x16x128xf32>
    %88 = arith.mulf %87, %86 : vector<8x16x128xf32>
    "tpu.trace_start"() <{level = 10 : i32, message = "bij,bjd->bid"}> : () -> ()
    %cst_59 = arith.constant dense<0.000000e+00> : vector<8x16x128xf32>
    %89 = tpu.matmul %0, %88, %cst_59 {dimension_numbers = #tpu.dot_dimension_numbers<[2], [1], [1], [2], [0, 0, 0, 1, 1, 2], [0], [0]>} : vector<8x16x16xf32>, vector<8x16x128xf32>, vector<8x16x128xf32> -> vector<8x16x128xf32>
    "tpu.trace_stop"() : () -> ()
    %90 = arith.addf %89, %88 : vector<8x16x128xf32>
    %91 = vector.broadcast %8 : vector<8x16x1xf32> to vector<8x16x128xf32>
    %92 = arith.mulf %91, %90 : vector<8x16x128xf32>
    %93 = vector.shape_cast %92 : vector<8x16x128xf32> to vector<128x128xf32>
    %c0_60 = arith.constant 0 : index
    %c0_61 = arith.constant 0 : index
    %c0_62 = arith.constant 0 : index
    %94 = vector.load %arg8[%c0_60, %c0_61, %c0_62] : memref<3x128x128xf32, #tpu.memory_space<vmem>>, vector<1x128x128xf32>
    %95 = vector.shape_cast %94 : vector<1x128x128xf32> to vector<128x128xf32>
    %cst_63 = arith.constant dense<0.000000e+00> : vector<128x128xf32>
    %96 = tpu.matmul %93, %95, %cst_63 {dimension_numbers = #tpu.dot_dimension_numbers<[1], [0], [0], [1], [0, 0, 1, 1], [], []>} : vector<128x128xf32>, vector<128x128xf32>, vector<128x128xf32> -> vector<128x128xf32>
    %c0_64 = arith.constant 0 : index
    %c0_65 = arith.constant 0 : index
    %c0_66 = arith.constant 0 : index
    %97 = vector.load %arg9[%c0_64, %c0_65, %c0_66] : memref<3x1x128xf32, #tpu.memory_space<vmem>>, vector<1x1x128xf32>
    %98 = vector.shape_cast %97 : vector<1x1x128xf32> to vector<1x128xf32>
    %99 = vector.broadcast %98 : vector<1x128xf32> to vector<128x128xf32>
    %100 = arith.addf %96, %99 : vector<128x128xf32>
    %cst_67 = arith.constant 0.000000e+00 : f32
    %101 = vector.broadcast %cst_67 : f32 to vector<128x128xf32>
    %102 = arith.maximumf %100, %101 : vector<128x128xf32>
    %103 = vector.shape_cast %102 : vector<128x128xf32> to vector<8x16x128xf32>
    %104 = vector.broadcast %8 : vector<8x16x1xf32> to vector<8x16x128xf32>
    %105 = arith.mulf %104, %103 : vector<8x16x128xf32>
    "tpu.trace_start"() <{level = 10 : i32, message = "bij,bjd->bid"}> : () -> ()
    %cst_68 = arith.constant dense<0.000000e+00> : vector<8x16x128xf32>
    %106 = tpu.matmul %0, %105, %cst_68 {dimension_numbers = #tpu.dot_dimension_numbers<[2], [1], [1], [2], [0, 0, 0, 1, 1, 2], [0], [0]>} : vector<8x16x16xf32>, vector<8x16x128xf32>, vector<8x16x128xf32> -> vector<8x16x128xf32>
    "tpu.trace_stop"() : () -> ()
    %107 = arith.addf %106, %105 : vector<8x16x128xf32>
    %108 = vector.broadcast %8 : vector<8x16x1xf32> to vector<8x16x128xf32>
    %109 = arith.mulf %108, %107 : vector<8x16x128xf32>
    %110 = vector.shape_cast %109 : vector<8x16x128xf32> to vector<128x128xf32>
    %c1_69 = arith.constant 1 : index
    %c0_70 = arith.constant 0 : index
    %c0_71 = arith.constant 0 : index
    %111 = vector.load %arg8[%c1_69, %c0_70, %c0_71] : memref<3x128x128xf32, #tpu.memory_space<vmem>>, vector<1x128x128xf32>
    %112 = vector.shape_cast %111 : vector<1x128x128xf32> to vector<128x128xf32>
    %cst_72 = arith.constant dense<0.000000e+00> : vector<128x128xf32>
    %113 = tpu.matmul %110, %112, %cst_72 {dimension_numbers = #tpu.dot_dimension_numbers<[1], [0], [0], [1], [0, 0, 1, 1], [], []>} : vector<128x128xf32>, vector<128x128xf32>, vector<128x128xf32> -> vector<128x128xf32>
    %c1_73 = arith.constant 1 : index
    %c0_74 = arith.constant 0 : index
    %c0_75 = arith.constant 0 : index
    %114 = vector.load %arg9[%c1_73, %c0_74, %c0_75] : memref<3x1x128xf32, #tpu.memory_space<vmem>>, vector<1x1x128xf32>
    %115 = vector.shape_cast %114 : vector<1x1x128xf32> to vector<1x128xf32>
    %116 = vector.broadcast %115 : vector<1x128xf32> to vector<128x128xf32>
    %117 = arith.addf %113, %116 : vector<128x128xf32>
    %cst_76 = arith.constant 0.000000e+00 : f32
    %118 = vector.broadcast %cst_76 : f32 to vector<128x128xf32>
    %119 = arith.maximumf %117, %118 : vector<128x128xf32>
    %120 = vector.shape_cast %119 : vector<128x128xf32> to vector<8x16x128xf32>
    %121 = vector.broadcast %8 : vector<8x16x1xf32> to vector<8x16x128xf32>
    %122 = arith.mulf %121, %120 : vector<8x16x128xf32>
    "tpu.trace_start"() <{level = 10 : i32, message = "bij,bjd->bid"}> : () -> ()
    %cst_77 = arith.constant dense<0.000000e+00> : vector<8x16x128xf32>
    %123 = tpu.matmul %0, %122, %cst_77 {dimension_numbers = #tpu.dot_dimension_numbers<[2], [1], [1], [2], [0, 0, 0, 1, 1, 2], [0], [0]>} : vector<8x16x16xf32>, vector<8x16x128xf32>, vector<8x16x128xf32> -> vector<8x16x128xf32>
    "tpu.trace_stop"() : () -> ()
    %124 = arith.addf %123, %122 : vector<8x16x128xf32>
    %125 = vector.broadcast %8 : vector<8x16x1xf32> to vector<8x16x128xf32>
    %126 = arith.mulf %125, %124 : vector<8x16x128xf32>
    %127 = vector.shape_cast %126 : vector<8x16x128xf32> to vector<128x128xf32>
    %c2_78 = arith.constant 2 : index
    %c0_79 = arith.constant 0 : index
    %c0_80 = arith.constant 0 : index
    %128 = vector.load %arg8[%c2_78, %c0_79, %c0_80] : memref<3x128x128xf32, #tpu.memory_space<vmem>>, vector<1x128x128xf32>
    %129 = vector.shape_cast %128 : vector<1x128x128xf32> to vector<128x128xf32>
    %cst_81 = arith.constant dense<0.000000e+00> : vector<128x128xf32>
    %130 = tpu.matmul %127, %129, %cst_81 {dimension_numbers = #tpu.dot_dimension_numbers<[1], [0], [0], [1], [0, 0, 1, 1], [], []>} : vector<128x128xf32>, vector<128x128xf32>, vector<128x128xf32> -> vector<128x128xf32>
    %c2_82 = arith.constant 2 : index
    %c0_83 = arith.constant 0 : index
    %c0_84 = arith.constant 0 : index
    %131 = vector.load %arg9[%c2_82, %c0_83, %c0_84] : memref<3x1x128xf32, #tpu.memory_space<vmem>>, vector<1x1x128xf32>
    %132 = vector.shape_cast %131 : vector<1x1x128xf32> to vector<1x128xf32>
    %133 = vector.broadcast %132 : vector<1x128xf32> to vector<128x128xf32>
    %134 = arith.addf %130, %133 : vector<128x128xf32>
    %cst_85 = arith.constant 0.000000e+00 : f32
    %135 = vector.broadcast %cst_85 : f32 to vector<128x128xf32>
    %136 = arith.maximumf %134, %135 : vector<128x128xf32>
    %137 = vector.shape_cast %84 : vector<128x128xf32> to vector<8x16x128xf32>
    %cst_86 = arith.constant dense<0.000000e+00> : vector<8x128xf32>
    %138 = vector.multi_reduction <add>, %137, %cst_86 [1] : vector<8x16x128xf32> to vector<8x128xf32>
    %cst_87 = arith.constant 6.250000e-02 : f32
    %139 = vector.broadcast %cst_87 : f32 to vector<8x128xf32>
    %140 = arith.mulf %138, %139 : vector<8x128xf32>
    %141 = vector.shape_cast %136 : vector<128x128xf32> to vector<8x16x128xf32>
    %cst_88 = arith.constant dense<0.000000e+00> : vector<8x128xf32>
    %142 = vector.multi_reduction <add>, %141, %cst_88 [1] : vector<8x16x128xf32> to vector<8x128xf32>
    %cst_89 = arith.constant 6.250000e-02 : f32
    %143 = vector.broadcast %cst_89 : f32 to vector<8x128xf32>
    %144 = arith.mulf %142, %143 : vector<8x128xf32>
    %c0_90 = arith.constant 0 : index
    %c0_91 = arith.constant 0 : index
    %145 = vector.load %arg10[%c0_90, %c0_91] : memref<128x128xf32, #tpu.memory_space<vmem>>, vector<128x128xf32>
    %cst_92 = arith.constant dense<0.000000e+00> : vector<8x128xf32>
    %146 = tpu.matmul %140, %145, %cst_92 {dimension_numbers = #tpu.dot_dimension_numbers<[1], [0], [0], [1], [0, 0, 1, 1], [], []>} : vector<8x128xf32>, vector<128x128xf32>, vector<8x128xf32> -> vector<8x128xf32>
    %c0_93 = arith.constant 0 : index
    %c0_94 = arith.constant 0 : index
    %147 = vector.load %arg11[%c0_93, %c0_94] : memref<128x128xf32, #tpu.memory_space<vmem>>, vector<128x128xf32>
    %cst_95 = arith.constant dense<0.000000e+00> : vector<8x128xf32>
    %148 = tpu.matmul %144, %147, %cst_95 {dimension_numbers = #tpu.dot_dimension_numbers<[1], [0], [0], [1], [0, 0, 1, 1], [], []>} : vector<8x128xf32>, vector<128x128xf32>, vector<8x128xf32> -> vector<8x128xf32>
    %149 = arith.addf %146, %148 : vector<8x128xf32>
    %c0_96 = arith.constant 0 : index
    %c0_97 = arith.constant 0 : index
    %150 = vector.load %arg12[%c0_96, %c0_97] : memref<1x128xf32, #tpu.memory_space<vmem>>, vector<1x128xf32>
    %151 = vector.broadcast %150 : vector<1x128xf32> to vector<8x128xf32>
    %152 = arith.addf %149, %151 : vector<8x128xf32>
    %153 = vector.shape_cast %152 : vector<8x128xf32> to vector<1x8x128xf32>
    %c0_98 = arith.constant 0 : index
    %c0_99 = arith.constant 0 : index
    %c0_100 = arith.constant 0 : index
    %154 = vector.load %arg13[%c0_98, %c0_99, %c0_100] : memref<1x8x128xf32, #tpu.memory_space<vmem>>, vector<1x8x128xf32>
    tpu.vector_store %arg13[%c0_98, %c0_99, %c0_100], %153 {strides = array<i32>} : memref<1x8x128xf32, #tpu.memory_space<vmem>>, vector<1x8x128xf32>,
    return
  }
  func.func @transform_0(%arg0: i32, %arg1: memref<3xf32, #tpu.memory_space<smem>>) -> (i32, i32, i32) {
    %c0_i32 = arith.constant 0 : i32
    %c0_i32_0 = arith.constant 0 : i32
    %c0_i32_1 = arith.constant 0 : i32
    return %arg0, %c0_i32, %c0_i32_0 : i32, i32, i32
  }
  func.func @transform_1(%arg0: i32, %arg1: memref<3xf32, #tpu.memory_space<smem>>) -> (i32, i32, i32) {
    %c0_i32 = arith.constant 0 : i32
    %c0_i32_0 = arith.constant 0 : i32
    %c0_i32_1 = arith.constant 0 : i32
    return %arg0, %c0_i32, %c0_i32_0 : i32, i32, i32
  }
  func.func @transform_2(%arg0: i32, %arg1: memref<3xf32, #tpu.memory_space<smem>>) -> (i32, i32, i32) {
    %c0_i32 = arith.constant 0 : i32
    %c0_i32_0 = arith.constant 0 : i32
    %c0_i32_1 = arith.constant 0 : i32
    %c0_i32_2 = arith.constant 0 : i32
    return %c0_i32, %c0_i32_0, %c0_i32_1 : i32, i32, i32
  }
  func.func @transform_3(%arg0: i32, %arg1: memref<3xf32, #tpu.memory_space<smem>>) -> (i32, i32, i32) {
    %c0_i32 = arith.constant 0 : i32
    %c0_i32_0 = arith.constant 0 : i32
    %c0_i32_1 = arith.constant 0 : i32
    %c0_i32_2 = arith.constant 0 : i32
    return %c0_i32, %c0_i32_0, %c0_i32_1 : i32, i32, i32
  }
  func.func @transform_4(%arg0: i32, %arg1: memref<3xf32, #tpu.memory_space<smem>>) -> (i32, i32, i32) {
    %c0_i32 = arith.constant 0 : i32
    %c0_i32_0 = arith.constant 0 : i32
    %c0_i32_1 = arith.constant 0 : i32
    %c0_i32_2 = arith.constant 0 : i32
    return %c0_i32, %c0_i32_0, %c0_i32_1 : i32, i32, i32
  }
  func.func @transform_5(%arg0: i32, %arg1: memref<3xf32, #tpu.memory_space<smem>>) -> (i32, i32, i32) {
    %c0_i32 = arith.constant 0 : i32
    %c0_i32_0 = arith.constant 0 : i32
    %c0_i32_1 = arith.constant 0 : i32
    %c0_i32_2 = arith.constant 0 : i32
    return %c0_i32, %c0_i32_0, %c0_i32_1 : i32, i32, i32
  }
  func.func @transform_6(%arg0: i32, %arg1: memref<3xf32, #tpu.memory_space<smem>>) -> (i32, i32, i32) {
    %c0_i32 = arith.constant 0 : i32
    %c0_i32_0 = arith.constant 0 : i32
    %c0_i32_1 = arith.constant 0 : i32
    %c0_i32_2 = arith.constant 0 : i32
    return %c0_i32, %c0_i32_0, %c0_i32_1 : i32, i32, i32
  }
  func.func @transform_7(%arg0: i32, %arg1: memref<3xf32, #tpu.memory_space<smem>>) -> (i32, i32, i32) {
    %c0_i32 = arith.constant 0 : i32
    %c0_i32_0 = arith.constant 0 : i32
    %c0_i32_1 = arith.constant 0 : i32
    %c0_i32_2 = arith.constant 0 : i32
    return %c0_i32, %c0_i32_0, %c0_i32_1 : i32, i32, i32
  }
  func.func @transform_8(%arg0: i32, %arg1: memref<3xf32, #tpu.memory_space<smem>>) -> (i32, i32) {
    %c0_i32 = arith.constant 0 : i32
    %c0_i32_0 = arith.constant 0 : i32
    %c0_i32_1 = arith.constant 0 : i32
    return %c0_i32, %c0_i32_0 : i32, i32
  }
  func.func @transform_9(%arg0: i32, %arg1: memref<3xf32, #tpu.memory_space<smem>>) -> (i32, i32) {
    %c0_i32 = arith.constant 0 : i32
    %c0_i32_0 = arith.constant 0 : i32
    %c0_i32_1 = arith.constant 0 : i32
    return %c0_i32, %c0_i32_0 : i32, i32
  }
  func.func @transform_10(%arg0: i32, %arg1: memref<3xf32, #tpu.memory_space<smem>>) -> (i32, i32) {
    %c0_i32 = arith.constant 0 : i32
    %c0_i32_0 = arith.constant 0 : i32
    %c0_i32_1 = arith.constant 0 : i32
    return %c0_i32, %c0_i32_0 : i32, i32
  }
  func.func @transform_11(%arg0: i32, %arg1: memref<3xf32, #tpu.memory_space<smem>>) -> (i32, i32, i32) {
    %c0_i32 = arith.constant 0 : i32
    %c0_i32_0 = arith.constant 0 : i32
    %c0_i32_1 = arith.constant 0 : i32
    return %arg0, %c0_i32, %c0_i32_0 : i32, i32, i32
  }
}

</mosaic_0001>

<llo_original>
// kernel: tpu_custom_call.1
$region0: #{tpu_custom_call.1}
  #allocation0 [shape = 'u32[]', space=smem, size = 0x4, offset = 0x4, fixed_abs, tag = 'smem constant byte address 0x4 - core index']
  #allocation1 [shape = 'u32[144,128]{1,0:T(1,128)}', space=vmem, size = 0x12000, scoped, tag = 'internal scratch']
  #allocation2 [shape = 's32[1]{0}', space=sflag, size = 0x4, scoped, tag = 'scoped memory for tpu_custom_call.1']
  #allocation3 [shape = 'u8[512]{0}', space=smem, size = 0x200, scoped, tag = 'prefetched SMEM operand 0']
  %s0 = inlined_call_operand.hbm [shape: f32[3], index: 0, kind: input, shape index: {}]
  %s1 = inlined_call_operand.hbm [shape: f32[16,16,16], index: 1, kind: input, shape index: {}]
  %s2 = inlined_call_operand.hbm [shape: f32[16,16,128], index: 2, kind: input, shape index: {}]
  %s3 = inlined_call_operand.hbm [shape: f32[3,128,128], index: 3, kind: input, shape index: {}]
  %s4 = inlined_call_operand.vmem [shape: f32[3,1,128], index: 4, kind: input, shape index: {}]
  %s5 = inlined_call_operand.hbm [shape: f32[3,128,128], index: 5, kind: input, shape index: {}]
  %s6 = inlined_call_operand.vmem [shape: f32[3,1,128], index: 6, kind: input, shape index: {}]
  %s7 = inlined_call_operand.hbm [shape: f32[3,128,128], index: 7, kind: input, shape index: {}]
  %s8 = inlined_call_operand.vmem [shape: f32[3,1,128], index: 8, kind: input, shape index: {}]
  %s9 = inlined_call_operand.hbm [shape: f32[128,128], index: 9, kind: input, shape index: {}]
  %s10 = inlined_call_operand.hbm [shape: f32[128,128], index: 10, kind: input, shape index: {}]
  %s11 = inlined_call_operand.vmem [shape: f32[1,128], index: 11, kind: input, shape index: {}]
  %s12 = inlined_call_operand.hbm [shape: f32[2,8,128], index: 12, kind: output, shape index: {}]
  %s13 = sld [smem:[#allocation0]]
  $region105: #{tpu_custom_call.1} parent=0
    _
  %s15 = ssub.s32 1, %s13
  %s16 = scalar_select 0, %s15, %s13
  %18 = dma.hbm_to_smem %s0, 16, [#allocation3], [#allocation2]
  %19 = dma.done [#allocation2], 16
  %20 = sfence
  $region1: #{tpu_custom_call.1} parent=0
    #allocation4 [shape = 'u8[131072]{0}', space=vmem, size = 0x20000, scoped, tag = 'input window, operand 1']
    #allocation5 [shape = 's32[2]{0}', space=sflag, size = 0x8, scoped, tag = 'scoped memory for tpu_custom_call.1']
    #allocation6 [shape = 's32[2]{0}', space=sflag, size = 0x8, scoped, tag = 'scoped memory for tpu_custom_call.1']
    #allocation7 [shape = 'u8[131072]{0}', space=vmem, size = 0x20000, scoped, tag = 'input window, operand 2']
    #allocation8 [shape = 's32[2]{0}', space=sflag, size = 0x8, scoped, tag = 'scoped memory for tpu_custom_call.1']
    #allocation9 [shape = 'u8[196608]{0}', space=vmem, size = 0x30000, scoped, tag = 'input window, operand 3, single buffered']
    #allocation10 [shape = 'u8[196608]{0}', space=vmem, size = 0x30000, scoped, tag = 'input window, operand 5, single buffered']
    #allocation11 [shape = 's32[1]{0}', space=sflag, size = 0x4, scoped, tag = 'scoped memory for tpu_custom_call.1']
    #allocation12 [shape = 'u8[196608]{0}', space=vmem, size = 0x30000, scoped, tag = 'input window, operand 7, single buffered']
    #allocation13 [shape = 'u8[65536]{0}', space=vmem, size = 0x10000, scoped, tag = 'input window, operand 9, single buffered']
    #allocation14 [shape = 's32[1]{0}', space=sflag, size = 0x4, scoped, tag = 'scoped memory for tpu_custom_call.1']
    #allocation15 [shape = 'u8[65536]{0}', space=vmem, size = 0x10000, scoped, tag = 'input window, operand 10, single buffered']
    #allocation16 [shape = 'u8[8192]{0}', space=vmem, size = 0x2000, scoped, tag = 'output window, operand 0']
    %21 = vsyncpa [#allocation5], 0
    %s22 = scalar_lea.sflag [#allocation5], 1
    %23 = vsyncpa %s22, 0
    %24 = vsyncpa [#allocation8], 0
    %s25 = scalar_lea.sflag [#allocation8], 1
    %26 = vsyncpa %s25, 0
    %27 = vsyncpa [#allocation11], 0
    %28 = vsyncpa [#allocation14], 0
    %29 = vsyncpa [#allocation6], 0
    %s30 = scalar_lea.sflag [#allocation6], 1
    %31 = vsyncpa %s30, 0
    loop: start=0, step=1, limit=4
    $region2: #{tpu_custom_call.1} parent=1 // loop_pre_header
      _
    $region3: #{tpu_custom_call.1} parent=1 // loop_header
      %s33 = sphi 0, %s37
      %p34 = scmp.ge.s32.totalorder %s33, 4
      %s43 = sphi 0, %s45
      %s46 = sphi 0, %s43
      %s47 = sphi 0, %s46
      %s63 = sphi 0, %s47
      %s69 = sphi 0, %s71
      %s72 = sphi 0, %s69
      %s73 = sphi 0, %s72
      %s89 = sphi 0, %s73
      %s93 = sphi 0, %s93
      %s95 = sphi 0, %s93
      %s96 = sphi 0, %s95
      %s110 = sphi 0, %s96
      %s114 = sphi 0, %s114
      %s116 = sphi 0, %s114
      %s117 = sphi 0, %s116
      %s131 = sphi 0, %s117
      %s135 = sphi 0, %s135
      %s137 = sphi 0, %s135
      %s138 = sphi 0, %s137
      %s152 = sphi 0, %s138
      %s156 = sphi 0, %s156
      %s158 = sphi 0, %s156
      %s159 = sphi 0, %s158
      %s173 = sphi 0, %s159
      %s177 = sphi 0, %s177
      %s179 = sphi 0, %s177
      %s180 = sphi 0, %s179
      %s194 = sphi 0, %s180
      %s198 = sphi 0, %s198
      %s200 = sphi 0, %s198
      %s201 = sphi 0, %s200
      %s215 = sphi 0, %s201
      %s219 = sphi 0, %s219
      %s221 = sphi 0, %s219
      %s222 = sphi 0, %s221
      %s236 = sphi 0, %s222
      %s240 = sphi 0, %s240
      %s242 = sphi 0, %s240
      %s243 = sphi 0, %s242
      %s257 = sphi 0, %s243
      %s261 = sphi 0, %s261
      %s263 = sphi 0, %s261
      %s264 = sphi 0, %s263
      %s278 = sphi 0, %s264
      %s284 = sphi 0, %s286
      %s287 = sphi 0, %s284
      %s288 = sphi 0, %s287
      %s304 = sphi 0, %s288
    $region4: #{tpu_custom_call.1} parent=1 // loop_header_branch
      %36 = sbr.rel (%p34) target = $region8
    $region5: #{tpu_custom_call.1} parent=1 // loop_body
      %s38 = ssub.s32 %s33, 1
      %s39 = ssub.s32 %s33, 2
      %s40 = sadd.s32 %s33, 1
      %s41 = ssub.s32 %s33, %s40
      %p42 = scmp.eq.s32.totalorder %s41, 0
      %s44 = sadd.s32 %s43, 1
      %s45 = scalar_select %p42, %s43, %s44
      %p48 = pneg %p42
      %p49 = scmp.eq.s32.totalorder %s33, 1
      %p50 = por %p48, %p49
      %p51 = scmp.ne.s32.totalorder %s43, %s46
      %p52 = scmp.eq.s32.totalorder %s33, 0
      %p53 = por %p51, %p52
      %p54 = scmp.ne.s32.totalorder %s43, %s46
      %p55 = scmp.eq.s32.totalorder %s38, 1
      %p56 = por %p54, %p55
      %p57 = scmp.ne.s32.totalorder %s46, %s47
      %p58 = scmp.eq.s32.totalorder %s38, 0
      %p59 = por %p57, %p58
      %p60 = scmp.ne.s32.totalorder %s46, %s47
      %p61 = scmp.eq.s32.totalorder %s39, 1
      %p62 = por %p60, %p61
      %p64 = scmp.ne.s32.totalorder %s47, %s63
      %p65 = scmp.eq.s32.totalorder %s39, 0
      %p66 = por %p64, %p65
      %s67 = ssub.s32 %s33, %s40
      %p68 = scmp.eq.s32.totalorder %s67, 0
      %s70 = sadd.s32 %s69, 1
      %s71 = scalar_select %p68, %s69, %s70
      %p74 = pneg %p68
      %p75 = scmp.eq.s32.totalorder %s33, 1
      %p76 = por %p74, %p75
      %p77 = scmp.ne.s32.totalorder %s69, %s72
      %p78 = scmp.eq.s32.totalorder %s33, 0
      %p79 = por %p77, %p78
      %p80 = scmp.ne.s32.totalorder %s69, %s72
      %p81 = scmp.eq.s32.totalorder %s38, 1
      %p82 = por %p80, %p81
      %p83 = scmp.ne.s32.totalorder %s72, %s73
      %p84 = scmp.eq.s32.totalorder %s38, 0
      %p85 = por %p83, %p84
      %p86 = scmp.ne.s32.totalorder %s72, %s73
      %p87 = scmp.eq.s32.totalorder %s39, 1
      %p88 = por %p86, %p87
      %p90 = scmp.ne.s32.totalorder %s73, %s89
      %p91 = scmp.eq.s32.totalorder %s39, 0
      %p92 = por %p90, %p91
      %s94 = sadd.s32 %s93, 1
      %p97 = scmp.eq.s32.totalorder %s33, 1
      %p98 = scmp.ne.s32.totalorder %s93, %s95
      %p99 = scmp.eq.s32.totalorder %s33, 0
      %p100 = por %p98, %p99
      %p101 = scmp.ne.s32.totalorder %s93, %s95
      %p102 = scmp.eq.s32.totalorder %s38, 1
      %p103 = por %p101, %p102
      %p104 = scmp.ne.s32.totalorder %s95, %s96
      %p105 = scmp.eq.s32.totalorder %s38, 0
      %p106 = por %p104, %p105
      %p107 = scmp.ne.s32.totalorder %s95, %s96
      %p108 = scmp.eq.s32.totalorder %s39, 1
      %p109 = por %p107, %p108
      %p111 = scmp.ne.s32.totalorder %s96, %s110
      %p112 = scmp.eq.s32.totalorder %s39, 0
      %p113 = por %p111, %p112
      %s115 = sadd.s32 %s114, 1
      %p118 = scmp.eq.s32.totalorder %s33, 1
      %p119 = scmp.ne.s32.totalorder %s114, %s116
      %p120 = scmp.eq.s32.totalorder %s33, 0
      %p121 = por %p119, %p120
      %p122 = scmp.ne.s32.totalorder %s114, %s116
      %p123 = scmp.eq.s32.totalorder %s38, 1
      %p124 = por %p122, %p123
      %p125 = scmp.ne.s32.totalorder %s116, %s117
      %p126 = scmp.eq.s32.totalorder %s38, 0
      %p127 = por %p125, %p126
      %p128 = scmp.ne.s32.totalorder %s116, %s117
      %p129 = scmp.eq.s32.totalorder %s39, 1
      %p130 = por %p128, %p129
      %p132 = scmp.ne.s32.totalorder %s117, %s131
      %p133 = scmp.eq.s32.totalorder %s39, 0
      %p134 = por %p132, %p133
      %s136 = sadd.s32 %s135, 1
      %p139 = scmp.eq.s32.totalorder %s33, 1
      %p140 = scmp.ne.s32.totalorder %s135, %s137
      %p141 = scmp.eq.s32.totalorder %s33, 0
      %p142 = por %p140, %p141
      %p143 = scmp.ne.s32.totalorder %s135, %s137
      %p144 = scmp.eq.s32.totalorder %s38, 1
      %p145 = por %p143, %p144
      %p146 = scmp.ne.s32.totalorder %s137, %s138
      %p147 = scmp.eq.s32.totalorder %s38, 0
      %p148 = por %p146, %p147
      %p149 = scmp.ne.s32.totalorder %s137, %s138
      %p150 = scmp.eq.s32.totalorder %s39, 1
      %p151 = por %p149, %p150
      %p153 = scmp.ne.s32.totalorder %s138, %s152
      %p154 = scmp.eq.s32.totalorder %s39, 0
      %p155 = por %p153, %p154
      %s157 = sadd.s32 %s156, 1
      %p160 = scmp.eq.s32.totalorder %s33, 1
      %p161 = scmp.ne.s32.totalorder %s156, %s158
      %p162 = scmp.eq.s32.totalorder %s33, 0
      %p163 = por %p161, %p162
      %p164 = scmp.ne.s32.totalorder %s156, %s158
      %p165 = scmp.eq.s32.totalorder %s38, 1
      %p166 = por %p164, %p165
      %p167 = scmp.ne.s32.totalorder %s158, %s159
      %p168 = scmp.eq.s32.totalorder %s38, 0
      %p169 = por %p167, %p168
      %p170 = scmp.ne.s32.totalorder %s158, %s159
      %p171 = scmp.eq.s32.totalorder %s39, 1
      %p172 = por %p170, %p171
      %p174 = scmp.ne.s32.totalorder %s159, %s173
      %p175 = scmp.eq.s32.totalorder %s39, 0
      %p176 = por %p174, %p175
      %s178 = sadd.s32 %s177, 1
      %p181 = scmp.eq.s32.totalorder %s33, 1
      %p182 = scmp.ne.s32.totalorder %s177, %s179
      %p183 = scmp.eq.s32.totalorder %s33, 0
      %p184 = por %p182, %p183
      %p185 = scmp.ne.s32.totalorder %s177, %s179
      %p186 = scmp.eq.s32.totalorder %s38, 1
      %p187 = por %p185, %p186
      %p188 = scmp.ne.s32.totalorder %s179, %s180
      %p189 = scmp.eq.s32.totalorder %s38, 0
      %p190 = por %p188, %p189
      %p191 = scmp.ne.s32.totalorder %s179, %s180
      %p192 = scmp.eq.s32.totalorder %s39, 1
      %p193 = por %p191, %p192
      %p195 = scmp.ne.s32.totalorder %s180, %s194
      %p196 = scmp.eq.s32.totalorder %s39, 0
      %p197 = por %p195, %p196
      %s199 = sadd.s32 %s198, 1
      %p202 = scmp.eq.s32.totalorder %s33, 1
      %p203 = scmp.ne.s32.totalorder %s198, %s200
      %p204 = scmp.eq.s32.totalorder %s33, 0
      %p205 = por %p203, %p204
      %p206 = scmp.ne.s32.totalorder %s198, %s200
      %p207 = scmp.eq.s32.totalorder %s38, 1
      %p208 = por %p206, %p207
      %p209 = scmp.ne.s32.totalorder %s200, %s201
      %p210 = scmp.eq.s32.totalorder %s38, 0
      %p211 = por %p209, %p210
      %p212 = scmp.ne.s32.totalorder %s200, %s201
      %p213 = scmp.eq.s32.totalorder %s39, 1
      %p214 = por %p212, %p213
      %p216 = scmp.ne.s32.totalorder %s201, %s215
      %p217 = scmp.eq.s32.totalorder %s39, 0
      %p218 = por %p216, %p217
      %s220 = sadd.s32 %s219, 1
      %p223 = scmp.eq.s32.totalorder %s33, 1
      %p224 = scmp.ne.s32.totalorder %s219, %s221
      %p225 = scmp.eq.s32.totalorder %s33, 0
      %p226 = por %p224, %p225
      %p227 = scmp.ne.s32.totalorder %s219, %s221
      %p228 = scmp.eq.s32.totalorder %s38, 1
      %p229 = por %p227, %p228
      %p230 = scmp.ne.s32.totalorder %s221, %s222
      %p231 = scmp.eq.s32.totalorder %s38, 0
      %p232 = por %p230, %p231
      %p233 = scmp.ne.s32.totalorder %s221, %s222
      %p234 = scmp.eq.s32.totalorder %s39, 1
      %p235 = por %p233, %p234
      %p237 = scmp.ne.s32.totalorder %s222, %s236
      %p238 = scmp.eq.s32.totalorder %s39, 0
      %p239 = por %p237, %p238
      %s241 = sadd.s32 %s240, 1
      %p244 = scmp.eq.s32.totalorder %s33, 1
      %p245 = scmp.ne.s32.totalorder %s240, %s242
      %p246 = scmp.eq.s32.totalorder %s33, 0
      %p247 = por %p245, %p246
      %p248 = scmp.ne.s32.totalorder %s240, %s242
      %p249 = scmp.eq.s32.totalorder %s38, 1
      %p250 = por %p248, %p249
      %p251 = scmp.ne.s32.totalorder %s242, %s243
      %p252 = scmp.eq.s32.totalorder %s38, 0
      %p253 = por %p251, %p252
      %p254 = scmp.ne.s32.totalorder %s242, %s243
      %p255 = scmp.eq.s32.totalorder %s39, 1
      %p256 = por %p254, %p255
      %p258 = scmp.ne.s32.totalorder %s243, %s257
      %p259 = scmp.eq.s32.totalorder %s39, 0
      %p260 = por %p258, %p259
      %s262 = sadd.s32 %s261, 1
      %p265 = scmp.eq.s32.totalorder %s33, 1
      %p266 = scmp.ne.s32.totalorder %s261, %s263
      %p267 = scmp.eq.s32.totalorder %s33, 0
      %p268 = por %p266, %p267
      %p269 = scmp.ne.s32.totalorder %s261, %s263
      %p270 = scmp.eq.s32.totalorder %s38, 1
      %p271 = por %p269, %p270
      %p272 = scmp.ne.s32.totalorder %s263, %s264
      %p273 = scmp.eq.s32.totalorder %s38, 0
      %p274 = por %p272, %p273
      %p275 = scmp.ne.s32.totalorder %s263, %s264
      %p276 = scmp.eq.s32.totalorder %s39, 1
      %p277 = por %p275, %p276
      %p279 = scmp.ne.s32.totalorder %s264, %s278
      %p280 = scmp.eq.s32.totalorder %s39, 0
      %p281 = por %p279, %p280
      %s282 = ssub.s32 %s33, %s40
      %p283 = scmp.eq.s32.totalorder %s282, 0
      %s285 = sadd.s32 %s284, 1
      %s286 = scalar_select %p283, %s284, %s285
      %p289 = pneg %p283
      %p290 = scmp.eq.s32.totalorder %s33, 1
      %p291 = por %p289, %p290
      %p292 = scmp.ne.s32.totalorder %s284, %s287
      %p293 = scmp.eq.s32.totalorder %s33, 0
      %p294 = por %p292, %p293
      %p295 = scmp.ne.s32.totalorder %s284, %s287
      %p296 = scmp.eq.s32.totalorder %s38, 1
      %p297 = por %p295, %p296
      %p298 = scmp.ne.s32.totalorder %s287, %s288
      %p299 = scmp.eq.s32.totalorder %s38, 0
      %p300 = por %p298, %p299
      %p301 = scmp.ne.s32.totalorder %s287, %s288
      %p302 = scmp.eq.s32.totalorder %s39, 1
      %p303 = por %p301, %p302
      %p305 = scmp.ne.s32.totalorder %s288, %s304
      %p306 = scmp.eq.s32.totalorder %s39, 0
      %p307 = por %p305, %p306
      %p308 = scmp.le.s32.totalorder 1, %s33
      %p309 = scmp.lt.s32.totalorder %s33, 3
      %p310 = pnand %p308, %p309
      %p311 = pneg %p310
      // Predicated region
      $region9: #{tpu_custom_call.1} parent=5 // pred_check
        _
      $region10: #{tpu_custom_call.1} parent=5 // pred_check_branch
        %313 = sbr.rel (%p310) target = $region12
      $region11: #{tpu_custom_call.1} parent=5 // pred_region
        %s314 = ssub.s32 %s33, 1
        // Predicated region
        $region13: #{tpu_custom_call.1} parent=11 // pred_check
          %p315 = pneg %p106
        $region14: #{tpu_custom_call.1} parent=11 // pred_check_branch
          %317 = sbr.rel (%p315) target = $region16
        $region15: #{tpu_custom_call.1} parent=11 // pred_region
          %s319 = ssub.s32 6144, 6144
          %320 = vsyncadd [#allocation8], %s319
          %s321 = sshll.u32 [#allocation9], 4
          %s322 = int_to_ptr.vmem [resolvable:$true] %s321
          %327 = dma.hbm_to_vmem [thread:$0]  %s3, 6144, %s322, [#allocation8], 128, 128, 8
        $region16: #{tpu_custom_call.1} parent=11 // pred_fallthru
          _
        // Predicated region
        $region17: #{tpu_custom_call.1} parent=11 // pred_check
          %p328 = pneg %p127
        $region18: #{tpu_custom_call.1} parent=11 // pred_check_branch
          %330 = sbr.rel (%p328) target = $region20
        $region19: #{tpu_custom_call.1} parent=11 // pred_region
          _
        $region20: #{tpu_custom_call.1} parent=11 // pred_fallthru
          _
        // Predicated region
        $region21: #{tpu_custom_call.1} parent=11 // pred_check
          %p331 = pneg %p148
        $region22: #{tpu_custom_call.1} parent=11 // pred_check_branch
          %333 = sbr.rel (%p331) target = $region24
        $region23: #{tpu_custom_call.1} parent=11 // pred_region
          %s335 = ssub.s32 6144, 6144
          %336 = vsyncadd [#allocation11], %s335
          %s337 = sshll.u32 [#allocation10], 4
          %s338 = int_to_ptr.vmem [resolvable:$true] %s337
          %343 = dma.hbm_to_vmem [thread:$0]  %s5, 6144, %s338, [#allocation11], 128, 128, 8
        $region24: #{tpu_custom_call.1} parent=11 // pred_fallthru
          _
        // Predicated region
        $region25: #{tpu_custom_call.1} parent=11 // pred_check
          %p344 = pneg %p169
        $region26: #{tpu_custom_call.1} parent=11 // pred_check_branch
          %346 = sbr.rel (%p344) target = $region28
        $region27: #{tpu_custom_call.1} parent=11 // pred_region
          _
        $region28: #{tpu_custom_call.1} parent=11 // pred_fallthru
          _
        // Predicated region
        $region29: #{tpu_custom_call.1} parent=11 // pred_check
          %p347 = pneg %p190
        $region30: #{tpu_custom_call.1} parent=11 // pred_check_branch
          %349 = sbr.rel (%p347) target = $region32
        $region31: #{tpu_custom_call.1} parent=11 // pred_region
          %s351 = ssub.s32 6144, 6144
          %352 = vsyncadd [#allocation11], %s351
          %s353 = sshll.u32 [#allocation12], 4
          %s354 = int_to_ptr.vmem [resolvable:$true] %s353
          %359 = dma.hbm_to_vmem [thread:$0]  %s7, 6144, %s354, [#allocation11], 128, 128, 8
        $region32: #{tpu_custom_call.1} parent=11 // pred_fallthru
          _
        // Predicated region
        $region33: #{tpu_custom_call.1} parent=11 // pred_check
          %p360 = pneg %p211
        $region34: #{tpu_custom_call.1} parent=11 // pred_check_branch
          %362 = sbr.rel (%p360) target = $region36
        $region35: #{tpu_custom_call.1} parent=11 // pred_region
          _
        $region36: #{tpu_custom_call.1} parent=11 // pred_fallthru
          _
        // Predicated region
        $region37: #{tpu_custom_call.1} parent=11 // pred_check
          %p363 = pneg %p232
        $region38: #{tpu_custom_call.1} parent=11 // pred_check_branch
          %365 = sbr.rel (%p363) target = $region40
        $region39: #{tpu_custom_call.1} parent=11 // pred_region
          %s367 = ssub.s32 2048, 2048
          %368 = vsyncadd [#allocation14], %s367
          %s369 = sshll.u32 [#allocation13], 4
          %s370 = int_to_ptr.vmem [resolvable:$true] %s369
          %375 = dma.hbm_to_vmem [thread:$0]  %s9, 2048, %s370, [#allocation14], 128, 128, 8
        $region40: #{tpu_custom_call.1} parent=11 // pred_fallthru
          _
        // Predicated region
        $region41: #{tpu_custom_call.1} parent=11 // pred_check
          %p376 = pneg %p253
        $region42: #{tpu_custom_call.1} parent=11 // pred_check_branch
          %378 = sbr.rel (%p376) target = $region44
        $region43: #{tpu_custom_call.1} parent=11 // pred_region
          %s380 = ssub.s32 2048, 2048
          %381 = vsyncadd [#allocation14], %s380
          %s382 = sshll.u32 [#allocation15], 4
          %s383 = int_to_ptr.vmem [resolvable:$true] %s382
          %388 = dma.hbm_to_vmem [thread:$0]  %s10, 2048, %s383, [#allocation14], 128, 128, 8
        $region44: #{tpu_custom_call.1} parent=11 // pred_fallthru
          _
        // Predicated region
        $region45: #{tpu_custom_call.1} parent=11 // pred_check
          %p389 = pneg %p274
        $region46: #{tpu_custom_call.1} parent=11 // pred_check_branch
          %391 = sbr.rel (%p389) target = $region48
        $region47: #{tpu_custom_call.1} parent=11 // pred_region
          _
        $region48: #{tpu_custom_call.1} parent=11 // pred_fallthru
          _
      $region12: #{tpu_custom_call.1} parent=5 // pred_fallthru
        _
      %p392 = scmp.lt.s32.totalorder %s33, 2
      // Predicated region
      $region49: #{tpu_custom_call.1} parent=5 // pred_check
        %p393 = pneg %p392
      $region50: #{tpu_custom_call.1} parent=5 // pred_check_branch
        %395 = sbr.rel (%p393) target = $region52
      $region51: #{tpu_custom_call.1} parent=5 // pred_region
        // Predicated region
        $region53: #{tpu_custom_call.1} parent=51 // pred_check
          %p396 = pneg %p53
        $region54: #{tpu_custom_call.1} parent=51 // pred_check_branch
          %398 = sbr.rel (%p396) target = $region56
        $region55: #{tpu_custom_call.1} parent=51 // pred_region
          %s399 = sand.u32 %s43, 1
          %s400 = scalar_lea.sflag [#allocation5], %s399
          %s401 = sand.u32 %s43, 1
          %s402 = smul.addr %s401, 128
          %s403 = scalar_lea.vmem [#allocation4], %s402
          %s404 = smul.u32 8, %s33
          %s406 = ssub.s32 2048, 2048
          %407 = vsyncadd %s400, %s406
          %s408 = smul.addr %s404, 2
          %s409 = smul.addr %s408, 128
          %s410 = scalar_lea.hbm %s1, %s409
          %s411 = sshll.u32 %s403, 4
          %s412 = int_to_ptr.vmem [resolvable:$true] %s411
          %417 = dma.hbm_to_vmem [thread:$0]  %s410, 2048, %s412, %s400, 128, 128, 8
        $region56: #{tpu_custom_call.1} parent=51 // pred_fallthru
          _
        // Predicated region
        $region57: #{tpu_custom_call.1} parent=51 // pred_check
          %p418 = pneg %p79
        $region58: #{tpu_custom_call.1} parent=51 // pred_check_branch
          %420 = sbr.rel (%p418) target = $region60
        $region59: #{tpu_custom_call.1} parent=51 // pred_region
          %s421 = sand.u32 %s33, 1
          %s422 = scalar_lea.sflag [#allocation8], %s421
          %s423 = sand.u32 %s69, 1
          %s424 = smul.addr %s423, 128
          %s425 = scalar_lea.vmem [#allocation7], %s424
          %s426 = smul.u32 8, %s33
          %s428 = ssub.s32 2048, 2048
          %429 = vsyncadd %s422, %s428
          %s430 = smul.addr %s426, 2
          %s431 = smul.addr %s430, 128
          %s432 = scalar_lea.hbm %s2, %s431
          %s433 = sshll.u32 %s425, 4
          %s434 = int_to_ptr.vmem [resolvable:$true] %s433
          %439 = dma.hbm_to_vmem [thread:$0]  %s432, 2048, %s434, %s422, 128, 128, 8
        $region60: #{tpu_custom_call.1} parent=51 // pred_fallthru
          _
      $region52: #{tpu_custom_call.1} parent=5 // pred_fallthru
        _
      %p440 = scmp.le.s32.totalorder 1, %s33
      %p441 = scmp.lt.s32.totalorder %s33, 3
      %p442 = pnand %p440, %p441
      %p443 = pneg %p442
      // Predicated region
      $region61: #{tpu_custom_call.1} parent=5 // pred_check
        _
      $region62: #{tpu_custom_call.1} parent=5 // pred_check_branch
        %445 = sbr.rel (%p442) target = $region64
      $region63: #{tpu_custom_call.1} parent=5 // pred_region
        %s446 = ssub.s32 %s33, 1
        %s447 = sand.u32 %s46, 1
        %s448 = scalar_lea.sflag [#allocation5], %s447
        %s449 = sand.u32 %s46, 1
        %s450 = smul.addr %s449, 128
        %s451 = scalar_lea.vmem [#allocation4], %s450
        // Predicated region
        $region65: #{tpu_custom_call.1} parent=63 // pred_check
          %p452 = pneg %p59
        $region66: #{tpu_custom_call.1} parent=63 // pred_check_branch
          %454 = sbr.rel (%p452) target = $region68
        $region67: #{tpu_custom_call.1} parent=63 // pred_region
          %455 = dma.done %s448, 2048
        $region68: #{tpu_custom_call.1} parent=63 // pred_fallthru
          _
        %s456 = sand.u32 %s38, 1
        %s457 = scalar_lea.sflag [#allocation8], %s456
        %s458 = sand.u32 %s72, 1
        %s459 = smul.addr %s458, 128
        %s460 = scalar_lea.vmem [#allocation7], %s459
        // Predicated region
        $region69: #{tpu_custom_call.1} parent=63 // pred_check
          %p461 = pneg %p85
        $region70: #{tpu_custom_call.1} parent=63 // pred_check_branch
          %463 = sbr.rel (%p461) target = $region72
        $region71: #{tpu_custom_call.1} parent=63 // pred_region
          %464 = dma.done %s457, 2048
        $region72: #{tpu_custom_call.1} parent=63 // pred_fallthru
          _
        // Predicated region
        $region73: #{tpu_custom_call.1} parent=63 // pred_check
          %p465 = pneg %p106
        $region74: #{tpu_custom_call.1} parent=63 // pred_check_branch
          %467 = sbr.rel (%p465) target = $region76
        $region75: #{tpu_custom_call.1} parent=63 // pred_region
          %468 = dma.done [#allocation8], 6144
        $region76: #{tpu_custom_call.1} parent=63 // pred_fallthru
          _
        // Predicated region
        $region77: #{tpu_custom_call.1} parent=63 // pred_check
          %p469 = pneg %p148
        $region78: #{tpu_custom_call.1} parent=63 // pred_check_branch
          %471 = sbr.rel (%p469) target = $region80
        $region79: #{tpu_custom_call.1} parent=63 // pred_region
          %472 = dma.done [#allocation11], 6144
        $region80: #{tpu_custom_call.1} parent=63 // pred_fallthru
          _
        // Predicated region
        $region81: #{tpu_custom_call.1} parent=63 // pred_check
          %p473 = pneg %p190
        $region82: #{tpu_custom_call.1} parent=63 // pred_check_branch
          %475 = sbr.rel (%p473) target = $region84
        $region83: #{tpu_custom_call.1} parent=63 // pred_region
          %476 = dma.done [#allocation11], 6144
        $region84: #{tpu_custom_call.1} parent=63 // pred_fallthru
          _
        // Predicated region
        $region85: #{tpu_custom_call.1} parent=63 // pred_check
          %p477 = pneg %p232
        $region86: #{tpu_custom_call.1} parent=63 // pred_check_branch
          %479 = sbr.rel (%p477) target = $region88
        $region87: #{tpu_custom_call.1} parent=63 // pred_region
          %480 = dma.done [#allocation14], 2048
        $region88: #{tpu_custom_call.1} parent=63 // pred_fallthru
          _
        // Predicated region
        $region89: #{tpu_custom_call.1} parent=63 // pred_check
          %p481 = pneg %p253
        $region90: #{tpu_custom_call.1} parent=63 // pred_check_branch
          %483 = sbr.rel (%p481) target = $region92
        $region91: #{tpu_custom_call.1} parent=63 // pred_region
          %484 = dma.done [#allocation14], 2048
        $region92: #{tpu_custom_call.1} parent=63 // pred_fallthru
          _
        %s485 = sand.u32 %s46, 1
        %s486 = scalar_lea.sflag [#allocation5], %s485
        %s487 = sand.u32 %s46, 1
        %s488 = smul.addr %s487, 128
        %s489 = scalar_lea.vmem [#allocation4], %s488
        %p490 = pneg %p59
        %p491 = pneg %p56
        %s492 = sand.u32 %s38, 1
        %s493 = scalar_lea.sflag [#allocation8], %s492
        %s494 = sand.u32 %s72, 1
        %s495 = smul.addr %s494, 128
        %s496 = scalar_lea.vmem [#allocation7], %s495
        %p497 = pneg %p85
        %p498 = pneg %p82
        %p499 = pneg %p106
        %p500 = pneg %p103
        %p501 = pneg %p127
        %p502 = pneg %p124
        %p503 = pneg %p148
        %p504 = pneg %p145
        %p505 = pneg %p169
        %p506 = pneg %p166
        %p507 = pneg %p190
        %p508 = pneg %p187
        %p509 = pneg %p211
        %p510 = pneg %p208
        %p511 = pneg %p232
        %p512 = pneg %p229
        %p513 = pneg %p253
        %p514 = pneg %p250
        %p515 = pneg %p274
        %p516 = pneg %p271
        %p517 = pneg %p300
        %p518 = pneg %p297
        %s519 = sand.u32 %s287, 1
        %s520 = scalar_lea.sflag [#allocation6], %s519
        %s521 = sand.u32 %s287, 1
        %s522 = smul.addr %s521, 8
        %s523 = scalar_lea.vmem [#allocation16], %s522
        %s524 = smul.u32 8, %s38
        %s525 = smul.u32 8, %s38
        %v526 = vld [vmem:[%s451] sm:$0xff]
        %v527 = vld [vmem:[%s451 + $0x8] sm:$0xff]
        %v528 = vld [vmem:[%s451 + $0x10] sm:$0xff]
        %v529 = vld [vmem:[%s451 + $0x18] sm:$0xff]
        %v530 = vld [vmem:[%s451 + $0x20] sm:$0xff]
        %v531 = vld [vmem:[%s451 + $0x28] sm:$0xff]
        %v532 = vld [vmem:[%s451 + $0x30] sm:$0xff]
        %v533 = vld [vmem:[%s451 + $0x38] sm:$0xff]
        %v534 = vld [vmem:[%s451 + $0x40] sm:$0xff]
        %v535 = vld [vmem:[%s451 + $0x48] sm:$0xff]
        %v536 = vld [vmem:[%s451 + $0x50] sm:$0xff]
        %v537 = vld [vmem:[%s451 + $0x58] sm:$0xff]
        %v538 = vld [vmem:[%s451 + $0x60] sm:$0xff]
        %v539 = vld [vmem:[%s451 + $0x68] sm:$0xff]
        %v540 = vld [vmem:[%s451 + $0x70] sm:$0xff]
        %v541 = vld [vmem:[%s451 + $0x78] sm:$0xff]
        %v542 = vld [vmem:[%s460] sm:$0xff]
        %v543 = vld [vmem:[%s460 + $0x8] sm:$0xff]
        %v544 = vld [vmem:[%s460 + $0x10] sm:$0xff]
        %v545 = vld [vmem:[%s460 + $0x18] sm:$0xff]
        %v546 = vld [vmem:[%s460 + $0x20] sm:$0xff]
        %v547 = vld [vmem:[%s460 + $0x28] sm:$0xff]
        %v548 = vld [vmem:[%s460 + $0x30] sm:$0xff]
        %v549 = vld [vmem:[%s460 + $0x38] sm:$0xff]
        %v550 = vld [vmem:[%s460 + $0x40] sm:$0xff]
        %v551 = vld [vmem:[%s460 + $0x48] sm:$0xff]
        %v552 = vld [vmem:[%s460 + $0x50] sm:$0xff]
        %v553 = vld [vmem:[%s460 + $0x58] sm:$0xff]
        %v554 = vld [vmem:[%s460 + $0x60] sm:$0xff]
        %v555 = vld [vmem:[%s460 + $0x68] sm:$0xff]
        %v556 = vld [vmem:[%s460 + $0x70] sm:$0xff]
        %v557 = vld [vmem:[%s460 + $0x78] sm:$0xff]
        %vm558 = vcmask 130048
        %v559 = vsel %vm558, %v526, 0.0
        %560 = vadd.xlane.f32.xlu0 %v559
        %v561 = vpop.xlane.xlu0 %560
        %v562 = vsel %vm558, %v527, 0.0
        %563 = vadd.xlane.f32.xlu0 %v562
        %v564 = vpop.xlane.xlu0 %563
        %v565 = vsel %vm558, %v528, 0.0
        %566 = vadd.xlane.f32.xlu0 %v565
        %v567 = vpop.xlane.xlu0 %566
        %v568 = vsel %vm558, %v529, 0.0
        %569 = vadd.xlane.f32.xlu0 %v568
        %v570 = vpop.xlane.xlu0 %569
        %v571 = vsel %vm558, %v530, 0.0
        %572 = vadd.xlane.f32.xlu0 %v571
        %v573 = vpop.xlane.xlu0 %572
        %v574 = vsel %vm558, %v531, 0.0
        %575 = vadd.xlane.f32.xlu0 %v574
        %v576 = vpop.xlane.xlu0 %575
        %v577 = vsel %vm558, %v532, 0.0
        %578 = vadd.xlane.f32.xlu0 %v577
        %v579 = vpop.xlane.xlu0 %578
        %v580 = vsel %vm558, %v533, 0.0
        %581 = vadd.xlane.f32.xlu0 %v580
        %v582 = vpop.xlane.xlu0 %581
        %v583 = vsel %vm558, %v534, 0.0
        %584 = vadd.xlane.f32.xlu0 %v583
        %v585 = vpop.xlane.xlu0 %584
        %v586 = vsel %vm558, %v535, 0.0
        %587 = vadd.xlane.f32.xlu0 %v586
        %v588 = vpop.xlane.xlu0 %587
        %v589 = vsel %vm558, %v536, 0.0
        %590 = vadd.xlane.f32.xlu0 %v589
        %v591 = vpop.xlane.xlu0 %590
        %v592 = vsel %vm558, %v537, 0.0
        %593 = vadd.xlane.f32.xlu0 %v592
        %v594 = vpop.xlane.xlu0 %593
        %v595 = vsel %vm558, %v538, 0.0
        %596 = vadd.xlane.f32.xlu0 %v595
        %v597 = vpop.xlane.xlu0 %596
        %v598 = vsel %vm558, %v539, 0.0
        %599 = vadd.xlane.f32.xlu0 %v598
        %v600 = vpop.xlane.xlu0 %599
        %v601 = vsel %vm558, %v540, 0.0
        %602 = vadd.xlane.f32.xlu0 %v601
        %v603 = vpop.xlane.xlu0 %602
        %v604 = vsel %vm558, %v541, 0.0
        %605 = vadd.xlane.f32.xlu0 %v604
        %v606 = vpop.xlane.xlu0 %605
        %v607 = vadd.f32 %v561, 1.0
        %v608 = vadd.f32 %v564, 1.0
        %v609 = vadd.f32 %v567, 1.0
        %v610 = vadd.f32 %v570, 1.0
        %v611 = vadd.f32 %v573, 1.0
        %v612 = vadd.f32 %v576, 1.0
        %v613 = vadd.f32 %v579, 1.0
        %v614 = vadd.f32 %v582, 1.0
        %v615 = vadd.f32 %v585, 1.0
        %v616 = vadd.f32 %v588, 1.0
        %v617 = vadd.f32 %v591, 1.0
        %v618 = vadd.f32 %v594, 1.0
        %v619 = vadd.f32 %v597, 1.0
        %v620 = vadd.f32 %v600, 1.0
        %v621 = vadd.f32 %v603, 1.0
        %v622 = vadd.f32 %v606, 1.0
        %v623 = vmax.f32 %v607, 1e-12
        %v624 = vmax.f32 %v608, 1e-12
        %v625 = vmax.f32 %v609, 1e-12
        %v626 = vmax.f32 %v610, 1e-12
        %v627 = vmax.f32 %v611, 1e-12
        %v628 = vmax.f32 %v612, 1e-12
        %v629 = vmax.f32 %v613, 1e-12
        %v630 = vmax.f32 %v614, 1e-12
        %v631 = vmax.f32 %v615, 1e-12
        %v632 = vmax.f32 %v616, 1e-12
        %v633 = vmax.f32 %v617, 1e-12
        %v634 = vmax.f32 %v618, 1e-12
        %v635 = vmax.f32 %v619, 1e-12
        %v636 = vmax.f32 %v620, 1e-12
        %v637 = vmax.f32 %v621, 1e-12
        %v638 = vmax.f32 %v622, 1e-12
        %v639 = vrsqrt.pop %v623
        %v640 = vrsqrt.pop %v624
        %v641 = vrsqrt.pop %v625
        %v642 = vrsqrt.pop %v626
        %v643 = vrsqrt.pop %v627
        %v644 = vrsqrt.pop %v628
        %v645 = vrsqrt.pop %v629
        %v646 = vrsqrt.pop %v630
        %v647 = vrsqrt.pop %v631
        %v648 = vrsqrt.pop %v632
        %v649 = vrsqrt.pop %v633
        %v650 = vrsqrt.pop %v634
        %v651 = vrsqrt.pop %v635
        %v652 = vrsqrt.pop %v636
        %v653 = vrsqrt.pop %v637
        %v654 = vrsqrt.pop %v638
        %s655 = sld [smem:[#allocation3]]
        %v657 = vsel %vm558, %v526, 0
        %v660 = vsel %vm558, %v527, 0
        %662 = vmatprep.subr.mxu0 0.0
        %663 = vmatpush1.msra.mxu0 0.0
        %664 = vmatprep.subr.mxu0 0.0
        %665 = vmatpush1.msra.mxu0 0.0
        %666 = vmatprep.subr.mxu0 0.0
        %667 = vmatpush1.msra.mxu0 0.0
        %668 = vmatprep.subr.mxu0 0.0
        %669 = vmatpush1.msra.mxu0 0.0
        %670 = vmatprep.subr.mxu0 0.0
        %671 = vmatpush1.msra.mxu0 0.0
        %672 = vmatprep.subr.mxu0 0.0
        %673 = vmatpush1.msra.mxu0 0.0
        %674 = vmatprep.subr.mxu0 0.0
        %675 = vmatpush1.msra.mxu0 0.0
        %676 = vmatprep.subr.mxu0 0.0
        %677 = vmatpush1.msra.mxu0 0.0
        %678 = vmatprep.subr.mxu0 0.0
        %679 = vmatpush1.msra.mxu0 0.0
        %680 = vmatprep.subr.mxu0 0.0
        %681 = vmatpush1.msra.mxu0 0.0
        %682 = vmatprep.subr.mxu0 0.0
        %683 = vmatpush1.msra.mxu0 0.0
        %684 = vmatprep.subr.mxu0 0.0
        %685 = vmatpush1.msra.mxu0 0.0
        %686 = vmatprep.subr.mxu0 0.0
        %687 = vmatpush1.msra.mxu0 0.0
        %688 = vmatprep.subr.mxu0 0.0
        %689 = vmatpush1.msra.mxu0 0.0
        %690 = vmatprep.subr.mxu0 0.0
        %691 = vmatpush1.msra.mxu0 %v543
        %692 = vmatprep.subr.mxu0 0.0
        %693 = vmatpush1.msra.mxu0 %v542
        %694 = vmatprep.subr.mxu0 0.0
        %695 = vmatpush2.msra.mxu0 0.0
        %696 = vmatprep.subr.mxu0 0.0
        %697 = vmatpush2.msra.mxu0 0.0
        %698 = vmatprep.subr.mxu0 0.0
        %699 = vmatpush2.msra.mxu0 0.0
        %700 = vmatprep.subr.mxu0 0.0
        %701 = vmatpush2.msra.mxu0 0.0
        %702 = vmatprep.subr.mxu0 0.0
        %703 = vmatpush2.msra.mxu0 0.0
        %704 = vmatprep.subr.mxu0 0.0
        %705 = vmatpush2.msra.mxu0 0.0
        %706 = vmatprep.subr.mxu0 0.0
        %707 = vmatpush2.msra.mxu0 0.0
        %708 = vmatprep.subr.mxu0 0.0
        %709 = vmatpush2.msra.mxu0 0.0
        %710 = vmatprep.subr.mxu0 0.0
        %711 = vmatpush2.msra.mxu0 0.0
        %712 = vmatprep.subr.mxu0 0.0
        %713 = vmatpush2.msra.mxu0 0.0
        %714 = vmatprep.subr.mxu0 0.0
        %715 = vmatpush2.msra.mxu0 0.0
        %716 = vmatprep.subr.mxu0 0.0
        %717 = vmatpush2.msra.mxu0 0.0
        %718 = vmatprep.subr.mxu0 0.0
        %719 = vmatpush2.msra.mxu0 0.0
        %720 = vmatprep.subr.mxu0 0.0
        %721 = vmatpush2.msra.mxu0 0.0
        %722 = vmatprep.subr.mxu0 0.0
        %723 = vmatpush2.msra.mxu0 0.0
        %724 = vmatprep.subr.mxu0 0.0
        %725 = vmatpush2.msra.mxu0 0.0
        %726 = vmatprep.mubr.f32.mxu0 0.0
        %727 = vmatmul.mubr.f32.gmra.mxu0 %v657
        %v728 = vpop.f32.mrf.mxu0
        %v729 = vadd.f32 0.0, %v728
        %v730 = vpop.f32.mrf.mxu0
        %731 = vmatprep.mubr.f32.mxu0 0.0
        %732 = vmatmul.mubr.f32.gmra.mxu0 %v660
        %v733 = vpop.f32.mrf.mxu0
        %v734 = vadd.f32 0.0, %v733
        %v735 = vpop.f32.mrf.mxu0
        %736 = vdwg.mxu0
        %v738 = vsel %vm558, %v528, 0
        %v741 = vsel %vm558, %v529, 0
        %743 = vmatprep.subr.mxu0 0.0
        %744 = vmatpush1.msra.mxu0 0.0
        %745 = vmatprep.subr.mxu0 0.0
        %746 = vmatpush1.msra.mxu0 0.0
        %747 = vmatprep.subr.mxu0 0.0
        %748 = vmatpush1.msra.mxu0 0.0
        %749 = vmatprep.subr.mxu0 0.0
        %750 = vmatpush1.msra.mxu0 0.0
        %751 = vmatprep.subr.mxu0 0.0
        %752 = vmatpush1.msra.mxu0 0.0
        %753 = vmatprep.subr.mxu0 0.0
        %754 = vmatpush1.msra.mxu0 0.0
        %755 = vmatprep.subr.mxu0 0.0
        %756 = vmatpush1.msra.mxu0 0.0
        %757 = vmatprep.subr.mxu0 0.0
        %758 = vmatpush1.msra.mxu0 0.0
        %759 = vmatprep.subr.mxu0 0.0
        %760 = vmatpush1.msra.mxu0 0.0
        %761 = vmatprep.subr.mxu0 0.0
        %762 = vmatpush1.msra.mxu0 0.0
        %763 = vmatprep.subr.mxu0 0.0
        %764 = vmatpush1.msra.mxu0 0.0
        %765 = vmatprep.subr.mxu0 0.0
        %766 = vmatpush1.msra.mxu0 0.0
        %767 = vmatprep.subr.mxu0 0.0
        %768 = vmatpush1.msra.mxu0 0.0
        %769 = vmatprep.subr.mxu0 0.0
        %770 = vmatpush1.msra.mxu0 0.0
        %771 = vmatprep.subr.mxu0 0.0
        %772 = vmatpush1.msra.mxu0 %v545
        %773 = vmatprep.subr.mxu0 0.0
        %774 = vmatpush1.msra.mxu0 %v544
        %775 = vmatprep.subr.mxu0 0.0
        %776 = vmatpush2.msra.mxu0 0.0
        %777 = vmatprep.subr.mxu0 0.0
        %778 = vmatpush2.msra.mxu0 0.0
        %779 = vmatprep.subr.mxu0 0.0
        %780 = vmatpush2.msra.mxu0 0.0
        %781 = vmatprep.subr.mxu0 0.0
        %782 = vmatpush2.msra.mxu0 0.0
        %783 = vmatprep.subr.mxu0 0.0
        %784 = vmatpush2.msra.mxu0 0.0
        %785 = vmatprep.subr.mxu0 0.0
        %786 = vmatpush2.msra.mxu0 0.0
        %787 = vmatprep.subr.mxu0 0.0
        %788 = vmatpush2.msra.mxu0 0.0
        %789 = vmatprep.subr.mxu0 0.0
        %790 = vmatpush2.msra.mxu0 0.0
        %791 = vmatprep.subr.mxu0 0.0
        %792 = vmatpush2.msra.mxu0 0.0
        %793 = vmatprep.subr.mxu0 0.0
        %794 = vmatpush2.msra.mxu0 0.0
        %795 = vmatprep.subr.mxu0 0.0
        %796 = vmatpush2.msra.mxu0 0.0
        %797 = vmatprep.subr.mxu0 0.0
        %798 = vmatpush2.msra.mxu0 0.0
        %799 = vmatprep.subr.mxu0 0.0
        %800 = vmatpush2.msra.mxu0 0.0
        %801 = vmatprep.subr.mxu0 0.0
        %802 = vmatpush2.msra.mxu0 0.0
        %803 = vmatprep.subr.mxu0 0.0
        %804 = vmatpush2.msra.mxu0 0.0
        %805 = vmatprep.subr.mxu0 0.0
        %806 = vmatpush2.msra.mxu0 0.0
        %807 = vmatprep.mubr.f32.mxu0 0.0
        %808 = vmatmul.mubr.f32.gmra.mxu0 %v738
        %v809 = vpop.f32.mrf.mxu0
        %v810 = vadd.f32 0.0, %v809
        %v811 = vpop.f32.mrf.mxu0
        %812 = vmatprep.mubr.f32.mxu0 0.0
        %813 = vmatmul.mubr.f32.gmra.mxu0 %v741
        %v814 = vpop.f32.mrf.mxu0
        %v815 = vadd.f32 0.0, %v814
        %v816 = vpop.f32.mrf.mxu0
        %817 = vdwg.mxu0
        %v819 = vsel %vm558, %v530, 0
        %v822 = vsel %vm558, %v531, 0
        %824 = vmatprep.subr.mxu0 0.0
        %825 = vmatpush1.msra.mxu0 0.0
        %826 = vmatprep.subr.mxu0 0.0
        %827 = vmatpush1.msra.mxu0 0.0
        %828 = vmatprep.subr.mxu0 0.0
        %829 = vmatpush1.msra.mxu0 0.0
        %830 = vmatprep.subr.mxu0 0.0
        %831 = vmatpush1.msra.mxu0 0.0
        %832 = vmatprep.subr.mxu0 0.0
        %833 = vmatpush1.msra.mxu0 0.0
        %834 = vmatprep.subr.mxu0 0.0
        %835 = vmatpush1.msra.mxu0 0.0
        %836 = vmatprep.subr.mxu0 0.0
        %837 = vmatpush1.msra.mxu0 0.0
        %838 = vmatprep.subr.mxu0 0.0
        %839 = vmatpush1.msra.mxu0 0.0
        %840 = vmatprep.subr.mxu0 0.0
        %841 = vmatpush1.msra.mxu0 0.0
        %842 = vmatprep.subr.mxu0 0.0
        %843 = vmatpush1.msra.mxu0 0.0
        %844 = vmatprep.subr.mxu0 0.0
        %845 = vmatpush1.msra.mxu0 0.0
        %846 = vmatprep.subr.mxu0 0.0
        %847 = vmatpush1.msra.mxu0 0.0
        %848 = vmatprep.subr.mxu0 0.0
        %849 = vmatpush1.msra.mxu0 0.0
        %850 = vmatprep.subr.mxu0 0.0
        %851 = vmatpush1.msra.mxu0 0.0
        %852 = vmatprep.subr.mxu0 0.0
        %853 = vmatpush1.msra.mxu0 %v547
        %854 = vmatprep.subr.mxu0 0.0
        %855 = vmatpush1.msra.mxu0 %v546
        %856 = vmatprep.subr.mxu0 0.0
        %857 = vmatpush2.msra.mxu0 0.0
        %858 = vmatprep.subr.mxu0 0.0
        %859 = vmatpush2.msra.mxu0 0.0
        %860 = vmatprep.subr.mxu0 0.0
        %861 = vmatpush2.msra.mxu0 0.0
        %862 = vmatprep.subr.mxu0 0.0
        %863 = vmatpush2.msra.mxu0 0.0
        %864 = vmatprep.subr.mxu0 0.0
        %865 = vmatpush2.msra.mxu0 0.0
        %866 = vmatprep.subr.mxu0 0.0
        %867 = vmatpush2.msra.mxu0 0.0
        %868 = vmatprep.subr.mxu0 0.0
        %869 = vmatpush2.msra.mxu0 0.0
        %870 = vmatprep.subr.mxu0 0.0
        %871 = vmatpush2.msra.mxu0 0.0
        %872 = vmatprep.subr.mxu0 0.0
        %873 = vmatpush2.msra.mxu0 0.0
        %874 = vmatprep.subr.mxu0 0.0
        %875 = vmatpush2.msra.mxu0 0.0
        %876 = vmatprep.subr.mxu0 0.0
        %877 = vmatpush2.msra.mxu0 0.0
        %878 = vmatprep.subr.mxu0 0.0
        %879 = vmatpush2.msra.mxu0 0.0
        %880 = vmatprep.subr.mxu0 0.0
        %881 = vmatpush2.msra.mxu0 0.0
        %882 = vmatprep.subr.mxu0 0.0
        %883 = vmatpush2.msra.mxu0 0.0
        %884 = vmatprep.subr.mxu0 0.0
        %885 = vmatpush2.msra.mxu0 0.0
        %886 = vmatprep.subr.mxu0 0.0
        %887 = vmatpush2.msra.mxu0 0.0
        %888 = vmatprep.mubr.f32.mxu0 0.0
        %889 = vmatmul.mubr.f32.gmra.mxu0 %v819
        %v890 = vpop.f32.mrf.mxu0
        %v891 = vadd.f32 0.0, %v890
        %v892 = vpop.f32.mrf.mxu0
        %893 = vmatprep.mubr.f32.mxu0 0.0
        %894 = vmatmul.mubr.f32.gmra.mxu0 %v822
        %v895 = vpop.f32.mrf.mxu0
        %v896 = vadd.f32 0.0, %v895
        %v897 = vpop.f32.mrf.mxu0
        %898 = vdwg.mxu0
        %v900 = vsel %vm558, %v532, 0
        %v903 = vsel %vm558, %v533, 0
        %905 = vmatprep.subr.mxu0 0.0
        %906 = vmatpush1.msra.mxu0 0.0
        %907 = vmatprep.subr.mxu0 0.0
        %908 = vmatpush1.msra.mxu0 0.0
        %909 = vmatprep.subr.mxu0 0.0
        %910 = vmatpush1.msra.mxu0 0.0
        %911 = vmatprep.subr.mxu0 0.0
        %912 = vmatpush1.msra.mxu0 0.0
        %913 = vmatprep.subr.mxu0 0.0
        %914 = vmatpush1.msra.mxu0 0.0
        %915 = vmatprep.subr.mxu0 0.0
        %916 = vmatpush1.msra.mxu0 0.0
        %917 = vmatprep.subr.mxu0 0.0
        %918 = vmatpush1.msra.mxu0 0.0
        %919 = vmatprep.subr.mxu0 0.0
        %920 = vmatpush1.msra.mxu0 0.0
        %921 = vmatprep.subr.mxu0 0.0
        %922 = vmatpush1.msra.mxu0 0.0
        %923 = vmatprep.subr.mxu0 0.0
        %924 = vmatpush1.msra.mxu0 0.0
        %925 = vmatprep.subr.mxu0 0.0
        %926 = vmatpush1.msra.mxu0 0.0
        %927 = vmatprep.subr.mxu0 0.0
        %928 = vmatpush1.msra.mxu0 0.0
        %929 = vmatprep.subr.mxu0 0.0
        %930 = vmatpush1.msra.mxu0 0.0
        %931 = vmatprep.subr.mxu0 0.0
        %932 = vmatpush1.msra.mxu0 0.0
        %933 = vmatprep.subr.mxu0 0.0
        %934 = vmatpush1.msra.mxu0 %v549
        %935 = vmatprep.subr.mxu0 0.0
        %936 = vmatpush1.msra.mxu0 %v548
        %937 = vmatprep.subr.mxu0 0.0
        %938 = vmatpush2.msra.mxu0 0.0
        %939 = vmatprep.subr.mxu0 0.0
        %940 = vmatpush2.msra.mxu0 0.0
        %941 = vmatprep.subr.mxu0 0.0
        %942 = vmatpush2.msra.mxu0 0.0
        %943 = vmatprep.subr.mxu0 0.0
        %944 = vmatpush2.msra.mxu0 0.0
        %945 = vmatprep.subr.mxu0 0.0
        %946 = vmatpush2.msra.mxu0 0.0
        %947 = vmatprep.subr.mxu0 0.0
        %948 = vmatpush2.msra.mxu0 0.0
        %949 = vmatprep.subr.mxu0 0.0
        %950 = vmatpush2.msra.mxu0 0.0
        %951 = vmatprep.subr.mxu0 0.0
        %952 = vmatpush2.msra.mxu0 0.0
        %953 = vmatprep.subr.mxu0 0.0
        %954 = vmatpush2.msra.mxu0 0.0
        %955 = vmatprep.subr.mxu0 0.0
        %956 = vmatpush2.msra.mxu0 0.0
        %957 = vmatprep.subr.mxu0 0.0
        %958 = vmatpush2.msra.mxu0 0.0
        %959 = vmatprep.subr.mxu0 0.0
        %960 = vmatpush2.msra.mxu0 0.0
        %961 = vmatprep.subr.mxu0 0.0
        %962 = vmatpush2.msra.mxu0 0.0
        %963 = vmatprep.subr.mxu0 0.0
        %964 = vmatpush2.msra.mxu0 0.0
        %965 = vmatprep.subr.mxu0 0.0
        %966 = vmatpush2.msra.mxu0 0.0
        %967 = vmatprep.subr.mxu0 0.0
        %968 = vmatpush2.msra.mxu0 0.0
        %969 = vmatprep.mubr.f32.mxu0 0.0
        %970 = vmatmul.mubr.f32.gmra.mxu0 %v900
        %v971 = vpop.f32.mrf.mxu0
        %v972 = vadd.f32 0.0, %v971
        %v973 = vpop.f32.mrf.mxu0
        %974 = vmatprep.mubr.f32.mxu0 0.0
        %975 = vmatmul.mubr.f32.gmra.mxu0 %v903
        %v976 = vpop.f32.mrf.mxu0
        %v977 = vadd.f32 0.0, %v976
        %v978 = vpop.f32.mrf.mxu0
        %979 = vdwg.mxu0
        %v981 = vsel %vm558, %v534, 0
        %v984 = vsel %vm558, %v535, 0
        %986 = vmatprep.subr.mxu0 0.0
        %987 = vmatpush1.msra.mxu0 0.0
        %988 = vmatprep.subr.mxu0 0.0
        %989 = vmatpush1.msra.mxu0 0.0
        %990 = vmatprep.subr.mxu0 0.0
        %991 = vmatpush1.msra.mxu0 0.0
        %992 = vmatprep.subr.mxu0 0.0
        %993 = vmatpush1.msra.mxu0 0.0
        %994 = vmatprep.subr.mxu0 0.0
        %995 = vmatpush1.msra.mxu0 0.0
        %996 = vmatprep.subr.mxu0 0.0
        %997 = vmatpush1.msra.mxu0 0.0
        %998 = vmatprep.subr.mxu0 0.0
        %999 = vmatpush1.msra.mxu0 0.0
        %1000 = vmatprep.subr.mxu0 0.0
        %1001 = vmatpush1.msra.mxu0 0.0
        %1002 = vmatprep.subr.mxu0 0.0
        %1003 = vmatpush1.msra.mxu0 0.0
        %1004 = vmatprep.subr.mxu0 0.0
        %1005 = vmatpush1.msra.mxu0 0.0
        %1006 = vmatprep.subr.mxu0 0.0
        %1007 = vmatpush1.msra.mxu0 0.0
        %1008 = vmatprep.subr.mxu0 0.0
        %1009 = vmatpush1.msra.mxu0 0.0
        %1010 = vmatprep.subr.mxu0 0.0
        %1011 = vmatpush1.msra.mxu0 0.0
        %1012 = vmatprep.subr.mxu0 0.0
        %1013 = vmatpush1.msra.mxu0 0.0
        %1014 = vmatprep.subr.mxu0 0.0
        %1015 = vmatpush1.msra.mxu0 %v551
        %1016 = vmatprep.subr.mxu0 0.0
        %1017 = vmatpush1.msra.mxu0 %v550
        %1018 = vmatprep.subr.mxu0 0.0
        %1019 = vmatpush2.msra.mxu0 0.0
        %1020 = vmatprep.subr.mxu0 0.0
        %1021 = vmatpush2.msra.mxu0 0.0
        %1022 = vmatprep.subr.mxu0 0.0
        %1023 = vmatpush2.msra.mxu0 0.0
        %1024 = vmatprep.subr.mxu0 0.0
        %1025 = vmatpush2.msra.mxu0 0.0
        %1026 = vmatprep.subr.mxu0 0.0
        %1027 = vmatpush2.msra.mxu0 0.0
        %1028 = vmatprep.subr.mxu0 0.0
        %1029 = vmatpush2.msra.mxu0 0.0
        %1030 = vmatprep.subr.mxu0 0.0
        %1031 = vmatpush2.msra.mxu0 0.0
        %1032 = vmatprep.subr.mxu0 0.0
        %1033 = vmatpush2.msra.mxu0 0.0
        %1034 = vmatprep.subr.mxu0 0.0
        %1035 = vmatpush2.msra.mxu0 0.0
        %1036 = vmatprep.subr.mxu0 0.0
        %1037 = vmatpush2.msra.mxu0 0.0
        %1038 = vmatprep.subr.mxu0 0.0
        %1039 = vmatpush2.msra.mxu0 0.0
        %1040 = vmatprep.subr.mxu0 0.0
        %1041 = vmatpush2.msra.mxu0 0.0
        %1042 = vmatprep.subr.mxu0 0.0
        %1043 = vmatpush2.msra.mxu0 0.0
        %1044 = vmatprep.subr.mxu0 0.0
        %1045 = vmatpush2.msra.mxu0 0.0
        %1046 = vmatprep.subr.mxu0 0.0
        %1047 = vmatpush2.msra.mxu0 0.0
        %1048 = vmatprep.subr.mxu0 0.0
        %1049 = vmatpush2.msra.mxu0 0.0
        %1050 = vmatprep.mubr.f32.mxu0 0.0
        %1051 = vmatmul.mubr.f32.gmra.mxu0 %v981
        %v1052 = vpop.f32.mrf.mxu0
        %v1053 = vadd.f32 0.0, %v1052
        %v1054 = vpop.f32.mrf.mxu0
        %1055 = vmatprep.mubr.f32.mxu0 0.0
        %1056 = vmatmul.mubr.f32.gmra.mxu0 %v984
        %v1057 = vpop.f32.mrf.mxu0
        %v1058 = vadd.f32 0.0, %v1057
        %v1059 = vpop.f32.mrf.mxu0
        %1060 = vdwg.mxu0
        %v1062 = vsel %vm558, %v536, 0
        %v1065 = vsel %vm558, %v537, 0
        %1067 = vmatprep.subr.mxu0 0.0
        %1068 = vmatpush1.msra.mxu0 0.0
        %1069 = vmatprep.subr.mxu0 0.0
        %1070 = vmatpush1.msra.mxu0 0.0
        %1071 = vmatprep.subr.mxu0 0.0
        %1072 = vmatpush1.msra.mxu0 0.0
        %1073 = vmatprep.subr.mxu0 0.0
        %1074 = vmatpush1.msra.mxu0 0.0
        %1075 = vmatprep.subr.mxu0 0.0
        %1076 = vmatpush1.msra.mxu0 0.0
        %1077 = vmatprep.subr.mxu0 0.0
        %1078 = vmatpush1.msra.mxu0 0.0
        %1079 = vmatprep.subr.mxu0 0.0
        %1080 = vmatpush1.msra.mxu0 0.0
        %1081 = vmatprep.subr.mxu0 0.0
        %1082 = vmatpush1.msra.mxu0 0.0
        %1083 = vmatprep.subr.mxu0 0.0
        %1084 = vmatpush1.msra.mxu0 0.0
        %1085 = vmatprep.subr.mxu0 0.0
        %1086 = vmatpush1.msra.mxu0 0.0
        %1087 = vmatprep.subr.mxu0 0.0
        %1088 = vmatpush1.msra.mxu0 0.0
        %1089 = vmatprep.subr.mxu0 0.0
        %1090 = vmatpush1.msra.mxu0 0.0
        %1091 = vmatprep.subr.mxu0 0.0
        %1092 = vmatpush1.msra.mxu0 0.0
        %1093 = vmatprep.subr.mxu0 0.0
        %1094 = vmatpush1.msra.mxu0 0.0
        %1095 = vmatprep.subr.mxu0 0.0
        %1096 = vmatpush1.msra.mxu0 %v553
        %1097 = vmatprep.subr.mxu0 0.0
        %1098 = vmatpush1.msra.mxu0 %v552
        %1099 = vmatprep.subr.mxu0 0.0
        %1100 = vmatpush2.msra.mxu0 0.0
        %1101 = vmatprep.subr.mxu0 0.0
        %1102 = vmatpush2.msra.mxu0 0.0
        %1103 = vmatprep.subr.mxu0 0.0
        %1104 = vmatpush2.msra.mxu0 0.0
        %1105 = vmatprep.subr.mxu0 0.0
        %1106 = vmatpush2.msra.mxu0 0.0
        %1107 = vmatprep.subr.mxu0 0.0
        %1108 = vmatpush2.msra.mxu0 0.0
        %1109 = vmatprep.subr.mxu0 0.0
        %1110 = vmatpush2.msra.mxu0 0.0
        %1111 = vmatprep.subr.mxu0 0.0
        %1112 = vmatpush2.msra.mxu0 0.0
        %1113 = vmatprep.subr.mxu0 0.0
        %1114 = vmatpush2.msra.mxu0 0.0
        %1115 = vmatprep.subr.mxu0 0.0
        %1116 = vmatpush2.msra.mxu0 0.0
        %1117 = vmatprep.subr.mxu0 0.0
        %1118 = vmatpush2.msra.mxu0 0.0
        %1119 = vmatprep.subr.mxu0 0.0
        %1120 = vmatpush2.msra.mxu0 0.0
        %1121 = vmatprep.subr.mxu0 0.0
        %1122 = vmatpush2.msra.mxu0 0.0
        %1123 = vmatprep.subr.mxu0 0.0
        %1124 = vmatpush2.msra.mxu0 0.0
        %1125 = vmatprep.subr.mxu0 0.0
        %1126 = vmatpush2.msra.mxu0 0.0
        %1127 = vmatprep.subr.mxu0 0.0
        %1128 = vmatpush2.msra.mxu0 0.0
        %1129 = vmatprep.subr.mxu0 0.0
        %1130 = vmatpush2.msra.mxu0 0.0
        %1131 = vmatprep.mubr.f32.mxu0 0.0
        %1132 = vmatmul.mubr.f32.gmra.mxu0 %v1062
        %v1133 = vpop.f32.mrf.mxu0
        %v1134 = vadd.f32 0.0, %v1133
        %v1135 = vpop.f32.mrf.mxu0
        %1136 = vmatprep.mubr.f32.mxu0 0.0
        %1137 = vmatmul.mubr.f32.gmra.mxu0 %v1065
        %v1138 = vpop.f32.mrf.mxu0
        %v1139 = vadd.f32 0.0, %v1138
        %v1140 = vpop.f32.mrf.mxu0
        %1141 = vdwg.mxu0
        %v1143 = vsel %vm558, %v538, 0
        %v1146 = vsel %vm558, %v539, 0
        %1148 = vmatprep.subr.mxu0 0.0
        %1149 = vmatpush1.msra.mxu0 0.0
        %1150 = vmatprep.subr.mxu0 0.0
        %1151 = vmatpush1.msra.mxu0 0.0
        %1152 = vmatprep.subr.mxu0 0.0
        %1153 = vmatpush1.msra.mxu0 0.0
        %1154 = vmatprep.subr.mxu0 0.0
        %1155 = vmatpush1.msra.mxu0 0.0
        %1156 = vmatprep.subr.mxu0 0.0
        %1157 = vmatpush1.msra.mxu0 0.0
        %1158 = vmatprep.subr.mxu0 0.0
        %1159 = vmatpush1.msra.mxu0 0.0
        %1160 = vmatprep.subr.mxu0 0.0
        %1161 = vmatpush1.msra.mxu0 0.0
        %1162 = vmatprep.subr.mxu0 0.0
        %1163 = vmatpush1.msra.mxu0 0.0
        %1164 = vmatprep.subr.mxu0 0.0
        %1165 = vmatpush1.msra.mxu0 0.0
        %1166 = vmatprep.subr.mxu0 0.0
        %1167 = vmatpush1.msra.mxu0 0.0
        %1168 = vmatprep.subr.mxu0 0.0
        %1169 = vmatpush1.msra.mxu0 0.0
        %1170 = vmatprep.subr.mxu0 0.0
        %1171 = vmatpush1.msra.mxu0 0.0
        %1172 = vmatprep.subr.mxu0 0.0
        %1173 = vmatpush1.msra.mxu0 0.0
        %1174 = vmatprep.subr.mxu0 0.0
        %1175 = vmatpush1.msra.mxu0 0.0
        %1176 = vmatprep.subr.mxu0 0.0
        %1177 = vmatpush1.msra.mxu0 %v555
        %1178 = vmatprep.subr.mxu0 0.0
        %1179 = vmatpush1.msra.mxu0 %v554
        %1180 = vmatprep.subr.mxu0 0.0
        %1181 = vmatpush2.msra.mxu0 0.0
        %1182 = vmatprep.subr.mxu0 0.0
        %1183 = vmatpush2.msra.mxu0 0.0
        %1184 = vmatprep.subr.mxu0 0.0
        %1185 = vmatpush2.msra.mxu0 0.0
        %1186 = vmatprep.subr.mxu0 0.0
        %1187 = vmatpush2.msra.mxu0 0.0
        %1188 = vmatprep.subr.mxu0 0.0
        %1189 = vmatpush2.msra.mxu0 0.0
        %1190 = vmatprep.subr.mxu0 0.0
        %1191 = vmatpush2.msra.mxu0 0.0
        %1192 = vmatprep.subr.mxu0 0.0
        %1193 = vmatpush2.msra.mxu0 0.0
        %1194 = vmatprep.subr.mxu0 0.0
        %1195 = vmatpush2.msra.mxu0 0.0
        %1196 = vmatprep.subr.mxu0 0.0
        %1197 = vmatpush2.msra.mxu0 0.0
        %1198 = vmatprep.subr.mxu0 0.0
        %1199 = vmatpush2.msra.mxu0 0.0
        %1200 = vmatprep.subr.mxu0 0.0
        %1201 = vmatpush2.msra.mxu0 0.0
        %1202 = vmatprep.subr.mxu0 0.0
        %1203 = vmatpush2.msra.mxu0 0.0
        %1204 = vmatprep.subr.mxu0 0.0
        %1205 = vmatpush2.msra.mxu0 0.0
        %1206 = vmatprep.subr.mxu0 0.0
        %1207 = vmatpush2.msra.mxu0 0.0
        %1208 = vmatprep.subr.mxu0 0.0
        %1209 = vmatpush2.msra.mxu0 0.0
        %1210 = vmatprep.subr.mxu0 0.0
        %1211 = vmatpush2.msra.mxu0 0.0
        %1212 = vmatprep.mubr.f32.mxu0 0.0
        %1213 = vmatmul.mubr.f32.gmra.mxu0 %v1143
        %v1214 = vpop.f32.mrf.mxu0
        %v1215 = vadd.f32 0.0, %v1214
        %v1216 = vpop.f32.mrf.mxu0
        %1217 = vmatprep.mubr.f32.mxu0 0.0
        %1218 = vmatmul.mubr.f32.gmra.mxu0 %v1146
        %v1219 = vpop.f32.mrf.mxu0
        %v1220 = vadd.f32 0.0, %v1219
        %v1221 = vpop.f32.mrf.mxu0
        %1222 = vdwg.mxu0
        %v1224 = vsel %vm558, %v540, 0
        %v1227 = vsel %vm558, %v541, 0
        %1229 = vmatprep.subr.mxu0 0.0
        %1230 = vmatpush1.msra.mxu0 0.0
        %1231 = vmatprep.subr.mxu0 0.0
        %1232 = vmatpush1.msra.mxu0 0.0
        %1233 = vmatprep.subr.mxu0 0.0
        %1234 = vmatpush1.msra.mxu0 0.0
        %1235 = vmatprep.subr.mxu0 0.0
        %1236 = vmatpush1.msra.mxu0 0.0
        %1237 = vmatprep.subr.mxu0 0.0
        %1238 = vmatpush1.msra.mxu0 0.0
        %1239 = vmatprep.subr.mxu0 0.0
        %1240 = vmatpush1.msra.mxu0 0.0
        %1241 = vmatprep.subr.mxu0 0.0
        %1242 = vmatpush1.msra.mxu0 0.0
        %1243 = vmatprep.subr.mxu0 0.0
        %1244 = vmatpush1.msra.mxu0 0.0
        %1245 = vmatprep.subr.mxu0 0.0
        %1246 = vmatpush1.msra.mxu0 0.0
        %1247 = vmatprep.subr.mxu0 0.0
        %1248 = vmatpush1.msra.mxu0 0.0
        %1249 = vmatprep.subr.mxu0 0.0
        %1250 = vmatpush1.msra.mxu0 0.0
        %1251 = vmatprep.subr.mxu0 0.0
        %1252 = vmatpush1.msra.mxu0 0.0
        %1253 = vmatprep.subr.mxu0 0.0
        %1254 = vmatpush1.msra.mxu0 0.0
        %1255 = vmatprep.subr.mxu0 0.0
        %1256 = vmatpush1.msra.mxu0 0.0
        %1257 = vmatprep.subr.mxu0 0.0
        %1258 = vmatpush1.msra.mxu0 %v557
        %1259 = vmatprep.subr.mxu0 0.0
        %1260 = vmatpush1.msra.mxu0 %v556
        %1261 = vmatprep.subr.mxu0 0.0
        %1262 = vmatpush2.msra.mxu0 0.0
        %1263 = vmatprep.subr.mxu0 0.0
        %1264 = vmatpush2.msra.mxu0 0.0
        %1265 = vmatprep.subr.mxu0 0.0
        %1266 = vmatpush2.msra.mxu0 0.0
        %1267 = vmatprep.subr.mxu0 0.0
        %1268 = vmatpush2.msra.mxu0 0.0
        %1269 = vmatprep.subr.mxu0 0.0
        %1270 = vmatpush2.msra.mxu0 0.0
        %1271 = vmatprep.subr.mxu0 0.0
        %1272 = vmatpush2.msra.mxu0 0.0
        %1273 = vmatprep.subr.mxu0 0.0
        %1274 = vmatpush2.msra.mxu0 0.0
        %1275 = vmatprep.subr.mxu0 0.0
        %1276 = vmatpush2.msra.mxu0 0.0
        %1277 = vmatprep.subr.mxu0 0.0
        %1278 = vmatpush2.msra.mxu0 0.0
        %1279 = vmatprep.subr.mxu0 0.0
        %1280 = vmatpush2.msra.mxu0 0.0
        %1281 = vmatprep.subr.mxu0 0.0
        %1282 = vmatpush2.msra.mxu0 0.0
        %1283 = vmatprep.subr.mxu0 0.0
        %1284 = vmatpush2.msra.mxu0 0.0
        %1285 = vmatprep.subr.mxu0 0.0
        %1286 = vmatpush2.msra.mxu0 0.0
        %1287 = vmatprep.subr.mxu0 0.0
        %1288 = vmatpush2.msra.mxu0 0.0
        %1289 = vmatprep.subr.mxu0 0.0
        %1290 = vmatpush2.msra.mxu0 0.0
        %1291 = vmatprep.subr.mxu0 0.0
        %1292 = vmatpush2.msra.mxu0 0.0
        %1293 = vmatprep.mubr.f32.mxu0 0.0
        %1294 = vmatmul.mubr.f32.gmra.mxu0 %v1224
        %v1295 = vpop.f32.mrf.mxu0
        %v1296 = vadd.f32 0.0, %v1295
        %v1297 = vpop.f32.mrf.mxu0
        %1298 = vmatprep.mubr.f32.mxu0 0.0
        %1299 = vmatmul.mubr.f32.gmra.mxu0 %v1227
        %v1300 = vpop.f32.mrf.mxu0
        %v1301 = vadd.f32 0.0, %v1300
        %v1302 = vpop.f32.mrf.mxu0
        %1303 = vdwg.mxu0
        %v1304 = vstv %s655
        %v1305 = vmul.f32 %v1304, %v542
        %v1306 = vmul.f32 %v1304, %v543
        %v1307 = vmul.f32 %v1304, %v544
        %v1308 = vmul.f32 %v1304, %v545
        %v1309 = vmul.f32 %v1304, %v546
        %v1310 = vmul.f32 %v1304, %v547
        %v1311 = vmul.f32 %v1304, %v548
        %v1312 = vmul.f32 %v1304, %v549
        %v1313 = vmul.f32 %v1304, %v550
        %v1314 = vmul.f32 %v1304, %v551
        %v1315 = vmul.f32 %v1304, %v552
        %v1316 = vmul.f32 %v1304, %v553
        %v1317 = vmul.f32 %v1304, %v554
        %v1318 = vmul.f32 %v1304, %v555
        %v1319 = vmul.f32 %v1304, %v556
        %v1320 = vmul.f32 %v1304, %v557
        %v1321 = vadd.f32 %v729, %v1305
        %v1322 = vadd.f32 %v734, %v1306
        %v1323 = vadd.f32 %v810, %v1307
        %v1324 = vadd.f32 %v815, %v1308
        %v1325 = vadd.f32 %v891, %v1309
        %v1326 = vadd.f32 %v896, %v1310
        %v1327 = vadd.f32 %v972, %v1311
        %v1328 = vadd.f32 %v977, %v1312
        %v1329 = vadd.f32 %v1053, %v1313
        %v1330 = vadd.f32 %v1058, %v1314
        %v1331 = vadd.f32 %v1134, %v1315
        %v1332 = vadd.f32 %v1139, %v1316
        %v1333 = vadd.f32 %v1215, %v1317
        %v1334 = vadd.f32 %v1220, %v1318
        %v1335 = vadd.f32 %v1296, %v1319
        %v1336 = vadd.f32 %v1301, %v1320
        %v1337 = vld [vmem:[#allocation9] sm:$0xff]
        %v1338 = vld [vmem:[#allocation9 + $0x8] sm:$0xff]
        %v1339 = vld [vmem:[#allocation9 + $0x10] sm:$0xff]
        %v1340 = vld [vmem:[#allocation9 + $0x18] sm:$0xff]
        %v1341 = vld [vmem:[#allocation9 + $0x20] sm:$0xff]
        %v1342 = vld [vmem:[#allocation9 + $0x28] sm:$0xff]
        %v1343 = vld [vmem:[#allocation9 + $0x30] sm:$0xff]
        %v1344 = vld [vmem:[#allocation9 + $0x38] sm:$0xff]
        %v1345 = vld [vmem:[#allocation9 + $0x40] sm:$0xff]
        %v1346 = vld [vmem:[#allocation9 + $0x48] sm:$0xff]
        %v1347 = vld [vmem:[#allocation9 + $0x50] sm:$0xff]
        %v1348 = vld [vmem:[#allocation9 + $0x58] sm:$0xff]
        %v1349 = vld [vmem:[#allocation9 + $0x60] sm:$0xff]
        %v1350 = vld [vmem:[#allocation9 + $0x68] sm:$0xff]
        %v1351 = vld [vmem:[#allocation9 + $0x70] sm:$0xff]
        %v1352 = vld [vmem:[#allocation9 + $0x78] sm:$0xff]
        %v1353 = vld [vmem:[%s4] sm:$0x1]
        %v1355 = vlaneseq
        %v1356 = vshrl.u32 %v1355, 7
        %v1357 = vsub.s32 0, %v1356
        %v1358 = vrot.slane %v1353, %v1357
        %1360 = vmatprep.subr.mxu0 0.0
        %1361 = vmatpush1.msra.mxu0 %v1352
        %1362 = vmatprep.subr.mxu0 0.0
        %1363 = vmatpush1.msra.mxu0 %v1351
        %1364 = vmatprep.subr.mxu0 0.0
        %1365 = vmatpush1.msra.mxu0 %v1350
        %1366 = vmatprep.subr.mxu0 0.0
        %1367 = vmatpush1.msra.mxu0 %v1349
        %1368 = vmatprep.subr.mxu0 0.0
        %1369 = vmatpush1.msra.mxu0 %v1348
        %1370 = vmatprep.subr.mxu0 0.0
        %1371 = vmatpush1.msra.mxu0 %v1347
        %1372 = vmatprep.subr.mxu0 0.0
        %1373 = vmatpush1.msra.mxu0 %v1346
        %1374 = vmatprep.subr.mxu0 0.0
        %1375 = vmatpush1.msra.mxu0 %v1345
        %1376 = vmatprep.subr.mxu0 0.0
        %1377 = vmatpush1.msra.mxu0 %v1344
        %1378 = vmatprep.subr.mxu0 0.0
        %1379 = vmatpush1.msra.mxu0 %v1343
        %1380 = vmatprep.subr.mxu0 0.0
        %1381 = vmatpush1.msra.mxu0 %v1342
        %1382 = vmatprep.subr.mxu0 0.0
        %1383 = vmatpush1.msra.mxu0 %v1341
        %1384 = vmatprep.subr.mxu0 0.0
        %1385 = vmatpush1.msra.mxu0 %v1340
        %1386 = vmatprep.subr.mxu0 0.0
        %1387 = vmatpush1.msra.mxu0 %v1339
        %1388 = vmatprep.subr.mxu0 0.0
        %1389 = vmatpush1.msra.mxu0 %v1338
        %1390 = vmatprep.subr.mxu0 0.0
        %1391 = vmatpush1.msra.mxu0 %v1337
        %1392 = vmatprep.subr.mxu0 0.0
        %1393 = vmatpush2.msra.mxu0 0.0
        %1394 = vmatprep.subr.mxu0 0.0
        %1395 = vmatpush2.msra.mxu0 0.0
        %1396 = vmatprep.subr.mxu0 0.0
        %1397 = vmatpush2.msra.mxu0 0.0
        %1398 = vmatprep.subr.mxu0 0.0
        %1399 = vmatpush2.msra.mxu0 0.0
        %1400 = vmatprep.subr.mxu0 0.0
        %1401 = vmatpush2.msra.mxu0 0.0
        %1402 = vmatprep.subr.mxu0 0.0
        %1403 = vmatpush2.msra.mxu0 0.0
        %1404 = vmatprep.subr.mxu0 0.0
        %1405 = vmatpush2.msra.mxu0 0.0
        %1406 = vmatprep.subr.mxu0 0.0
        %1407 = vmatpush2.msra.mxu0 0.0
        %1408 = vmatprep.subr.mxu0 0.0
        %1409 = vmatpush2.msra.mxu0 0.0
        %1410 = vmatprep.subr.mxu0 0.0
        %1411 = vmatpush2.msra.mxu0 0.0
        %1412 = vmatprep.subr.mxu0 0.0
        %1413 = vmatpush2.msra.mxu0 0.0
        %1414 = vmatprep.subr.mxu0 0.0
        %1415 = vmatpush2.msra.mxu0 0.0
        %1416 = vmatprep.subr.mxu0 0.0
        %1417 = vmatpush2.msra.mxu0 0.0
        %1418 = vmatprep.subr.mxu0 0.0
        %1419 = vmatpush2.msra.mxu0 0.0
        %1420 = vmatprep.subr.mxu0 0.0
        %1421 = vmatpush2.msra.mxu0 0.0
        %1422 = vmatprep.subr.mxu0 0.0
        %1423 = vmatpush2.msra.mxu0 0.0
        %1424 = vmatprep.mubr.f32.mxu0 0.0
        %1425 = vmatmul.mubr.f32.gmra.mxu0 %v1321
        %v1426 = vpop.f32.mrf.mxu0
        %v1427 = vadd.f32 %v1358, %v1426
        %v1428 = vpop.f32.mrf.mxu0
        %1429 = vmatprep.mubr.f32.mxu0 0.0
        %1430 = vmatmul.mubr.f32.gmra.mxu0 %v1322
        %v1431 = vpop.f32.mrf.mxu0
        %v1432 = vadd.f32 %v1358, %v1431
        %v1433 = vpop.f32.mrf.mxu0
        %1434 = vmatprep.mubr.f32.mxu0 0.0
        %1435 = vmatmul.mubr.f32.gmra.mxu0 %v1323
        %v1436 = vpop.f32.mrf.mxu0
        %v1437 = vadd.f32 %v1358, %v1436
        %v1438 = vpop.f32.mrf.mxu0
        %1439 = vmatprep.mubr.f32.mxu0 0.0
        %1440 = vmatmul.mubr.f32.gmra.mxu0 %v1324
        %v1441 = vpop.f32.mrf.mxu0
        %v1442 = vadd.f32 %v1358, %v1441
        %v1443 = vpop.f32.mrf.mxu0
        %1444 = vmatprep.mubr.f32.mxu0 0.0
        %1445 = vmatmul.mubr.f32.gmra.mxu0 %v1325
        %v1446 = vpop.f32.mrf.mxu0
        %v1447 = vadd.f32 %v1358, %v1446
        %v1448 = vpop.f32.mrf.mxu0
        %1449 = vmatprep.mubr.f32.mxu0 0.0
        %1450 = vmatmul.mubr.f32.gmra.mxu0 %v1326
        %v1451 = vpop.f32.mrf.mxu0
        %v1452 = vadd.f32 %v1358, %v1451
        %v1453 = vpop.f32.mrf.mxu0
        %1454 = vmatprep.mubr.f32.mxu0 0.0
        %1455 = vmatmul.mubr.f32.gmra.mxu0 %v1327
        %v1456 = vpop.f32.mrf.mxu0
        %v1457 = vadd.f32 %v1358, %v1456
        %v1458 = vpop.f32.mrf.mxu0
        %1459 = vmatprep.mubr.f32.mxu0 0.0
        %1460 = vmatmul.mubr.f32.gmra.mxu0 %v1328
        %v1461 = vpop.f32.mrf.mxu0
        %v1462 = vadd.f32 %v1358, %v1461
        %v1463 = vpop.f32.mrf.mxu0
        %1464 = vmatprep.mubr.f32.mxu0 0.0
        %1465 = vmatmul.mubr.f32.gmra.mxu0 %v1329
        %v1466 = vpop.f32.mrf.mxu0
        %v1467 = vadd.f32 %v1358, %v1466
        %v1468 = vpop.f32.mrf.mxu0
        %1469 = vmatprep.mubr.f32.mxu0 0.0
        %1470 = vmatmul.mubr.f32.gmra.mxu0 %v1330
        %v1471 = vpop.f32.mrf.mxu0
        %v1472 = vadd.f32 %v1358, %v1471
        %v1473 = vpop.f32.mrf.mxu0
        %1474 = vmatprep.mubr.f32.mxu0 0.0
        %1475 = vmatmul.mubr.f32.gmra.mxu0 %v1331
        %v1476 = vpop.f32.mrf.mxu0
        %v1477 = vadd.f32 %v1358, %v1476
        %v1478 = vpop.f32.mrf.mxu0
        %1479 = vmatprep.mubr.f32.mxu0 0.0
        %1480 = vmatmul.mubr.f32.gmra.mxu0 %v1332
        %v1481 = vpop.f32.mrf.mxu0
        %v1482 = vadd.f32 %v1358, %v1481
        %v1483 = vpop.f32.mrf.mxu0
        %1484 = vmatprep.mubr.f32.mxu0 0.0
        %1485 = vmatmul.mubr.f32.gmra.mxu0 %v1333
        %v1486 = vpop.f32.mrf.mxu0
        %v1487 = vadd.f32 %v1358, %v1486
        %v1488 = vpop.f32.mrf.mxu0
        %1489 = vmatprep.mubr.f32.mxu0 0.0
        %1490 = vmatmul.mubr.f32.gmra.mxu0 %v1334
        %v1491 = vpop.f32.mrf.mxu0
        %v1492 = vadd.f32 %v1358, %v1491
        %v1493 = vpop.f32.mrf.mxu0
        %1494 = vmatprep.mubr.f32.mxu0 0.0
        %1495 = vmatmul.mubr.f32.gmra.mxu0 %v1335
        %v1496 = vpop.f32.mrf.mxu0
        %v1497 = vadd.f32 %v1358, %v1496
        %v1498 = vpop.f32.mrf.mxu0
        %1499 = vmatprep.mubr.f32.mxu0 0.0
        %1500 = vmatmul.mubr.f32.gmra.mxu0 %v1336
        %v1501 = vpop.f32.mrf.mxu0
        %v1502 = vadd.f32 %v1358, %v1501
        %v1503 = vpop.f32.mrf.mxu0
        %1504 = vdwg.mxu0
        %v1505 = vmax.f32 %v1427, 0.0
        %v1506 = vmax.f32 %v1432, 0.0
        %v1507 = vmax.f32 %v1437, 0.0
        %v1508 = vmax.f32 %v1442, 0.0
        %v1509 = vmax.f32 %v1447, 0.0
        %v1510 = vmax.f32 %v1452, 0.0
        %v1511 = vmax.f32 %v1457, 0.0
        %v1512 = vmax.f32 %v1462, 0.0
        %v1513 = vmax.f32 %v1467, 0.0
        %v1514 = vmax.f32 %v1472, 0.0
        %v1515 = vmax.f32 %v1477, 0.0
        %v1516 = vmax.f32 %v1482, 0.0
        %v1517 = vmax.f32 %v1487, 0.0
        %v1518 = vmax.f32 %v1492, 0.0
        %v1519 = vmax.f32 %v1497, 0.0
        %v1520 = vmax.f32 %v1502, 0.0
        %v1521 = vld [vmem:[#allocation10] sm:$0xff]
        %v1522 = vld [vmem:[#allocation10 + $0x8] sm:$0xff]
        %v1523 = vld [vmem:[#allocation10 + $0x10] sm:$0xff]
        %v1524 = vld [vmem:[#allocation10 + $0x18] sm:$0xff]
        %v1525 = vld [vmem:[#allocation10 + $0x20] sm:$0xff]
        %v1526 = vld [vmem:[#allocation10 + $0x28] sm:$0xff]
        %v1527 = vld [vmem:[#allocation10 + $0x30] sm:$0xff]
        %v1528 = vld [vmem:[#allocation10 + $0x38] sm:$0xff]
        %v1529 = vld [vmem:[#allocation10 + $0x40] sm:$0xff]
        %v1530 = vld [vmem:[#allocation10 + $0x48] sm:$0xff]
        %v1531 = vld [vmem:[#allocation10 + $0x50] sm:$0xff]
        %v1532 = vld [vmem:[#allocation10 + $0x58] sm:$0xff]
        %v1533 = vld [vmem:[#allocation10 + $0x60] sm:$0xff]
        %v1534 = vld [vmem:[#allocation10 + $0x68] sm:$0xff]
        %v1535 = vld [vmem:[#allocation10 + $0x70] sm:$0xff]
        %v1536 = vld [vmem:[#allocation10 + $0x78] sm:$0xff]
        %v1537 = vld [vmem:[%s6] sm:$0x1]
        %v1539 = vlaneseq
        %v1540 = vshrl.u32 %v1539, 7
        %v1541 = vsub.s32 0, %v1540
        %v1542 = vrot.slane %v1537, %v1541
        %1544 = vmatprep.subr.mxu0 0.0
        %1545 = vmatpush1.msra.mxu0 %v1536
        %1546 = vmatprep.subr.mxu0 0.0
        %1547 = vmatpush1.msra.mxu0 %v1535
        %1548 = vmatprep.subr.mxu0 0.0
        %1549 = vmatpush1.msra.mxu0 %v1534
        %1550 = vmatprep.subr.mxu0 0.0
        %1551 = vmatpush1.msra.mxu0 %v1533
        %1552 = vmatprep.subr.mxu0 0.0
        %1553 = vmatpush1.msra.mxu0 %v1532
        %1554 = vmatprep.subr.mxu0 0.0
        %1555 = vmatpush1.msra.mxu0 %v1531
        %1556 = vmatprep.subr.mxu0 0.0
        %1557 = vmatpush1.msra.mxu0 %v1530
        %1558 = vmatprep.subr.mxu0 0.0
        %1559 = vmatpush1.msra.mxu0 %v1529
        %1560 = vmatprep.subr.mxu0 0.0
        %1561 = vmatpush1.msra.mxu0 %v1528
        %1562 = vmatprep.subr.mxu0 0.0
        %1563 = vmatpush1.msra.mxu0 %v1527
        %1564 = vmatprep.subr.mxu0 0.0
        %1565 = vmatpush1.msra.mxu0 %v1526
        %1566 = vmatprep.subr.mxu0 0.0
        %1567 = vmatpush1.msra.mxu0 %v1525
        %1568 = vmatprep.subr.mxu0 0.0
        %1569 = vmatpush1.msra.mxu0 %v1524
        %1570 = vmatprep.subr.mxu0 0.0
        %1571 = vmatpush1.msra.mxu0 %v1523
        %1572 = vmatprep.subr.mxu0 0.0
        %1573 = vmatpush1.msra.mxu0 %v1522
        %1574 = vmatprep.subr.mxu0 0.0
        %1575 = vmatpush1.msra.mxu0 %v1521
        %1576 = vmatprep.subr.mxu0 0.0
        %1577 = vmatpush2.msra.mxu0 0.0
        %1578 = vmatprep.subr.mxu0 0.0
        %1579 = vmatpush2.msra.mxu0 0.0
        %1580 = vmatprep.subr.mxu0 0.0
        %1581 = vmatpush2.msra.mxu0 0.0
        %1582 = vmatprep.subr.mxu0 0.0
        %1583 = vmatpush2.msra.mxu0 0.0
        %1584 = vmatprep.subr.mxu0 0.0
        %1585 = vmatpush2.msra.mxu0 0.0
        %1586 = vmatprep.subr.mxu0 0.0
        %1587 = vmatpush2.msra.mxu0 0.0
        %1588 = vmatprep.subr.mxu0 0.0
        %1589 = vmatpush2.msra.mxu0 0.0
        %1590 = vmatprep.subr.mxu0 0.0
        %1591 = vmatpush2.msra.mxu0 0.0
        %1592 = vmatprep.subr.mxu0 0.0
        %1593 = vmatpush2.msra.mxu0 0.0
        %1594 = vmatprep.subr.mxu0 0.0
        %1595 = vmatpush2.msra.mxu0 0.0
        %1596 = vmatprep.subr.mxu0 0.0
        %1597 = vmatpush2.msra.mxu0 0.0
        %1598 = vmatprep.subr.mxu0 0.0
        %1599 = vmatpush2.msra.mxu0 0.0
        %1600 = vmatprep.subr.mxu0 0.0
        %1601 = vmatpush2.msra.mxu0 0.0
        %1602 = vmatprep.subr.mxu0 0.0
        %1603 = vmatpush2.msra.mxu0 0.0
        %1604 = vmatprep.subr.mxu0 0.0
        %1605 = vmatpush2.msra.mxu0 0.0
        %1606 = vmatprep.subr.mxu0 0.0
        %1607 = vmatpush2.msra.mxu0 0.0
        %1608 = vmatprep.mubr.f32.mxu0 0.0
        %1609 = vmatmul.mubr.f32.gmra.mxu0 %v1505
        %v1610 = vpop.f32.mrf.mxu0
        %v1611 = vadd.f32 %v1542, %v1610
        %v1612 = vpop.f32.mrf.mxu0
        %1613 = vmatprep.mubr.f32.mxu0 0.0
        %1614 = vmatmul.mubr.f32.gmra.mxu0 %v1506
        %v1615 = vpop.f32.mrf.mxu0
        %v1616 = vadd.f32 %v1542, %v1615
        %v1617 = vpop.f32.mrf.mxu0
        %1618 = vmatprep.mubr.f32.mxu0 0.0
        %1619 = vmatmul.mubr.f32.gmra.mxu0 %v1507
        %v1620 = vpop.f32.mrf.mxu0
        %v1621 = vadd.f32 %v1542, %v1620
        %v1622 = vpop.f32.mrf.mxu0
        %1623 = vmatprep.mubr.f32.mxu0 0.0
        %1624 = vmatmul.mubr.f32.gmra.mxu0 %v1508
        %v1625 = vpop.f32.mrf.mxu0
        %v1626 = vadd.f32 %v1542, %v1625
        %v1627 = vpop.f32.mrf.mxu0
        %1628 = vmatprep.mubr.f32.mxu0 0.0
        %1629 = vmatmul.mubr.f32.gmra.mxu0 %v1509
        %v1630 = vpop.f32.mrf.mxu0
        %v1631 = vadd.f32 %v1542, %v1630
        %v1632 = vpop.f32.mrf.mxu0
        %1633 = vmatprep.mubr.f32.mxu0 0.0
        %1634 = vmatmul.mubr.f32.gmra.mxu0 %v1510
        %v1635 = vpop.f32.mrf.mxu0
        %v1636 = vadd.f32 %v1542, %v1635
        %v1637 = vpop.f32.mrf.mxu0
        %1638 = vmatprep.mubr.f32.mxu0 0.0
        %1639 = vmatmul.mubr.f32.gmra.mxu0 %v1511
        %v1640 = vpop.f32.mrf.mxu0
        %v1641 = vadd.f32 %v1542, %v1640
        %v1642 = vpop.f32.mrf.mxu0
        %1643 = vmatprep.mubr.f32.mxu0 0.0
        %1644 = vmatmul.mubr.f32.gmra.mxu0 %v1512
        %v1645 = vpop.f32.mrf.mxu0
        %v1646 = vadd.f32 %v1542, %v1645
        %v1647 = vpop.f32.mrf.mxu0
        %1648 = vmatprep.mubr.f32.mxu0 0.0
        %1649 = vmatmul.mubr.f32.gmra.mxu0 %v1513
        %v1650 = vpop.f32.mrf.mxu0
        %v1651 = vadd.f32 %v1542, %v1650
        %v1652 = vpop.f32.mrf.mxu0
        %1653 = vmatprep.mubr.f32.mxu0 0.0
        %1654 = vmatmul.mubr.f32.gmra.mxu0 %v1514
        %v1655 = vpop.f32.mrf.mxu0
        %v1656 = vadd.f32 %v1542, %v1655
        %v1657 = vpop.f32.mrf.mxu0
        %1658 = vmatprep.mubr.f32.mxu0 0.0
        %1659 = vmatmul.mubr.f32.gmra.mxu0 %v1515
        %v1660 = vpop.f32.mrf.mxu0
        %v1661 = vadd.f32 %v1542, %v1660
        %v1662 = vpop.f32.mrf.mxu0
        %1663 = vmatprep.mubr.f32.mxu0 0.0
        %1664 = vmatmul.mubr.f32.gmra.mxu0 %v1516
        %v1665 = vpop.f32.mrf.mxu0
        %v1666 = vadd.f32 %v1542, %v1665
        %v1667 = vpop.f32.mrf.mxu0
        %1668 = vmatprep.mubr.f32.mxu0 0.0
        %1669 = vmatmul.mubr.f32.gmra.mxu0 %v1517
        %v1670 = vpop.f32.mrf.mxu0
        %v1671 = vadd.f32 %v1542, %v1670
        %v1672 = vpop.f32.mrf.mxu0
        %1673 = vmatprep.mubr.f32.mxu0 0.0
        %1674 = vmatmul.mubr.f32.gmra.mxu0 %v1518
        %v1675 = vpop.f32.mrf.mxu0
        %v1676 = vadd.f32 %v1542, %v1675
        %v1677 = vpop.f32.mrf.mxu0
        %1678 = vmatprep.mubr.f32.mxu0 0.0
        %1679 = vmatmul.mubr.f32.gmra.mxu0 %v1519
        %v1680 = vpop.f32.mrf.mxu0
        %v1681 = vadd.f32 %v1542, %v1680
        %v1682 = vpop.f32.mrf.mxu0
        %1683 = vmatprep.mubr.f32.mxu0 0.0
        %1684 = vmatmul.mubr.f32.gmra.mxu0 %v1520
        %v1685 = vpop.f32.mrf.mxu0
        %v1686 = vadd.f32 %v1542, %v1685
        %v1687 = vpop.f32.mrf.mxu0
        %1688 = vdwg.mxu0
        %v1689 = vmax.f32 %v1611, 0.0
        %v1690 = vmax.f32 %v1616, 0.0
        %v1691 = vmax.f32 %v1621, 0.0
        %v1692 = vmax.f32 %v1626, 0.0
        %v1693 = vmax.f32 %v1631, 0.0
        %v1694 = vmax.f32 %v1636, 0.0
        %v1695 = vmax.f32 %v1641, 0.0
        %v1696 = vmax.f32 %v1646, 0.0
        %v1697 = vmax.f32 %v1651, 0.0
        %v1698 = vmax.f32 %v1656, 0.0
        %v1699 = vmax.f32 %v1661, 0.0
        %v1700 = vmax.f32 %v1666, 0.0
        %v1701 = vmax.f32 %v1671, 0.0
        %v1702 = vmax.f32 %v1676, 0.0
        %v1703 = vmax.f32 %v1681, 0.0
        %v1704 = vmax.f32 %v1686, 0.0
        %s1705 = sld [smem:[#allocation3 + $0x1]]
        %1706 = vmatprep.subr.mxu0 0.0
        %1707 = vmatpush1.msra.mxu0 0.0
        %1708 = vmatprep.subr.mxu0 0.0
        %1709 = vmatpush1.msra.mxu0 0.0
        %1710 = vmatprep.subr.mxu0 0.0
        %1711 = vmatpush1.msra.mxu0 0.0
        %1712 = vmatprep.subr.mxu0 0.0
        %1713 = vmatpush1.msra.mxu0 0.0
        %1714 = vmatprep.subr.mxu0 0.0
        %1715 = vmatpush1.msra.mxu0 0.0
        %1716 = vmatprep.subr.mxu0 0.0
        %1717 = vmatpush1.msra.mxu0 0.0
        %1718 = vmatprep.subr.mxu0 0.0
        %1719 = vmatpush1.msra.mxu0 0.0
        %1720 = vmatprep.subr.mxu0 0.0
        %1721 = vmatpush1.msra.mxu0 0.0
        %1722 = vmatprep.subr.mxu0 0.0
        %1723 = vmatpush1.msra.mxu0 0.0
        %1724 = vmatprep.subr.mxu0 0.0
        %1725 = vmatpush1.msra.mxu0 0.0
        %1726 = vmatprep.subr.mxu0 0.0
        %1727 = vmatpush1.msra.mxu0 0.0
        %1728 = vmatprep.subr.mxu0 0.0
        %1729 = vmatpush1.msra.mxu0 0.0
        %1730 = vmatprep.subr.mxu0 0.0
        %1731 = vmatpush1.msra.mxu0 0.0
        %1732 = vmatprep.subr.mxu0 0.0
        %1733 = vmatpush1.msra.mxu0 0.0
        %1734 = vmatprep.subr.mxu0 0.0
        %1735 = vmatpush1.msra.mxu0 %v1690
        %1736 = vmatprep.subr.mxu0 0.0
        %1737 = vmatpush1.msra.mxu0 %v1689
        %1738 = vmatprep.subr.mxu0 0.0
        %1739 = vmatpush2.msra.mxu0 0.0
        %1740 = vmatprep.subr.mxu0 0.0
        %1741 = vmatpush2.msra.mxu0 0.0
        %1742 = vmatprep.subr.mxu0 0.0
        %1743 = vmatpush2.msra.mxu0 0.0
        %1744 = vmatprep.subr.mxu0 0.0
        %1745 = vmatpush2.msra.mxu0 0.0
        %1746 = vmatprep.subr.mxu0 0.0
        %1747 = vmatpush2.msra.mxu0 0.0
        %1748 = vmatprep.subr.mxu0 0.0
        %1749 = vmatpush2.msra.mxu0 0.0
        %1750 = vmatprep.subr.mxu0 0.0
        %1751 = vmatpush2.msra.mxu0 0.0
        %1752 = vmatprep.subr.mxu0 0.0
        %1753 = vmatpush2.msra.mxu0 0.0
        %1754 = vmatprep.subr.mxu0 0.0
        %1755 = vmatpush2.msra.mxu0 0.0
        %1756 = vmatprep.subr.mxu0 0.0
        %1757 = vmatpush2.msra.mxu0 0.0
        %1758 = vmatprep.subr.mxu0 0.0
        %1759 = vmatpush2.msra.mxu0 0.0
        %1760 = vmatprep.subr.mxu0 0.0
        %1761 = vmatpush2.msra.mxu0 0.0
        %1762 = vmatprep.subr.mxu0 0.0
        %1763 = vmatpush2.msra.mxu0 0.0
        %1764 = vmatprep.subr.mxu0 0.0
        %1765 = vmatpush2.msra.mxu0 0.0
        %1766 = vmatprep.subr.mxu0 0.0
        %1767 = vmatpush2.msra.mxu0 0.0
        %1768 = vmatprep.subr.mxu0 0.0
        %1769 = vmatpush2.msra.mxu0 0.0
        %1770 = vmatprep.mubr.f32.mxu0 0.0
        %1771 = vmatmul.mubr.f32.gmra.mxu0 %v657
        %v1772 = vpop.f32.mrf.mxu0
        %v1773 = vadd.f32 0.0, %v1772
        %v1774 = vpop.f32.mrf.mxu0
        %1775 = vmatprep.mubr.f32.mxu0 0.0
        %1776 = vmatmul.mubr.f32.gmra.mxu0 %v660
        %v1777 = vpop.f32.mrf.mxu0
        %v1778 = vadd.f32 0.0, %v1777
        %v1779 = vpop.f32.mrf.mxu0
        %1780 = vdwg.mxu0
        %1781 = vmatprep.subr.mxu0 0.0
        %1782 = vmatpush1.msra.mxu0 0.0
        %1783 = vmatprep.subr.mxu0 0.0
        %1784 = vmatpush1.msra.mxu0 0.0
        %1785 = vmatprep.subr.mxu0 0.0
        %1786 = vmatpush1.msra.mxu0 0.0
        %1787 = vmatprep.subr.mxu0 0.0
        %1788 = vmatpush1.msra.mxu0 0.0
        %1789 = vmatprep.subr.mxu0 0.0
        %1790 = vmatpush1.msra.mxu0 0.0
        %1791 = vmatprep.subr.mxu0 0.0
        %1792 = vmatpush1.msra.mxu0 0.0
        %1793 = vmatprep.subr.mxu0 0.0
        %1794 = vmatpush1.msra.mxu0 0.0
        %1795 = vmatprep.subr.mxu0 0.0
        %1796 = vmatpush1.msra.mxu0 0.0
        %1797 = vmatprep.subr.mxu0 0.0
        %1798 = vmatpush1.msra.mxu0 0.0
        %1799 = vmatprep.subr.mxu0 0.0
        %1800 = vmatpush1.msra.mxu0 0.0
        %1801 = vmatprep.subr.mxu0 0.0
        %1802 = vmatpush1.msra.mxu0 0.0
        %1803 = vmatprep.subr.mxu0 0.0
        %1804 = vmatpush1.msra.mxu0 0.0
        %1805 = vmatprep.subr.mxu0 0.0
        %1806 = vmatpush1.msra.mxu0 0.0
        %1807 = vmatprep.subr.mxu0 0.0
        %1808 = vmatpush1.msra.mxu0 0.0
        %1809 = vmatprep.subr.mxu0 0.0
        %1810 = vmatpush1.msra.mxu0 %v1692
        %1811 = vmatprep.subr.mxu0 0.0
        %1812 = vmatpush1.msra.mxu0 %v1691
        %1813 = vmatprep.subr.mxu0 0.0
        %1814 = vmatpush2.msra.mxu0 0.0
        %1815 = vmatprep.subr.mxu0 0.0
        %1816 = vmatpush2.msra.mxu0 0.0
        %1817 = vmatprep.subr.mxu0 0.0
        %1818 = vmatpush2.msra.mxu0 0.0
        %1819 = vmatprep.subr.mxu0 0.0
        %1820 = vmatpush2.msra.mxu0 0.0
        %1821 = vmatprep.subr.mxu0 0.0
        %1822 = vmatpush2.msra.mxu0 0.0
        %1823 = vmatprep.subr.mxu0 0.0
        %1824 = vmatpush2.msra.mxu0 0.0
        %1825 = vmatprep.subr.mxu0 0.0
        %1826 = vmatpush2.msra.mxu0 0.0
        %1827 = vmatprep.subr.mxu0 0.0
        %1828 = vmatpush2.msra.mxu0 0.0
        %1829 = vmatprep.subr.mxu0 0.0
        %1830 = vmatpush2.msra.mxu0 0.0
        %1831 = vmatprep.subr.mxu0 0.0
        %1832 = vmatpush2.msra.mxu0 0.0
        %1833 = vmatprep.subr.mxu0 0.0
        %1834 = vmatpush2.msra.mxu0 0.0
        %1835 = vmatprep.subr.mxu0 0.0
        %1836 = vmatpush2.msra.mxu0 0.0
        %1837 = vmatprep.subr.mxu0 0.0
        %1838 = vmatpush2.msra.mxu0 0.0
        %1839 = vmatprep.subr.mxu0 0.0
        %1840 = vmatpush2.msra.mxu0 0.0
        %1841 = vmatprep.subr.mxu0 0.0
        %1842 = vmatpush2.msra.mxu0 0.0
        %1843 = vmatprep.subr.mxu0 0.0
        %1844 = vmatpush2.msra.mxu0 0.0
        %1845 = vmatprep.mubr.f32.mxu0 0.0
        %1846 = vmatmul.mubr.f32.gmra.mxu0 %v738
        %v1847 = vpop.f32.mrf.mxu0
        %v1848 = vadd.f32 0.0, %v1847
        %v1849 = vpop.f32.mrf.mxu0
        %1850 = vmatprep.mubr.f32.mxu0 0.0
        %1851 = vmatmul.mubr.f32.gmra.mxu0 %v741
        %v1852 = vpop.f32.mrf.mxu0
        %v1853 = vadd.f32 0.0, %v1852
        %v1854 = vpop.f32.mrf.mxu0
        %1855 = vdwg.mxu0
        %1856 = vmatprep.subr.mxu0 0.0
        %1857 = vmatpush1.msra.mxu0 0.0
        %1858 = vmatprep.subr.mxu0 0.0
        %1859 = vmatpush1.msra.mxu0 0.0
        %1860 = vmatprep.subr.mxu0 0.0
        %1861 = vmatpush1.msra.mxu0 0.0
        %1862 = vmatprep.subr.mxu0 0.0
        %1863 = vmatpush1.msra.mxu0 0.0
        %1864 = vmatprep.subr.mxu0 0.0
        %1865 = vmatpush1.msra.mxu0 0.0
        %1866 = vmatprep.subr.mxu0 0.0
        %1867 = vmatpush1.msra.mxu0 0.0
        %1868 = vmatprep.subr.mxu0 0.0
        %1869 = vmatpush1.msra.mxu0 0.0
        %1870 = vmatprep.subr.mxu0 0.0
        %1871 = vmatpush1.msra.mxu0 0.0
        %1872 = vmatprep.subr.mxu0 0.0
        %1873 = vmatpush1.msra.mxu0 0.0
        %1874 = vmatprep.subr.mxu0 0.0
        %1875 = vmatpush1.msra.mxu0 0.0
        %1876 = vmatprep.subr.mxu0 0.0
        %1877 = vmatpush1.msra.mxu0 0.0
        %1878 = vmatprep.subr.mxu0 0.0
        %1879 = vmatpush1.msra.mxu0 0.0
        %1880 = vmatprep.subr.mxu0 0.0
        %1881 = vmatpush1.msra.mxu0 0.0
        %1882 = vmatprep.subr.mxu0 0.0
        %1883 = vmatpush1.msra.mxu0 0.0
        %1884 = vmatprep.subr.mxu0 0.0
        %1885 = vmatpush1.msra.mxu0 %v1694
        %1886 = vmatprep.subr.mxu0 0.0
        %1887 = vmatpush1.msra.mxu0 %v1693
        %1888 = vmatprep.subr.mxu0 0.0
        %1889 = vmatpush2.msra.mxu0 0.0
        %1890 = vmatprep.subr.mxu0 0.0
        %1891 = vmatpush2.msra.mxu0 0.0
        %1892 = vmatprep.subr.mxu0 0.0
        %1893 = vmatpush2.msra.mxu0 0.0
        %1894 = vmatprep.subr.mxu0 0.0
        %1895 = vmatpush2.msra.mxu0 0.0
        %1896 = vmatprep.subr.mxu0 0.0
        %1897 = vmatpush2.msra.mxu0 0.0
        %1898 = vmatprep.subr.mxu0 0.0
        %1899 = vmatpush2.msra.mxu0 0.0
        %1900 = vmatprep.subr.mxu0 0.0
        %1901 = vmatpush2.msra.mxu0 0.0
        %1902 = vmatprep.subr.mxu0 0.0
        %1903 = vmatpush2.msra.mxu0 0.0
        %1904 = vmatprep.subr.mxu0 0.0
        %1905 = vmatpush2.msra.mxu0 0.0
        %1906 = vmatprep.subr.mxu0 0.0
        %1907 = vmatpush2.msra.mxu0 0.0
        %1908 = vmatprep.subr.mxu0 0.0
        %1909 = vmatpush2.msra.mxu0 0.0
        %1910 = vmatprep.subr.mxu0 0.0
        %1911 = vmatpush2.msra.mxu0 0.0
        %1912 = vmatprep.subr.mxu0 0.0
        %1913 = vmatpush2.msra.mxu0 0.0
        %1914 = vmatprep.subr.mxu0 0.0
        %1915 = vmatpush2.msra.mxu0 0.0
        %1916 = vmatprep.subr.mxu0 0.0
        %1917 = vmatpush2.msra.mxu0 0.0
        %1918 = vmatprep.subr.mxu0 0.0
        %1919 = vmatpush2.msra.mxu0 0.0
        %1920 = vmatprep.mubr.f32.mxu0 0.0
        %1921 = vmatmul.mubr.f32.gmra.mxu0 %v819
        %v1922 = vpop.f32.mrf.mxu0
        %v1923 = vadd.f32 0.0, %v1922
        %v1924 = vpop.f32.mrf.mxu0
        %1925 = vmatprep.mubr.f32.mxu0 0.0
        %1926 = vmatmul.mubr.f32.gmra.mxu0 %v822
        %v1927 = vpop.f32.mrf.mxu0
        %v1928 = vadd.f32 0.0, %v1927
        %v1929 = vpop.f32.mrf.mxu0
        %1930 = vdwg.mxu0
        %1931 = vmatprep.subr.mxu0 0.0
        %1932 = vmatpush1.msra.mxu0 0.0
        %1933 = vmatprep.subr.mxu0 0.0
        %1934 = vmatpush1.msra.mxu0 0.0
        %1935 = vmatprep.subr.mxu0 0.0
        %1936 = vmatpush1.msra.mxu0 0.0
        %1937 = vmatprep.subr.mxu0 0.0
        %1938 = vmatpush1.msra.mxu0 0.0
        %1939 = vmatprep.subr.mxu0 0.0
        %1940 = vmatpush1.msra.mxu0 0.0
        %1941 = vmatprep.subr.mxu0 0.0
        %1942 = vmatpush1.msra.mxu0 0.0
        %1943 = vmatprep.subr.mxu0 0.0
        %1944 = vmatpush1.msra.mxu0 0.0
        %1945 = vmatprep.subr.mxu0 0.0
        %1946 = vmatpush1.msra.mxu0 0.0
        %1947 = vmatprep.subr.mxu0 0.0
        %1948 = vmatpush1.msra.mxu0 0.0
        %1949 = vmatprep.subr.mxu0 0.0
        %1950 = vmatpush1.msra.mxu0 0.0
        %1951 = vmatprep.subr.mxu0 0.0
        %1952 = vmatpush1.msra.mxu0 0.0
        %1953 = vmatprep.subr.mxu0 0.0
        %1954 = vmatpush1.msra.mxu0 0.0
        %1955 = vmatprep.subr.mxu0 0.0
        %1956 = vmatpush1.msra.mxu0 0.0
        %1957 = vmatprep.subr.mxu0 0.0
        %1958 = vmatpush1.msra.mxu0 0.0
        %1959 = vmatprep.subr.mxu0 0.0
        %1960 = vmatpush1.msra.mxu0 %v1696
        %1961 = vmatprep.subr.mxu0 0.0
        %1962 = vmatpush1.msra.mxu0 %v1695
        %1963 = vmatprep.subr.mxu0 0.0
        %1964 = vmatpush2.msra.mxu0 0.0
        %1965 = vmatprep.subr.mxu0 0.0
        %1966 = vmatpush2.msra.mxu0 0.0
        %1967 = vmatprep.subr.mxu0 0.0
        %1968 = vmatpush2.msra.mxu0 0.0
        %1969 = vmatprep.subr.mxu0 0.0
        %1970 = vmatpush2.msra.mxu0 0.0
        %1971 = vmatprep.subr.mxu0 0.0
        %1972 = vmatpush2.msra.mxu0 0.0
        %1973 = vmatprep.subr.mxu0 0.0
        %1974 = vmatpush2.msra.mxu0 0.0
        %1975 = vmatprep.subr.mxu0 0.0
        %1976 = vmatpush2.msra.mxu0 0.0
        %1977 = vmatprep.subr.mxu0 0.0
        %1978 = vmatpush2.msra.mxu0 0.0
        %1979 = vmatprep.subr.mxu0 0.0
        %1980 = vmatpush2.msra.mxu0 0.0
        %1981 = vmatprep.subr.mxu0 0.0
        %1982 = vmatpush2.msra.mxu0 0.0
        %1983 = vmatprep.subr.mxu0 0.0
        %1984 = vmatpush2.msra.mxu0 0.0
        %1985 = vmatprep.subr.mxu0 0.0
        %1986 = vmatpush2.msra.mxu0 0.0
        %1987 = vmatprep.subr.mxu0 0.0
        %1988 = vmatpush2.msra.mxu0 0.0
        %1989 = vmatprep.subr.mxu0 0.0
        %1990 = vmatpush2.msra.mxu0 0.0
        %1991 = vmatprep.subr.mxu0 0.0
        %1992 = vmatpush2.msra.mxu0 0.0
        %1993 = vmatprep.subr.mxu0 0.0
        %1994 = vmatpush2.msra.mxu0 0.0
        %1995 = vmatprep.mubr.f32.mxu0 0.0
        %1996 = vmatmul.mubr.f32.gmra.mxu0 %v900
        %v1997 = vpop.f32.mrf.mxu0
        %v1998 = vadd.f32 0.0, %v1997
        %v1999 = vpop.f32.mrf.mxu0
        %2000 = vmatprep.mubr.f32.mxu0 0.0
        %2001 = vmatmul.mubr.f32.gmra.mxu0 %v903
        %v2002 = vpop.f32.mrf.mxu0
        %v2003 = vadd.f32 0.0, %v2002
        %v2004 = vpop.f32.mrf.mxu0
        %2005 = vdwg.mxu0
        %2006 = vmatprep.subr.mxu0 0.0
        %2007 = vmatpush1.msra.mxu0 0.0
        %2008 = vmatprep.subr.mxu0 0.0
        %2009 = vmatpush1.msra.mxu0 0.0
        %2010 = vmatprep.subr.mxu0 0.0
        %2011 = vmatpush1.msra.mxu0 0.0
        %2012 = vmatprep.subr.mxu0 0.0
        %2013 = vmatpush1.msra.mxu0 0.0
        %2014 = vmatprep.subr.mxu0 0.0
        %2015 = vmatpush1.msra.mxu0 0.0
        %2016 = vmatprep.subr.mxu0 0.0
        %2017 = vmatpush1.msra.mxu0 0.0
        %2018 = vmatprep.subr.mxu0 0.0
        %2019 = vmatpush1.msra.mxu0 0.0
        %2020 = vmatprep.subr.mxu0 0.0
        %2021 = vmatpush1.msra.mxu0 0.0
        %2022 = vmatprep.subr.mxu0 0.0
        %2023 = vmatpush1.msra.mxu0 0.0
        %2024 = vmatprep.subr.mxu0 0.0
        %2025 = vmatpush1.msra.mxu0 0.0
        %2026 = vmatprep.subr.mxu0 0.0
        %2027 = vmatpush1.msra.mxu0 0.0
        %2028 = vmatprep.subr.mxu0 0.0
        %2029 = vmatpush1.msra.mxu0 0.0
        %2030 = vmatprep.subr.mxu0 0.0
        %2031 = vmatpush1.msra.mxu0 0.0
        %2032 = vmatprep.subr.mxu0 0.0
        %2033 = vmatpush1.msra.mxu0 0.0
        %2034 = vmatprep.subr.mxu0 0.0
        %2035 = vmatpush1.msra.mxu0 %v1698
        %2036 = vmatprep.subr.mxu0 0.0
        %2037 = vmatpush1.msra.mxu0 %v1697
        %2038 = vmatprep.subr.mxu0 0.0
        %2039 = vmatpush2.msra.mxu0 0.0
        %2040 = vmatprep.subr.mxu0 0.0
        %2041 = vmatpush2.msra.mxu0 0.0
        %2042 = vmatprep.subr.mxu0 0.0
        %2043 = vmatpush2.msra.mxu0 0.0
        %2044 = vmatprep.subr.mxu0 0.0
        %2045 = vmatpush2.msra.mxu0 0.0
        %2046 = vmatprep.subr.mxu0 0.0
        %2047 = vmatpush2.msra.mxu0 0.0
        %2048 = vmatprep.subr.mxu0 0.0
        %2049 = vmatpush2.msra.mxu0 0.0
        %2050 = vmatprep.subr.mxu0 0.0
        %2051 = vmatpush2.msra.mxu0 0.0
        %2052 = vmatprep.subr.mxu0 0.0
        %2053 = vmatpush2.msra.mxu0 0.0
        %2054 = vmatprep.subr.mxu0 0.0
        %2055 = vmatpush2.msra.mxu0 0.0
        %2056 = vmatprep.subr.mxu0 0.0
        %2057 = vmatpush2.msra.mxu0 0.0
        %2058 = vmatprep.subr.mxu0 0.0
        %2059 = vmatpush2.msra.mxu0 0.0
        %2060 = vmatprep.subr.mxu0 0.0
        %2061 = vmatpush2.msra.mxu0 0.0
        %2062 = vmatprep.subr.mxu0 0.0
        %2063 = vmatpush2.msra.mxu0 0.0
        %2064 = vmatprep.subr.mxu0 0.0
        %2065 = vmatpush2.msra.mxu0 0.0
        %2066 = vmatprep.subr.mxu0 0.0
        %2067 = vmatpush2.msra.mxu0 0.0
        %2068 = vmatprep.subr.mxu0 0.0
        %2069 = vmatpush2.msra.mxu0 0.0
        %2070 = vmatprep.mubr.f32.mxu0 0.0
        %2071 = vmatmul.mubr.f32.gmra.mxu0 %v981
        %v2072 = vpop.f32.mrf.mxu0
        %v2073 = vadd.f32 0.0, %v2072
        %v2074 = vpop.f32.mrf.mxu0
        %2075 = vmatprep.mubr.f32.mxu0 0.0
        %2076 = vmatmul.mubr.f32.gmra.mxu0 %v984
        %v2077 = vpop.f32.mrf.mxu0
        %v2078 = vadd.f32 0.0, %v2077
        %v2079 = vpop.f32.mrf.mxu0
        %2080 = vdwg.mxu0
        %2081 = vmatprep.subr.mxu0 0.0
        %2082 = vmatpush1.msra.mxu0 0.0
        %2083 = vmatprep.subr.mxu0 0.0
        %2084 = vmatpush1.msra.mxu0 0.0
        %2085 = vmatprep.subr.mxu0 0.0
        %2086 = vmatpush1.msra.mxu0 0.0
        %2087 = vmatprep.subr.mxu0 0.0
        %2088 = vmatpush1.msra.mxu0 0.0
        %2089 = vmatprep.subr.mxu0 0.0
        %2090 = vmatpush1.msra.mxu0 0.0
        %2091 = vmatprep.subr.mxu0 0.0
        %2092 = vmatpush1.msra.mxu0 0.0
        %2093 = vmatprep.subr.mxu0 0.0
        %2094 = vmatpush1.msra.mxu0 0.0
        %2095 = vmatprep.subr.mxu0 0.0
        %2096 = vmatpush1.msra.mxu0 0.0
        %2097 = vmatprep.subr.mxu0 0.0
        %2098 = vmatpush1.msra.mxu0 0.0
        %2099 = vmatprep.subr.mxu0 0.0
        %2100 = vmatpush1.msra.mxu0 0.0
        %2101 = vmatprep.subr.mxu0 0.0
        %2102 = vmatpush1.msra.mxu0 0.0
        %2103 = vmatprep.subr.mxu0 0.0
        %2104 = vmatpush1.msra.mxu0 0.0
        %2105 = vmatprep.subr.mxu0 0.0
        %2106 = vmatpush1.msra.mxu0 0.0
        %2107 = vmatprep.subr.mxu0 0.0
        %2108 = vmatpush1.msra.mxu0 0.0
        %2109 = vmatprep.subr.mxu0 0.0
        %2110 = vmatpush1.msra.mxu0 %v1700
        %2111 = vmatprep.subr.mxu0 0.0
        %2112 = vmatpush1.msra.mxu0 %v1699
        %2113 = vmatprep.subr.mxu0 0.0
        %2114 = vmatpush2.msra.mxu0 0.0
        %2115 = vmatprep.subr.mxu0 0.0
        %2116 = vmatpush2.msra.mxu0 0.0
        %2117 = vmatprep.subr.mxu0 0.0
        %2118 = vmatpush2.msra.mxu0 0.0
        %2119 = vmatprep.subr.mxu0 0.0
        %2120 = vmatpush2.msra.mxu0 0.0
        %2121 = vmatprep.subr.mxu0 0.0
        %2122 = vmatpush2.msra.mxu0 0.0
        %2123 = vmatprep.subr.mxu0 0.0
        %2124 = vmatpush2.msra.mxu0 0.0
        %2125 = vmatprep.subr.mxu0 0.0
        %2126 = vmatpush2.msra.mxu0 0.0
        %2127 = vmatprep.subr.mxu0 0.0
        %2128 = vmatpush2.msra.mxu0 0.0
        %2129 = vmatprep.subr.mxu0 0.0
        %2130 = vmatpush2.msra.mxu0 0.0
        %2131 = vmatprep.subr.mxu0 0.0
        %2132 = vmatpush2.msra.mxu0 0.0
        %2133 = vmatprep.subr.mxu0 0.0
        %2134 = vmatpush2.msra.mxu0 0.0
        %2135 = vmatprep.subr.mxu0 0.0
        %2136 = vmatpush2.msra.mxu0 0.0
        %2137 = vmatprep.subr.mxu0 0.0
        %2138 = vmatpush2.msra.mxu0 0.0
        %2139 = vmatprep.subr.mxu0 0.0
        %2140 = vmatpush2.msra.mxu0 0.0
        %2141 = vmatprep.subr.mxu0 0.0
        %2142 = vmatpush2.msra.mxu0 0.0
        %2143 = vmatprep.subr.mxu0 0.0
        %2144 = vmatpush2.msra.mxu0 0.0
        %2145 = vmatprep.mubr.f32.mxu0 0.0
        %2146 = vmatmul.mubr.f32.gmra.mxu0 %v1062
        %v2147 = vpop.f32.mrf.mxu0
        %v2148 = vadd.f32 0.0, %v2147
        %v2149 = vpop.f32.mrf.mxu0
        %2150 = vmatprep.mubr.f32.mxu0 0.0
        %2151 = vmatmul.mubr.f32.gmra.mxu0 %v1065
        %v2152 = vpop.f32.mrf.mxu0
        %v2153 = vadd.f32 0.0, %v2152
        %v2154 = vpop.f32.mrf.mxu0
        %2155 = vdwg.mxu0
        %2156 = vmatprep.subr.mxu0 0.0
        %2157 = vmatpush1.msra.mxu0 0.0
        %2158 = vmatprep.subr.mxu0 0.0
        %2159 = vmatpush1.msra.mxu0 0.0
        %2160 = vmatprep.subr.mxu0 0.0
        %2161 = vmatpush1.msra.mxu0 0.0
        %2162 = vmatprep.subr.mxu0 0.0
        %2163 = vmatpush1.msra.mxu0 0.0
        %2164 = vmatprep.subr.mxu0 0.0
        %2165 = vmatpush1.msra.mxu0 0.0
        %2166 = vmatprep.subr.mxu0 0.0
        %2167 = vmatpush1.msra.mxu0 0.0
        %2168 = vmatprep.subr.mxu0 0.0
        %2169 = vmatpush1.msra.mxu0 0.0
        %2170 = vmatprep.subr.mxu0 0.0
        %2171 = vmatpush1.msra.mxu0 0.0
        %2172 = vmatprep.subr.mxu0 0.0
        %2173 = vmatpush1.msra.mxu0 0.0
        %2174 = vmatprep.subr.mxu0 0.0
        %2175 = vmatpush1.msra.mxu0 0.0
        %2176 = vmatprep.subr.mxu0 0.0
        %2177 = vmatpush1.msra.mxu0 0.0
        %2178 = vmatprep.subr.mxu0 0.0
        %2179 = vmatpush1.msra.mxu0 0.0
        %2180 = vmatprep.subr.mxu0 0.0
        %2181 = vmatpush1.msra.mxu0 0.0
        %2182 = vmatprep.subr.mxu0 0.0
        %2183 = vmatpush1.msra.mxu0 0.0
        %2184 = vmatprep.subr.mxu0 0.0
        %2185 = vmatpush1.msra.mxu0 %v1702
        %2186 = vmatprep.subr.mxu0 0.0
        %2187 = vmatpush1.msra.mxu0 %v1701
        %2188 = vmatprep.subr.mxu0 0.0
        %2189 = vmatpush2.msra.mxu0 0.0
        %2190 = vmatprep.subr.mxu0 0.0
        %2191 = vmatpush2.msra.mxu0 0.0
        %2192 = vmatprep.subr.mxu0 0.0
        %2193 = vmatpush2.msra.mxu0 0.0
        %2194 = vmatprep.subr.mxu0 0.0
        %2195 = vmatpush2.msra.mxu0 0.0
        %2196 = vmatprep.subr.mxu0 0.0
        %2197 = vmatpush2.msra.mxu0 0.0
        %2198 = vmatprep.subr.mxu0 0.0
        %2199 = vmatpush2.msra.mxu0 0.0
        %2200 = vmatprep.subr.mxu0 0.0
        %2201 = vmatpush2.msra.mxu0 0.0
        %2202 = vmatprep.subr.mxu0 0.0
        %2203 = vmatpush2.msra.mxu0 0.0
        %2204 = vmatprep.subr.mxu0 0.0
        %2205 = vmatpush2.msra.mxu0 0.0
        %2206 = vmatprep.subr.mxu0 0.0
        %2207 = vmatpush2.msra.mxu0 0.0
        %2208 = vmatprep.subr.mxu0 0.0
        %2209 = vmatpush2.msra.mxu0 0.0
        %2210 = vmatprep.subr.mxu0 0.0
        %2211 = vmatpush2.msra.mxu0 0.0
        %2212 = vmatprep.subr.mxu0 0.0
        %2213 = vmatpush2.msra.mxu0 0.0
        %2214 = vmatprep.subr.mxu0 0.0
        %2215 = vmatpush2.msra.mxu0 0.0
        %2216 = vmatprep.subr.mxu0 0.0
        %2217 = vmatpush2.msra.mxu0 0.0
        %2218 = vmatprep.subr.mxu0 0.0
        %2219 = vmatpush2.msra.mxu0 0.0
        %2220 = vmatprep.mubr.f32.mxu0 0.0
        %2221 = vmatmul.mubr.f32.gmra.mxu0 %v1143
        %v2222 = vpop.f32.mrf.mxu0
        %v2223 = vadd.f32 0.0, %v2222
        %v2224 = vpop.f32.mrf.mxu0
        %2225 = vmatprep.mubr.f32.mxu0 0.0
        %2226 = vmatmul.mubr.f32.gmra.mxu0 %v1146
        %v2227 = vpop.f32.mrf.mxu0
        %v2228 = vadd.f32 0.0, %v2227
        %v2229 = vpop.f32.mrf.mxu0
        %2230 = vdwg.mxu0
        %2231 = vmatprep.subr.mxu0 0.0
        %2232 = vmatpush1.msra.mxu0 0.0
        %2233 = vmatprep.subr.mxu0 0.0
        %2234 = vmatpush1.msra.mxu0 0.0
        %2235 = vmatprep.subr.mxu0 0.0
        %2236 = vmatpush1.msra.mxu0 0.0
        %2237 = vmatprep.subr.mxu0 0.0
        %2238 = vmatpush1.msra.mxu0 0.0
        %2239 = vmatprep.subr.mxu0 0.0
        %2240 = vmatpush1.msra.mxu0 0.0
        %2241 = vmatprep.subr.mxu0 0.0
        %2242 = vmatpush1.msra.mxu0 0.0
        %2243 = vmatprep.subr.mxu0 0.0
        %2244 = vmatpush1.msra.mxu0 0.0
        %2245 = vmatprep.subr.mxu0 0.0
        %2246 = vmatpush1.msra.mxu0 0.0
        %2247 = vmatprep.subr.mxu0 0.0
        %2248 = vmatpush1.msra.mxu0 0.0
        %2249 = vmatprep.subr.mxu0 0.0
        %2250 = vmatpush1.msra.mxu0 0.0
        %2251 = vmatprep.subr.mxu0 0.0
        %2252 = vmatpush1.msra.mxu0 0.0
        %2253 = vmatprep.subr.mxu0 0.0
        %2254 = vmatpush1.msra.mxu0 0.0
        %2255 = vmatprep.subr.mxu0 0.0
        %2256 = vmatpush1.msra.mxu0 0.0
        %2257 = vmatprep.subr.mxu0 0.0
        %2258 = vmatpush1.msra.mxu0 0.0
        %2259 = vmatprep.subr.mxu0 0.0
        %2260 = vmatpush1.msra.mxu0 %v1704
        %2261 = vmatprep.subr.mxu0 0.0
        %2262 = vmatpush1.msra.mxu0 %v1703
        %2263 = vmatprep.subr.mxu0 0.0
        %2264 = vmatpush2.msra.mxu0 0.0
        %2265 = vmatprep.subr.mxu0 0.0
        %2266 = vmatpush2.msra.mxu0 0.0
        %2267 = vmatprep.subr.mxu0 0.0
        %2268 = vmatpush2.msra.mxu0 0.0
        %2269 = vmatprep.subr.mxu0 0.0
        %2270 = vmatpush2.msra.mxu0 0.0
        %2271 = vmatprep.subr.mxu0 0.0
        %2272 = vmatpush2.msra.mxu0 0.0
        %2273 = vmatprep.subr.mxu0 0.0
        %2274 = vmatpush2.msra.mxu0 0.0
        %2275 = vmatprep.subr.mxu0 0.0
        %2276 = vmatpush2.msra.mxu0 0.0
        %2277 = vmatprep.subr.mxu0 0.0
        %2278 = vmatpush2.msra.mxu0 0.0
        %2279 = vmatprep.subr.mxu0 0.0
        %2280 = vmatpush2.msra.mxu0 0.0
        %2281 = vmatprep.subr.mxu0 0.0
        %2282 = vmatpush2.msra.mxu0 0.0
        %2283 = vmatprep.subr.mxu0 0.0
        %2284 = vmatpush2.msra.mxu0 0.0
        %2285 = vmatprep.subr.mxu0 0.0
        %2286 = vmatpush2.msra.mxu0 0.0
        %2287 = vmatprep.subr.mxu0 0.0
        %2288 = vmatpush2.msra.mxu0 0.0
        %2289 = vmatprep.subr.mxu0 0.0
        %2290 = vmatpush2.msra.mxu0 0.0
        %2291 = vmatprep.subr.mxu0 0.0
        %2292 = vmatpush2.msra.mxu0 0.0
        %2293 = vmatprep.subr.mxu0 0.0
        %2294 = vmatpush2.msra.mxu0 0.0
        %2295 = vmatprep.mubr.f32.mxu0 0.0
        %2296 = vmatmul.mubr.f32.gmra.mxu0 %v1224
        %v2297 = vpop.f32.mrf.mxu0
        %v2298 = vadd.f32 0.0, %v2297
        %v2299 = vpop.f32.mrf.mxu0
        %2300 = vmatprep.mubr.f32.mxu0 0.0
        %2301 = vmatmul.mubr.f32.gmra.mxu0 %v1227
        %v2302 = vpop.f32.mrf.mxu0
        %v2303 = vadd.f32 0.0, %v2302
        %v2304 = vpop.f32.mrf.mxu0
        %2305 = vdwg.mxu0
        %v2306 = vstv %s1705
        %v2307 = vmul.f32 %v2306, %v1689
        %v2308 = vmul.f32 %v2306, %v1690
        %v2309 = vmul.f32 %v2306, %v1691
        %v2310 = vmul.f32 %v2306, %v1692
        %v2311 = vmul.f32 %v2306, %v1693
        %v2312 = vmul.f32 %v2306, %v1694
        %v2313 = vmul.f32 %v2306, %v1695
        %v2314 = vmul.f32 %v2306, %v1696
        %v2315 = vmul.f32 %v2306, %v1697
        %v2316 = vmul.f32 %v2306, %v1698
        %v2317 = vmul.f32 %v2306, %v1699
        %v2318 = vmul.f32 %v2306, %v1700
        %v2319 = vmul.f32 %v2306, %v1701
        %v2320 = vmul.f32 %v2306, %v1702
        %v2321 = vmul.f32 %v2306, %v1703
        %v2322 = vmul.f32 %v2306, %v1704
        %v2323 = vadd.f32 %v1773, %v2307
        %v2324 = vadd.f32 %v1778, %v2308
        %v2325 = vadd.f32 %v1848, %v2309
        %v2326 = vadd.f32 %v1853, %v2310
        %v2327 = vadd.f32 %v1923, %v2311
        %v2328 = vadd.f32 %v1928, %v2312
        %v2329 = vadd.f32 %v1998, %v2313
        %v2330 = vadd.f32 %v2003, %v2314
        %v2331 = vadd.f32 %v2073, %v2315
        %v2332 = vadd.f32 %v2078, %v2316
        %v2333 = vadd.f32 %v2148, %v2317
        %v2334 = vadd.f32 %v2153, %v2318
        %v2335 = vadd.f32 %v2223, %v2319
        %v2336 = vadd.f32 %v2228, %v2320
        %v2337 = vadd.f32 %v2298, %v2321
        %v2338 = vadd.f32 %v2303, %v2322
        %s2339 = scalar_lea.vmem [#allocation9], 128
        %v2340 = vld [vmem:[%s2339] sm:$0xff]
        %v2341 = vld [vmem:[%s2339 + $0x8] sm:$0xff]
        %v2342 = vld [vmem:[%s2339 + $0x10] sm:$0xff]
        %v2343 = vld [vmem:[%s2339 + $0x18] sm:$0xff]
        %v2344 = vld [vmem:[%s2339 + $0x20] sm:$0xff]
        %v2345 = vld [vmem:[%s2339 + $0x28] sm:$0xff]
        %v2346 = vld [vmem:[%s2339 + $0x30] sm:$0xff]
        %v2347 = vld [vmem:[%s2339 + $0x38] sm:$0xff]
        %v2348 = vld [vmem:[%s2339 + $0x40] sm:$0xff]
        %v2349 = vld [vmem:[%s2339 + $0x48] sm:$0xff]
        %v2350 = vld [vmem:[%s2339 + $0x50] sm:$0xff]
        %v2351 = vld [vmem:[%s2339 + $0x58] sm:$0xff]
        %v2352 = vld [vmem:[%s2339 + $0x60] sm:$0xff]
        %v2353 = vld [vmem:[%s2339 + $0x68] sm:$0xff]
        %v2354 = vld [vmem:[%s2339 + $0x70] sm:$0xff]
        %v2355 = vld [vmem:[%s2339 + $0x78] sm:$0xff]
        %s2356 = scalar_lea.vmem %s4, 1
        %v2357 = vld [vmem:[%s2356] sm:$0x1]
        %v2359 = vlaneseq
        %v2360 = vshrl.u32 %v2359, 7
        %v2361 = vsub.s32 0, %v2360
        %v2362 = vrot.slane %v2357, %v2361
        %2364 = vmatprep.subr.mxu0 0.0
        %2365 = vmatpush1.msra.mxu0 %v2355
        %2366 = vmatprep.subr.mxu0 0.0
        %2367 = vmatpush1.msra.mxu0 %v2354
        %2368 = vmatprep.subr.mxu0 0.0
        %2369 = vmatpush1.msra.mxu0 %v2353
        %2370 = vmatprep.subr.mxu0 0.0
        %2371 = vmatpush1.msra.mxu0 %v2352
        %2372 = vmatprep.subr.mxu0 0.0
        %2373 = vmatpush1.msra.mxu0 %v2351
        %2374 = vmatprep.subr.mxu0 0.0
        %2375 = vmatpush1.msra.mxu0 %v2350
        %2376 = vmatprep.subr.mxu0 0.0
        %2377 = vmatpush1.msra.mxu0 %v2349
        %2378 = vmatprep.subr.mxu0 0.0
        %2379 = vmatpush1.msra.mxu0 %v2348
        %2380 = vmatprep.subr.mxu0 0.0
        %2381 = vmatpush1.msra.mxu0 %v2347
        %2382 = vmatprep.subr.mxu0 0.0
        %2383 = vmatpush1.msra.mxu0 %v2346
        %2384 = vmatprep.subr.mxu0 0.0
        %2385 = vmatpush1.msra.mxu0 %v2345
        %2386 = vmatprep.subr.mxu0 0.0
        %2387 = vmatpush1.msra.mxu0 %v2344
        %2388 = vmatprep.subr.mxu0 0.0
        %2389 = vmatpush1.msra.mxu0 %v2343
        %2390 = vmatprep.subr.mxu0 0.0
        %2391 = vmatpush1.msra.mxu0 %v2342
        %2392 = vmatprep.subr.mxu0 0.0
        %2393 = vmatpush1.msra.mxu0 %v2341
        %2394 = vmatprep.subr.mxu0 0.0
        %2395 = vmatpush1.msra.mxu0 %v2340
        %2396 = vmatprep.subr.mxu0 0.0
        %2397 = vmatpush2.msra.mxu0 0.0
        %2398 = vmatprep.subr.mxu0 0.0
        %2399 = vmatpush2.msra.mxu0 0.0
        %2400 = vmatprep.subr.mxu0 0.0
        %2401 = vmatpush2.msra.mxu0 0.0
        %2402 = vmatprep.subr.mxu0 0.0
        %2403 = vmatpush2.msra.mxu0 0.0
        %2404 = vmatprep.subr.mxu0 0.0
        %2405 = vmatpush2.msra.mxu0 0.0
        %2406 = vmatprep.subr.mxu0 0.0
        %2407 = vmatpush2.msra.mxu0 0.0
        %2408 = vmatprep.subr.mxu0 0.0
        %2409 = vmatpush2.msra.mxu0 0.0
        %2410 = vmatprep.subr.mxu0 0.0
        %2411 = vmatpush2.msra.mxu0 0.0
        %2412 = vmatprep.subr.mxu0 0.0
        %2413 = vmatpush2.msra.mxu0 0.0
        %2414 = vmatprep.subr.mxu0 0.0
        %2415 = vmatpush2.msra.mxu0 0.0
        %2416 = vmatprep.subr.mxu0 0.0
        %2417 = vmatpush2.msra.mxu0 0.0
        %2418 = vmatprep.subr.mxu0 0.0
        %2419 = vmatpush2.msra.mxu0 0.0
        %2420 = vmatprep.subr.mxu0 0.0
        %2421 = vmatpush2.msra.mxu0 0.0
        %2422 = vmatprep.subr.mxu0 0.0
        %2423 = vmatpush2.msra.mxu0 0.0
        %2424 = vmatprep.subr.mxu0 0.0
        %2425 = vmatpush2.msra.mxu0 0.0
        %2426 = vmatprep.subr.mxu0 0.0
        %2427 = vmatpush2.msra.mxu0 0.0
        %2428 = vmatprep.mubr.f32.mxu0 0.0
        %2429 = vmatmul.mubr.f32.gmra.mxu0 %v2323
        %v2430 = vpop.f32.mrf.mxu0
        %v2431 = vadd.f32 %v2362, %v2430
        %v2432 = vpop.f32.mrf.mxu0
        %2433 = vmatprep.mubr.f32.mxu0 0.0
        %2434 = vmatmul.mubr.f32.gmra.mxu0 %v2324
        %v2435 = vpop.f32.mrf.mxu0
        %v2436 = vadd.f32 %v2362, %v2435
        %v2437 = vpop.f32.mrf.mxu0
        %2438 = vmatprep.mubr.f32.mxu0 0.0
        %2439 = vmatmul.mubr.f32.gmra.mxu0 %v2325
        %v2440 = vpop.f32.mrf.mxu0
        %v2441 = vadd.f32 %v2362, %v2440
        %v2442 = vpop.f32.mrf.mxu0
        %2443 = vmatprep.mubr.f32.mxu0 0.0
        %2444 = vmatmul.mubr.f32.gmra.mxu0 %v2326
        %v2445 = vpop.f32.mrf.mxu0
        %v2446 = vadd.f32 %v2362, %v2445
        %v2447 = vpop.f32.mrf.mxu0
        %2448 = vmatprep.mubr.f32.mxu0 0.0
        %2449 = vmatmul.mubr.f32.gmra.mxu0 %v2327
        %v2450 = vpop.f32.mrf.mxu0
        %v2451 = vadd.f32 %v2362, %v2450
        %v2452 = vpop.f32.mrf.mxu0
        %2453 = vmatprep.mubr.f32.mxu0 0.0
        %2454 = vmatmul.mubr.f32.gmra.mxu0 %v2328
        %v2455 = vpop.f32.mrf.mxu0
        %v2456 = vadd.f32 %v2362, %v2455
        %v2457 = vpop.f32.mrf.mxu0
        %2458 = vmatprep.mubr.f32.mxu0 0.0
        %2459 = vmatmul.mubr.f32.gmra.mxu0 %v2329
        %v2460 = vpop.f32.mrf.mxu0
        %v2461 = vadd.f32 %v2362, %v2460
        %v2462 = vpop.f32.mrf.mxu0
        %2463 = vmatprep.mubr.f32.mxu0 0.0
        %2464 = vmatmul.mubr.f32.gmra.mxu0 %v2330
        %v2465 = vpop.f32.mrf.mxu0
        %v2466 = vadd.f32 %v2362, %v2465
        %v2467 = vpop.f32.mrf.mxu0
        %2468 = vmatprep.mubr.f32.mxu0 0.0
        %2469 = vmatmul.mubr.f32.gmra.mxu0 %v2331
        %v2470 = vpop.f32.mrf.mxu0
        %v2471 = vadd.f32 %v2362, %v2470
        %v2472 = vpop.f32.mrf.mxu0
        %2473 = vmatprep.mubr.f32.mxu0 0.0
        %2474 = vmatmul.mubr.f32.gmra.mxu0 %v2332
        %v2475 = vpop.f32.mrf.mxu0
        %v2476 = vadd.f32 %v2362, %v2475
        %v2477 = vpop.f32.mrf.mxu0
        %2478 = vmatprep.mubr.f32.mxu0 0.0
        %2479 = vmatmul.mubr.f32.gmra.mxu0 %v2333
        %v2480 = vpop.f32.mrf.mxu0
        %v2481 = vadd.f32 %v2362, %v2480
        %v2482 = vpop.f32.mrf.mxu0
        %2483 = vmatprep.mubr.f32.mxu0 0.0
        %2484 = vmatmul.mubr.f32.gmra.mxu0 %v2334
        %v2485 = vpop.f32.mrf.mxu0
        %v2486 = vadd.f32 %v2362, %v2485
        %v2487 = vpop.f32.mrf.mxu0
        %2488 = vmatprep.mubr.f32.mxu0 0.0
        %2489 = vmatmul.mubr.f32.gmra.mxu0 %v2335
        %v2490 = vpop.f32.mrf.mxu0
        %v2491 = vadd.f32 %v2362, %v2490
        %v2492 = vpop.f32.mrf.mxu0
        %2493 = vmatprep.mubr.f32.mxu0 0.0
        %2494 = vmatmul.mubr.f32.gmra.mxu0 %v2336
        %v2495 = vpop.f32.mrf.mxu0
        %v2496 = vadd.f32 %v2362, %v2495
        %v2497 = vpop.f32.mrf.mxu0
        %2498 = vmatprep.mubr.f32.mxu0 0.0
        %2499 = vmatmul.mubr.f32.gmra.mxu0 %v2337
        %v2500 = vpop.f32.mrf.mxu0
        %v2501 = vadd.f32 %v2362, %v2500
        %v2502 = vpop.f32.mrf.mxu0
        %2503 = vmatprep.mubr.f32.mxu0 0.0
        %2504 = vmatmul.mubr.f32.gmra.mxu0 %v2338
        %v2505 = vpop.f32.mrf.mxu0
        %v2506 = vadd.f32 %v2362, %v2505
        %v2507 = vpop.f32.mrf.mxu0
        %2508 = vdwg.mxu0
        %v2509 = vmax.f32 %v2431, 0.0
        %v2510 = vmax.f32 %v2436, 0.0
        %v2511 = vmax.f32 %v2441, 0.0
        %v2512 = vmax.f32 %v2446, 0.0
        %v2513 = vmax.f32 %v2451, 0.0
        %v2514 = vmax.f32 %v2456, 0.0
        %v2515 = vmax.f32 %v2461, 0.0
        %v2516 = vmax.f32 %v2466, 0.0
        %v2517 = vmax.f32 %v2471, 0.0
        %v2518 = vmax.f32 %v2476, 0.0
        %v2519 = vmax.f32 %v2481, 0.0
        %v2520 = vmax.f32 %v2486, 0.0
        %v2521 = vmax.f32 %v2491, 0.0
        %v2522 = vmax.f32 %v2496, 0.0
        %v2523 = vmax.f32 %v2501, 0.0
        %v2524 = vmax.f32 %v2506, 0.0
        %s2525 = scalar_lea.vmem [#allocation10], 128
        %v2526 = vld [vmem:[%s2525] sm:$0xff]
        %v2527 = vld [vmem:[%s2525 + $0x8] sm:$0xff]
        %v2528 = vld [vmem:[%s2525 + $0x10] sm:$0xff]
        %v2529 = vld [vmem:[%s2525 + $0x18] sm:$0xff]
        %v2530 = vld [vmem:[%s2525 + $0x20] sm:$0xff]
        %v2531 = vld [vmem:[%s2525 + $0x28] sm:$0xff]
        %v2532 = vld [vmem:[%s2525 + $0x30] sm:$0xff]
        %v2533 = vld [vmem:[%s2525 + $0x38] sm:$0xff]
        %v2534 = vld [vmem:[%s2525 + $0x40] sm:$0xff]
        %v2535 = vld [vmem:[%s2525 + $0x48] sm:$0xff]
        %v2536 = vld [vmem:[%s2525 + $0x50] sm:$0xff]
        %v2537 = vld [vmem:[%s2525 + $0x58] sm:$0xff]
        %v2538 = vld [vmem:[%s2525 + $0x60] sm:$0xff]
        %v2539 = vld [vmem:[%s2525 + $0x68] sm:$0xff]
        %v2540 = vld [vmem:[%s2525 + $0x70] sm:$0xff]
        %v2541 = vld [vmem:[%s2525 + $0x78] sm:$0xff]
        %s2542 = scalar_lea.vmem %s6, 1
        %v2543 = vld [vmem:[%s2542] sm:$0x1]
        %v2545 = vlaneseq
        %v2546 = vshrl.u32 %v2545, 7
        %v2547 = vsub.s32 0, %v2546
        %v2548 = vrot.slane %v2543, %v2547
        %2550 = vmatprep.subr.mxu0 0.0
        %2551 = vmatpush1.msra.mxu0 %v2541
        %2552 = vmatprep.subr.mxu0 0.0
        %2553 = vmatpush1.msra.mxu0 %v2540
        %2554 = vmatprep.subr.mxu0 0.0
        %2555 = vmatpush1.msra.mxu0 %v2539
        %2556 = vmatprep.subr.mxu0 0.0
        %2557 = vmatpush1.msra.mxu0 %v2538
        %2558 = vmatprep.subr.mxu0 0.0
        %2559 = vmatpush1.msra.mxu0 %v2537
        %2560 = vmatprep.subr.mxu0 0.0
        %2561 = vmatpush1.msra.mxu0 %v2536
        %2562 = vmatprep.subr.mxu0 0.0
        %2563 = vmatpush1.msra.mxu0 %v2535
        %2564 = vmatprep.subr.mxu0 0.0
        %2565 = vmatpush1.msra.mxu0 %v2534
        %2566 = vmatprep.subr.mxu0 0.0
        %2567 = vmatpush1.msra.mxu0 %v2533
        %2568 = vmatprep.subr.mxu0 0.0
        %2569 = vmatpush1.msra.mxu0 %v2532
        %2570 = vmatprep.subr.mxu0 0.0
        %2571 = vmatpush1.msra.mxu0 %v2531
        %2572 = vmatprep.subr.mxu0 0.0
        %2573 = vmatpush1.msra.mxu0 %v2530
        %2574 = vmatprep.subr.mxu0 0.0
        %2575 = vmatpush1.msra.mxu0 %v2529
        %2576 = vmatprep.subr.mxu0 0.0
        %2577 = vmatpush1.msra.mxu0 %v2528
        %2578 = vmatprep.subr.mxu0 0.0
        %2579 = vmatpush1.msra.mxu0 %v2527
        %2580 = vmatprep.subr.mxu0 0.0
        %2581 = vmatpush1.msra.mxu0 %v2526
        %2582 = vmatprep.subr.mxu0 0.0
        %2583 = vmatpush2.msra.mxu0 0.0
        %2584 = vmatprep.subr.mxu0 0.0
        %2585 = vmatpush2.msra.mxu0 0.0
        %2586 = vmatprep.subr.mxu0 0.0
        %2587 = vmatpush2.msra.mxu0 0.0
        %2588 = vmatprep.subr.mxu0 0.0
        %2589 = vmatpush2.msra.mxu0 0.0
        %2590 = vmatprep.subr.mxu0 0.0
        %2591 = vmatpush2.msra.mxu0 0.0
        %2592 = vmatprep.subr.mxu0 0.0
        %2593 = vmatpush2.msra.mxu0 0.0
        %2594 = vmatprep.subr.mxu0 0.0
        %2595 = vmatpush2.msra.mxu0 0.0
        %2596 = vmatprep.subr.mxu0 0.0
        %2597 = vmatpush2.msra.mxu0 0.0
        %2598 = vmatprep.subr.mxu0 0.0
        %2599 = vmatpush2.msra.mxu0 0.0
        %2600 = vmatprep.subr.mxu0 0.0
        %2601 = vmatpush2.msra.mxu0 0.0
        %2602 = vmatprep.subr.mxu0 0.0
        %2603 = vmatpush2.msra.mxu0 0.0
        %2604 = vmatprep.subr.mxu0 0.0
        %2605 = vmatpush2.msra.mxu0 0.0
        %2606 = vmatprep.subr.mxu0 0.0
        %2607 = vmatpush2.msra.mxu0 0.0
        %2608 = vmatprep.subr.mxu0 0.0
        %2609 = vmatpush2.msra.mxu0 0.0
        %2610 = vmatprep.subr.mxu0 0.0
        %2611 = vmatpush2.msra.mxu0 0.0
        %2612 = vmatprep.subr.mxu0 0.0
        %2613 = vmatpush2.msra.mxu0 0.0
        %2614 = vmatprep.mubr.f32.mxu0 0.0
        %2615 = vmatmul.mubr.f32.gmra.mxu0 %v2509
        %v2616 = vpop.f32.mrf.mxu0
        %v2617 = vadd.f32 %v2548, %v2616
        %v2618 = vpop.f32.mrf.mxu0
        %2619 = vmatprep.mubr.f32.mxu0 0.0
        %2620 = vmatmul.mubr.f32.gmra.mxu0 %v2510
        %v2621 = vpop.f32.mrf.mxu0
        %v2622 = vadd.f32 %v2548, %v2621
        %v2623 = vpop.f32.mrf.mxu0
        %2624 = vmatprep.mubr.f32.mxu0 0.0
        %2625 = vmatmul.mubr.f32.gmra.mxu0 %v2511
        %v2626 = vpop.f32.mrf.mxu0
        %v2627 = vadd.f32 %v2548, %v2626
        %v2628 = vpop.f32.mrf.mxu0
        %2629 = vmatprep.mubr.f32.mxu0 0.0
        %2630 = vmatmul.mubr.f32.gmra.mxu0 %v2512
        %v2631 = vpop.f32.mrf.mxu0
        %v2632 = vadd.f32 %v2548, %v2631
        %v2633 = vpop.f32.mrf.mxu0
        %2634 = vmatprep.mubr.f32.mxu0 0.0
        %2635 = vmatmul.mubr.f32.gmra.mxu0 %v2513
        %v2636 = vpop.f32.mrf.mxu0
        %v2637 = vadd.f32 %v2548, %v2636
        %v2638 = vpop.f32.mrf.mxu0
        %2639 = vmatprep.mubr.f32.mxu0 0.0
        %2640 = vmatmul.mubr.f32.gmra.mxu0 %v2514
        %v2641 = vpop.f32.mrf.mxu0
        %v2642 = vadd.f32 %v2548, %v2641
        %v2643 = vpop.f32.mrf.mxu0
        %2644 = vmatprep.mubr.f32.mxu0 0.0
        %2645 = vmatmul.mubr.f32.gmra.mxu0 %v2515
        %v2646 = vpop.f32.mrf.mxu0
        %v2647 = vadd.f32 %v2548, %v2646
        %v2648 = vpop.f32.mrf.mxu0
        %2649 = vmatprep.mubr.f32.mxu0 0.0
        %2650 = vmatmul.mubr.f32.gmra.mxu0 %v2516
        %v2651 = vpop.f32.mrf.mxu0
        %v2652 = vadd.f32 %v2548, %v2651
        %v2653 = vpop.f32.mrf.mxu0
        %2654 = vmatprep.mubr.f32.mxu0 0.0
        %2655 = vmatmul.mubr.f32.gmra.mxu0 %v2517
        %v2656 = vpop.f32.mrf.mxu0
        %v2657 = vadd.f32 %v2548, %v2656
        %v2658 = vpop.f32.mrf.mxu0
        %2659 = vmatprep.mubr.f32.mxu0 0.0
        %2660 = vmatmul.mubr.f32.gmra.mxu0 %v2518
        %v2661 = vpop.f32.mrf.mxu0
        %v2662 = vadd.f32 %v2548, %v2661
        %v2663 = vpop.f32.mrf.mxu0
        %2664 = vmatprep.mubr.f32.mxu0 0.0
        %2665 = vmatmul.mubr.f32.gmra.mxu0 %v2519
        %v2666 = vpop.f32.mrf.mxu0
        %v2667 = vadd.f32 %v2548, %v2666
        %v2668 = vpop.f32.mrf.mxu0
        %2669 = vmatprep.mubr.f32.mxu0 0.0
        %2670 = vmatmul.mubr.f32.gmra.mxu0 %v2520
        %v2671 = vpop.f32.mrf.mxu0
        %v2672 = vadd.f32 %v2548, %v2671
        %v2673 = vpop.f32.mrf.mxu0
        %2674 = vmatprep.mubr.f32.mxu0 0.0
        %2675 = vmatmul.mubr.f32.gmra.mxu0 %v2521
        %v2676 = vpop.f32.mrf.mxu0
        %v2677 = vadd.f32 %v2548, %v2676
        %v2678 = vpop.f32.mrf.mxu0
        %2679 = vmatprep.mubr.f32.mxu0 0.0
        %2680 = vmatmul.mubr.f32.gmra.mxu0 %v2522
        %v2681 = vpop.f32.mrf.mxu0
        %v2682 = vadd.f32 %v2548, %v2681
        %v2683 = vpop.f32.mrf.mxu0
        %2684 = vmatprep.mubr.f32.mxu0 0.0
        %2685 = vmatmul.mubr.f32.gmra.mxu0 %v2523
        %v2686 = vpop.f32.mrf.mxu0
        %v2687 = vadd.f32 %v2548, %v2686
        %v2688 = vpop.f32.mrf.mxu0
        %2689 = vmatprep.mubr.f32.mxu0 0.0
        %2690 = vmatmul.mubr.f32.gmra.mxu0 %v2524
        %v2691 = vpop.f32.mrf.mxu0
        %v2692 = vadd.f32 %v2548, %v2691
        %v2693 = vpop.f32.mrf.mxu0
        %2694 = vdwg.mxu0
        %v2695 = vmax.f32 %v2617, 0.0
        %v2696 = vmax.f32 %v2622, 0.0
        %v2697 = vmax.f32 %v2627, 0.0
        %v2698 = vmax.f32 %v2632, 0.0
        %v2699 = vmax.f32 %v2637, 0.0
        %v2700 = vmax.f32 %v2642, 0.0
        %v2701 = vmax.f32 %v2647, 0.0
        %v2702 = vmax.f32 %v2652, 0.0
        %v2703 = vmax.f32 %v2657, 0.0
        %v2704 = vmax.f32 %v2662, 0.0
        %v2705 = vmax.f32 %v2667, 0.0
        %v2706 = vmax.f32 %v2672, 0.0
        %v2707 = vmax.f32 %v2677, 0.0
        %v2708 = vmax.f32 %v2682, 0.0
        %v2709 = vmax.f32 %v2687, 0.0
        %v2710 = vmax.f32 %v2692, 0.0
        %s2711 = sld [smem:[#allocation3 + $0x2]]
        %2712 = vmatprep.subr.mxu0 0.0
        %2713 = vmatpush1.msra.mxu0 0.0
        %2714 = vmatprep.subr.mxu0 0.0
        %2715 = vmatpush1.msra.mxu0 0.0
        %2716 = vmatprep.subr.mxu0 0.0
        %2717 = vmatpush1.msra.mxu0 0.0
        %2718 = vmatprep.subr.mxu0 0.0
        %2719 = vmatpush1.msra.mxu0 0.0
        %2720 = vmatprep.subr.mxu0 0.0
        %2721 = vmatpush1.msra.mxu0 0.0
        %2722 = vmatprep.subr.mxu0 0.0
        %2723 = vmatpush1.msra.mxu0 0.0
        %2724 = vmatprep.subr.mxu0 0.0
        %2725 = vmatpush1.msra.mxu0 0.0
        %2726 = vmatprep.subr.mxu0 0.0
        %2727 = vmatpush1.msra.mxu0 0.0
        %2728 = vmatprep.subr.mxu0 0.0
        %2729 = vmatpush1.msra.mxu0 0.0
        %2730 = vmatprep.subr.mxu0 0.0
        %2731 = vmatpush1.msra.mxu0 0.0
        %2732 = vmatprep.subr.mxu0 0.0
        %2733 = vmatpush1.msra.mxu0 0.0
        %2734 = vmatprep.subr.mxu0 0.0
        %2735 = vmatpush1.msra.mxu0 0.0
        %2736 = vmatprep.subr.mxu0 0.0
        %2737 = vmatpush1.msra.mxu0 0.0
        %2738 = vmatprep.subr.mxu0 0.0
        %2739 = vmatpush1.msra.mxu0 0.0
        %2740 = vmatprep.subr.mxu0 0.0
        %2741 = vmatpush1.msra.mxu0 %v2696
        %2742 = vmatprep.subr.mxu0 0.0
        %2743 = vmatpush1.msra.mxu0 %v2695
        %2744 = vmatprep.subr.mxu0 0.0
        %2745 = vmatpush2.msra.mxu0 0.0
        %2746 = vmatprep.subr.mxu0 0.0
        %2747 = vmatpush2.msra.mxu0 0.0
        %2748 = vmatprep.subr.mxu0 0.0
        %2749 = vmatpush2.msra.mxu0 0.0
        %2750 = vmatprep.subr.mxu0 0.0
        %2751 = vmatpush2.msra.mxu0 0.0
        %2752 = vmatprep.subr.mxu0 0.0
        %2753 = vmatpush2.msra.mxu0 0.0
        %2754 = vmatprep.subr.mxu0 0.0
        %2755 = vmatpush2.msra.mxu0 0.0
        %2756 = vmatprep.subr.mxu0 0.0
        %2757 = vmatpush2.msra.mxu0 0.0
        %2758 = vmatprep.subr.mxu0 0.0
        %2759 = vmatpush2.msra.mxu0 0.0
        %2760 = vmatprep.subr.mxu0 0.0
        %2761 = vmatpush2.msra.mxu0 0.0
        %2762 = vmatprep.subr.mxu0 0.0
        %2763 = vmatpush2.msra.mxu0 0.0
        %2764 = vmatprep.subr.mxu0 0.0
        %2765 = vmatpush2.msra.mxu0 0.0
        %2766 = vmatprep.subr.mxu0 0.0
        %2767 = vmatpush2.msra.mxu0 0.0
        %2768 = vmatprep.subr.mxu0 0.0
        %2769 = vmatpush2.msra.mxu0 0.0
        %2770 = vmatprep.subr.mxu0 0.0
        %2771 = vmatpush2.msra.mxu0 0.0
        %2772 = vmatprep.subr.mxu0 0.0
        %2773 = vmatpush2.msra.mxu0 0.0
        %2774 = vmatprep.subr.mxu0 0.0
        %2775 = vmatpush2.msra.mxu0 0.0
        %2776 = vmatprep.mubr.f32.mxu0 0.0
        %2777 = vmatmul.mubr.f32.gmra.mxu0 %v657
        %v2778 = vpop.f32.mrf.mxu0
        %v2779 = vadd.f32 0.0, %v2778
        %v2780 = vpop.f32.mrf.mxu0
        %2781 = vmatprep.mubr.f32.mxu0 0.0
        %2782 = vmatmul.mubr.f32.gmra.mxu0 %v660
        %v2783 = vpop.f32.mrf.mxu0
        %v2784 = vadd.f32 0.0, %v2783
        %v2785 = vpop.f32.mrf.mxu0
        %2786 = vdwg.mxu0
        %2787 = vmatprep.subr.mxu0 0.0
        %2788 = vmatpush1.msra.mxu0 0.0
        %2789 = vmatprep.subr.mxu0 0.0
        %2790 = vmatpush1.msra.mxu0 0.0
        %2791 = vmatprep.subr.mxu0 0.0
        %2792 = vmatpush1.msra.mxu0 0.0
        %2793 = vmatprep.subr.mxu0 0.0
        %2794 = vmatpush1.msra.mxu0 0.0
        %2795 = vmatprep.subr.mxu0 0.0
        %2796 = vmatpush1.msra.mxu0 0.0
        %2797 = vmatprep.subr.mxu0 0.0
        %2798 = vmatpush1.msra.mxu0 0.0
        %2799 = vmatprep.subr.mxu0 0.0
        %2800 = vmatpush1.msra.mxu0 0.0
        %2801 = vmatprep.subr.mxu0 0.0
        %2802 = vmatpush1.msra.mxu0 0.0
        %2803 = vmatprep.subr.mxu0 0.0
        %2804 = vmatpush1.msra.mxu0 0.0
        %2805 = vmatprep.subr.mxu0 0.0
        %2806 = vmatpush1.msra.mxu0 0.0
        %2807 = vmatprep.subr.mxu0 0.0
        %2808 = vmatpush1.msra.mxu0 0.0
        %2809 = vmatprep.subr.mxu0 0.0
        %2810 = vmatpush1.msra.mxu0 0.0
        %2811 = vmatprep.subr.mxu0 0.0
        %2812 = vmatpush1.msra.mxu0 0.0
        %2813 = vmatprep.subr.mxu0 0.0
        %2814 = vmatpush1.msra.mxu0 0.0
        %2815 = vmatprep.subr.mxu0 0.0
        %2816 = vmatpush1.msra.mxu0 %v2698
        %2817 = vmatprep.subr.mxu0 0.0
        %2818 = vmatpush1.msra.mxu0 %v2697
        %2819 = vmatprep.subr.mxu0 0.0
        %2820 = vmatpush2.msra.mxu0 0.0
        %2821 = vmatprep.subr.mxu0 0.0
        %2822 = vmatpush2.msra.mxu0 0.0
        %2823 = vmatprep.subr.mxu0 0.0
        %2824 = vmatpush2.msra.mxu0 0.0
        %2825 = vmatprep.subr.mxu0 0.0
        %2826 = vmatpush2.msra.mxu0 0.0
        %2827 = vmatprep.subr.mxu0 0.0
        %2828 = vmatpush2.msra.mxu0 0.0
        %2829 = vmatprep.subr.mxu0 0.0
        %2830 = vmatpush2.msra.mxu0 0.0
        %2831 = vmatprep.subr.mxu0 0.0
        %2832 = vmatpush2.msra.mxu0 0.0
        %2833 = vmatprep.subr.mxu0 0.0
        %2834 = vmatpush2.msra.mxu0 0.0
        %2835 = vmatprep.subr.mxu0 0.0
        %2836 = vmatpush2.msra.mxu0 0.0
        %2837 = vmatprep.subr.mxu0 0.0
        %2838 = vmatpush2.msra.mxu0 0.0
        %2839 = vmatprep.subr.mxu0 0.0
        %2840 = vmatpush2.msra.mxu0 0.0
        %2841 = vmatprep.subr.mxu0 0.0
        %2842 = vmatpush2.msra.mxu0 0.0
        %2843 = vmatprep.subr.mxu0 0.0
        %2844 = vmatpush2.msra.mxu0 0.0
        %2845 = vmatprep.subr.mxu0 0.0
        %2846 = vmatpush2.msra.mxu0 0.0
        %2847 = vmatprep.subr.mxu0 0.0
        %2848 = vmatpush2.msra.mxu0 0.0
        %2849 = vmatprep.subr.mxu0 0.0
        %2850 = vmatpush2.msra.mxu0 0.0
        %2851 = vmatprep.mubr.f32.mxu0 0.0
        %2852 = vmatmul.mubr.f32.gmra.mxu0 %v738
        %v2853 = vpop.f32.mrf.mxu0
        %v2854 = vadd.f32 0.0, %v2853
        %v2855 = vpop.f32.mrf.mxu0
        %2856 = vmatprep.mubr.f32.mxu0 0.0
        %2857 = vmatmul.mubr.f32.gmra.mxu0 %v741
        %v2858 = vpop.f32.mrf.mxu0
        %v2859 = vadd.f32 0.0, %v2858
        %v2860 = vpop.f32.mrf.mxu0
        %2861 = vdwg.mxu0
        %2862 = vmatprep.subr.mxu0 0.0
        %2863 = vmatpush1.msra.mxu0 0.0
        %2864 = vmatprep.subr.mxu0 0.0
        %2865 = vmatpush1.msra.mxu0 0.0
        %2866 = vmatprep.subr.mxu0 0.0
        %2867 = vmatpush1.msra.mxu0 0.0
        %2868 = vmatprep.subr.mxu0 0.0
        %2869 = vmatpush1.msra.mxu0 0.0
        %2870 = vmatprep.subr.mxu0 0.0
        %2871 = vmatpush1.msra.mxu0 0.0
        %2872 = vmatprep.subr.mxu0 0.0
        %2873 = vmatpush1.msra.mxu0 0.0
        %2874 = vmatprep.subr.mxu0 0.0
        %2875 = vmatpush1.msra.mxu0 0.0
        %2876 = vmatprep.subr.mxu0 0.0
        %2877 = vmatpush1.msra.mxu0 0.0
        %2878 = vmatprep.subr.mxu0 0.0
        %2879 = vmatpush1.msra.mxu0 0.0
        %2880 = vmatprep.subr.mxu0 0.0
        %2881 = vmatpush1.msra.mxu0 0.0
        %2882 = vmatprep.subr.mxu0 0.0
        %2883 = vmatpush1.msra.mxu0 0.0
        %2884 = vmatprep.subr.mxu0 0.0
        %2885 = vmatpush1.msra.mxu0 0.0
        %2886 = vmatprep.subr.mxu0 0.0
        %2887 = vmatpush1.msra.mxu0 0.0
        %2888 = vmatprep.subr.mxu0 0.0
        %2889 = vmatpush1.msra.mxu0 0.0
        %2890 = vmatprep.subr.mxu0 0.0
        %2891 = vmatpush1.msra.mxu0 %v2700
        %2892 = vmatprep.subr.mxu0 0.0
        %2893 = vmatpush1.msra.mxu0 %v2699
        %2894 = vmatprep.subr.mxu0 0.0
        %2895 = vmatpush2.msra.mxu0 0.0
        %2896 = vmatprep.subr.mxu0 0.0
        %2897 = vmatpush2.msra.mxu0 0.0
        %2898 = vmatprep.subr.mxu0 0.0
        %2899 = vmatpush2.msra.mxu0 0.0
        %2900 = vmatprep.subr.mxu0 0.0
        %2901 = vmatpush2.msra.mxu0 0.0
        %2902 = vmatprep.subr.mxu0 0.0
        %2903 = vmatpush2.msra.mxu0 0.0
        %2904 = vmatprep.subr.mxu0 0.0
        %2905 = vmatpush2.msra.mxu0 0.0
        %2906 = vmatprep.subr.mxu0 0.0
        %2907 = vmatpush2.msra.mxu0 0.0
        %2908 = vmatprep.subr.mxu0 0.0
        %2909 = vmatpush2.msra.mxu0 0.0
        %2910 = vmatprep.subr.mxu0 0.0
        %2911 = vmatpush2.msra.mxu0 0.0
        %2912 = vmatprep.subr.mxu0 0.0
        %2913 = vmatpush2.msra.mxu0 0.0
        %2914 = vmatprep.subr.mxu0 0.0
        %2915 = vmatpush2.msra.mxu0 0.0
        %2916 = vmatprep.subr.mxu0 0.0
        %2917 = vmatpush2.msra.mxu0 0.0
        %2918 = vmatprep.subr.mxu0 0.0
        %2919 = vmatpush2.msra.mxu0 0.0
        %2920 = vmatprep.subr.mxu0 0.0
        %2921 = vmatpush2.msra.mxu0 0.0
        %2922 = vmatprep.subr.mxu0 0.0
        %2923 = vmatpush2.msra.mxu0 0.0
        %2924 = vmatprep.subr.mxu0 0.0
        %2925 = vmatpush2.msra.mxu0 0.0
        %2926 = vmatprep.mubr.f32.mxu0 0.0
        %2927 = vmatmul.mubr.f32.gmra.mxu0 %v819
        %v2928 = vpop.f32.mrf.mxu0
        %v2929 = vadd.f32 0.0, %v2928
        %v2930 = vpop.f32.mrf.mxu0
        %2931 = vmatprep.mubr.f32.mxu0 0.0
        %2932 = vmatmul.mubr.f32.gmra.mxu0 %v822
        %v2933 = vpop.f32.mrf.mxu0
        %v2934 = vadd.f32 0.0, %v2933
        %v2935 = vpop.f32.mrf.mxu0
        %2936 = vdwg.mxu0
        %2937 = vmatprep.subr.mxu0 0.0
        %2938 = vmatpush1.msra.mxu0 0.0
        %2939 = vmatprep.subr.mxu0 0.0
        %2940 = vmatpush1.msra.mxu0 0.0
        %2941 = vmatprep.subr.mxu0 0.0
        %2942 = vmatpush1.msra.mxu0 0.0
        %2943 = vmatprep.subr.mxu0 0.0
        %2944 = vmatpush1.msra.mxu0 0.0
        %2945 = vmatprep.subr.mxu0 0.0
        %2946 = vmatpush1.msra.mxu0 0.0
        %2947 = vmatprep.subr.mxu0 0.0
        %2948 = vmatpush1.msra.mxu0 0.0
        %2949 = vmatprep.subr.mxu0 0.0
        %2950 = vmatpush1.msra.mxu0 0.0
        %2951 = vmatprep.subr.mxu0 0.0
        %2952 = vmatpush1.msra.mxu0 0.0
        %2953 = vmatprep.subr.mxu0 0.0
        %2954 = vmatpush1.msra.mxu0 0.0
        %2955 = vmatprep.subr.mxu0 0.0
        %2956 = vmatpush1.msra.mxu0 0.0
        %2957 = vmatprep.subr.mxu0 0.0
        %2958 = vmatpush1.msra.mxu0 0.0
        %2959 = vmatprep.subr.mxu0 0.0
        %2960 = vmatpush1.msra.mxu0 0.0
        %2961 = vmatprep.subr.mxu0 0.0
        %2962 = vmatpush1.msra.mxu0 0.0
        %2963 = vmatprep.subr.mxu0 0.0
        %2964 = vmatpush1.msra.mxu0 0.0
        %2965 = vmatprep.subr.mxu0 0.0
        %2966 = vmatpush1.msra.mxu0 %v2702
        %2967 = vmatprep.subr.mxu0 0.0
        %2968 = vmatpush1.msra.mxu0 %v2701
        %2969 = vmatprep.subr.mxu0 0.0
        %2970 = vmatpush2.msra.mxu0 0.0
        %2971 = vmatprep.subr.mxu0 0.0
        %2972 = vmatpush2.msra.mxu0 0.0
        %2973 = vmatprep.subr.mxu0 0.0
        %2974 = vmatpush2.msra.mxu0 0.0
        %2975 = vmatprep.subr.mxu0 0.0
        %2976 = vmatpush2.msra.mxu0 0.0
        %2977 = vmatprep.subr.mxu0 0.0
        %2978 = vmatpush2.msra.mxu0 0.0
        %2979 = vmatprep.subr.mxu0 0.0
        %2980 = vmatpush2.msra.mxu0 0.0
        %2981 = vmatprep.subr.mxu0 0.0
        %2982 = vmatpush2.msra.mxu0 0.0
        %2983 = vmatprep.subr.mxu0 0.0
        %2984 = vmatpush2.msra.mxu0 0.0
        %2985 = vmatprep.subr.mxu0 0.0
        %2986 = vmatpush2.msra.mxu0 0.0
        %2987 = vmatprep.subr.mxu0 0.0
        %2988 = vmatpush2.msra.mxu0 0.0
        %2989 = vmatprep.subr.mxu0 0.0
        %2990 = vmatpush2.msra.mxu0 0.0
        %2991 = vmatprep.subr.mxu0 0.0
        %2992 = vmatpush2.msra.mxu0 0.0
        %2993 = vmatprep.subr.mxu0 0.0
        %2994 = vmatpush2.msra.mxu0 0.0
        %2995 = vmatprep.subr.mxu0 0.0
        %2996 = vmatpush2.msra.mxu0 0.0
        %2997 = vmatprep.subr.mxu0 0.0
        %2998 = vmatpush2.msra.mxu0 0.0
        %2999 = vmatprep.subr.mxu0 0.0
        %3000 = vmatpush2.msra.mxu0 0.0
        %3001 = vmatprep.mubr.f32.mxu0 0.0
        %3002 = vmatmul.mubr.f32.gmra.mxu0 %v900
        %v3003 = vpop.f32.mrf.mxu0
        %v3004 = vadd.f32 0.0, %v3003
        %v3005 = vpop.f32.mrf.mxu0
        %3006 = vmatprep.mubr.f32.mxu0 0.0
        %3007 = vmatmul.mubr.f32.gmra.mxu0 %v903
        %v3008 = vpop.f32.mrf.mxu0
        %v3009 = vadd.f32 0.0, %v3008
        %v3010 = vpop.f32.mrf.mxu0
        %3011 = vdwg.mxu0
        %3012 = vmatprep.subr.mxu0 0.0
        %3013 = vmatpush1.msra.mxu0 0.0
        %3014 = vmatprep.subr.mxu0 0.0
        %3015 = vmatpush1.msra.mxu0 0.0
        %3016 = vmatprep.subr.mxu0 0.0
        %3017 = vmatpush1.msra.mxu0 0.0
        %3018 = vmatprep.subr.mxu0 0.0
        %3019 = vmatpush1.msra.mxu0 0.0
        %3020 = vmatprep.subr.mxu0 0.0
        %3021 = vmatpush1.msra.mxu0 0.0
        %3022 = vmatprep.subr.mxu0 0.0
        %3023 = vmatpush1.msra.mxu0 0.0
        %3024 = vmatprep.subr.mxu0 0.0
        %3025 = vmatpush1.msra.mxu0 0.0
        %3026 = vmatprep.subr.mxu0 0.0
        %3027 = vmatpush1.msra.mxu0 0.0
        %3028 = vmatprep.subr.mxu0 0.0
        %3029 = vmatpush1.msra.mxu0 0.0
        %3030 = vmatprep.subr.mxu0 0.0
        %3031 = vmatpush1.msra.mxu0 0.0
        %3032 = vmatprep.subr.mxu0 0.0
        %3033 = vmatpush1.msra.mxu0 0.0
        %3034 = vmatprep.subr.mxu0 0.0
        %3035 = vmatpush1.msra.mxu0 0.0
        %3036 = vmatprep.subr.mxu0 0.0
        %3037 = vmatpush1.msra.mxu0 0.0
        %3038 = vmatprep.subr.mxu0 0.0
        %3039 = vmatpush1.msra.mxu0 0.0
        %3040 = vmatprep.subr.mxu0 0.0
        %3041 = vmatpush1.msra.mxu0 %v2704
        %3042 = vmatprep.subr.mxu0 0.0
        %3043 = vmatpush1.msra.mxu0 %v2703
        %3044 = vmatprep.subr.mxu0 0.0
        %3045 = vmatpush2.msra.mxu0 0.0
        %3046 = vmatprep.subr.mxu0 0.0
        %3047 = vmatpush2.msra.mxu0 0.0
        %3048 = vmatprep.subr.mxu0 0.0
        %3049 = vmatpush2.msra.mxu0 0.0
        %3050 = vmatprep.subr.mxu0 0.0
        %3051 = vmatpush2.msra.mxu0 0.0
        %3052 = vmatprep.subr.mxu0 0.0
        %3053 = vmatpush2.msra.mxu0 0.0
        %3054 = vmatprep.subr.mxu0 0.0
        %3055 = vmatpush2.msra.mxu0 0.0
        %3056 = vmatprep.subr.mxu0 0.0
        %3057 = vmatpush2.msra.mxu0 0.0
        %3058 = vmatprep.subr.mxu0 0.0
        %3059 = vmatpush2.msra.mxu0 0.0
        %3060 = vmatprep.subr.mxu0 0.0
        %3061 = vmatpush2.msra.mxu0 0.0
        %3062 = vmatprep.subr.mxu0 0.0
        %3063 = vmatpush2.msra.mxu0 0.0
        %3064 = vmatprep.subr.mxu0 0.0
        %3065 = vmatpush2.msra.mxu0 0.0
        %3066 = vmatprep.subr.mxu0 0.0
        %3067 = vmatpush2.msra.mxu0 0.0
        %3068 = vmatprep.subr.mxu0 0.0
        %3069 = vmatpush2.msra.mxu0 0.0
        %3070 = vmatprep.subr.mxu0 0.0
        %3071 = vmatpush2.msra.mxu0 0.0
        %3072 = vmatprep.subr.mxu0 0.0
        %3073 = vmatpush2.msra.mxu0 0.0
        %3074 = vmatprep.subr.mxu0 0.0
        %3075 = vmatpush2.msra.mxu0 0.0
        %3076 = vmatprep.mubr.f32.mxu0 0.0
        %3077 = vmatmul.mubr.f32.gmra.mxu0 %v981
        %v3078 = vpop.f32.mrf.mxu0
        %v3079 = vadd.f32 0.0, %v3078
        %v3080 = vpop.f32.mrf.mxu0
        %3081 = vmatprep.mubr.f32.mxu0 0.0
        %3082 = vmatmul.mubr.f32.gmra.mxu0 %v984
        %v3083 = vpop.f32.mrf.mxu0
        %v3084 = vadd.f32 0.0, %v3083
        %v3085 = vpop.f32.mrf.mxu0
        %3086 = vdwg.mxu0
        %3087 = vmatprep.subr.mxu0 0.0
        %3088 = vmatpush1.msra.mxu0 0.0
        %3089 = vmatprep.subr.mxu0 0.0
        %3090 = vmatpush1.msra.mxu0 0.0
        %3091 = vmatprep.subr.mxu0 0.0
        %3092 = vmatpush1.msra.mxu0 0.0
        %3093 = vmatprep.subr.mxu0 0.0
        %3094 = vmatpush1.msra.mxu0 0.0
        %3095 = vmatprep.subr.mxu0 0.0
        %3096 = vmatpush1.msra.mxu0 0.0
        %3097 = vmatprep.subr.mxu0 0.0
        %3098 = vmatpush1.msra.mxu0 0.0
        %3099 = vmatprep.subr.mxu0 0.0
        %3100 = vmatpush1.msra.mxu0 0.0
        %3101 = vmatprep.subr.mxu0 0.0
        %3102 = vmatpush1.msra.mxu0 0.0
        %3103 = vmatprep.subr.mxu0 0.0
        %3104 = vmatpush1.msra.mxu0 0.0
        %3105 = vmatprep.subr.mxu0 0.0
        %3106 = vmatpush1.msra.mxu0 0.0
        %3107 = vmatprep.subr.mxu0 0.0
        %3108 = vmatpush1.msra.mxu0 0.0
        %3109 = vmatprep.subr.mxu0 0.0
        %3110 = vmatpush1.msra.mxu0 0.0
        %3111 = vmatprep.subr.mxu0 0.0
        %3112 = vmatpush1.msra.mxu0 0.0
        %3113 = vmatprep.subr.mxu0 0.0
        %3114 = vmatpush1.msra.mxu0 0.0
        %3115 = vmatprep.subr.mxu0 0.0
        %3116 = vmatpush1.msra.mxu0 %v2706
        %3117 = vmatprep.subr.mxu0 0.0
        %3118 = vmatpush1.msra.mxu0 %v2705
        %3119 = vmatprep.subr.mxu0 0.0
        %3120 = vmatpush2.msra.mxu0 0.0
        %3121 = vmatprep.subr.mxu0 0.0
        %3122 = vmatpush2.msra.mxu0 0.0
        %3123 = vmatprep.subr.mxu0 0.0
        %3124 = vmatpush2.msra.mxu0 0.0
        %3125 = vmatprep.subr.mxu0 0.0
        %3126 = vmatpush2.msra.mxu0 0.0
        %3127 = vmatprep.subr.mxu0 0.0
        %3128 = vmatpush2.msra.mxu0 0.0
        %3129 = vmatprep.subr.mxu0 0.0
        %3130 = vmatpush2.msra.mxu0 0.0
        %3131 = vmatprep.subr.mxu0 0.0
        %3132 = vmatpush2.msra.mxu0 0.0
        %3133 = vmatprep.subr.mxu0 0.0
        %3134 = vmatpush2.msra.mxu0 0.0
        %3135 = vmatprep.subr.mxu0 0.0
        %3136 = vmatpush2.msra.mxu0 0.0
        %3137 = vmatprep.subr.mxu0 0.0
        %3138 = vmatpush2.msra.mxu0 0.0
        %3139 = vmatprep.subr.mxu0 0.0
        %3140 = vmatpush2.msra.mxu0 0.0
        %3141 = vmatprep.subr.mxu0 0.0
        %3142 = vmatpush2.msra.mxu0 0.0
        %3143 = vmatprep.subr.mxu0 0.0
        %3144 = vmatpush2.msra.mxu0 0.0
        %3145 = vmatprep.subr.mxu0 0.0
        %3146 = vmatpush2.msra.mxu0 0.0
        %3147 = vmatprep.subr.mxu0 0.0
        %3148 = vmatpush2.msra.mxu0 0.0
        %3149 = vmatprep.subr.mxu0 0.0
        %3150 = vmatpush2.msra.mxu0 0.0
        %3151 = vmatprep.mubr.f32.mxu0 0.0
        %3152 = vmatmul.mubr.f32.gmra.mxu0 %v1062
        %v3153 = vpop.f32.mrf.mxu0
        %v3154 = vadd.f32 0.0, %v3153
        %v3155 = vpop.f32.mrf.mxu0
        %3156 = vmatprep.mubr.f32.mxu0 0.0
        %3157 = vmatmul.mubr.f32.gmra.mxu0 %v1065
        %v3158 = vpop.f32.mrf.mxu0
        %v3159 = vadd.f32 0.0, %v3158
        %v3160 = vpop.f32.mrf.mxu0
        %3161 = vdwg.mxu0
        %3162 = vmatprep.subr.mxu0 0.0
        %3163 = vmatpush1.msra.mxu0 0.0
        %3164 = vmatprep.subr.mxu0 0.0
        %3165 = vmatpush1.msra.mxu0 0.0
        %3166 = vmatprep.subr.mxu0 0.0
        %3167 = vmatpush1.msra.mxu0 0.0
        %3168 = vmatprep.subr.mxu0 0.0
        %3169 = vmatpush1.msra.mxu0 0.0
        %3170 = vmatprep.subr.mxu0 0.0
        %3171 = vmatpush1.msra.mxu0 0.0
        %3172 = vmatprep.subr.mxu0 0.0
        %3173 = vmatpush1.msra.mxu0 0.0
        %3174 = vmatprep.subr.mxu0 0.0
        %3175 = vmatpush1.msra.mxu0 0.0
        %3176 = vmatprep.subr.mxu0 0.0
        %3177 = vmatpush1.msra.mxu0 0.0
        %3178 = vmatprep.subr.mxu0 0.0
        %3179 = vmatpush1.msra.mxu0 0.0
        %3180 = vmatprep.subr.mxu0 0.0
        %3181 = vmatpush1.msra.mxu0 0.0
        %3182 = vmatprep.subr.mxu0 0.0
        %3183 = vmatpush1.msra.mxu0 0.0
        %3184 = vmatprep.subr.mxu0 0.0
        %3185 = vmatpush1.msra.mxu0 0.0
        %3186 = vmatprep.subr.mxu0 0.0
        %3187 = vmatpush1.msra.mxu0 0.0
        %3188 = vmatprep.subr.mxu0 0.0
        %3189 = vmatpush1.msra.mxu0 0.0
        %3190 = vmatprep.subr.mxu0 0.0
        %3191 = vmatpush1.msra.mxu0 %v2708
        %3192 = vmatprep.subr.mxu0 0.0
        %3193 = vmatpush1.msra.mxu0 %v2707
        %3194 = vmatprep.subr.mxu0 0.0
        %3195 = vmatpush2.msra.mxu0 0.0
        %3196 = vmatprep.subr.mxu0 0.0
        %3197 = vmatpush2.msra.mxu0 0.0
        %3198 = vmatprep.subr.mxu0 0.0
        %3199 = vmatpush2.msra.mxu0 0.0
        %3200 = vmatprep.subr.mxu0 0.0
        %3201 = vmatpush2.msra.mxu0 0.0
        %3202 = vmatprep.subr.mxu0 0.0
        %3203 = vmatpush2.msra.mxu0 0.0
        %3204 = vmatprep.subr.mxu0 0.0
        %3205 = vmatpush2.msra.mxu0 0.0
        %3206 = vmatprep.subr.mxu0 0.0
        %3207 = vmatpush2.msra.mxu0 0.0
        %3208 = vmatprep.subr.mxu0 0.0
        %3209 = vmatpush2.msra.mxu0 0.0
        %3210 = vmatprep.subr.mxu0 0.0
        %3211 = vmatpush2.msra.mxu0 0.0
        %3212 = vmatprep.subr.mxu0 0.0
        %3213 = vmatpush2.msra.mxu0 0.0
        %3214 = vmatprep.subr.mxu0 0.0
        %3215 = vmatpush2.msra.mxu0 0.0
        %3216 = vmatprep.subr.mxu0 0.0
        %3217 = vmatpush2.msra.mxu0 0.0
        %3218 = vmatprep.subr.mxu0 0.0
        %3219 = vmatpush2.msra.mxu0 0.0
        %3220 = vmatprep.subr.mxu0 0.0
        %3221 = vmatpush2.msra.mxu0 0.0
        %3222 = vmatprep.subr.mxu0 0.0
        %3223 = vmatpush2.msra.mxu0 0.0
        %3224 = vmatprep.subr.mxu0 0.0
        %3225 = vmatpush2.msra.mxu0 0.0
        %3226 = vmatprep.mubr.f32.mxu0 0.0
        %3227 = vmatmul.mubr.f32.gmra.mxu0 %v1143
        %v3228 = vpop.f32.mrf.mxu0
        %v3229 = vadd.f32 0.0, %v3228
        %v3230 = vpop.f32.mrf.mxu0
        %3231 = vmatprep.mubr.f32.mxu0 0.0
        %3232 = vmatmul.mubr.f32.gmra.mxu0 %v1146
        %v3233 = vpop.f32.mrf.mxu0
        %v3234 = vadd.f32 0.0, %v3233
        %v3235 = vpop.f32.mrf.mxu0
        %3236 = vdwg.mxu0
        %3237 = vmatprep.subr.mxu0 0.0
        %3238 = vmatpush1.msra.mxu0 0.0
        %3239 = vmatprep.subr.mxu0 0.0
        %3240 = vmatpush1.msra.mxu0 0.0
        %3241 = vmatprep.subr.mxu0 0.0
        %3242 = vmatpush1.msra.mxu0 0.0
        %3243 = vmatprep.subr.mxu0 0.0
        %3244 = vmatpush1.msra.mxu0 0.0
        %3245 = vmatprep.subr.mxu0 0.0
        %3246 = vmatpush1.msra.mxu0 0.0
        %3247 = vmatprep.subr.mxu0 0.0
        %3248 = vmatpush1.msra.mxu0 0.0
        %3249 = vmatprep.subr.mxu0 0.0
        %3250 = vmatpush1.msra.mxu0 0.0
        %3251 = vmatprep.subr.mxu0 0.0
        %3252 = vmatpush1.msra.mxu0 0.0
        %3253 = vmatprep.subr.mxu0 0.0
        %3254 = vmatpush1.msra.mxu0 0.0
        %3255 = vmatprep.subr.mxu0 0.0
        %3256 = vmatpush1.msra.mxu0 0.0
        %3257 = vmatprep.subr.mxu0 0.0
        %3258 = vmatpush1.msra.mxu0 0.0
        %3259 = vmatprep.subr.mxu0 0.0
        %3260 = vmatpush1.msra.mxu0 0.0
        %3261 = vmatprep.subr.mxu0 0.0
        %3262 = vmatpush1.msra.mxu0 0.0
        %3263 = vmatprep.subr.mxu0 0.0
        %3264 = vmatpush1.msra.mxu0 0.0
        %3265 = vmatprep.subr.mxu0 0.0
        %3266 = vmatpush1.msra.mxu0 %v2710
        %3267 = vmatprep.subr.mxu0 0.0
        %3268 = vmatpush1.msra.mxu0 %v2709
        %3269 = vmatprep.subr.mxu0 0.0
        %3270 = vmatpush2.msra.mxu0 0.0
        %3271 = vmatprep.subr.mxu0 0.0
        %3272 = vmatpush2.msra.mxu0 0.0
        %3273 = vmatprep.subr.mxu0 0.0
        %3274 = vmatpush2.msra.mxu0 0.0
        %3275 = vmatprep.subr.mxu0 0.0
        %3276 = vmatpush2.msra.mxu0 0.0
        %3277 = vmatprep.subr.mxu0 0.0
        %3278 = vmatpush2.msra.mxu0 0.0
        %3279 = vmatprep.subr.mxu0 0.0
        %3280 = vmatpush2.msra.mxu0 0.0
        %3281 = vmatprep.subr.mxu0 0.0
        %3282 = vmatpush2.msra.mxu0 0.0
        %3283 = vmatprep.subr.mxu0 0.0
        %3284 = vmatpush2.msra.mxu0 0.0
        %3285 = vmatprep.subr.mxu0 0.0
        %3286 = vmatpush2.msra.mxu0 0.0
        %3287 = vmatprep.subr.mxu0 0.0
        %3288 = vmatpush2.msra.mxu0 0.0
        %3289 = vmatprep.subr.mxu0 0.0
        %3290 = vmatpush2.msra.mxu0 0.0
        %3291 = vmatprep.subr.mxu0 0.0
        %3292 = vmatpush2.msra.mxu0 0.0
        %3293 = vmatprep.subr.mxu0 0.0
        %3294 = vmatpush2.msra.mxu0 0.0
        %3295 = vmatprep.subr.mxu0 0.0
        %3296 = vmatpush2.msra.mxu0 0.0
        %3297 = vmatprep.subr.mxu0 0.0
        %3298 = vmatpush2.msra.mxu0 0.0
        %3299 = vmatprep.subr.mxu0 0.0
        %3300 = vmatpush2.msra.mxu0 0.0
        %3301 = vmatprep.mubr.f32.mxu0 0.0
        %3302 = vmatmul.mubr.f32.gmra.mxu0 %v1224
        %v3303 = vpop.f32.mrf.mxu0
        %v3304 = vadd.f32 0.0, %v3303
        %v3305 = vpop.f32.mrf.mxu0
        %3306 = vmatprep.mubr.f32.mxu0 0.0
        %3307 = vmatmul.mubr.f32.gmra.mxu0 %v1227
        %v3308 = vpop.f32.mrf.mxu0
        %v3309 = vadd.f32 0.0, %v3308
        %v3310 = vpop.f32.mrf.mxu0
        %3311 = vdwg.mxu0
        %v3312 = vstv %s2711
        %v3313 = vmul.f32 %v3312, %v2695
        %v3314 = vmul.f32 %v3312, %v2696
        %v3315 = vmul.f32 %v3312, %v2697
        %v3316 = vmul.f32 %v3312, %v2698
        %v3317 = vmul.f32 %v3312, %v2699
        %v3318 = vmul.f32 %v3312, %v2700
        %v3319 = vmul.f32 %v3312, %v2701
        %v3320 = vmul.f32 %v3312, %v2702
        %v3321 = vmul.f32 %v3312, %v2703
        %v3322 = vmul.f32 %v3312, %v2704
        %v3323 = vmul.f32 %v3312, %v2705
        %v3324 = vmul.f32 %v3312, %v2706
        %v3325 = vmul.f32 %v3312, %v2707
        %v3326 = vmul.f32 %v3312, %v2708
        %v3327 = vmul.f32 %v3312, %v2709
        %v3328 = vmul.f32 %v3312, %v2710
        %v3329 = vadd.f32 %v2779, %v3313
        %v3330 = vadd.f32 %v2784, %v3314
        %v3331 = vadd.f32 %v2854, %v3315
        %v3332 = vadd.f32 %v2859, %v3316
        %v3333 = vadd.f32 %v2929, %v3317
        %v3334 = vadd.f32 %v2934, %v3318
        %v3335 = vadd.f32 %v3004, %v3319
        %v3336 = vadd.f32 %v3009, %v3320
        %v3337 = vadd.f32 %v3079, %v3321
        %v3338 = vadd.f32 %v3084, %v3322
        %v3339 = vadd.f32 %v3154, %v3323
        %v3340 = vadd.f32 %v3159, %v3324
        %v3341 = vadd.f32 %v3229, %v3325
        %v3342 = vadd.f32 %v3234, %v3326
        %v3343 = vadd.f32 %v3304, %v3327
        %v3344 = vadd.f32 %v3309, %v3328
        %s3345 = scalar_lea.vmem [#allocation9], 256
        %v3346 = vld [vmem:[%s3345] sm:$0xff]
        %v3347 = vld [vmem:[%s3345 + $0x8] sm:$0xff]
        %v3348 = vld [vmem:[%s3345 + $0x10] sm:$0xff]
        %v3349 = vld [vmem:[%s3345 + $0x18] sm:$0xff]
        %v3350 = vld [vmem:[%s3345 + $0x20] sm:$0xff]
        %v3351 = vld [vmem:[%s3345 + $0x28] sm:$0xff]
        %v3352 = vld [vmem:[%s3345 + $0x30] sm:$0xff]
        %v3353 = vld [vmem:[%s3345 + $0x38] sm:$0xff]
        %v3354 = vld [vmem:[%s3345 + $0x40] sm:$0xff]
        %v3355 = vld [vmem:[%s3345 + $0x48] sm:$0xff]
        %v3356 = vld [vmem:[%s3345 + $0x50] sm:$0xff]
        %v3357 = vld [vmem:[%s3345 + $0x58] sm:$0xff]
        %v3358 = vld [vmem:[%s3345 + $0x60] sm:$0xff]
        %v3359 = vld [vmem:[%s3345 + $0x68] sm:$0xff]
        %v3360 = vld [vmem:[%s3345 + $0x70] sm:$0xff]
        %v3361 = vld [vmem:[%s3345 + $0x78] sm:$0xff]
        %s3362 = scalar_lea.vmem %s4, 2
        %v3363 = vld [vmem:[%s3362] sm:$0x1]
        %v3365 = vlaneseq
        %v3366 = vshrl.u32 %v3365, 7
        %v3367 = vsub.s32 0, %v3366
        %v3368 = vrot.slane %v3363, %v3367
        %3370 = vmatprep.subr.mxu0 0.0
        %3371 = vmatpush1.msra.mxu0 %v3361
        %3372 = vmatprep.subr.mxu0 0.0
        %3373 = vmatpush1.msra.mxu0 %v3360
        %3374 = vmatprep.subr.mxu0 0.0
        %3375 = vmatpush1.msra.mxu0 %v3359
        %3376 = vmatprep.subr.mxu0 0.0
        %3377 = vmatpush1.msra.mxu0 %v3358
        %3378 = vmatprep.subr.mxu0 0.0
        %3379 = vmatpush1.msra.mxu0 %v3357
        %3380 = vmatprep.subr.mxu0 0.0
        %3381 = vmatpush1.msra.mxu0 %v3356
        %3382 = vmatprep.subr.mxu0 0.0
        %3383 = vmatpush1.msra.mxu0 %v3355
        %3384 = vmatprep.subr.mxu0 0.0
        %3385 = vmatpush1.msra.mxu0 %v3354
        %3386 = vmatprep.subr.mxu0 0.0
        %3387 = vmatpush1.msra.mxu0 %v3353
        %3388 = vmatprep.subr.mxu0 0.0
        %3389 = vmatpush1.msra.mxu0 %v3352
        %3390 = vmatprep.subr.mxu0 0.0
        %3391 = vmatpush1.msra.mxu0 %v3351
        %3392 = vmatprep.subr.mxu0 0.0
        %3393 = vmatpush1.msra.mxu0 %v3350
        %3394 = vmatprep.subr.mxu0 0.0
        %3395 = vmatpush1.msra.mxu0 %v3349
        %3396 = vmatprep.subr.mxu0 0.0
        %3397 = vmatpush1.msra.mxu0 %v3348
        %3398 = vmatprep.subr.mxu0 0.0
        %3399 = vmatpush1.msra.mxu0 %v3347
        %3400 = vmatprep.subr.mxu0 0.0
        %3401 = vmatpush1.msra.mxu0 %v3346
        %3402 = vmatprep.subr.mxu0 0.0
        %3403 = vmatpush2.msra.mxu0 0.0
        %3404 = vmatprep.subr.mxu0 0.0
        %3405 = vmatpush2.msra.mxu0 0.0
        %3406 = vmatprep.subr.mxu0 0.0
        %3407 = vmatpush2.msra.mxu0 0.0
        %3408 = vmatprep.subr.mxu0 0.0
        %3409 = vmatpush2.msra.mxu0 0.0
        %3410 = vmatprep.subr.mxu0 0.0
        %3411 = vmatpush2.msra.mxu0 0.0
        %3412 = vmatprep.subr.mxu0 0.0
        %3413 = vmatpush2.msra.mxu0 0.0
        %3414 = vmatprep.subr.mxu0 0.0
        %3415 = vmatpush2.msra.mxu0 0.0
        %3416 = vmatprep.subr.mxu0 0.0
        %3417 = vmatpush2.msra.mxu0 0.0
        %3418 = vmatprep.subr.mxu0 0.0
        %3419 = vmatpush2.msra.mxu0 0.0
        %3420 = vmatprep.subr.mxu0 0.0
        %3421 = vmatpush2.msra.mxu0 0.0
        %3422 = vmatprep.subr.mxu0 0.0
        %3423 = vmatpush2.msra.mxu0 0.0
        %3424 = vmatprep.subr.mxu0 0.0
        %3425 = vmatpush2.msra.mxu0 0.0
        %3426 = vmatprep.subr.mxu0 0.0
        %3427 = vmatpush2.msra.mxu0 0.0
        %3428 = vmatprep.subr.mxu0 0.0
        %3429 = vmatpush2.msra.mxu0 0.0
        %3430 = vmatprep.subr.mxu0 0.0
        %3431 = vmatpush2.msra.mxu0 0.0
        %3432 = vmatprep.subr.mxu0 0.0
        %3433 = vmatpush2.msra.mxu0 0.0
        %3434 = vmatprep.mubr.f32.mxu0 0.0
        %3435 = vmatmul.mubr.f32.gmra.mxu0 %v3329
        %v3436 = vpop.f32.mrf.mxu0
        %v3437 = vadd.f32 %v3368, %v3436
        %v3438 = vpop.f32.mrf.mxu0
        %3439 = vmatprep.mubr.f32.mxu0 0.0
        %3440 = vmatmul.mubr.f32.gmra.mxu0 %v3330
        %v3441 = vpop.f32.mrf.mxu0
        %v3442 = vadd.f32 %v3368, %v3441
        %v3443 = vpop.f32.mrf.mxu0
        %3444 = vmatprep.mubr.f32.mxu0 0.0
        %3445 = vmatmul.mubr.f32.gmra.mxu0 %v3331
        %v3446 = vpop.f32.mrf.mxu0
        %v3447 = vadd.f32 %v3368, %v3446
        %v3448 = vpop.f32.mrf.mxu0
        %3449 = vmatprep.mubr.f32.mxu0 0.0
        %3450 = vmatmul.mubr.f32.gmra.mxu0 %v3332
        %v3451 = vpop.f32.mrf.mxu0
        %v3452 = vadd.f32 %v3368, %v3451
        %v3453 = vpop.f32.mrf.mxu0
        %3454 = vmatprep.mubr.f32.mxu0 0.0
        %3455 = vmatmul.mubr.f32.gmra.mxu0 %v3333
        %v3456 = vpop.f32.mrf.mxu0
        %v3457 = vadd.f32 %v3368, %v3456
        %v3458 = vpop.f32.mrf.mxu0
        %3459 = vmatprep.mubr.f32.mxu0 0.0
        %3460 = vmatmul.mubr.f32.gmra.mxu0 %v3334
        %v3461 = vpop.f32.mrf.mxu0
        %v3462 = vadd.f32 %v3368, %v3461
        %v3463 = vpop.f32.mrf.mxu0
        %3464 = vmatprep.mubr.f32.mxu0 0.0
        %3465 = vmatmul.mubr.f32.gmra.mxu0 %v3335
        %v3466 = vpop.f32.mrf.mxu0
        %v3467 = vadd.f32 %v3368, %v3466
        %v3468 = vpop.f32.mrf.mxu0
        %3469 = vmatprep.mubr.f32.mxu0 0.0
        %3470 = vmatmul.mubr.f32.gmra.mxu0 %v3336
        %v3471 = vpop.f32.mrf.mxu0
        %v3472 = vadd.f32 %v3368, %v3471
        %v3473 = vpop.f32.mrf.mxu0
        %3474 = vmatprep.mubr.f32.mxu0 0.0
        %3475 = vmatmul.mubr.f32.gmra.mxu0 %v3337
        %v3476 = vpop.f32.mrf.mxu0
        %v3477 = vadd.f32 %v3368, %v3476
        %v3478 = vpop.f32.mrf.mxu0
        %3479 = vmatprep.mubr.f32.mxu0 0.0
        %3480 = vmatmul.mubr.f32.gmra.mxu0 %v3338
        %v3481 = vpop.f32.mrf.mxu0
        %v3482 = vadd.f32 %v3368, %v3481
        %v3483 = vpop.f32.mrf.mxu0
        %3484 = vmatprep.mubr.f32.mxu0 0.0
        %3485 = vmatmul.mubr.f32.gmra.mxu0 %v3339
        %v3486 = vpop.f32.mrf.mxu0
        %v3487 = vadd.f32 %v3368, %v3486
        %v3488 = vpop.f32.mrf.mxu0
        %3489 = vmatprep.mubr.f32.mxu0 0.0
        %3490 = vmatmul.mubr.f32.gmra.mxu0 %v3340
        %v3491 = vpop.f32.mrf.mxu0
        %v3492 = vadd.f32 %v3368, %v3491
        %v3493 = vpop.f32.mrf.mxu0
        %3494 = vmatprep.mubr.f32.mxu0 0.0
        %3495 = vmatmul.mubr.f32.gmra.mxu0 %v3341
        %v3496 = vpop.f32.mrf.mxu0
        %v3497 = vadd.f32 %v3368, %v3496
        %v3498 = vpop.f32.mrf.mxu0
        %3499 = vmatprep.mubr.f32.mxu0 0.0
        %3500 = vmatmul.mubr.f32.gmra.mxu0 %v3342
        %v3501 = vpop.f32.mrf.mxu0
        %v3502 = vadd.f32 %v3368, %v3501
        %v3503 = vpop.f32.mrf.mxu0
        %3504 = vmatprep.mubr.f32.mxu0 0.0
        %3505 = vmatmul.mubr.f32.gmra.mxu0 %v3343
        %v3506 = vpop.f32.mrf.mxu0
        %v3507 = vadd.f32 %v3368, %v3506
        %v3508 = vpop.f32.mrf.mxu0
        %3509 = vmatprep.mubr.f32.mxu0 0.0
        %3510 = vmatmul.mubr.f32.gmra.mxu0 %v3344
        %v3511 = vpop.f32.mrf.mxu0
        %v3512 = vadd.f32 %v3368, %v3511
        %v3513 = vpop.f32.mrf.mxu0
        %3514 = vdwg.mxu0
        %v3515 = vmax.f32 %v3437, 0.0
        %v3516 = vmax.f32 %v3442, 0.0
        %v3517 = vmax.f32 %v3447, 0.0
        %v3518 = vmax.f32 %v3452, 0.0
        %v3519 = vmax.f32 %v3457, 0.0
        %v3520 = vmax.f32 %v3462, 0.0
        %v3521 = vmax.f32 %v3467, 0.0
        %v3522 = vmax.f32 %v3472, 0.0
        %v3523 = vmax.f32 %v3477, 0.0
        %v3524 = vmax.f32 %v3482, 0.0
        %v3525 = vmax.f32 %v3487, 0.0
        %v3526 = vmax.f32 %v3492, 0.0
        %v3527 = vmax.f32 %v3497, 0.0
        %v3528 = vmax.f32 %v3502, 0.0
        %v3529 = vmax.f32 %v3507, 0.0
        %v3530 = vmax.f32 %v3512, 0.0
        %s3531 = scalar_lea.vmem [#allocation10], 256
        %v3532 = vld [vmem:[%s3531] sm:$0xff]
        %v3533 = vld [vmem:[%s3531 + $0x8] sm:$0xff]
        %v3534 = vld [vmem:[%s3531 + $0x10] sm:$0xff]
        %v3535 = vld [vmem:[%s3531 + $0x18] sm:$0xff]
        %v3536 = vld [vmem:[%s3531 + $0x20] sm:$0xff]
        %v3537 = vld [vmem:[%s3531 + $0x28] sm:$0xff]
        %v3538 = vld [vmem:[%s3531 + $0x30] sm:$0xff]
        %v3539 = vld [vmem:[%s3531 + $0x38] sm:$0xff]
        %v3540 = vld [vmem:[%s3531 + $0x40] sm:$0xff]
        %v3541 = vld [vmem:[%s3531 + $0x48] sm:$0xff]
        %v3542 = vld [vmem:[%s3531 + $0x50] sm:$0xff]
        %v3543 = vld [vmem:[%s3531 + $0x58] sm:$0xff]
        %v3544 = vld [vmem:[%s3531 + $0x60] sm:$0xff]
        %v3545 = vld [vmem:[%s3531 + $0x68] sm:$0xff]
        %v3546 = vld [vmem:[%s3531 + $0x70] sm:$0xff]
        %v3547 = vld [vmem:[%s3531 + $0x78] sm:$0xff]
        %s3548 = scalar_lea.vmem %s6, 2
        %v3549 = vld [vmem:[%s3548] sm:$0x1]
        %v3551 = vlaneseq
        %v3552 = vshrl.u32 %v3551, 7
        %v3553 = vsub.s32 0, %v3552
        %v3554 = vrot.slane %v3549, %v3553
        %3556 = vmatprep.subr.mxu0 0.0
        %3557 = vmatpush1.msra.mxu0 %v3547
        %3558 = vmatprep.subr.mxu0 0.0
        %3559 = vmatpush1.msra.mxu0 %v3546
        %3560 = vmatprep.subr.mxu0 0.0
        %3561 = vmatpush1.msra.mxu0 %v3545
        %3562 = vmatprep.subr.mxu0 0.0
        %3563 = vmatpush1.msra.mxu0 %v3544
        %3564 = vmatprep.subr.mxu0 0.0
        %3565 = vmatpush1.msra.mxu0 %v3543
        %3566 = vmatprep.subr.mxu0 0.0
        %3567 = vmatpush1.msra.mxu0 %v3542
        %3568 = vmatprep.subr.mxu0 0.0
        %3569 = vmatpush1.msra.mxu0 %v3541
        %3570 = vmatprep.subr.mxu0 0.0
        %3571 = vmatpush1.msra.mxu0 %v3540
        %3572 = vmatprep.subr.mxu0 0.0
        %3573 = vmatpush1.msra.mxu0 %v3539
        %3574 = vmatprep.subr.mxu0 0.0
        %3575 = vmatpush1.msra.mxu0 %v3538
        %3576 = vmatprep.subr.mxu0 0.0
        %3577 = vmatpush1.msra.mxu0 %v3537
        %3578 = vmatprep.subr.mxu0 0.0
        %3579 = vmatpush1.msra.mxu0 %v3536
        %3580 = vmatprep.subr.mxu0 0.0
        %3581 = vmatpush1.msra.mxu0 %v3535
        %3582 = vmatprep.subr.mxu0 0.0
        %3583 = vmatpush1.msra.mxu0 %v3534
        %3584 = vmatprep.subr.mxu0 0.0
        %3585 = vmatpush1.msra.mxu0 %v3533
        %3586 = vmatprep.subr.mxu0 0.0
        %3587 = vmatpush1.msra.mxu0 %v3532
        %3588 = vmatprep.subr.mxu0 0.0
        %3589 = vmatpush2.msra.mxu0 0.0
        %3590 = vmatprep.subr.mxu0 0.0
        %3591 = vmatpush2.msra.mxu0 0.0
        %3592 = vmatprep.subr.mxu0 0.0
        %3593 = vmatpush2.msra.mxu0 0.0
        %3594 = vmatprep.subr.mxu0 0.0
        %3595 = vmatpush2.msra.mxu0 0.0
        %3596 = vmatprep.subr.mxu0 0.0
        %3597 = vmatpush2.msra.mxu0 0.0
        %3598 = vmatprep.subr.mxu0 0.0
        %3599 = vmatpush2.msra.mxu0 0.0
        %3600 = vmatprep.subr.mxu0 0.0
        %3601 = vmatpush2.msra.mxu0 0.0
        %3602 = vmatprep.subr.mxu0 0.0
        %3603 = vmatpush2.msra.mxu0 0.0
        %3604 = vmatprep.subr.mxu0 0.0
        %3605 = vmatpush2.msra.mxu0 0.0
        %3606 = vmatprep.subr.mxu0 0.0
        %3607 = vmatpush2.msra.mxu0 0.0
        %3608 = vmatprep.subr.mxu0 0.0
        %3609 = vmatpush2.msra.mxu0 0.0
        %3610 = vmatprep.subr.mxu0 0.0
        %3611 = vmatpush2.msra.mxu0 0.0
        %3612 = vmatprep.subr.mxu0 0.0
        %3613 = vmatpush2.msra.mxu0 0.0
        %3614 = vmatprep.subr.mxu0 0.0
        %3615 = vmatpush2.msra.mxu0 0.0
        %3616 = vmatprep.subr.mxu0 0.0
        %3617 = vmatpush2.msra.mxu0 0.0
        %3618 = vmatprep.subr.mxu0 0.0
        %3619 = vmatpush2.msra.mxu0 0.0
        %3620 = vmatprep.mubr.f32.mxu0 0.0
        %3621 = vmatmul.mubr.f32.gmra.mxu0 %v3515
        %v3622 = vpop.f32.mrf.mxu0
        %v3623 = vadd.f32 %v3554, %v3622
        %v3624 = vpop.f32.mrf.mxu0
        %3625 = vmatprep.mubr.f32.mxu0 0.0
        %3626 = vmatmul.mubr.f32.gmra.mxu0 %v3516
        %v3627 = vpop.f32.mrf.mxu0
        %v3628 = vadd.f32 %v3554, %v3627
        %v3629 = vpop.f32.mrf.mxu0
        %3630 = vmatprep.mubr.f32.mxu0 0.0
        %3631 = vmatmul.mubr.f32.gmra.mxu0 %v3517
        %v3632 = vpop.f32.mrf.mxu0
        %v3633 = vadd.f32 %v3554, %v3632
        %v3634 = vpop.f32.mrf.mxu0
        %3635 = vmatprep.mubr.f32.mxu0 0.0
        %3636 = vmatmul.mubr.f32.gmra.mxu0 %v3518
        %v3637 = vpop.f32.mrf.mxu0
        %v3638 = vadd.f32 %v3554, %v3637
        %v3639 = vpop.f32.mrf.mxu0
        %3640 = vmatprep.mubr.f32.mxu0 0.0
        %3641 = vmatmul.mubr.f32.gmra.mxu0 %v3519
        %v3642 = vpop.f32.mrf.mxu0
        %v3643 = vadd.f32 %v3554, %v3642
        %v3644 = vpop.f32.mrf.mxu0
        %3645 = vmatprep.mubr.f32.mxu0 0.0
        %3646 = vmatmul.mubr.f32.gmra.mxu0 %v3520
        %v3647 = vpop.f32.mrf.mxu0
        %v3648 = vadd.f32 %v3554, %v3647
        %v3649 = vpop.f32.mrf.mxu0
        %3650 = vmatprep.mubr.f32.mxu0 0.0
        %3651 = vmatmul.mubr.f32.gmra.mxu0 %v3521
        %v3652 = vpop.f32.mrf.mxu0
        %v3653 = vadd.f32 %v3554, %v3652
        %v3654 = vpop.f32.mrf.mxu0
        %3655 = vmatprep.mubr.f32.mxu0 0.0
        %3656 = vmatmul.mubr.f32.gmra.mxu0 %v3522
        %v3657 = vpop.f32.mrf.mxu0
        %v3658 = vadd.f32 %v3554, %v3657
        %v3659 = vpop.f32.mrf.mxu0
        %3660 = vmatprep.mubr.f32.mxu0 0.0
        %3661 = vmatmul.mubr.f32.gmra.mxu0 %v3523
        %v3662 = vpop.f32.mrf.mxu0
        %v3663 = vadd.f32 %v3554, %v3662
        %v3664 = vpop.f32.mrf.mxu0
        %3665 = vmatprep.mubr.f32.mxu0 0.0
        %3666 = vmatmul.mubr.f32.gmra.mxu0 %v3524
        %v3667 = vpop.f32.mrf.mxu0
        %v3668 = vadd.f32 %v3554, %v3667
        %v3669 = vpop.f32.mrf.mxu0
        %3670 = vmatprep.mubr.f32.mxu0 0.0
        %3671 = vmatmul.mubr.f32.gmra.mxu0 %v3525
        %v3672 = vpop.f32.mrf.mxu0
        %v3673 = vadd.f32 %v3554, %v3672
        %v3674 = vpop.f32.mrf.mxu0
        %3675 = vmatprep.mubr.f32.mxu0 0.0
        %3676 = vmatmul.mubr.f32.gmra.mxu0 %v3526
        %v3677 = vpop.f32.mrf.mxu0
        %v3678 = vadd.f32 %v3554, %v3677
        %v3679 = vpop.f32.mrf.mxu0
        %3680 = vmatprep.mubr.f32.mxu0 0.0
        %3681 = vmatmul.mubr.f32.gmra.mxu0 %v3527
        %v3682 = vpop.f32.mrf.mxu0
        %v3683 = vadd.f32 %v3554, %v3682
        %v3684 = vpop.f32.mrf.mxu0
        %3685 = vmatprep.mubr.f32.mxu0 0.0
        %3686 = vmatmul.mubr.f32.gmra.mxu0 %v3528
        %v3687 = vpop.f32.mrf.mxu0
        %v3688 = vadd.f32 %v3554, %v3687
        %v3689 = vpop.f32.mrf.mxu0
        %3690 = vmatprep.mubr.f32.mxu0 0.0
        %3691 = vmatmul.mubr.f32.gmra.mxu0 %v3529
        %v3692 = vpop.f32.mrf.mxu0
        %v3693 = vadd.f32 %v3554, %v3692
        %v3694 = vpop.f32.mrf.mxu0
        %3695 = vmatprep.mubr.f32.mxu0 0.0
        %3696 = vmatmul.mubr.f32.gmra.mxu0 %v3530
        %v3697 = vpop.f32.mrf.mxu0
        %v3698 = vadd.f32 %v3554, %v3697
        %v3699 = vpop.f32.mrf.mxu0
        %3700 = vdwg.mxu0
        %v3701 = vmax.f32 %v3623, 0.0
        %v3702 = vmax.f32 %v3628, 0.0
        %v3703 = vmax.f32 %v3633, 0.0
        %v3704 = vmax.f32 %v3638, 0.0
        %v3705 = vmax.f32 %v3643, 0.0
        %v3706 = vmax.f32 %v3648, 0.0
        %v3707 = vmax.f32 %v3653, 0.0
        %v3708 = vmax.f32 %v3658, 0.0
        %v3709 = vmax.f32 %v3663, 0.0
        %v3710 = vmax.f32 %v3668, 0.0
        %v3711 = vmax.f32 %v3673, 0.0
        %v3712 = vmax.f32 %v3678, 0.0
        %v3713 = vmax.f32 %v3683, 0.0
        %v3714 = vmax.f32 %v3688, 0.0
        %v3715 = vmax.f32 %v3693, 0.0
        %v3716 = vmax.f32 %v3698, 0.0
        %v3717 = vmul.f32 %v639, %v542
        %v3718 = vmul.f32 %v640, %v543
        %v3719 = vmul.f32 %v641, %v544
        %v3720 = vmul.f32 %v642, %v545
        %v3721 = vmul.f32 %v643, %v546
        %v3722 = vmul.f32 %v644, %v547
        %v3723 = vmul.f32 %v645, %v548
        %v3724 = vmul.f32 %v646, %v549
        %v3725 = vmul.f32 %v647, %v550
        %v3726 = vmul.f32 %v648, %v551
        %v3727 = vmul.f32 %v649, %v552
        %v3728 = vmul.f32 %v650, %v553
        %v3729 = vmul.f32 %v651, %v554
        %v3730 = vmul.f32 %v652, %v555
        %v3731 = vmul.f32 %v653, %v556
        %v3732 = vmul.f32 %v654, %v557
        %3733 = vmatprep.subr.mxu0 0.0
        %3734 = vmatpush1.msra.mxu0 0.0
        %3735 = vmatprep.subr.mxu0 0.0
        %3736 = vmatpush1.msra.mxu0 0.0
        %3737 = vmatprep.subr.mxu0 0.0
        %3738 = vmatpush1.msra.mxu0 0.0
        %3739 = vmatprep.subr.mxu0 0.0
        %3740 = vmatpush1.msra.mxu0 0.0
        %3741 = vmatprep.subr.mxu0 0.0
        %3742 = vmatpush1.msra.mxu0 0.0
        %3743 = vmatprep.subr.mxu0 0.0
        %3744 = vmatpush1.msra.mxu0 0.0
        %3745 = vmatprep.subr.mxu0 0.0
        %3746 = vmatpush1.msra.mxu0 0.0
        %3747 = vmatprep.subr.mxu0 0.0
        %3748 = vmatpush1.msra.mxu0 0.0
        %3749 = vmatprep.subr.mxu0 0.0
        %3750 = vmatpush1.msra.mxu0 0.0
        %3751 = vmatprep.subr.mxu0 0.0
        %3752 = vmatpush1.msra.mxu0 0.0
        %3753 = vmatprep.subr.mxu0 0.0
        %3754 = vmatpush1.msra.mxu0 0.0
        %3755 = vmatprep.subr.mxu0 0.0
        %3756 = vmatpush1.msra.mxu0 0.0
        %3757 = vmatprep.subr.mxu0 0.0
        %3758 = vmatpush1.msra.mxu0 0.0
        %3759 = vmatprep.subr.mxu0 0.0
        %3760 = vmatpush1.msra.mxu0 0.0
        %3761 = vmatprep.subr.mxu0 0.0
        %3762 = vmatpush1.msra.mxu0 %v3718
        %3763 = vmatprep.subr.mxu0 0.0
        %3764 = vmatpush1.msra.mxu0 %v3717
        %3765 = vmatprep.subr.mxu0 0.0
        %3766 = vmatpush2.msra.mxu0 0.0
        %3767 = vmatprep.subr.mxu0 0.0
        %3768 = vmatpush2.msra.mxu0 0.0
        %3769 = vmatprep.subr.mxu0 0.0
        %3770 = vmatpush2.msra.mxu0 0.0
        %3771 = vmatprep.subr.mxu0 0.0
        %3772 = vmatpush2.msra.mxu0 0.0
        %3773 = vmatprep.subr.mxu0 0.0
        %3774 = vmatpush2.msra.mxu0 0.0
        %3775 = vmatprep.subr.mxu0 0.0
        %3776 = vmatpush2.msra.mxu0 0.0
        %3777 = vmatprep.subr.mxu0 0.0
        %3778 = vmatpush2.msra.mxu0 0.0
        %3779 = vmatprep.subr.mxu0 0.0
        %3780 = vmatpush2.msra.mxu0 0.0
        %3781 = vmatprep.subr.mxu0 0.0
        %3782 = vmatpush2.msra.mxu0 0.0
        %3783 = vmatprep.subr.mxu0 0.0
        %3784 = vmatpush2.msra.mxu0 0.0
        %3785 = vmatprep.subr.mxu0 0.0
        %3786 = vmatpush2.msra.mxu0 0.0
        %3787 = vmatprep.subr.mxu0 0.0
        %3788 = vmatpush2.msra.mxu0 0.0
        %3789 = vmatprep.subr.mxu0 0.0
        %3790 = vmatpush2.msra.mxu0 0.0
        %3791 = vmatprep.subr.mxu0 0.0
        %3792 = vmatpush2.msra.mxu0 0.0
        %3793 = vmatprep.subr.mxu0 0.0
        %3794 = vmatpush2.msra.mxu0 0.0
        %3795 = vmatprep.subr.mxu0 0.0
        %3796 = vmatpush2.msra.mxu0 0.0
        %3797 = vmatprep.mubr.f32.mxu0 0.0
        %3798 = vmatmul.mubr.f32.gmra.mxu0 %v657
        %v3799 = vpop.f32.mrf.mxu0
        %v3800 = vadd.f32 %v3717, %v3799
        %v3801 = vpop.f32.mrf.mxu0
        %3802 = vmatprep.mubr.f32.mxu0 0.0
        %3803 = vmatmul.mubr.f32.gmra.mxu0 %v660
        %v3804 = vpop.f32.mrf.mxu0
        %v3805 = vadd.f32 %v3718, %v3804
        %v3806 = vpop.f32.mrf.mxu0
        %3807 = vdwg.mxu0
        %3808 = vmatprep.subr.mxu0 0.0
        %3809 = vmatpush1.msra.mxu0 0.0
        %3810 = vmatprep.subr.mxu0 0.0
        %3811 = vmatpush1.msra.mxu0 0.0
        %3812 = vmatprep.subr.mxu0 0.0
        %3813 = vmatpush1.msra.mxu0 0.0
        %3814 = vmatprep.subr.mxu0 0.0
        %3815 = vmatpush1.msra.mxu0 0.0
        %3816 = vmatprep.subr.mxu0 0.0
        %3817 = vmatpush1.msra.mxu0 0.0
        %3818 = vmatprep.subr.mxu0 0.0
        %3819 = vmatpush1.msra.mxu0 0.0
        %3820 = vmatprep.subr.mxu0 0.0
        %3821 = vmatpush1.msra.mxu0 0.0
        %3822 = vmatprep.subr.mxu0 0.0
        %3823 = vmatpush1.msra.mxu0 0.0
        %3824 = vmatprep.subr.mxu0 0.0
        %3825 = vmatpush1.msra.mxu0 0.0
        %3826 = vmatprep.subr.mxu0 0.0
        %3827 = vmatpush1.msra.mxu0 0.0
        %3828 = vmatprep.subr.mxu0 0.0
        %3829 = vmatpush1.msra.mxu0 0.0
        %3830 = vmatprep.subr.mxu0 0.0
        %3831 = vmatpush1.msra.mxu0 0.0
        %3832 = vmatprep.subr.mxu0 0.0
        %3833 = vmatpush1.msra.mxu0 0.0
        %3834 = vmatprep.subr.mxu0 0.0
        %3835 = vmatpush1.msra.mxu0 0.0
        %3836 = vmatprep.subr.mxu0 0.0
        %3837 = vmatpush1.msra.mxu0 %v3720
        %3838 = vmatprep.subr.mxu0 0.0
        %3839 = vmatpush1.msra.mxu0 %v3719
        %3840 = vmatprep.subr.mxu0 0.0
        %3841 = vmatpush2.msra.mxu0 0.0
        %3842 = vmatprep.subr.mxu0 0.0
        %3843 = vmatpush2.msra.mxu0 0.0
        %3844 = vmatprep.subr.mxu0 0.0
        %3845 = vmatpush2.msra.mxu0 0.0
        %3846 = vmatprep.subr.mxu0 0.0
        %3847 = vmatpush2.msra.mxu0 0.0
        %3848 = vmatprep.subr.mxu0 0.0
        %3849 = vmatpush2.msra.mxu0 0.0
        %3850 = vmatprep.subr.mxu0 0.0
        %3851 = vmatpush2.msra.mxu0 0.0
        %3852 = vmatprep.subr.mxu0 0.0
        %3853 = vmatpush2.msra.mxu0 0.0
        %3854 = vmatprep.subr.mxu0 0.0
        %3855 = vmatpush2.msra.mxu0 0.0
        %3856 = vmatprep.subr.mxu0 0.0
        %3857 = vmatpush2.msra.mxu0 0.0
        %3858 = vmatprep.subr.mxu0 0.0
        %3859 = vmatpush2.msra.mxu0 0.0
        %3860 = vmatprep.subr.mxu0 0.0
        %3861 = vmatpush2.msra.mxu0 0.0
        %3862 = vmatprep.subr.mxu0 0.0
        %3863 = vmatpush2.msra.mxu0 0.0
        %3864 = vmatprep.subr.mxu0 0.0
        %3865 = vmatpush2.msra.mxu0 0.0
        %3866 = vmatprep.subr.mxu0 0.0
        %3867 = vmatpush2.msra.mxu0 0.0
        %3868 = vmatprep.subr.mxu0 0.0
        %3869 = vmatpush2.msra.mxu0 0.0
        %3870 = vmatprep.subr.mxu0 0.0
        %3871 = vmatpush2.msra.mxu0 0.0
        %3872 = vmatprep.mubr.f32.mxu0 0.0
        %3873 = vmatmul.mubr.f32.gmra.mxu0 %v738
        %v3874 = vpop.f32.mrf.mxu0
        %v3875 = vadd.f32 %v3719, %v3874
        %v3876 = vpop.f32.mrf.mxu0
        %3877 = vmatprep.mubr.f32.mxu0 0.0
        %3878 = vmatmul.mubr.f32.gmra.mxu0 %v741
        %v3879 = vpop.f32.mrf.mxu0
        %v3880 = vadd.f32 %v3720, %v3879
        %v3881 = vpop.f32.mrf.mxu0
        %3882 = vdwg.mxu0
        %3883 = vmatprep.subr.mxu0 0.0
        %3884 = vmatpush1.msra.mxu0 0.0
        %3885 = vmatprep.subr.mxu0 0.0
        %3886 = vmatpush1.msra.mxu0 0.0
        %3887 = vmatprep.subr.mxu0 0.0
        %3888 = vmatpush1.msra.mxu0 0.0
        %3889 = vmatprep.subr.mxu0 0.0
        %3890 = vmatpush1.msra.mxu0 0.0
        %3891 = vmatprep.subr.mxu0 0.0
        %3892 = vmatpush1.msra.mxu0 0.0
        %3893 = vmatprep.subr.mxu0 0.0
        %3894 = vmatpush1.msra.mxu0 0.0
        %3895 = vmatprep.subr.mxu0 0.0
        %3896 = vmatpush1.msra.mxu0 0.0
        %3897 = vmatprep.subr.mxu0 0.0
        %3898 = vmatpush1.msra.mxu0 0.0
        %3899 = vmatprep.subr.mxu0 0.0
        %3900 = vmatpush1.msra.mxu0 0.0
        %3901 = vmatprep.subr.mxu0 0.0
        %3902 = vmatpush1.msra.mxu0 0.0
        %3903 = vmatprep.subr.mxu0 0.0
        %3904 = vmatpush1.msra.mxu0 0.0
        %3905 = vmatprep.subr.mxu0 0.0
        %3906 = vmatpush1.msra.mxu0 0.0
        %3907 = vmatprep.subr.mxu0 0.0
        %3908 = vmatpush1.msra.mxu0 0.0
        %3909 = vmatprep.subr.mxu0 0.0
        %3910 = vmatpush1.msra.mxu0 0.0
        %3911 = vmatprep.subr.mxu0 0.0
        %3912 = vmatpush1.msra.mxu0 %v3722
        %3913 = vmatprep.subr.mxu0 0.0
        %3914 = vmatpush1.msra.mxu0 %v3721
        %3915 = vmatprep.subr.mxu0 0.0
        %3916 = vmatpush2.msra.mxu0 0.0
        %3917 = vmatprep.subr.mxu0 0.0
        %3918 = vmatpush2.msra.mxu0 0.0
        %3919 = vmatprep.subr.mxu0 0.0
        %3920 = vmatpush2.msra.mxu0 0.0
        %3921 = vmatprep.subr.mxu0 0.0
        %3922 = vmatpush2.msra.mxu0 0.0
        %3923 = vmatprep.subr.mxu0 0.0
        %3924 = vmatpush2.msra.mxu0 0.0
        %3925 = vmatprep.subr.mxu0 0.0
        %3926 = vmatpush2.msra.mxu0 0.0
        %3927 = vmatprep.subr.mxu0 0.0
        %3928 = vmatpush2.msra.mxu0 0.0
        %3929 = vmatprep.subr.mxu0 0.0
        %3930 = vmatpush2.msra.mxu0 0.0
        %3931 = vmatprep.subr.mxu0 0.0
        %3932 = vmatpush2.msra.mxu0 0.0
        %3933 = vmatprep.subr.mxu0 0.0
        %3934 = vmatpush2.msra.mxu0 0.0
        %3935 = vmatprep.subr.mxu0 0.0
        %3936 = vmatpush2.msra.mxu0 0.0
        %3937 = vmatprep.subr.mxu0 0.0
        %3938 = vmatpush2.msra.mxu0 0.0
        %3939 = vmatprep.subr.mxu0 0.0
        %3940 = vmatpush2.msra.mxu0 0.0
        %3941 = vmatprep.subr.mxu0 0.0
        %3942 = vmatpush2.msra.mxu0 0.0
        %3943 = vmatprep.subr.mxu0 0.0
        %3944 = vmatpush2.msra.mxu0 0.0
        %3945 = vmatprep.subr.mxu0 0.0
        %3946 = vmatpush2.msra.mxu0 0.0
        %3947 = vmatprep.mubr.f32.mxu0 0.0
        %3948 = vmatmul.mubr.f32.gmra.mxu0 %v819
        %v3949 = vpop.f32.mrf.mxu0
        %v3950 = vadd.f32 %v3721, %v3949
        %v3951 = vpop.f32.mrf.mxu0
        %3952 = vmatprep.mubr.f32.mxu0 0.0
        %3953 = vmatmul.mubr.f32.gmra.mxu0 %v822
        %v3954 = vpop.f32.mrf.mxu0
        %v3955 = vadd.f32 %v3722, %v3954
        %v3956 = vpop.f32.mrf.mxu0
        %3957 = vdwg.mxu0
        %3958 = vmatprep.subr.mxu0 0.0
        %3959 = vmatpush1.msra.mxu0 0.0
        %3960 = vmatprep.subr.mxu0 0.0
        %3961 = vmatpush1.msra.mxu0 0.0
        %3962 = vmatprep.subr.mxu0 0.0
        %3963 = vmatpush1.msra.mxu0 0.0
        %3964 = vmatprep.subr.mxu0 0.0
        %3965 = vmatpush1.msra.mxu0 0.0
        %3966 = vmatprep.subr.mxu0 0.0
        %3967 = vmatpush1.msra.mxu0 0.0
        %3968 = vmatprep.subr.mxu0 0.0
        %3969 = vmatpush1.msra.mxu0 0.0
        %3970 = vmatprep.subr.mxu0 0.0
        %3971 = vmatpush1.msra.mxu0 0.0
        %3972 = vmatprep.subr.mxu0 0.0
        %3973 = vmatpush1.msra.mxu0 0.0
        %3974 = vmatprep.subr.mxu0 0.0
        %3975 = vmatpush1.msra.mxu0 0.0
        %3976 = vmatprep.subr.mxu0 0.0
        %3977 = vmatpush1.msra.mxu0 0.0
        %3978 = vmatprep.subr.mxu0 0.0
        %3979 = vmatpush1.msra.mxu0 0.0
        %3980 = vmatprep.subr.mxu0 0.0
        %3981 = vmatpush1.msra.mxu0 0.0
        %3982 = vmatprep.subr.mxu0 0.0
        %3983 = vmatpush1.msra.mxu0 0.0
        %3984 = vmatprep.subr.mxu0 0.0
        %3985 = vmatpush1.msra.mxu0 0.0
        %3986 = vmatprep.subr.mxu0 0.0
        %3987 = vmatpush1.msra.mxu0 %v3724
        %3988 = vmatprep.subr.mxu0 0.0
        %3989 = vmatpush1.msra.mxu0 %v3723
        %3990 = vmatprep.subr.mxu0 0.0
        %3991 = vmatpush2.msra.mxu0 0.0
        %3992 = vmatprep.subr.mxu0 0.0
        %3993 = vmatpush2.msra.mxu0 0.0
        %3994 = vmatprep.subr.mxu0 0.0
        %3995 = vmatpush2.msra.mxu0 0.0
        %3996 = vmatprep.subr.mxu0 0.0
        %3997 = vmatpush2.msra.mxu0 0.0
        %3998 = vmatprep.subr.mxu0 0.0
        %3999 = vmatpush2.msra.mxu0 0.0
        %4000 = vmatprep.subr.mxu0 0.0
        %4001 = vmatpush2.msra.mxu0 0.0
        %4002 = vmatprep.subr.mxu0 0.0
        %4003 = vmatpush2.msra.mxu0 0.0
        %4004 = vmatprep.subr.mxu0 0.0
        %4005 = vmatpush2.msra.mxu0 0.0
        %4006 = vmatprep.subr.mxu0 0.0
        %4007 = vmatpush2.msra.mxu0 0.0
        %4008 = vmatprep.subr.mxu0 0.0
        %4009 = vmatpush2.msra.mxu0 0.0
        %4010 = vmatprep.subr.mxu0 0.0
        %4011 = vmatpush2.msra.mxu0 0.0
        %4012 = vmatprep.subr.mxu0 0.0
        %4013 = vmatpush2.msra.mxu0 0.0
        %4014 = vmatprep.subr.mxu0 0.0
        %4015 = vmatpush2.msra.mxu0 0.0
        %4016 = vmatprep.subr.mxu0 0.0
        %4017 = vmatpush2.msra.mxu0 0.0
        %4018 = vmatprep.subr.mxu0 0.0
        %4019 = vmatpush2.msra.mxu0 0.0
        %4020 = vmatprep.subr.mxu0 0.0
        %4021 = vmatpush2.msra.mxu0 0.0
        %4022 = vmatprep.mubr.f32.mxu0 0.0
        %4023 = vmatmul.mubr.f32.gmra.mxu0 %v900
        %v4024 = vpop.f32.mrf.mxu0
        %v4025 = vadd.f32 %v3723, %v4024
        %v4026 = vpop.f32.mrf.mxu0
        %4027 = vmatprep.mubr.f32.mxu0 0.0
        %4028 = vmatmul.mubr.f32.gmra.mxu0 %v903
        %v4029 = vpop.f32.mrf.mxu0
        %v4030 = vadd.f32 %v3724, %v4029
        %v4031 = vpop.f32.mrf.mxu0
        %4032 = vdwg.mxu0
        %4033 = vmatprep.subr.mxu0 0.0
        %4034 = vmatpush1.msra.mxu0 0.0
        %4035 = vmatprep.subr.mxu0 0.0
        %4036 = vmatpush1.msra.mxu0 0.0
        %4037 = vmatprep.subr.mxu0 0.0
        %4038 = vmatpush1.msra.mxu0 0.0
        %4039 = vmatprep.subr.mxu0 0.0
        %4040 = vmatpush1.msra.mxu0 0.0
        %4041 = vmatprep.subr.mxu0 0.0
        %4042 = vmatpush1.msra.mxu0 0.0
        %4043 = vmatprep.subr.mxu0 0.0
        %4044 = vmatpush1.msra.mxu0 0.0
        %4045 = vmatprep.subr.mxu0 0.0
        %4046 = vmatpush1.msra.mxu0 0.0
        %4047 = vmatprep.subr.mxu0 0.0
        %4048 = vmatpush1.msra.mxu0 0.0
        %4049 = vmatprep.subr.mxu0 0.0
        %4050 = vmatpush1.msra.mxu0 0.0
        %4051 = vmatprep.subr.mxu0 0.0
        %4052 = vmatpush1.msra.mxu0 0.0
        %4053 = vmatprep.subr.mxu0 0.0
        %4054 = vmatpush1.msra.mxu0 0.0
        %4055 = vmatprep.subr.mxu0 0.0
        %4056 = vmatpush1.msra.mxu0 0.0
        %4057 = vmatprep.subr.mxu0 0.0
        %4058 = vmatpush1.msra.mxu0 0.0
        %4059 = vmatprep.subr.mxu0 0.0
        %4060 = vmatpush1.msra.mxu0 0.0
        %4061 = vmatprep.subr.mxu0 0.0
        %4062 = vmatpush1.msra.mxu0 %v3726
        %4063 = vmatprep.subr.mxu0 0.0
        %4064 = vmatpush1.msra.mxu0 %v3725
        %4065 = vmatprep.subr.mxu0 0.0
        %4066 = vmatpush2.msra.mxu0 0.0
        %4067 = vmatprep.subr.mxu0 0.0
        %4068 = vmatpush2.msra.mxu0 0.0
        %4069 = vmatprep.subr.mxu0 0.0
        %4070 = vmatpush2.msra.mxu0 0.0
        %4071 = vmatprep.subr.mxu0 0.0
        %4072 = vmatpush2.msra.mxu0 0.0
        %4073 = vmatprep.subr.mxu0 0.0
        %4074 = vmatpush2.msra.mxu0 0.0
        %4075 = vmatprep.subr.mxu0 0.0
        %4076 = vmatpush2.msra.mxu0 0.0
        %4077 = vmatprep.subr.mxu0 0.0
        %4078 = vmatpush2.msra.mxu0 0.0
        %4079 = vmatprep.subr.mxu0 0.0
        %4080 = vmatpush2.msra.mxu0 0.0
        %4081 = vmatprep.subr.mxu0 0.0
        %4082 = vmatpush2.msra.mxu0 0.0
        %4083 = vmatprep.subr.mxu0 0.0
        %4084 = vmatpush2.msra.mxu0 0.0
        %4085 = vmatprep.subr.mxu0 0.0
        %4086 = vmatpush2.msra.mxu0 0.0
        %4087 = vmatprep.subr.mxu0 0.0
        %4088 = vmatpush2.msra.mxu0 0.0
        %4089 = vmatprep.subr.mxu0 0.0
        %4090 = vmatpush2.msra.mxu0 0.0
        %4091 = vmatprep.subr.mxu0 0.0
        %4092 = vmatpush2.msra.mxu0 0.0
        %4093 = vmatprep.subr.mxu0 0.0
        %4094 = vmatpush2.msra.mxu0 0.0
        %4095 = vmatprep.subr.mxu0 0.0
        %4096 = vmatpush2.msra.mxu0 0.0
        %4097 = vmatprep.mubr.f32.mxu0 0.0
        %4098 = vmatmul.mubr.f32.gmra.mxu0 %v981
        %v4099 = vpop.f32.mrf.mxu0
        %v4100 = vadd.f32 %v3725, %v4099
        %v4101 = vpop.f32.mrf.mxu0
        %4102 = vmatprep.mubr.f32.mxu0 0.0
        %4103 = vmatmul.mubr.f32.gmra.mxu0 %v984
        %v4104 = vpop.f32.mrf.mxu0
        %v4105 = vadd.f32 %v3726, %v4104
        %v4106 = vpop.f32.mrf.mxu0
        %4107 = vdwg.mxu0
        %4108 = vmatprep.subr.mxu0 0.0
        %4109 = vmatpush1.msra.mxu0 0.0
        %4110 = vmatprep.subr.mxu0 0.0
        %4111 = vmatpush1.msra.mxu0 0.0
        %4112 = vmatprep.subr.mxu0 0.0
        %4113 = vmatpush1.msra.mxu0 0.0
        %4114 = vmatprep.subr.mxu0 0.0
        %4115 = vmatpush1.msra.mxu0 0.0
        %4116 = vmatprep.subr.mxu0 0.0
        %4117 = vmatpush1.msra.mxu0 0.0
        %4118 = vmatprep.subr.mxu0 0.0
        %4119 = vmatpush1.msra.mxu0 0.0
        %4120 = vmatprep.subr.mxu0 0.0
        %4121 = vmatpush1.msra.mxu0 0.0
        %4122 = vmatprep.subr.mxu0 0.0
        %4123 = vmatpush1.msra.mxu0 0.0
        %4124 = vmatprep.subr.mxu0 0.0
        %4125 = vmatpush1.msra.mxu0 0.0
        %4126 = vmatprep.subr.mxu0 0.0
        %4127 = vmatpush1.msra.mxu0 0.0
        %4128 = vmatprep.subr.mxu0 0.0
        %4129 = vmatpush1.msra.mxu0 0.0
        %4130 = vmatprep.subr.mxu0 0.0
        %4131 = vmatpush1.msra.mxu0 0.0
        %4132 = vmatprep.subr.mxu0 0.0
        %4133 = vmatpush1.msra.mxu0 0.0
        %4134 = vmatprep.subr.mxu0 0.0
        %4135 = vmatpush1.msra.mxu0 0.0
        %4136 = vmatprep.subr.mxu0 0.0
        %4137 = vmatpush1.msra.mxu0 %v3728
        %4138 = vmatprep.subr.mxu0 0.0
        %4139 = vmatpush1.msra.mxu0 %v3727
        %4140 = vmatprep.subr.mxu0 0.0
        %4141 = vmatpush2.msra.mxu0 0.0
        %4142 = vmatprep.subr.mxu0 0.0
        %4143 = vmatpush2.msra.mxu0 0.0
        %4144 = vmatprep.subr.mxu0 0.0
        %4145 = vmatpush2.msra.mxu0 0.0
        %4146 = vmatprep.subr.mxu0 0.0
        %4147 = vmatpush2.msra.mxu0 0.0
        %4148 = vmatprep.subr.mxu0 0.0
        %4149 = vmatpush2.msra.mxu0 0.0
        %4150 = vmatprep.subr.mxu0 0.0
        %4151 = vmatpush2.msra.mxu0 0.0
        %4152 = vmatprep.subr.mxu0 0.0
        %4153 = vmatpush2.msra.mxu0 0.0
        %4154 = vmatprep.subr.mxu0 0.0
        %4155 = vmatpush2.msra.mxu0 0.0
        %4156 = vmatprep.subr.mxu0 0.0
        %4157 = vmatpush2.msra.mxu0 0.0
        %4158 = vmatprep.subr.mxu0 0.0
        %4159 = vmatpush2.msra.mxu0 0.0
        %4160 = vmatprep.subr.mxu0 0.0
        %4161 = vmatpush2.msra.mxu0 0.0
        %4162 = vmatprep.subr.mxu0 0.0
        %4163 = vmatpush2.msra.mxu0 0.0
        %4164 = vmatprep.subr.mxu0 0.0
        %4165 = vmatpush2.msra.mxu0 0.0
        %4166 = vmatprep.subr.mxu0 0.0
        %4167 = vmatpush2.msra.mxu0 0.0
        %4168 = vmatprep.subr.mxu0 0.0
        %4169 = vmatpush2.msra.mxu0 0.0
        %4170 = vmatprep.subr.mxu0 0.0
        %4171 = vmatpush2.msra.mxu0 0.0
        %4172 = vmatprep.mubr.f32.mxu0 0.0
        %4173 = vmatmul.mubr.f32.gmra.mxu0 %v1062
        %v4174 = vpop.f32.mrf.mxu0
        %v4175 = vadd.f32 %v3727, %v4174
        %v4176 = vpop.f32.mrf.mxu0
        %4177 = vmatprep.mubr.f32.mxu0 0.0
        %4178 = vmatmul.mubr.f32.gmra.mxu0 %v1065
        %v4179 = vpop.f32.mrf.mxu0
        %v4180 = vadd.f32 %v3728, %v4179
        %v4181 = vpop.f32.mrf.mxu0
        %4182 = vdwg.mxu0
        %4183 = vmatprep.subr.mxu0 0.0
        %4184 = vmatpush1.msra.mxu0 0.0
        %4185 = vmatprep.subr.mxu0 0.0
        %4186 = vmatpush1.msra.mxu0 0.0
        %4187 = vmatprep.subr.mxu0 0.0
        %4188 = vmatpush1.msra.mxu0 0.0
        %4189 = vmatprep.subr.mxu0 0.0
        %4190 = vmatpush1.msra.mxu0 0.0
        %4191 = vmatprep.subr.mxu0 0.0
        %4192 = vmatpush1.msra.mxu0 0.0
        %4193 = vmatprep.subr.mxu0 0.0
        %4194 = vmatpush1.msra.mxu0 0.0
        %4195 = vmatprep.subr.mxu0 0.0
        %4196 = vmatpush1.msra.mxu0 0.0
        %4197 = vmatprep.subr.mxu0 0.0
        %4198 = vmatpush1.msra.mxu0 0.0
        %4199 = vmatprep.subr.mxu0 0.0
        %4200 = vmatpush1.msra.mxu0 0.0
        %4201 = vmatprep.subr.mxu0 0.0
        %4202 = vmatpush1.msra.mxu0 0.0
        %4203 = vmatprep.subr.mxu0 0.0
        %4204 = vmatpush1.msra.mxu0 0.0
        %4205 = vmatprep.subr.mxu0 0.0
        %4206 = vmatpush1.msra.mxu0 0.0
        %4207 = vmatprep.subr.mxu0 0.0
        %4208 = vmatpush1.msra.mxu0 0.0
        %4209 = vmatprep.subr.mxu0 0.0
        %4210 = vmatpush1.msra.mxu0 0.0
        %4211 = vmatprep.subr.mxu0 0.0
        %4212 = vmatpush1.msra.mxu0 %v3730
        %4213 = vmatprep.subr.mxu0 0.0
        %4214 = vmatpush1.msra.mxu0 %v3729
        %4215 = vmatprep.subr.mxu0 0.0
        %4216 = vmatpush2.msra.mxu0 0.0
        %4217 = vmatprep.subr.mxu0 0.0
        %4218 = vmatpush2.msra.mxu0 0.0
        %4219 = vmatprep.subr.mxu0 0.0
        %4220 = vmatpush2.msra.mxu0 0.0
        %4221 = vmatprep.subr.mxu0 0.0
        %4222 = vmatpush2.msra.mxu0 0.0
        %4223 = vmatprep.subr.mxu0 0.0
        %4224 = vmatpush2.msra.mxu0 0.0
        %4225 = vmatprep.subr.mxu0 0.0
        %4226 = vmatpush2.msra.mxu0 0.0
        %4227 = vmatprep.subr.mxu0 0.0
        %4228 = vmatpush2.msra.mxu0 0.0
        %4229 = vmatprep.subr.mxu0 0.0
        %4230 = vmatpush2.msra.mxu0 0.0
        %4231 = vmatprep.subr.mxu0 0.0
        %4232 = vmatpush2.msra.mxu0 0.0
        %4233 = vmatprep.subr.mxu0 0.0
        %4234 = vmatpush2.msra.mxu0 0.0
        %4235 = vmatprep.subr.mxu0 0.0
        %4236 = vmatpush2.msra.mxu0 0.0
        %4237 = vmatprep.subr.mxu0 0.0
        %4238 = vmatpush2.msra.mxu0 0.0
        %4239 = vmatprep.subr.mxu0 0.0
        %4240 = vmatpush2.msra.mxu0 0.0
        %4241 = vmatprep.subr.mxu0 0.0
        %4242 = vmatpush2.msra.mxu0 0.0
        %4243 = vmatprep.subr.mxu0 0.0
        %4244 = vmatpush2.msra.mxu0 0.0
        %4245 = vmatprep.subr.mxu0 0.0
        %4246 = vmatpush2.msra.mxu0 0.0
        %4247 = vmatprep.mubr.f32.mxu0 0.0
        %4248 = vmatmul.mubr.f32.gmra.mxu0 %v1143
        %v4249 = vpop.f32.mrf.mxu0
        %v4250 = vadd.f32 %v3729, %v4249
        %v4251 = vpop.f32.mrf.mxu0
        %4252 = vmatprep.mubr.f32.mxu0 0.0
        %4253 = vmatmul.mubr.f32.gmra.mxu0 %v1146
        %v4254 = vpop.f32.mrf.mxu0
        %v4255 = vadd.f32 %v3730, %v4254
        %v4256 = vpop.f32.mrf.mxu0
        %4257 = vdwg.mxu0
        %4258 = vmatprep.subr.mxu0 0.0
        %4259 = vmatpush1.msra.mxu0 0.0
        %4260 = vmatprep.subr.mxu0 0.0
        %4261 = vmatpush1.msra.mxu0 0.0
        %4262 = vmatprep.subr.mxu0 0.0
        %4263 = vmatpush1.msra.mxu0 0.0
        %4264 = vmatprep.subr.mxu0 0.0
        %4265 = vmatpush1.msra.mxu0 0.0
        %4266 = vmatprep.subr.mxu0 0.0
        %4267 = vmatpush1.msra.mxu0 0.0
        %4268 = vmatprep.subr.mxu0 0.0
        %4269 = vmatpush1.msra.mxu0 0.0
        %4270 = vmatprep.subr.mxu0 0.0
        %4271 = vmatpush1.msra.mxu0 0.0
        %4272 = vmatprep.subr.mxu0 0.0
        %4273 = vmatpush1.msra.mxu0 0.0
        %4274 = vmatprep.subr.mxu0 0.0
        %4275 = vmatpush1.msra.mxu0 0.0
        %4276 = vmatprep.subr.mxu0 0.0
        %4277 = vmatpush1.msra.mxu0 0.0
        %4278 = vmatprep.subr.mxu0 0.0
        %4279 = vmatpush1.msra.mxu0 0.0
        %4280 = vmatprep.subr.mxu0 0.0
        %4281 = vmatpush1.msra.mxu0 0.0
        %4282 = vmatprep.subr.mxu0 0.0
        %4283 = vmatpush1.msra.mxu0 0.0
        %4284 = vmatprep.subr.mxu0 0.0
        %4285 = vmatpush1.msra.mxu0 0.0
        %4286 = vmatprep.subr.mxu0 0.0
        %4287 = vmatpush1.msra.mxu0 %v3732
        %4288 = vmatprep.subr.mxu0 0.0
        %4289 = vmatpush1.msra.mxu0 %v3731
        %4290 = vmatprep.subr.mxu0 0.0
        %4291 = vmatpush2.msra.mxu0 0.0
        %4292 = vmatprep.subr.mxu0 0.0
        %4293 = vmatpush2.msra.mxu0 0.0
        %4294 = vmatprep.subr.mxu0 0.0
        %4295 = vmatpush2.msra.mxu0 0.0
        %4296 = vmatprep.subr.mxu0 0.0
        %4297 = vmatpush2.msra.mxu0 0.0
        %4298 = vmatprep.subr.mxu0 0.0
        %4299 = vmatpush2.msra.mxu0 0.0
        %4300 = vmatprep.subr.mxu0 0.0
        %4301 = vmatpush2.msra.mxu0 0.0
        %4302 = vmatprep.subr.mxu0 0.0
        %4303 = vmatpush2.msra.mxu0 0.0
        %4304 = vmatprep.subr.mxu0 0.0
        %4305 = vmatpush2.msra.mxu0 0.0
        %4306 = vmatprep.subr.mxu0 0.0
        %4307 = vmatpush2.msra.mxu0 0.0
        %4308 = vmatprep.subr.mxu0 0.0
        %4309 = vmatpush2.msra.mxu0 0.0
        %4310 = vmatprep.subr.mxu0 0.0
        %4311 = vmatpush2.msra.mxu0 0.0
        %4312 = vmatprep.subr.mxu0 0.0
        %4313 = vmatpush2.msra.mxu0 0.0
        %4314 = vmatprep.subr.mxu0 0.0
        %4315 = vmatpush2.msra.mxu0 0.0
        %4316 = vmatprep.subr.mxu0 0.0
        %4317 = vmatpush2.msra.mxu0 0.0
        %4318 = vmatprep.subr.mxu0 0.0
        %4319 = vmatpush2.msra.mxu0 0.0
        %4320 = vmatprep.subr.mxu0 0.0
        %4321 = vmatpush2.msra.mxu0 0.0
        %4322 = vmatprep.mubr.f32.mxu0 0.0
        %4323 = vmatmul.mubr.f32.gmra.mxu0 %v1224
        %v4324 = vpop.f32.mrf.mxu0
        %v4325 = vadd.f32 %v3731, %v4324
        %v4326 = vpop.f32.mrf.mxu0
        %4327 = vmatprep.mubr.f32.mxu0 0.0
        %4328 = vmatmul.mubr.f32.gmra.mxu0 %v1227
        %v4329 = vpop.f32.mrf.mxu0
        %v4330 = vadd.f32 %v3732, %v4329
        %v4331 = vpop.f32.mrf.mxu0
        %4332 = vdwg.mxu0
        %v4333 = vmul.f32 %v639, %v3800
        %v4334 = vmul.f32 %v640, %v3805
        %v4335 = vmul.f32 %v641, %v3875
        %v4336 = vmul.f32 %v642, %v3880
        %v4337 = vmul.f32 %v643, %v3950
        %v4338 = vmul.f32 %v644, %v3955
        %v4339 = vmul.f32 %v645, %v4025
        %v4340 = vmul.f32 %v646, %v4030
        %v4341 = vmul.f32 %v647, %v4100
        %v4342 = vmul.f32 %v648, %v4105
        %v4343 = vmul.f32 %v649, %v4175
        %v4344 = vmul.f32 %v650, %v4180
        %v4345 = vmul.f32 %v651, %v4250
        %v4346 = vmul.f32 %v652, %v4255
        %v4347 = vmul.f32 %v653, %v4325
        %v4348 = vmul.f32 %v654, %v4330
        %v4349 = vld [vmem:[#allocation12] sm:$0xff]
        %v4350 = vld [vmem:[#allocation12 + $0x8] sm:$0xff]
        %v4351 = vld [vmem:[#allocation12 + $0x10] sm:$0xff]
        %v4352 = vld [vmem:[#allocation12 + $0x18] sm:$0xff]
        %v4353 = vld [vmem:[#allocation12 + $0x20] sm:$0xff]
        %v4354 = vld [vmem:[#allocation12 + $0x28] sm:$0xff]
        %v4355 = vld [vmem:[#allocation12 + $0x30] sm:$0xff]
        %v4356 = vld [vmem:[#allocation12 + $0x38] sm:$0xff]
        %v4357 = vld [vmem:[#allocation12 + $0x40] sm:$0xff]
        %v4358 = vld [vmem:[#allocation12 + $0x48] sm:$0xff]
        %v4359 = vld [vmem:[#allocation12 + $0x50] sm:$0xff]
        %v4360 = vld [vmem:[#allocation12 + $0x58] sm:$0xff]
        %v4361 = vld [vmem:[#allocation12 + $0x60] sm:$0xff]
        %v4362 = vld [vmem:[#allocation12 + $0x68] sm:$0xff]
        %v4363 = vld [vmem:[#allocation12 + $0x70] sm:$0xff]
        %v4364 = vld [vmem:[#allocation12 + $0x78] sm:$0xff]
        %v4365 = vld [vmem:[%s8] sm:$0x1]
        %v4367 = vlaneseq
        %v4368 = vshrl.u32 %v4367, 7
        %v4369 = vsub.s32 0, %v4368
        %v4370 = vrot.slane %v4365, %v4369
        %4372 = vmatprep.subr.mxu0 0.0
        %4373 = vmatpush1.msra.mxu0 %v4364
        %4374 = vmatprep.subr.mxu0 0.0
        %4375 = vmatpush1.msra.mxu0 %v4363
        %4376 = vmatprep.subr.mxu0 0.0
        %4377 = vmatpush1.msra.mxu0 %v4362
        %4378 = vmatprep.subr.mxu0 0.0
        %4379 = vmatpush1.msra.mxu0 %v4361
        %4380 = vmatprep.subr.mxu0 0.0
        %4381 = vmatpush1.msra.mxu0 %v4360
        %4382 = vmatprep.subr.mxu0 0.0
        %4383 = vmatpush1.msra.mxu0 %v4359
        %4384 = vmatprep.subr.mxu0 0.0
        %4385 = vmatpush1.msra.mxu0 %v4358
        %4386 = vmatprep.subr.mxu0 0.0
        %4387 = vmatpush1.msra.mxu0 %v4357
        %4388 = vmatprep.subr.mxu0 0.0
        %4389 = vmatpush1.msra.mxu0 %v4356
        %4390 = vmatprep.subr.mxu0 0.0
        %4391 = vmatpush1.msra.mxu0 %v4355
        %4392 = vmatprep.subr.mxu0 0.0
        %4393 = vmatpush1.msra.mxu0 %v4354
        %4394 = vmatprep.subr.mxu0 0.0
        %4395 = vmatpush1.msra.mxu0 %v4353
        %4396 = vmatprep.subr.mxu0 0.0
        %4397 = vmatpush1.msra.mxu0 %v4352
        %4398 = vmatprep.subr.mxu0 0.0
        %4399 = vmatpush1.msra.mxu0 %v4351
        %4400 = vmatprep.subr.mxu0 0.0
        %4401 = vmatpush1.msra.mxu0 %v4350
        %4402 = vmatprep.subr.mxu0 0.0
        %4403 = vmatpush1.msra.mxu0 %v4349
        %4404 = vmatprep.subr.mxu0 0.0
        %4405 = vmatpush2.msra.mxu0 0.0
        %4406 = vmatprep.subr.mxu0 0.0
        %4407 = vmatpush2.msra.mxu0 0.0
        %4408 = vmatprep.subr.mxu0 0.0
        %4409 = vmatpush2.msra.mxu0 0.0
        %4410 = vmatprep.subr.mxu0 0.0
        %4411 = vmatpush2.msra.mxu0 0.0
        %4412 = vmatprep.subr.mxu0 0.0
        %4413 = vmatpush2.msra.mxu0 0.0
        %4414 = vmatprep.subr.mxu0 0.0
        %4415 = vmatpush2.msra.mxu0 0.0
        %4416 = vmatprep.subr.mxu0 0.0
        %4417 = vmatpush2.msra.mxu0 0.0
        %4418 = vmatprep.subr.mxu0 0.0
        %4419 = vmatpush2.msra.mxu0 0.0
        %4420 = vmatprep.subr.mxu0 0.0
        %4421 = vmatpush2.msra.mxu0 0.0
        %4422 = vmatprep.subr.mxu0 0.0
        %4423 = vmatpush2.msra.mxu0 0.0
        %4424 = vmatprep.subr.mxu0 0.0
        %4425 = vmatpush2.msra.mxu0 0.0
        %4426 = vmatprep.subr.mxu0 0.0
        %4427 = vmatpush2.msra.mxu0 0.0
        %4428 = vmatprep.subr.mxu0 0.0
        %4429 = vmatpush2.msra.mxu0 0.0
        %4430 = vmatprep.subr.mxu0 0.0
        %4431 = vmatpush2.msra.mxu0 0.0
        %4432 = vmatprep.subr.mxu0 0.0
        %4433 = vmatpush2.msra.mxu0 0.0
        %4434 = vmatprep.subr.mxu0 0.0
        %4435 = vmatpush2.msra.mxu0 0.0
        %4436 = vmatprep.mubr.f32.mxu0 0.0
        %4437 = vmatmul.mubr.f32.gmra.mxu0 %v4333
        %v4438 = vpop.f32.mrf.mxu0
        %v4439 = vadd.f32 %v4370, %v4438
        %v4440 = vpop.f32.mrf.mxu0
        %4441 = vmatprep.mubr.f32.mxu0 0.0
        %4442 = vmatmul.mubr.f32.gmra.mxu0 %v4334
        %v4443 = vpop.f32.mrf.mxu0
        %v4444 = vadd.f32 %v4370, %v4443
        %v4445 = vpop.f32.mrf.mxu0
        %4446 = vmatprep.mubr.f32.mxu0 0.0
        %4447 = vmatmul.mubr.f32.gmra.mxu0 %v4335
        %v4448 = vpop.f32.mrf.mxu0
        %v4449 = vadd.f32 %v4370, %v4448
        %v4450 = vpop.f32.mrf.mxu0
        %4451 = vmatprep.mubr.f32.mxu0 0.0
        %4452 = vmatmul.mubr.f32.gmra.mxu0 %v4336
        %v4453 = vpop.f32.mrf.mxu0
        %v4454 = vadd.f32 %v4370, %v4453
        %v4455 = vpop.f32.mrf.mxu0
        %4456 = vmatprep.mubr.f32.mxu0 0.0
        %4457 = vmatmul.mubr.f32.gmra.mxu0 %v4337
        %v4458 = vpop.f32.mrf.mxu0
        %v4459 = vadd.f32 %v4370, %v4458
        %v4460 = vpop.f32.mrf.mxu0
        %4461 = vmatprep.mubr.f32.mxu0 0.0
        %4462 = vmatmul.mubr.f32.gmra.mxu0 %v4338
        %v4463 = vpop.f32.mrf.mxu0
        %v4464 = vadd.f32 %v4370, %v4463
        %v4465 = vpop.f32.mrf.mxu0
        %4466 = vmatprep.mubr.f32.mxu0 0.0
        %4467 = vmatmul.mubr.f32.gmra.mxu0 %v4339
        %v4468 = vpop.f32.mrf.mxu0
        %v4469 = vadd.f32 %v4370, %v4468
        %v4470 = vpop.f32.mrf.mxu0
        %4471 = vmatprep.mubr.f32.mxu0 0.0
        %4472 = vmatmul.mubr.f32.gmra.mxu0 %v4340
        %v4473 = vpop.f32.mrf.mxu0
        %v4474 = vadd.f32 %v4370, %v4473
        %v4475 = vpop.f32.mrf.mxu0
        %4476 = vmatprep.mubr.f32.mxu0 0.0
        %4477 = vmatmul.mubr.f32.gmra.mxu0 %v4341
        %v4478 = vpop.f32.mrf.mxu0
        %v4479 = vadd.f32 %v4370, %v4478
        %v4480 = vpop.f32.mrf.mxu0
        %4481 = vmatprep.mubr.f32.mxu0 0.0
        %4482 = vmatmul.mubr.f32.gmra.mxu0 %v4342
        %v4483 = vpop.f32.mrf.mxu0
        %v4484 = vadd.f32 %v4370, %v4483
        %v4485 = vpop.f32.mrf.mxu0
        %4486 = vmatprep.mubr.f32.mxu0 0.0
        %4487 = vmatmul.mubr.f32.gmra.mxu0 %v4343
        %v4488 = vpop.f32.mrf.mxu0
        %v4489 = vadd.f32 %v4370, %v4488
        %v4490 = vpop.f32.mrf.mxu0
        %4491 = vmatprep.mubr.f32.mxu0 0.0
        %4492 = vmatmul.mubr.f32.gmra.mxu0 %v4344
        %v4493 = vpop.f32.mrf.mxu0
        %v4494 = vadd.f32 %v4370, %v4493
        %v4495 = vpop.f32.mrf.mxu0
        %4496 = vmatprep.mubr.f32.mxu0 0.0
        %4497 = vmatmul.mubr.f32.gmra.mxu0 %v4345
        %v4498 = vpop.f32.mrf.mxu0
        %v4499 = vadd.f32 %v4370, %v4498
        %v4500 = vpop.f32.mrf.mxu0
        %4501 = vmatprep.mubr.f32.mxu0 0.0
        %4502 = vmatmul.mubr.f32.gmra.mxu0 %v4346
        %v4503 = vpop.f32.mrf.mxu0
        %v4504 = vadd.f32 %v4370, %v4503
        %v4505 = vpop.f32.mrf.mxu0
        %4506 = vmatprep.mubr.f32.mxu0 0.0
        %4507 = vmatmul.mubr.f32.gmra.mxu0 %v4347
        %v4508 = vpop.f32.mrf.mxu0
        %v4509 = vadd.f32 %v4370, %v4508
        %v4510 = vpop.f32.mrf.mxu0
        %4511 = vmatprep.mubr.f32.mxu0 0.0
        %4512 = vmatmul.mubr.f32.gmra.mxu0 %v4348
        %v4513 = vpop.f32.mrf.mxu0
        %v4514 = vadd.f32 %v4370, %v4513
        %v4515 = vpop.f32.mrf.mxu0
        %4516 = vdwg.mxu0
        %v4517 = vmax.f32 %v4439, 0.0
        %v4518 = vmax.f32 %v4444, 0.0
        %v4519 = vmax.f32 %v4449, 0.0
        %v4520 = vmax.f32 %v4454, 0.0
        %v4521 = vmax.f32 %v4459, 0.0
        %v4522 = vmax.f32 %v4464, 0.0
        %v4523 = vmax.f32 %v4469, 0.0
        %v4524 = vmax.f32 %v4474, 0.0
        %v4525 = vmax.f32 %v4479, 0.0
        %v4526 = vmax.f32 %v4484, 0.0
        %v4527 = vmax.f32 %v4489, 0.0
        %v4528 = vmax.f32 %v4494, 0.0
        %v4529 = vmax.f32 %v4499, 0.0
        %v4530 = vmax.f32 %v4504, 0.0
        %v4531 = vmax.f32 %v4509, 0.0
        %v4532 = vmax.f32 %v4514, 0.0
        %v4533 = vmul.f32 %v639, %v4517
        %v4534 = vmul.f32 %v640, %v4518
        %v4535 = vmul.f32 %v641, %v4519
        %v4536 = vmul.f32 %v642, %v4520
        %v4537 = vmul.f32 %v643, %v4521
        %v4538 = vmul.f32 %v644, %v4522
        %v4539 = vmul.f32 %v645, %v4523
        %v4540 = vmul.f32 %v646, %v4524
        %v4541 = vmul.f32 %v647, %v4525
        %v4542 = vmul.f32 %v648, %v4526
        %v4543 = vmul.f32 %v649, %v4527
        %v4544 = vmul.f32 %v650, %v4528
        %v4545 = vmul.f32 %v651, %v4529
        %v4546 = vmul.f32 %v652, %v4530
        %v4547 = vmul.f32 %v653, %v4531
        %v4548 = vmul.f32 %v654, %v4532
        %4549 = vmatprep.subr.mxu0 0.0
        %4550 = vmatpush1.msra.mxu0 0.0
        %4551 = vmatprep.subr.mxu0 0.0
        %4552 = vmatpush1.msra.mxu0 0.0
        %4553 = vmatprep.subr.mxu0 0.0
        %4554 = vmatpush1.msra.mxu0 0.0
        %4555 = vmatprep.subr.mxu0 0.0
        %4556 = vmatpush1.msra.mxu0 0.0
        %4557 = vmatprep.subr.mxu0 0.0
        %4558 = vmatpush1.msra.mxu0 0.0
        %4559 = vmatprep.subr.mxu0 0.0
        %4560 = vmatpush1.msra.mxu0 0.0
        %4561 = vmatprep.subr.mxu0 0.0
        %4562 = vmatpush1.msra.mxu0 0.0
        %4563 = vmatprep.subr.mxu0 0.0
        %4564 = vmatpush1.msra.mxu0 0.0
        %4565 = vmatprep.subr.mxu0 0.0
        %4566 = vmatpush1.msra.mxu0 0.0
        %4567 = vmatprep.subr.mxu0 0.0
        %4568 = vmatpush1.msra.mxu0 0.0
        %4569 = vmatprep.subr.mxu0 0.0
        %4570 = vmatpush1.msra.mxu0 0.0
        %4571 = vmatprep.subr.mxu0 0.0
        %4572 = vmatpush1.msra.mxu0 0.0
        %4573 = vmatprep.subr.mxu0 0.0
        %4574 = vmatpush1.msra.mxu0 0.0
        %4575 = vmatprep.subr.mxu0 0.0
        %4576 = vmatpush1.msra.mxu0 0.0
        %4577 = vmatprep.subr.mxu0 0.0
        %4578 = vmatpush1.msra.mxu0 %v4534
        %4579 = vmatprep.subr.mxu0 0.0
        %4580 = vmatpush1.msra.mxu0 %v4533
        %4581 = vmatprep.subr.mxu0 0.0
        %4582 = vmatpush2.msra.mxu0 0.0
        %4583 = vmatprep.subr.mxu0 0.0
        %4584 = vmatpush2.msra.mxu0 0.0
        %4585 = vmatprep.subr.mxu0 0.0
        %4586 = vmatpush2.msra.mxu0 0.0
        %4587 = vmatprep.subr.mxu0 0.0
        %4588 = vmatpush2.msra.mxu0 0.0
        %4589 = vmatprep.subr.mxu0 0.0
        %4590 = vmatpush2.msra.mxu0 0.0
        %4591 = vmatprep.subr.mxu0 0.0
        %4592 = vmatpush2.msra.mxu0 0.0
        %4593 = vmatprep.subr.mxu0 0.0
        %4594 = vmatpush2.msra.mxu0 0.0
        %4595 = vmatprep.subr.mxu0 0.0
        %4596 = vmatpush2.msra.mxu0 0.0
        %4597 = vmatprep.subr.mxu0 0.0
        %4598 = vmatpush2.msra.mxu0 0.0
        %4599 = vmatprep.subr.mxu0 0.0
        %4600 = vmatpush2.msra.mxu0 0.0
        %4601 = vmatprep.subr.mxu0 0.0
        %4602 = vmatpush2.msra.mxu0 0.0
        %4603 = vmatprep.subr.mxu0 0.0
        %4604 = vmatpush2.msra.mxu0 0.0
        %4605 = vmatprep.subr.mxu0 0.0
        %4606 = vmatpush2.msra.mxu0 0.0
        %4607 = vmatprep.subr.mxu0 0.0
        %4608 = vmatpush2.msra.mxu0 0.0
        %4609 = vmatprep.subr.mxu0 0.0
        %4610 = vmatpush2.msra.mxu0 0.0
        %4611 = vmatprep.subr.mxu0 0.0
        %4612 = vmatpush2.msra.mxu0 0.0
        %4613 = vmatprep.mubr.f32.mxu0 0.0
        %4614 = vmatmul.mubr.f32.gmra.mxu0 %v657
        %v4615 = vpop.f32.mrf.mxu0
        %v4616 = vadd.f32 %v4533, %v4615
        %v4617 = vpop.f32.mrf.mxu0
        %4618 = vmatprep.mubr.f32.mxu0 0.0
        %4619 = vmatmul.mubr.f32.gmra.mxu0 %v660
        %v4620 = vpop.f32.mrf.mxu0
        %v4621 = vadd.f32 %v4534, %v4620
        %v4622 = vpop.f32.mrf.mxu0
        %4623 = vdwg.mxu0
        %4624 = vmatprep.subr.mxu0 0.0
        %4625 = vmatpush1.msra.mxu0 0.0
        %4626 = vmatprep.subr.mxu0 0.0
        %4627 = vmatpush1.msra.mxu0 0.0
        %4628 = vmatprep.subr.mxu0 0.0
        %4629 = vmatpush1.msra.mxu0 0.0
        %4630 = vmatprep.subr.mxu0 0.0
        %4631 = vmatpush1.msra.mxu0 0.0
        %4632 = vmatprep.subr.mxu0 0.0
        %4633 = vmatpush1.msra.mxu0 0.0
        %4634 = vmatprep.subr.mxu0 0.0
        %4635 = vmatpush1.msra.mxu0 0.0
        %4636 = vmatprep.subr.mxu0 0.0
        %4637 = vmatpush1.msra.mxu0 0.0
        %4638 = vmatprep.subr.mxu0 0.0
        %4639 = vmatpush1.msra.mxu0 0.0
        %4640 = vmatprep.subr.mxu0 0.0
        %4641 = vmatpush1.msra.mxu0 0.0
        %4642 = vmatprep.subr.mxu0 0.0
        %4643 = vmatpush1.msra.mxu0 0.0
        %4644 = vmatprep.subr.mxu0 0.0
        %4645 = vmatpush1.msra.mxu0 0.0
        %4646 = vmatprep.subr.mxu0 0.0
        %4647 = vmatpush1.msra.mxu0 0.0
        %4648 = vmatprep.subr.mxu0 0.0
        %4649 = vmatpush1.msra.mxu0 0.0
        %4650 = vmatprep.subr.mxu0 0.0
        %4651 = vmatpush1.msra.mxu0 0.0
        %4652 = vmatprep.subr.mxu0 0.0
        %4653 = vmatpush1.msra.mxu0 %v4536
        %4654 = vmatprep.subr.mxu0 0.0
        %4655 = vmatpush1.msra.mxu0 %v4535
        %4656 = vmatprep.subr.mxu0 0.0
        %4657 = vmatpush2.msra.mxu0 0.0
        %4658 = vmatprep.subr.mxu0 0.0
        %4659 = vmatpush2.msra.mxu0 0.0
        %4660 = vmatprep.subr.mxu0 0.0
        %4661 = vmatpush2.msra.mxu0 0.0
        %4662 = vmatprep.subr.mxu0 0.0
        %4663 = vmatpush2.msra.mxu0 0.0
        %4664 = vmatprep.subr.mxu0 0.0
        %4665 = vmatpush2.msra.mxu0 0.0
        %4666 = vmatprep.subr.mxu0 0.0
        %4667 = vmatpush2.msra.mxu0 0.0
        %4668 = vmatprep.subr.mxu0 0.0
        %4669 = vmatpush2.msra.mxu0 0.0
        %4670 = vmatprep.subr.mxu0 0.0
        %4671 = vmatpush2.msra.mxu0 0.0
        %4672 = vmatprep.subr.mxu0 0.0
        %4673 = vmatpush2.msra.mxu0 0.0
        %4674 = vmatprep.subr.mxu0 0.0
        %4675 = vmatpush2.msra.mxu0 0.0
        %4676 = vmatprep.subr.mxu0 0.0
        %4677 = vmatpush2.msra.mxu0 0.0
        %4678 = vmatprep.subr.mxu0 0.0
        %4679 = vmatpush2.msra.mxu0 0.0
        %4680 = vmatprep.subr.mxu0 0.0
        %4681 = vmatpush2.msra.mxu0 0.0
        %4682 = vmatprep.subr.mxu0 0.0
        %4683 = vmatpush2.msra.mxu0 0.0
        %4684 = vmatprep.subr.mxu0 0.0
        %4685 = vmatpush2.msra.mxu0 0.0
        %4686 = vmatprep.subr.mxu0 0.0
        %4687 = vmatpush2.msra.mxu0 0.0
        %4688 = vmatprep.mubr.f32.mxu0 0.0
        %4689 = vmatmul.mubr.f32.gmra.mxu0 %v738
        %v4690 = vpop.f32.mrf.mxu0
        %v4691 = vadd.f32 %v4535, %v4690
        %v4692 = vpop.f32.mrf.mxu0
        %4693 = vmatprep.mubr.f32.mxu0 0.0
        %4694 = vmatmul.mubr.f32.gmra.mxu0 %v741
        %v4695 = vpop.f32.mrf.mxu0
        %v4696 = vadd.f32 %v4536, %v4695
        %v4697 = vpop.f32.mrf.mxu0
        %4698 = vdwg.mxu0
        %4699 = vmatprep.subr.mxu0 0.0
        %4700 = vmatpush1.msra.mxu0 0.0
        %4701 = vmatprep.subr.mxu0 0.0
        %4702 = vmatpush1.msra.mxu0 0.0
        %4703 = vmatprep.subr.mxu0 0.0
        %4704 = vmatpush1.msra.mxu0 0.0
        %4705 = vmatprep.subr.mxu0 0.0
        %4706 = vmatpush1.msra.mxu0 0.0
        %4707 = vmatprep.subr.mxu0 0.0
        %4708 = vmatpush1.msra.mxu0 0.0
        %4709 = vmatprep.subr.mxu0 0.0
        %4710 = vmatpush1.msra.mxu0 0.0
        %4711 = vmatprep.subr.mxu0 0.0
        %4712 = vmatpush1.msra.mxu0 0.0
        %4713 = vmatprep.subr.mxu0 0.0
        %4714 = vmatpush1.msra.mxu0 0.0
        %4715 = vmatprep.subr.mxu0 0.0
        %4716 = vmatpush1.msra.mxu0 0.0
        %4717 = vmatprep.subr.mxu0 0.0
        %4718 = vmatpush1.msra.mxu0 0.0
        %4719 = vmatprep.subr.mxu0 0.0
        %4720 = vmatpush1.msra.mxu0 0.0
        %4721 = vmatprep.subr.mxu0 0.0
        %4722 = vmatpush1.msra.mxu0 0.0
        %4723 = vmatprep.subr.mxu0 0.0
        %4724 = vmatpush1.msra.mxu0 0.0
        %4725 = vmatprep.subr.mxu0 0.0
        %4726 = vmatpush1.msra.mxu0 0.0
        %4727 = vmatprep.subr.mxu0 0.0
        %4728 = vmatpush1.msra.mxu0 %v4538
        %4729 = vmatprep.subr.mxu0 0.0
        %4730 = vmatpush1.msra.mxu0 %v4537
        %4731 = vmatprep.subr.mxu0 0.0
        %4732 = vmatpush2.msra.mxu0 0.0
        %4733 = vmatprep.subr.mxu0 0.0
        %4734 = vmatpush2.msra.mxu0 0.0
        %4735 = vmatprep.subr.mxu0 0.0
        %4736 = vmatpush2.msra.mxu0 0.0
        %4737 = vmatprep.subr.mxu0 0.0
        %4738 = vmatpush2.msra.mxu0 0.0
        %4739 = vmatprep.subr.mxu0 0.0
        %4740 = vmatpush2.msra.mxu0 0.0
        %4741 = vmatprep.subr.mxu0 0.0
        %4742 = vmatpush2.msra.mxu0 0.0
        %4743 = vmatprep.subr.mxu0 0.0
        %4744 = vmatpush2.msra.mxu0 0.0
        %4745 = vmatprep.subr.mxu0 0.0
        %4746 = vmatpush2.msra.mxu0 0.0
        %4747 = vmatprep.subr.mxu0 0.0
        %4748 = vmatpush2.msra.mxu0 0.0
        %4749 = vmatprep.subr.mxu0 0.0
        %4750 = vmatpush2.msra.mxu0 0.0
        %4751 = vmatprep.subr.mxu0 0.0
        %4752 = vmatpush2.msra.mxu0 0.0
        %4753 = vmatprep.subr.mxu0 0.0
        %4754 = vmatpush2.msra.mxu0 0.0
        %4755 = vmatprep.subr.mxu0 0.0
        %4756 = vmatpush2.msra.mxu0 0.0
        %4757 = vmatprep.subr.mxu0 0.0
        %4758 = vmatpush2.msra.mxu0 0.0
        %4759 = vmatprep.subr.mxu0 0.0
        %4760 = vmatpush2.msra.mxu0 0.0
        %4761 = vmatprep.subr.mxu0 0.0
        %4762 = vmatpush2.msra.mxu0 0.0
        %4763 = vmatprep.mubr.f32.mxu0 0.0
        %4764 = vmatmul.mubr.f32.gmra.mxu0 %v819
        %v4765 = vpop.f32.mrf.mxu0
        %v4766 = vadd.f32 %v4537, %v4765
        %v4767 = vpop.f32.mrf.mxu0
        %4768 = vmatprep.mubr.f32.mxu0 0.0
        %4769 = vmatmul.mubr.f32.gmra.mxu0 %v822
        %v4770 = vpop.f32.mrf.mxu0
        %v4771 = vadd.f32 %v4538, %v4770
        %v4772 = vpop.f32.mrf.mxu0
        %4773 = vdwg.mxu0
        %4774 = vmatprep.subr.mxu0 0.0
        %4775 = vmatpush1.msra.mxu0 0.0
        %4776 = vmatprep.subr.mxu0 0.0
        %4777 = vmatpush1.msra.mxu0 0.0
        %4778 = vmatprep.subr.mxu0 0.0
        %4779 = vmatpush1.msra.mxu0 0.0
        %4780 = vmatprep.subr.mxu0 0.0
        %4781 = vmatpush1.msra.mxu0 0.0
        %4782 = vmatprep.subr.mxu0 0.0
        %4783 = vmatpush1.msra.mxu0 0.0
        %4784 = vmatprep.subr.mxu0 0.0
        %4785 = vmatpush1.msra.mxu0 0.0
        %4786 = vmatprep.subr.mxu0 0.0
        %4787 = vmatpush1.msra.mxu0 0.0
        %4788 = vmatprep.subr.mxu0 0.0
        %4789 = vmatpush1.msra.mxu0 0.0
        %4790 = vmatprep.subr.mxu0 0.0
        %4791 = vmatpush1.msra.mxu0 0.0
        %4792 = vmatprep.subr.mxu0 0.0
        %4793 = vmatpush1.msra.mxu0 0.0
        %4794 = vmatprep.subr.mxu0 0.0
        %4795 = vmatpush1.msra.mxu0 0.0
        %4796 = vmatprep.subr.mxu0 0.0
        %4797 = vmatpush1.msra.mxu0 0.0
        %4798 = vmatprep.subr.mxu0 0.0
        %4799 = vmatpush1.msra.mxu0 0.0
        %4800 = vmatprep.subr.mxu0 0.0
        %4801 = vmatpush1.msra.mxu0 0.0
        %4802 = vmatprep.subr.mxu0 0.0
        %4803 = vmatpush1.msra.mxu0 %v4540
        %4804 = vmatprep.subr.mxu0 0.0
        %4805 = vmatpush1.msra.mxu0 %v4539
        %4806 = vmatprep.subr.mxu0 0.0
        %4807 = vmatpush2.msra.mxu0 0.0
        %4808 = vmatprep.subr.mxu0 0.0
        %4809 = vmatpush2.msra.mxu0 0.0
        %4810 = vmatprep.subr.mxu0 0.0
        %4811 = vmatpush2.msra.mxu0 0.0
        %4812 = vmatprep.subr.mxu0 0.0
        %4813 = vmatpush2.msra.mxu0 0.0
        %4814 = vmatprep.subr.mxu0 0.0
        %4815 = vmatpush2.msra.mxu0 0.0
        %4816 = vmatprep.subr.mxu0 0.0
        %4817 = vmatpush2.msra.mxu0 0.0
        %4818 = vmatprep.subr.mxu0 0.0
        %4819 = vmatpush2.msra.mxu0 0.0
        %4820 = vmatprep.subr.mxu0 0.0
        %4821 = vmatpush2.msra.mxu0 0.0
        %4822 = vmatprep.subr.mxu0 0.0
        %4823 = vmatpush2.msra.mxu0 0.0
        %4824 = vmatprep.subr.mxu0 0.0
        %4825 = vmatpush2.msra.mxu0 0.0
        %4826 = vmatprep.subr.mxu0 0.0
        %4827 = vmatpush2.msra.mxu0 0.0
        %4828 = vmatprep.subr.mxu0 0.0
        %4829 = vmatpush2.msra.mxu0 0.0
        %4830 = vmatprep.subr.mxu0 0.0
        %4831 = vmatpush2.msra.mxu0 0.0
        %4832 = vmatprep.subr.mxu0 0.0
        %4833 = vmatpush2.msra.mxu0 0.0
        %4834 = vmatprep.subr.mxu0 0.0
        %4835 = vmatpush2.msra.mxu0 0.0
        %4836 = vmatprep.subr.mxu0 0.0
        %4837 = vmatpush2.msra.mxu0 0.0
        %4838 = vmatprep.mubr.f32.mxu0 0.0
        %4839 = vmatmul.mubr.f32.gmra.mxu0 %v900
        %v4840 = vpop.f32.mrf.mxu0
        %v4841 = vadd.f32 %v4539, %v4840
        %v4842 = vpop.f32.mrf.mxu0
        %4843 = vmatprep.mubr.f32.mxu0 0.0
        %4844 = vmatmul.mubr.f32.gmra.mxu0 %v903
        %v4845 = vpop.f32.mrf.mxu0
        %v4846 = vadd.f32 %v4540, %v4845
        %v4847 = vpop.f32.mrf.mxu0
        %4848 = vdwg.mxu0
        %4849 = vmatprep.subr.mxu0 0.0
        %4850 = vmatpush1.msra.mxu0 0.0
        %4851 = vmatprep.subr.mxu0 0.0
        %4852 = vmatpush1.msra.mxu0 0.0
        %4853 = vmatprep.subr.mxu0 0.0
        %4854 = vmatpush1.msra.mxu0 0.0
        %4855 = vmatprep.subr.mxu0 0.0
        %4856 = vmatpush1.msra.mxu0 0.0
        %4857 = vmatprep.subr.mxu0 0.0
        %4858 = vmatpush1.msra.mxu0 0.0
        %4859 = vmatprep.subr.mxu0 0.0
        %4860 = vmatpush1.msra.mxu0 0.0
        %4861 = vmatprep.subr.mxu0 0.0
        %4862 = vmatpush1.msra.mxu0 0.0
        %4863 = vmatprep.subr.mxu0 0.0
        %4864 = vmatpush1.msra.mxu0 0.0
        %4865 = vmatprep.subr.mxu0 0.0
        %4866 = vmatpush1.msra.mxu0 0.0
        %4867 = vmatprep.subr.mxu0 0.0
        %4868 = vmatpush1.msra.mxu0 0.0
        %4869 = vmatprep.subr.mxu0 0.0
        %4870 = vmatpush1.msra.mxu0 0.0
        %4871 = vmatprep.subr.mxu0 0.0
        %4872 = vmatpush1.msra.mxu0 0.0
        %4873 = vmatprep.subr.mxu0 0.0
        %4874 = vmatpush1.msra.mxu0 0.0
        %4875 = vmatprep.subr.mxu0 0.0
        %4876 = vmatpush1.msra.mxu0 0.0
        %4877 = vmatprep.subr.mxu0 0.0
        %4878 = vmatpush1.msra.mxu0 %v4542
        %4879 = vmatprep.subr.mxu0 0.0
        %4880 = vmatpush1.msra.mxu0 %v4541
        %4881 = vmatprep.subr.mxu0 0.0
        %4882 = vmatpush2.msra.mxu0 0.0
        %4883 = vmatprep.subr.mxu0 0.0
        %4884 = vmatpush2.msra.mxu0 0.0
        %4885 = vmatprep.subr.mxu0 0.0
        %4886 = vmatpush2.msra.mxu0 0.0
        %4887 = vmatprep.subr.mxu0 0.0
        %4888 = vmatpush2.msra.mxu0 0.0
        %4889 = vmatprep.subr.mxu0 0.0
        %4890 = vmatpush2.msra.mxu0 0.0
        %4891 = vmatprep.subr.mxu0 0.0
        %4892 = vmatpush2.msra.mxu0 0.0
        %4893 = vmatprep.subr.mxu0 0.0
        %4894 = vmatpush2.msra.mxu0 0.0
        %4895 = vmatprep.subr.mxu0 0.0
        %4896 = vmatpush2.msra.mxu0 0.0
        %4897 = vmatprep.subr.mxu0 0.0
        %4898 = vmatpush2.msra.mxu0 0.0
        %4899 = vmatprep.subr.mxu0 0.0
        %4900 = vmatpush2.msra.mxu0 0.0
        %4901 = vmatprep.subr.mxu0 0.0
        %4902 = vmatpush2.msra.mxu0 0.0
        %4903 = vmatprep.subr.mxu0 0.0
        %4904 = vmatpush2.msra.mxu0 0.0
        %4905 = vmatprep.subr.mxu0 0.0
        %4906 = vmatpush2.msra.mxu0 0.0
        %4907 = vmatprep.subr.mxu0 0.0
        %4908 = vmatpush2.msra.mxu0 0.0
        %4909 = vmatprep.subr.mxu0 0.0
        %4910 = vmatpush2.msra.mxu0 0.0
        %4911 = vmatprep.subr.mxu0 0.0
        %4912 = vmatpush2.msra.mxu0 0.0
        %4913 = vmatprep.mubr.f32.mxu0 0.0
        %4914 = vmatmul.mubr.f32.gmra.mxu0 %v981
        %v4915 = vpop.f32.mrf.mxu0
        %v4916 = vadd.f32 %v4541, %v4915
        %v4917 = vpop.f32.mrf.mxu0
        %4918 = vmatprep.mubr.f32.mxu0 0.0
        %4919 = vmatmul.mubr.f32.gmra.mxu0 %v984
        %v4920 = vpop.f32.mrf.mxu0
        %v4921 = vadd.f32 %v4542, %v4920
        %v4922 = vpop.f32.mrf.mxu0
        %4923 = vdwg.mxu0
        %4924 = vmatprep.subr.mxu0 0.0
        %4925 = vmatpush1.msra.mxu0 0.0
        %4926 = vmatprep.subr.mxu0 0.0
        %4927 = vmatpush1.msra.mxu0 0.0
        %4928 = vmatprep.subr.mxu0 0.0
        %4929 = vmatpush1.msra.mxu0 0.0
        %4930 = vmatprep.subr.mxu0 0.0
        %4931 = vmatpush1.msra.mxu0 0.0
        %4932 = vmatprep.subr.mxu0 0.0
        %4933 = vmatpush1.msra.mxu0 0.0
        %4934 = vmatprep.subr.mxu0 0.0
        %4935 = vmatpush1.msra.mxu0 0.0
        %4936 = vmatprep.subr.mxu0 0.0
        %4937 = vmatpush1.msra.mxu0 0.0
        %4938 = vmatprep.subr.mxu0 0.0
        %4939 = vmatpush1.msra.mxu0 0.0
        %4940 = vmatprep.subr.mxu0 0.0
        %4941 = vmatpush1.msra.mxu0 0.0
        %4942 = vmatprep.subr.mxu0 0.0
        %4943 = vmatpush1.msra.mxu0 0.0
        %4944 = vmatprep.subr.mxu0 0.0
        %4945 = vmatpush1.msra.mxu0 0.0
        %4946 = vmatprep.subr.mxu0 0.0
        %4947 = vmatpush1.msra.mxu0 0.0
        %4948 = vmatprep.subr.mxu0 0.0
        %4949 = vmatpush1.msra.mxu0 0.0
        %4950 = vmatprep.subr.mxu0 0.0
        %4951 = vmatpush1.msra.mxu0 0.0
        %4952 = vmatprep.subr.mxu0 0.0
        %4953 = vmatpush1.msra.mxu0 %v4544
        %4954 = vmatprep.subr.mxu0 0.0
        %4955 = vmatpush1.msra.mxu0 %v4543
        %4956 = vmatprep.subr.mxu0 0.0
        %4957 = vmatpush2.msra.mxu0 0.0
        %4958 = vmatprep.subr.mxu0 0.0
        %4959 = vmatpush2.msra.mxu0 0.0
        %4960 = vmatprep.subr.mxu0 0.0
        %4961 = vmatpush2.msra.mxu0 0.0
        %4962 = vmatprep.subr.mxu0 0.0
        %4963 = vmatpush2.msra.mxu0 0.0
        %4964 = vmatprep.subr.mxu0 0.0
        %4965 = vmatpush2.msra.mxu0 0.0
        %4966 = vmatprep.subr.mxu0 0.0
        %4967 = vmatpush2.msra.mxu0 0.0
        %4968 = vmatprep.subr.mxu0 0.0
        %4969 = vmatpush2.msra.mxu0 0.0
        %4970 = vmatprep.subr.mxu0 0.0
        %4971 = vmatpush2.msra.mxu0 0.0
        %4972 = vmatprep.subr.mxu0 0.0
        %4973 = vmatpush2.msra.mxu0 0.0
        %4974 = vmatprep.subr.mxu0 0.0
        %4975 = vmatpush2.msra.mxu0 0.0
        %4976 = vmatprep.subr.mxu0 0.0
        %4977 = vmatpush2.msra.mxu0 0.0
        %4978 = vmatprep.subr.mxu0 0.0
        %4979 = vmatpush2.msra.mxu0 0.0
        %4980 = vmatprep.subr.mxu0 0.0
        %4981 = vmatpush2.msra.mxu0 0.0
        %4982 = vmatprep.subr.mxu0 0.0
        %4983 = vmatpush2.msra.mxu0 0.0
        %4984 = vmatprep.subr.mxu0 0.0
        %4985 = vmatpush2.msra.mxu0 0.0
        %4986 = vmatprep.subr.mxu0 0.0
        %4987 = vmatpush2.msra.mxu0 0.0
        %4988 = vmatprep.mubr.f32.mxu0 0.0
        %4989 = vmatmul.mubr.f32.gmra.mxu0 %v1062
        %v4990 = vpop.f32.mrf.mxu0
        %v4991 = vadd.f32 %v4543, %v4990
        %v4992 = vpop.f32.mrf.mxu0
        %4993 = vmatprep.mubr.f32.mxu0 0.0
        %4994 = vmatmul.mubr.f32.gmra.mxu0 %v1065
        %v4995 = vpop.f32.mrf.mxu0
        %v4996 = vadd.f32 %v4544, %v4995
        %v4997 = vpop.f32.mrf.mxu0
        %4998 = vdwg.mxu0
        %4999 = vmatprep.subr.mxu0 0.0
        %5000 = vmatpush1.msra.mxu0 0.0
        %5001 = vmatprep.subr.mxu0 0.0
        %5002 = vmatpush1.msra.mxu0 0.0
        %5003 = vmatprep.subr.mxu0 0.0
        %5004 = vmatpush1.msra.mxu0 0.0
        %5005 = vmatprep.subr.mxu0 0.0
        %5006 = vmatpush1.msra.mxu0 0.0
        %5007 = vmatprep.subr.mxu0 0.0
        %5008 = vmatpush1.msra.mxu0 0.0
        %5009 = vmatprep.subr.mxu0 0.0
        %5010 = vmatpush1.msra.mxu0 0.0
        %5011 = vmatprep.subr.mxu0 0.0
        %5012 = vmatpush1.msra.mxu0 0.0
        %5013 = vmatprep.subr.mxu0 0.0
        %5014 = vmatpush1.msra.mxu0 0.0
        %5015 = vmatprep.subr.mxu0 0.0
        %5016 = vmatpush1.msra.mxu0 0.0
        %5017 = vmatprep.subr.mxu0 0.0
        %5018 = vmatpush1.msra.mxu0 0.0
        %5019 = vmatprep.subr.mxu0 0.0
        %5020 = vmatpush1.msra.mxu0 0.0
        %5021 = vmatprep.subr.mxu0 0.0
        %5022 = vmatpush1.msra.mxu0 0.0
        %5023 = vmatprep.subr.mxu0 0.0
        %5024 = vmatpush1.msra.mxu0 0.0
        %5025 = vmatprep.subr.mxu0 0.0
        %5026 = vmatpush1.msra.mxu0 0.0
        %5027 = vmatprep.subr.mxu0 0.0
        %5028 = vmatpush1.msra.mxu0 %v4546
        %5029 = vmatprep.subr.mxu0 0.0
        %5030 = vmatpush1.msra.mxu0 %v4545
        %5031 = vmatprep.subr.mxu0 0.0
        %5032 = vmatpush2.msra.mxu0 0.0
        %5033 = vmatprep.subr.mxu0 0.0
        %5034 = vmatpush2.msra.mxu0 0.0
        %5035 = vmatprep.subr.mxu0 0.0
        %5036 = vmatpush2.msra.mxu0 0.0
        %5037 = vmatprep.subr.mxu0 0.0
        %5038 = vmatpush2.msra.mxu0 0.0
        %5039 = vmatprep.subr.mxu0 0.0
        %5040 = vmatpush2.msra.mxu0 0.0
        %5041 = vmatprep.subr.mxu0 0.0
        %5042 = vmatpush2.msra.mxu0 0.0
        %5043 = vmatprep.subr.mxu0 0.0
        %5044 = vmatpush2.msra.mxu0 0.0
        %5045 = vmatprep.subr.mxu0 0.0
        %5046 = vmatpush2.msra.mxu0 0.0
        %5047 = vmatprep.subr.mxu0 0.0
        %5048 = vmatpush2.msra.mxu0 0.0
        %5049 = vmatprep.subr.mxu0 0.0
        %5050 = vmatpush2.msra.mxu0 0.0
        %5051 = vmatprep.subr.mxu0 0.0
        %5052 = vmatpush2.msra.mxu0 0.0
        %5053 = vmatprep.subr.mxu0 0.0
        %5054 = vmatpush2.msra.mxu0 0.0
        %5055 = vmatprep.subr.mxu0 0.0
        %5056 = vmatpush2.msra.mxu0 0.0
        %5057 = vmatprep.subr.mxu0 0.0
        %5058 = vmatpush2.msra.mxu0 0.0
        %5059 = vmatprep.subr.mxu0 0.0
        %5060 = vmatpush2.msra.mxu0 0.0
        %5061 = vmatprep.subr.mxu0 0.0
        %5062 = vmatpush2.msra.mxu0 0.0
        %5063 = vmatprep.mubr.f32.mxu0 0.0
        %5064 = vmatmul.mubr.f32.gmra.mxu0 %v1143
        %v5065 = vpop.f32.mrf.mxu0
        %v5066 = vadd.f32 %v4545, %v5065
        %v5067 = vpop.f32.mrf.mxu0
        %5068 = vmatprep.mubr.f32.mxu0 0.0
        %5069 = vmatmul.mubr.f32.gmra.mxu0 %v1146
        %v5070 = vpop.f32.mrf.mxu0
        %v5071 = vadd.f32 %v4546, %v5070
        %v5072 = vpop.f32.mrf.mxu0
        %5073 = vdwg.mxu0
        %5074 = vmatprep.subr.mxu0 0.0
        %5075 = vmatpush1.msra.mxu0 0.0
        %5076 = vmatprep.subr.mxu0 0.0
        %5077 = vmatpush1.msra.mxu0 0.0
        %5078 = vmatprep.subr.mxu0 0.0
        %5079 = vmatpush1.msra.mxu0 0.0
        %5080 = vmatprep.subr.mxu0 0.0
        %5081 = vmatpush1.msra.mxu0 0.0
        %5082 = vmatprep.subr.mxu0 0.0
        %5083 = vmatpush1.msra.mxu0 0.0
        %5084 = vmatprep.subr.mxu0 0.0
        %5085 = vmatpush1.msra.mxu0 0.0
        %5086 = vmatprep.subr.mxu0 0.0
        %5087 = vmatpush1.msra.mxu0 0.0
        %5088 = vmatprep.subr.mxu0 0.0
        %5089 = vmatpush1.msra.mxu0 0.0
        %5090 = vmatprep.subr.mxu0 0.0
        %5091 = vmatpush1.msra.mxu0 0.0
        %5092 = vmatprep.subr.mxu0 0.0
        %5093 = vmatpush1.msra.mxu0 0.0
        %5094 = vmatprep.subr.mxu0 0.0
        %5095 = vmatpush1.msra.mxu0 0.0
        %5096 = vmatprep.subr.mxu0 0.0
        %5097 = vmatpush1.msra.mxu0 0.0
        %5098 = vmatprep.subr.mxu0 0.0
        %5099 = vmatpush1.msra.mxu0 0.0
        %5100 = vmatprep.subr.mxu0 0.0
        %5101 = vmatpush1.msra.mxu0 0.0
        %5102 = vmatprep.subr.mxu0 0.0
        %5103 = vmatpush1.msra.mxu0 %v4548
        %5104 = vmatprep.subr.mxu0 0.0
        %5105 = vmatpush1.msra.mxu0 %v4547
        %5106 = vmatprep.subr.mxu0 0.0
        %5107 = vmatpush2.msra.mxu0 0.0
        %5108 = vmatprep.subr.mxu0 0.0
        %5109 = vmatpush2.msra.mxu0 0.0
        %5110 = vmatprep.subr.mxu0 0.0
        %5111 = vmatpush2.msra.mxu0 0.0
        %5112 = vmatprep.subr.mxu0 0.0
        %5113 = vmatpush2.msra.mxu0 0.0
        %5114 = vmatprep.subr.mxu0 0.0
        %5115 = vmatpush2.msra.mxu0 0.0
        %5116 = vmatprep.subr.mxu0 0.0
        %5117 = vmatpush2.msra.mxu0 0.0
        %5118 = vmatprep.subr.mxu0 0.0
        %5119 = vmatpush2.msra.mxu0 0.0
        %5120 = vmatprep.subr.mxu0 0.0
        %5121 = vmatpush2.msra.mxu0 0.0
        %5122 = vmatprep.subr.mxu0 0.0
        %5123 = vmatpush2.msra.mxu0 0.0
        %5124 = vmatprep.subr.mxu0 0.0
        %5125 = vmatpush2.msra.mxu0 0.0
        %5126 = vmatprep.subr.mxu0 0.0
        %5127 = vmatpush2.msra.mxu0 0.0
        %5128 = vmatprep.subr.mxu0 0.0
        %5129 = vmatpush2.msra.mxu0 0.0
        %5130 = vmatprep.subr.mxu0 0.0
        %5131 = vmatpush2.msra.mxu0 0.0
        %5132 = vmatprep.subr.mxu0 0.0
        %5133 = vmatpush2.msra.mxu0 0.0
        %5134 = vmatprep.subr.mxu0 0.0
        %5135 = vmatpush2.msra.mxu0 0.0
        %5136 = vmatprep.subr.mxu0 0.0
        %5137 = vmatpush2.msra.mxu0 0.0
        %5138 = vmatprep.mubr.f32.mxu0 0.0
        %5139 = vmatmul.mubr.f32.gmra.mxu0 %v1224
        %v5140 = vpop.f32.mrf.mxu0
        %v5141 = vadd.f32 %v4547, %v5140
        %v5142 = vpop.f32.mrf.mxu0
        %5143 = vmatprep.mubr.f32.mxu0 0.0
        %5144 = vmatmul.mubr.f32.gmra.mxu0 %v1227
        %v5145 = vpop.f32.mrf.mxu0
        %v5146 = vadd.f32 %v4548, %v5145
        %v5147 = vpop.f32.mrf.mxu0
        %5148 = vdwg.mxu0
        %v5149 = vmul.f32 %v639, %v4616
        %v5150 = vmul.f32 %v640, %v4621
        %v5151 = vmul.f32 %v641, %v4691
        %v5152 = vmul.f32 %v642, %v4696
        %v5153 = vmul.f32 %v643, %v4766
        %v5154 = vmul.f32 %v644, %v4771
        %v5155 = vmul.f32 %v645, %v4841
        %v5156 = vmul.f32 %v646, %v4846
        %v5157 = vmul.f32 %v647, %v4916
        %v5158 = vmul.f32 %v648, %v4921
        %v5159 = vmul.f32 %v649, %v4991
        %v5160 = vmul.f32 %v650, %v4996
        %v5161 = vmul.f32 %v651, %v5066
        %v5162 = vmul.f32 %v652, %v5071
        %v5163 = vmul.f32 %v653, %v5141
        %v5164 = vmul.f32 %v654, %v5146
        %s5165 = scalar_lea.vmem [#allocation12], 128
        %v5166 = vld [vmem:[%s5165] sm:$0xff]
        %v5167 = vld [vmem:[%s5165 + $0x8] sm:$0xff]
        %v5168 = vld [vmem:[%s5165 + $0x10] sm:$0xff]
        %v5169 = vld [vmem:[%s5165 + $0x18] sm:$0xff]
        %v5170 = vld [vmem:[%s5165 + $0x20] sm:$0xff]
        %v5171 = vld [vmem:[%s5165 + $0x28] sm:$0xff]
        %v5172 = vld [vmem:[%s5165 + $0x30] sm:$0xff]
        %v5173 = vld [vmem:[%s5165 + $0x38] sm:$0xff]
        %v5174 = vld [vmem:[%s5165 + $0x40] sm:$0xff]
        %v5175 = vld [vmem:[%s5165 + $0x48] sm:$0xff]
        %v5176 = vld [vmem:[%s5165 + $0x50] sm:$0xff]
        %v5177 = vld [vmem:[%s5165 + $0x58] sm:$0xff]
        %v5178 = vld [vmem:[%s5165 + $0x60] sm:$0xff]
        %v5179 = vld [vmem:[%s5165 + $0x68] sm:$0xff]
        %v5180 = vld [vmem:[%s5165 + $0x70] sm:$0xff]
        %v5181 = vld [vmem:[%s5165 + $0x78] sm:$0xff]
        %s5182 = scalar_lea.vmem %s8, 1
        %v5183 = vld [vmem:[%s5182] sm:$0x1]
        %v5185 = vlaneseq
        %v5186 = vshrl.u32 %v5185, 7
        %v5187 = vsub.s32 0, %v5186
        %v5188 = vrot.slane %v5183, %v5187
        %5190 = vmatprep.subr.mxu0 0.0
        %5191 = vmatpush1.msra.mxu0 %v5181
        %5192 = vmatprep.subr.mxu0 0.0
        %5193 = vmatpush1.msra.mxu0 %v5180
        %5194 = vmatprep.subr.mxu0 0.0
        %5195 = vmatpush1.msra.mxu0 %v5179
        %5196 = vmatprep.subr.mxu0 0.0
        %5197 = vmatpush1.msra.mxu0 %v5178
        %5198 = vmatprep.subr.mxu0 0.0
        %5199 = vmatpush1.msra.mxu0 %v5177
        %5200 = vmatprep.subr.mxu0 0.0
        %5201 = vmatpush1.msra.mxu0 %v5176
        %5202 = vmatprep.subr.mxu0 0.0
        %5203 = vmatpush1.msra.mxu0 %v5175
        %5204 = vmatprep.subr.mxu0 0.0
        %5205 = vmatpush1.msra.mxu0 %v5174
        %5206 = vmatprep.subr.mxu0 0.0
        %5207 = vmatpush1.msra.mxu0 %v5173
        %5208 = vmatprep.subr.mxu0 0.0
        %5209 = vmatpush1.msra.mxu0 %v5172
        %5210 = vmatprep.subr.mxu0 0.0
        %5211 = vmatpush1.msra.mxu0 %v5171
        %5212 = vmatprep.subr.mxu0 0.0
        %5213 = vmatpush1.msra.mxu0 %v5170
        %5214 = vmatprep.subr.mxu0 0.0
        %5215 = vmatpush1.msra.mxu0 %v5169
        %5216 = vmatprep.subr.mxu0 0.0
        %5217 = vmatpush1.msra.mxu0 %v5168
        %5218 = vmatprep.subr.mxu0 0.0
        %5219 = vmatpush1.msra.mxu0 %v5167
        %5220 = vmatprep.subr.mxu0 0.0
        %5221 = vmatpush1.msra.mxu0 %v5166
        %5222 = vmatprep.subr.mxu0 0.0
        %5223 = vmatpush2.msra.mxu0 0.0
        %5224 = vmatprep.subr.mxu0 0.0
        %5225 = vmatpush2.msra.mxu0 0.0
        %5226 = vmatprep.subr.mxu0 0.0
        %5227 = vmatpush2.msra.mxu0 0.0
        %5228 = vmatprep.subr.mxu0 0.0
        %5229 = vmatpush2.msra.mxu0 0.0
        %5230 = vmatprep.subr.mxu0 0.0
        %5231 = vmatpush2.msra.mxu0 0.0
        %5232 = vmatprep.subr.mxu0 0.0
        %5233 = vmatpush2.msra.mxu0 0.0
        %5234 = vmatprep.subr.mxu0 0.0
        %5235 = vmatpush2.msra.mxu0 0.0
        %5236 = vmatprep.subr.mxu0 0.0
        %5237 = vmatpush2.msra.mxu0 0.0
        %5238 = vmatprep.subr.mxu0 0.0
        %5239 = vmatpush2.msra.mxu0 0.0
        %5240 = vmatprep.subr.mxu0 0.0
        %5241 = vmatpush2.msra.mxu0 0.0
        %5242 = vmatprep.subr.mxu0 0.0
        %5243 = vmatpush2.msra.mxu0 0.0
        %5244 = vmatprep.subr.mxu0 0.0
        %5245 = vmatpush2.msra.mxu0 0.0
        %5246 = vmatprep.subr.mxu0 0.0
        %5247 = vmatpush2.msra.mxu0 0.0
        %5248 = vmatprep.subr.mxu0 0.0
        %5249 = vmatpush2.msra.mxu0 0.0
        %5250 = vmatprep.subr.mxu0 0.0
        %5251 = vmatpush2.msra.mxu0 0.0
        %5252 = vmatprep.subr.mxu0 0.0
        %5253 = vmatpush2.msra.mxu0 0.0
        %5254 = vmatprep.mubr.f32.mxu0 0.0
        %5255 = vmatmul.mubr.f32.gmra.mxu0 %v5149
        %v5256 = vpop.f32.mrf.mxu0
        %v5257 = vadd.f32 %v5188, %v5256
        %v5258 = vpop.f32.mrf.mxu0
        %5259 = vmatprep.mubr.f32.mxu0 0.0
        %5260 = vmatmul.mubr.f32.gmra.mxu0 %v5150
        %v5261 = vpop.f32.mrf.mxu0
        %v5262 = vadd.f32 %v5188, %v5261
        %v5263 = vpop.f32.mrf.mxu0
        %5264 = vmatprep.mubr.f32.mxu0 0.0
        %5265 = vmatmul.mubr.f32.gmra.mxu0 %v5151
        %v5266 = vpop.f32.mrf.mxu0
        %v5267 = vadd.f32 %v5188, %v5266
        %v5268 = vpop.f32.mrf.mxu0
        %5269 = vmatprep.mubr.f32.mxu0 0.0
        %5270 = vmatmul.mubr.f32.gmra.mxu0 %v5152
        %v5271 = vpop.f32.mrf.mxu0
        %v5272 = vadd.f32 %v5188, %v5271
        %v5273 = vpop.f32.mrf.mxu0
        %5274 = vmatprep.mubr.f32.mxu0 0.0
        %5275 = vmatmul.mubr.f32.gmra.mxu0 %v5153
        %v5276 = vpop.f32.mrf.mxu0
        %v5277 = vadd.f32 %v5188, %v5276
        %v5278 = vpop.f32.mrf.mxu0
        %5279 = vmatprep.mubr.f32.mxu0 0.0
        %5280 = vmatmul.mubr.f32.gmra.mxu0 %v5154
        %v5281 = vpop.f32.mrf.mxu0
        %v5282 = vadd.f32 %v5188, %v5281
        %v5283 = vpop.f32.mrf.mxu0
        %5284 = vmatprep.mubr.f32.mxu0 0.0
        %5285 = vmatmul.mubr.f32.gmra.mxu0 %v5155
        %v5286 = vpop.f32.mrf.mxu0
        %v5287 = vadd.f32 %v5188, %v5286
        %v5288 = vpop.f32.mrf.mxu0
        %5289 = vmatprep.mubr.f32.mxu0 0.0
        %5290 = vmatmul.mubr.f32.gmra.mxu0 %v5156
        %v5291 = vpop.f32.mrf.mxu0
        %v5292 = vadd.f32 %v5188, %v5291
        %v5293 = vpop.f32.mrf.mxu0
        %5294 = vmatprep.mubr.f32.mxu0 0.0
        %5295 = vmatmul.mubr.f32.gmra.mxu0 %v5157
        %v5296 = vpop.f32.mrf.mxu0
        %v5297 = vadd.f32 %v5188, %v5296
        %v5298 = vpop.f32.mrf.mxu0
        %5299 = vmatprep.mubr.f32.mxu0 0.0
        %5300 = vmatmul.mubr.f32.gmra.mxu0 %v5158
        %v5301 = vpop.f32.mrf.mxu0
        %v5302 = vadd.f32 %v5188, %v5301
        %v5303 = vpop.f32.mrf.mxu0
        %5304 = vmatprep.mubr.f32.mxu0 0.0
        %5305 = vmatmul.mubr.f32.gmra.mxu0 %v5159
        %v5306 = vpop.f32.mrf.mxu0
        %v5307 = vadd.f32 %v5188, %v5306
        %v5308 = vpop.f32.mrf.mxu0
        %5309 = vmatprep.mubr.f32.mxu0 0.0
        %5310 = vmatmul.mubr.f32.gmra.mxu0 %v5160
        %v5311 = vpop.f32.mrf.mxu0
        %v5312 = vadd.f32 %v5188, %v5311
        %v5313 = vpop.f32.mrf.mxu0
        %5314 = vmatprep.mubr.f32.mxu0 0.0
        %5315 = vmatmul.mubr.f32.gmra.mxu0 %v5161
        %v5316 = vpop.f32.mrf.mxu0
        %v5317 = vadd.f32 %v5188, %v5316
        %v5318 = vpop.f32.mrf.mxu0
        %5319 = vmatprep.mubr.f32.mxu0 0.0
        %5320 = vmatmul.mubr.f32.gmra.mxu0 %v5162
        %v5321 = vpop.f32.mrf.mxu0
        %v5322 = vadd.f32 %v5188, %v5321
        %v5323 = vpop.f32.mrf.mxu0
        %5324 = vmatprep.mubr.f32.mxu0 0.0
        %5325 = vmatmul.mubr.f32.gmra.mxu0 %v5163
        %v5326 = vpop.f32.mrf.mxu0
        %v5327 = vadd.f32 %v5188, %v5326
        %v5328 = vpop.f32.mrf.mxu0
        %5329 = vmatprep.mubr.f32.mxu0 0.0
        %5330 = vmatmul.mubr.f32.gmra.mxu0 %v5164
        %v5331 = vpop.f32.mrf.mxu0
        %v5332 = vadd.f32 %v5188, %v5331
        %v5333 = vpop.f32.mrf.mxu0
        %5334 = vdwg.mxu0
        %v5335 = vmax.f32 %v5257, 0.0
        %v5336 = vmax.f32 %v5262, 0.0
        %v5337 = vmax.f32 %v5267, 0.0
        %v5338 = vmax.f32 %v5272, 0.0
        %v5339 = vmax.f32 %v5277, 0.0
        %v5340 = vmax.f32 %v5282, 0.0
        %v5341 = vmax.f32 %v5287, 0.0
        %v5342 = vmax.f32 %v5292, 0.0
        %v5343 = vmax.f32 %v5297, 0.0
        %v5344 = vmax.f32 %v5302, 0.0
        %v5345 = vmax.f32 %v5307, 0.0
        %v5346 = vmax.f32 %v5312, 0.0
        %v5347 = vmax.f32 %v5317, 0.0
        %v5348 = vmax.f32 %v5322, 0.0
        %v5349 = vmax.f32 %v5327, 0.0
        %v5350 = vmax.f32 %v5332, 0.0
        %v5351 = vmul.f32 %v639, %v5335
        %v5352 = vmul.f32 %v640, %v5336
        %v5353 = vmul.f32 %v641, %v5337
        %v5354 = vmul.f32 %v642, %v5338
        %v5355 = vmul.f32 %v643, %v5339
        %v5356 = vmul.f32 %v644, %v5340
        %v5357 = vmul.f32 %v645, %v5341
        %v5358 = vmul.f32 %v646, %v5342
        %v5359 = vmul.f32 %v647, %v5343
        %v5360 = vmul.f32 %v648, %v5344
        %v5361 = vmul.f32 %v649, %v5345
        %v5362 = vmul.f32 %v650, %v5346
        %v5363 = vmul.f32 %v651, %v5347
        %v5364 = vmul.f32 %v652, %v5348
        %v5365 = vmul.f32 %v653, %v5349
        %v5366 = vmul.f32 %v654, %v5350
        %5367 = vmatprep.subr.mxu0 0.0
        %5368 = vmatpush1.msra.mxu0 0.0
        %5369 = vmatprep.subr.mxu0 0.0
        %5370 = vmatpush1.msra.mxu0 0.0
        %5371 = vmatprep.subr.mxu0 0.0
        %5372 = vmatpush1.msra.mxu0 0.0
        %5373 = vmatprep.subr.mxu0 0.0
        %5374 = vmatpush1.msra.mxu0 0.0
        %5375 = vmatprep.subr.mxu0 0.0
        %5376 = vmatpush1.msra.mxu0 0.0
        %5377 = vmatprep.subr.mxu0 0.0
        %5378 = vmatpush1.msra.mxu0 0.0
        %5379 = vmatprep.subr.mxu0 0.0
        %5380 = vmatpush1.msra.mxu0 0.0
        %5381 = vmatprep.subr.mxu0 0.0
        %5382 = vmatpush1.msra.mxu0 0.0
        %5383 = vmatprep.subr.mxu0 0.0
        %5384 = vmatpush1.msra.mxu0 0.0
        %5385 = vmatprep.subr.mxu0 0.0
        %5386 = vmatpush1.msra.mxu0 0.0
        %5387 = vmatprep.subr.mxu0 0.0
        %5388 = vmatpush1.msra.mxu0 0.0
        %5389 = vmatprep.subr.mxu0 0.0
        %5390 = vmatpush1.msra.mxu0 0.0
        %5391 = vmatprep.subr.mxu0 0.0
        %5392 = vmatpush1.msra.mxu0 0.0
        %5393 = vmatprep.subr.mxu0 0.0
        %5394 = vmatpush1.msra.mxu0 0.0
        %5395 = vmatprep.subr.mxu0 0.0
        %5396 = vmatpush1.msra.mxu0 %v5352
        %5397 = vmatprep.subr.mxu0 0.0
        %5398 = vmatpush1.msra.mxu0 %v5351
        %5399 = vmatprep.subr.mxu0 0.0
        %5400 = vmatpush2.msra.mxu0 0.0
        %5401 = vmatprep.subr.mxu0 0.0
        %5402 = vmatpush2.msra.mxu0 0.0
        %5403 = vmatprep.subr.mxu0 0.0
        %5404 = vmatpush2.msra.mxu0 0.0
        %5405 = vmatprep.subr.mxu0 0.0
        %5406 = vmatpush2.msra.mxu0 0.0
        %5407 = vmatprep.subr.mxu0 0.0
        %5408 = vmatpush2.msra.mxu0 0.0
        %5409 = vmatprep.subr.mxu0 0.0
        %5410 = vmatpush2.msra.mxu0 0.0
        %5411 = vmatprep.subr.mxu0 0.0
        %5412 = vmatpush2.msra.mxu0 0.0
        %5413 = vmatprep.subr.mxu0 0.0
        %5414 = vmatpush2.msra.mxu0 0.0
        %5415 = vmatprep.subr.mxu0 0.0
        %5416 = vmatpush2.msra.mxu0 0.0
        %5417 = vmatprep.subr.mxu0 0.0
        %5418 = vmatpush2.msra.mxu0 0.0
        %5419 = vmatprep.subr.mxu0 0.0
        %5420 = vmatpush2.msra.mxu0 0.0
        %5421 = vmatprep.subr.mxu0 0.0
        %5422 = vmatpush2.msra.mxu0 0.0
        %5423 = vmatprep.subr.mxu0 0.0
        %5424 = vmatpush2.msra.mxu0 0.0
        %5425 = vmatprep.subr.mxu0 0.0
        %5426 = vmatpush2.msra.mxu0 0.0
        %5427 = vmatprep.subr.mxu0 0.0
        %5428 = vmatpush2.msra.mxu0 0.0
        %5429 = vmatprep.subr.mxu0 0.0
        %5430 = vmatpush2.msra.mxu0 0.0
        %5431 = vmatprep.mubr.f32.mxu0 0.0
        %5432 = vmatmul.mubr.f32.gmra.mxu0 %v657
        %v5433 = vpop.f32.mrf.mxu0
        %v5434 = vadd.f32 %v5351, %v5433
        %v5435 = vpop.f32.mrf.mxu0
        %5436 = vmatprep.mubr.f32.mxu0 0.0
        %5437 = vmatmul.mubr.f32.gmra.mxu0 %v660
        %v5438 = vpop.f32.mrf.mxu0
        %v5439 = vadd.f32 %v5352, %v5438
        %v5440 = vpop.f32.mrf.mxu0
        %5441 = vdwg.mxu0
        %5442 = vmatprep.subr.mxu0 0.0
        %5443 = vmatpush1.msra.mxu0 0.0
        %5444 = vmatprep.subr.mxu0 0.0
        %5445 = vmatpush1.msra.mxu0 0.0
        %5446 = vmatprep.subr.mxu0 0.0
        %5447 = vmatpush1.msra.mxu0 0.0
        %5448 = vmatprep.subr.mxu0 0.0
        %5449 = vmatpush1.msra.mxu0 0.0
        %5450 = vmatprep.subr.mxu0 0.0
        %5451 = vmatpush1.msra.mxu0 0.0
        %5452 = vmatprep.subr.mxu0 0.0
        %5453 = vmatpush1.msra.mxu0 0.0
        %5454 = vmatprep.subr.mxu0 0.0
        %5455 = vmatpush1.msra.mxu0 0.0
        %5456 = vmatprep.subr.mxu0 0.0
        %5457 = vmatpush1.msra.mxu0 0.0
        %5458 = vmatprep.subr.mxu0 0.0
        %5459 = vmatpush1.msra.mxu0 0.0
        %5460 = vmatprep.subr.mxu0 0.0
        %5461 = vmatpush1.msra.mxu0 0.0
        %5462 = vmatprep.subr.mxu0 0.0
        %5463 = vmatpush1.msra.mxu0 0.0
        %5464 = vmatprep.subr.mxu0 0.0
        %5465 = vmatpush1.msra.mxu0 0.0
        %5466 = vmatprep.subr.mxu0 0.0
        %5467 = vmatpush1.msra.mxu0 0.0
        %5468 = vmatprep.subr.mxu0 0.0
        %5469 = vmatpush1.msra.mxu0 0.0
        %5470 = vmatprep.subr.mxu0 0.0
        %5471 = vmatpush1.msra.mxu0 %v5354
        %5472 = vmatprep.subr.mxu0 0.0
        %5473 = vmatpush1.msra.mxu0 %v5353
        %5474 = vmatprep.subr.mxu0 0.0
        %5475 = vmatpush2.msra.mxu0 0.0
        %5476 = vmatprep.subr.mxu0 0.0
        %5477 = vmatpush2.msra.mxu0 0.0
        %5478 = vmatprep.subr.mxu0 0.0
        %5479 = vmatpush2.msra.mxu0 0.0
        %5480 = vmatprep.subr.mxu0 0.0
        %5481 = vmatpush2.msra.mxu0 0.0
        %5482 = vmatprep.subr.mxu0 0.0
        %5483 = vmatpush2.msra.mxu0 0.0
        %5484 = vmatprep.subr.mxu0 0.0
        %5485 = vmatpush2.msra.mxu0 0.0
        %5486 = vmatprep.subr.mxu0 0.0
        %5487 = vmatpush2.msra.mxu0 0.0
        %5488 = vmatprep.subr.mxu0 0.0
        %5489 = vmatpush2.msra.mxu0 0.0
        %5490 = vmatprep.subr.mxu0 0.0
        %5491 = vmatpush2.msra.mxu0 0.0
        %5492 = vmatprep.subr.mxu0 0.0
        %5493 = vmatpush2.msra.mxu0 0.0
        %5494 = vmatprep.subr.mxu0 0.0
        %5495 = vmatpush2.msra.mxu0 0.0
        %5496 = vmatprep.subr.mxu0 0.0
        %5497 = vmatpush2.msra.mxu0 0.0
        %5498 = vmatprep.subr.mxu0 0.0
        %5499 = vmatpush2.msra.mxu0 0.0
        %5500 = vmatprep.subr.mxu0 0.0
        %5501 = vmatpush2.msra.mxu0 0.0
        %5502 = vmatprep.subr.mxu0 0.0
        %5503 = vmatpush2.msra.mxu0 0.0
        %5504 = vmatprep.subr.mxu0 0.0
        %5505 = vmatpush2.msra.mxu0 0.0
        %5506 = vmatprep.mubr.f32.mxu0 0.0
        %5507 = vmatmul.mubr.f32.gmra.mxu0 %v738
        %v5508 = vpop.f32.mrf.mxu0
        %v5509 = vadd.f32 %v5353, %v5508
        %v5510 = vpop.f32.mrf.mxu0
        %5511 = vmatprep.mubr.f32.mxu0 0.0
        %5512 = vmatmul.mubr.f32.gmra.mxu0 %v741
        %v5513 = vpop.f32.mrf.mxu0
        %v5514 = vadd.f32 %v5354, %v5513
        %v5515 = vpop.f32.mrf.mxu0
        %5516 = vdwg.mxu0
        %5517 = vmatprep.subr.mxu0 0.0
        %5518 = vmatpush1.msra.mxu0 0.0
        %5519 = vmatprep.subr.mxu0 0.0
        %5520 = vmatpush1.msra.mxu0 0.0
        %5521 = vmatprep.subr.mxu0 0.0
        %5522 = vmatpush1.msra.mxu0 0.0
        %5523 = vmatprep.subr.mxu0 0.0
        %5524 = vmatpush1.msra.mxu0 0.0
        %5525 = vmatprep.subr.mxu0 0.0
        %5526 = vmatpush1.msra.mxu0 0.0
        %5527 = vmatprep.subr.mxu0 0.0
        %5528 = vmatpush1.msra.mxu0 0.0
        %5529 = vmatprep.subr.mxu0 0.0
        %5530 = vmatpush1.msra.mxu0 0.0
        %5531 = vmatprep.subr.mxu0 0.0
        %5532 = vmatpush1.msra.mxu0 0.0
        %5533 = vmatprep.subr.mxu0 0.0
        %5534 = vmatpush1.msra.mxu0 0.0
        %5535 = vmatprep.subr.mxu0 0.0
        %5536 = vmatpush1.msra.mxu0 0.0
        %5537 = vmatprep.subr.mxu0 0.0
        %5538 = vmatpush1.msra.mxu0 0.0
        %5539 = vmatprep.subr.mxu0 0.0
        %5540 = vmatpush1.msra.mxu0 0.0
        %5541 = vmatprep.subr.mxu0 0.0
        %5542 = vmatpush1.msra.mxu0 0.0
        %5543 = vmatprep.subr.mxu0 0.0
        %5544 = vmatpush1.msra.mxu0 0.0
        %5545 = vmatprep.subr.mxu0 0.0
        %5546 = vmatpush1.msra.mxu0 %v5356
        %5547 = vmatprep.subr.mxu0 0.0
        %5548 = vmatpush1.msra.mxu0 %v5355
        %5549 = vmatprep.subr.mxu0 0.0
        %5550 = vmatpush2.msra.mxu0 0.0
        %5551 = vmatprep.subr.mxu0 0.0
        %5552 = vmatpush2.msra.mxu0 0.0
        %5553 = vmatprep.subr.mxu0 0.0
        %5554 = vmatpush2.msra.mxu0 0.0
        %5555 = vmatprep.subr.mxu0 0.0
        %5556 = vmatpush2.msra.mxu0 0.0
        %5557 = vmatprep.subr.mxu0 0.0
        %5558 = vmatpush2.msra.mxu0 0.0
        %5559 = vmatprep.subr.mxu0 0.0
        %5560 = vmatpush2.msra.mxu0 0.0
        %5561 = vmatprep.subr.mxu0 0.0
        %5562 = vmatpush2.msra.mxu0 0.0
        %5563 = vmatprep.subr.mxu0 0.0
        %5564 = vmatpush2.msra.mxu0 0.0
        %5565 = vmatprep.subr.mxu0 0.0
        %5566 = vmatpush2.msra.mxu0 0.0
        %5567 = vmatprep.subr.mxu0 0.0
        %5568 = vmatpush2.msra.mxu0 0.0
        %5569 = vmatprep.subr.mxu0 0.0
        %5570 = vmatpush2.msra.mxu0 0.0
        %5571 = vmatprep.subr.mxu0 0.0
        %5572 = vmatpush2.msra.mxu0 0.0
        %5573 = vmatprep.subr.mxu0 0.0
        %5574 = vmatpush2.msra.mxu0 0.0
        %5575 = vmatprep.subr.mxu0 0.0
        %5576 = vmatpush2.msra.mxu0 0.0
        %5577 = vmatprep.subr.mxu0 0.0
        %5578 = vmatpush2.msra.mxu0 0.0
        %5579 = vmatprep.subr.mxu0 0.0
        %5580 = vmatpush2.msra.mxu0 0.0
        %5581 = vmatprep.mubr.f32.mxu0 0.0
        %5582 = vmatmul.mubr.f32.gmra.mxu0 %v819
        %v5583 = vpop.f32.mrf.mxu0
        %v5584 = vadd.f32 %v5355, %v5583
        %v5585 = vpop.f32.mrf.mxu0
        %5586 = vmatprep.mubr.f32.mxu0 0.0
        %5587 = vmatmul.mubr.f32.gmra.mxu0 %v822
        %v5588 = vpop.f32.mrf.mxu0
        %v5589 = vadd.f32 %v5356, %v5588
        %v5590 = vpop.f32.mrf.mxu0
        %5591 = vdwg.mxu0
        %5592 = vmatprep.subr.mxu0 0.0
        %5593 = vmatpush1.msra.mxu0 0.0
        %5594 = vmatprep.subr.mxu0 0.0
        %5595 = vmatpush1.msra.mxu0 0.0
        %5596 = vmatprep.subr.mxu0 0.0
        %5597 = vmatpush1.msra.mxu0 0.0
        %5598 = vmatprep.subr.mxu0 0.0
        %5599 = vmatpush1.msra.mxu0 0.0
        %5600 = vmatprep.subr.mxu0 0.0
        %5601 = vmatpush1.msra.mxu0 0.0
        %5602 = vmatprep.subr.mxu0 0.0
        %5603 = vmatpush1.msra.mxu0 0.0
        %5604 = vmatprep.subr.mxu0 0.0
        %5605 = vmatpush1.msra.mxu0 0.0
        %5606 = vmatprep.subr.mxu0 0.0
        %5607 = vmatpush1.msra.mxu0 0.0
        %5608 = vmatprep.subr.mxu0 0.0
        %5609 = vmatpush1.msra.mxu0 0.0
        %5610 = vmatprep.subr.mxu0 0.0
        %5611 = vmatpush1.msra.mxu0 0.0
        %5612 = vmatprep.subr.mxu0 0.0
        %5613 = vmatpush1.msra.mxu0 0.0
        %5614 = vmatprep.subr.mxu0 0.0
        %5615 = vmatpush1.msra.mxu0 0.0
        %5616 = vmatprep.subr.mxu0 0.0
        %5617 = vmatpush1.msra.mxu0 0.0
        %5618 = vmatprep.subr.mxu0 0.0
        %5619 = vmatpush1.msra.mxu0 0.0
        %5620 = vmatprep.subr.mxu0 0.0
        %5621 = vmatpush1.msra.mxu0 %v5358
        %5622 = vmatprep.subr.mxu0 0.0
        %5623 = vmatpush1.msra.mxu0 %v5357
        %5624 = vmatprep.subr.mxu0 0.0
        %5625 = vmatpush2.msra.mxu0 0.0
        %5626 = vmatprep.subr.mxu0 0.0
        %5627 = vmatpush2.msra.mxu0 0.0
        %5628 = vmatprep.subr.mxu0 0.0
        %5629 = vmatpush2.msra.mxu0 0.0
        %5630 = vmatprep.subr.mxu0 0.0
        %5631 = vmatpush2.msra.mxu0 0.0
        %5632 = vmatprep.subr.mxu0 0.0
        %5633 = vmatpush2.msra.mxu0 0.0
        %5634 = vmatprep.subr.mxu0 0.0
        %5635 = vmatpush2.msra.mxu0 0.0
        %5636 = vmatprep.subr.mxu0 0.0
        %5637 = vmatpush2.msra.mxu0 0.0
        %5638 = vmatprep.subr.mxu0 0.0
        %5639 = vmatpush2.msra.mxu0 0.0
        %5640 = vmatprep.subr.mxu0 0.0
        %5641 = vmatpush2.msra.mxu0 0.0
        %5642 = vmatprep.subr.mxu0 0.0
        %5643 = vmatpush2.msra.mxu0 0.0
        %5644 = vmatprep.subr.mxu0 0.0
        %5645 = vmatpush2.msra.mxu0 0.0
        %5646 = vmatprep.subr.mxu0 0.0
        %5647 = vmatpush2.msra.mxu0 0.0
        %5648 = vmatprep.subr.mxu0 0.0
        %5649 = vmatpush2.msra.mxu0 0.0
        %5650 = vmatprep.subr.mxu0 0.0
        %5651 = vmatpush2.msra.mxu0 0.0
        %5652 = vmatprep.subr.mxu0 0.0
        %5653 = vmatpush2.msra.mxu0 0.0
        %5654 = vmatprep.subr.mxu0 0.0
        %5655 = vmatpush2.msra.mxu0 0.0
        %5656 = vmatprep.mubr.f32.mxu0 0.0
        %5657 = vmatmul.mubr.f32.gmra.mxu0 %v900
        %v5658 = vpop.f32.mrf.mxu0
        %v5659 = vadd.f32 %v5357, %v5658
        %v5660 = vpop.f32.mrf.mxu0
        %5661 = vmatprep.mubr.f32.mxu0 0.0
        %5662 = vmatmul.mubr.f32.gmra.mxu0 %v903
        %v5663 = vpop.f32.mrf.mxu0
        %v5664 = vadd.f32 %v5358, %v5663
        %v5665 = vpop.f32.mrf.mxu0
        %5666 = vdwg.mxu0
        %5667 = vmatprep.subr.mxu0 0.0
        %5668 = vmatpush1.msra.mxu0 0.0
        %5669 = vmatprep.subr.mxu0 0.0
        %5670 = vmatpush1.msra.mxu0 0.0
        %5671 = vmatprep.subr.mxu0 0.0
        %5672 = vmatpush1.msra.mxu0 0.0
        %5673 = vmatprep.subr.mxu0 0.0
        %5674 = vmatpush1.msra.mxu0 0.0
        %5675 = vmatprep.subr.mxu0 0.0
        %5676 = vmatpush1.msra.mxu0 0.0
        %5677 = vmatprep.subr.mxu0 0.0
        %5678 = vmatpush1.msra.mxu0 0.0
        %5679 = vmatprep.subr.mxu0 0.0
        %5680 = vmatpush1.msra.mxu0 0.0
        %5681 = vmatprep.subr.mxu0 0.0
        %5682 = vmatpush1.msra.mxu0 0.0
        %5683 = vmatprep.subr.mxu0 0.0
        %5684 = vmatpush1.msra.mxu0 0.0
        %5685 = vmatprep.subr.mxu0 0.0
        %5686 = vmatpush1.msra.mxu0 0.0
        %5687 = vmatprep.subr.mxu0 0.0
        %5688 = vmatpush1.msra.mxu0 0.0
        %5689 = vmatprep.subr.mxu0 0.0
        %5690 = vmatpush1.msra.mxu0 0.0
        %5691 = vmatprep.subr.mxu0 0.0
        %5692 = vmatpush1.msra.mxu0 0.0
        %5693 = vmatprep.subr.mxu0 0.0
        %5694 = vmatpush1.msra.mxu0 0.0
        %5695 = vmatprep.subr.mxu0 0.0
        %5696 = vmatpush1.msra.mxu0 %v5360
        %5697 = vmatprep.subr.mxu0 0.0
        %5698 = vmatpush1.msra.mxu0 %v5359
        %5699 = vmatprep.subr.mxu0 0.0
        %5700 = vmatpush2.msra.mxu0 0.0
        %5701 = vmatprep.subr.mxu0 0.0
        %5702 = vmatpush2.msra.mxu0 0.0
        %5703 = vmatprep.subr.mxu0 0.0
        %5704 = vmatpush2.msra.mxu0 0.0
        %5705 = vmatprep.subr.mxu0 0.0
        %5706 = vmatpush2.msra.mxu0 0.0
        %5707 = vmatprep.subr.mxu0 0.0
        %5708 = vmatpush2.msra.mxu0 0.0
        %5709 = vmatprep.subr.mxu0 0.0
        %5710 = vmatpush2.msra.mxu0 0.0
        %5711 = vmatprep.subr.mxu0 0.0
        %5712 = vmatpush2.msra.mxu0 0.0
        %5713 = vmatprep.subr.mxu0 0.0
        %5714 = vmatpush2.msra.mxu0 0.0
        %5715 = vmatprep.subr.mxu0 0.0
        %5716 = vmatpush2.msra.mxu0 0.0
        %5717 = vmatprep.subr.mxu0 0.0
        %5718 = vmatpush2.msra.mxu0 0.0
        %5719 = vmatprep.subr.mxu0 0.0
        %5720 = vmatpush2.msra.mxu0 0.0
        %5721 = vmatprep.subr.mxu0 0.0
        %5722 = vmatpush2.msra.mxu0 0.0
        %5723 = vmatprep.subr.mxu0 0.0
        %5724 = vmatpush2.msra.mxu0 0.0
        %5725 = vmatprep.subr.mxu0 0.0
        %5726 = vmatpush2.msra.mxu0 0.0
        %5727 = vmatprep.subr.mxu0 0.0
        %5728 = vmatpush2.msra.mxu0 0.0
        %5729 = vmatprep.subr.mxu0 0.0
        %5730 = vmatpush2.msra.mxu0 0.0
        %5731 = vmatprep.mubr.f32.mxu0 0.0
        %5732 = vmatmul.mubr.f32.gmra.mxu0 %v981
        %v5733 = vpop.f32.mrf.mxu0
        %v5734 = vadd.f32 %v5359, %v5733
        %v5735 = vpop.f32.mrf.mxu0
        %5736 = vmatprep.mubr.f32.mxu0 0.0
        %5737 = vmatmul.mubr.f32.gmra.mxu0 %v984
        %v5738 = vpop.f32.mrf.mxu0
        %v5739 = vadd.f32 %v5360, %v5738
        %v5740 = vpop.f32.mrf.mxu0
        %5741 = vdwg.mxu0
        %5742 = vmatprep.subr.mxu0 0.0
        %5743 = vmatpush1.msra.mxu0 0.0
        %5744 = vmatprep.subr.mxu0 0.0
        %5745 = vmatpush1.msra.mxu0 0.0
        %5746 = vmatprep.subr.mxu0 0.0
        %5747 = vmatpush1.msra.mxu0 0.0
        %5748 = vmatprep.subr.mxu0 0.0
        %5749 = vmatpush1.msra.mxu0 0.0
        %5750 = vmatprep.subr.mxu0 0.0
        %5751 = vmatpush1.msra.mxu0 0.0
        %5752 = vmatprep.subr.mxu0 0.0
        %5753 = vmatpush1.msra.mxu0 0.0
        %5754 = vmatprep.subr.mxu0 0.0
        %5755 = vmatpush1.msra.mxu0 0.0
        %5756 = vmatprep.subr.mxu0 0.0
        %5757 = vmatpush1.msra.mxu0 0.0
        %5758 = vmatprep.subr.mxu0 0.0
        %5759 = vmatpush1.msra.mxu0 0.0
        %5760 = vmatprep.subr.mxu0 0.0
        %5761 = vmatpush1.msra.mxu0 0.0
        %5762 = vmatprep.subr.mxu0 0.0
        %5763 = vmatpush1.msra.mxu0 0.0
        %5764 = vmatprep.subr.mxu0 0.0
        %5765 = vmatpush1.msra.mxu0 0.0
        %5766 = vmatprep.subr.mxu0 0.0
        %5767 = vmatpush1.msra.mxu0 0.0
        %5768 = vmatprep.subr.mxu0 0.0
        %5769 = vmatpush1.msra.mxu0 0.0
        %5770 = vmatprep.subr.mxu0 0.0
        %5771 = vmatpush1.msra.mxu0 %v5362
        %5772 = vmatprep.subr.mxu0 0.0
        %5773 = vmatpush1.msra.mxu0 %v5361
        %5774 = vmatprep.subr.mxu0 0.0
        %5775 = vmatpush2.msra.mxu0 0.0
        %5776 = vmatprep.subr.mxu0 0.0
        %5777 = vmatpush2.msra.mxu0 0.0
        %5778 = vmatprep.subr.mxu0 0.0
        %5779 = vmatpush2.msra.mxu0 0.0
        %5780 = vmatprep.subr.mxu0 0.0
        %5781 = vmatpush2.msra.mxu0 0.0
        %5782 = vmatprep.subr.mxu0 0.0
        %5783 = vmatpush2.msra.mxu0 0.0
        %5784 = vmatprep.subr.mxu0 0.0
        %5785 = vmatpush2.msra.mxu0 0.0
        %5786 = vmatprep.subr.mxu0 0.0
        %5787 = vmatpush2.msra.mxu0 0.0
        %5788 = vmatprep.subr.mxu0 0.0
        %5789 = vmatpush2.msra.mxu0 0.0
        %5790 = vmatprep.subr.mxu0 0.0
        %5791 = vmatpush2.msra.mxu0 0.0
        %5792 = vmatprep.subr.mxu0 0.0
        %5793 = vmatpush2.msra.mxu0 0.0
        %5794 = vmatprep.subr.mxu0 0.0
        %5795 = vmatpush2.msra.mxu0 0.0
        %5796 = vmatprep.subr.mxu0 0.0
        %5797 = vmatpush2.msra.mxu0 0.0
        %5798 = vmatprep.subr.mxu0 0.0
        %5799 = vmatpush2.msra.mxu0 0.0
        %5800 = vmatprep.subr.mxu0 0.0
        %5801 = vmatpush2.msra.mxu0 0.0
        %5802 = vmatprep.subr.mxu0 0.0
        %5803 = vmatpush2.msra.mxu0 0.0
        %5804 = vmatprep.subr.mxu0 0.0
        %5805 = vmatpush2.msra.mxu0 0.0
        %5806 = vmatprep.mubr.f32.mxu0 0.0
        %5807 = vmatmul.mubr.f32.gmra.mxu0 %v1062
        %v5808 = vpop.f32.mrf.mxu0
        %v5809 = vadd.f32 %v5361, %v5808
        %v5810 = vpop.f32.mrf.mxu0
        %5811 = vmatprep.mubr.f32.mxu0 0.0
        %5812 = vmatmul.mubr.f32.gmra.mxu0 %v1065
        %v5813 = vpop.f32.mrf.mxu0
        %v5814 = vadd.f32 %v5362, %v5813
        %v5815 = vpop.f32.mrf.mxu0
        %5816 = vdwg.mxu0
        %5817 = vmatprep.subr.mxu0 0.0
        %5818 = vmatpush1.msra.mxu0 0.0
        %5819 = vmatprep.subr.mxu0 0.0
        %5820 = vmatpush1.msra.mxu0 0.0
        %5821 = vmatprep.subr.mxu0 0.0
        %5822 = vmatpush1.msra.mxu0 0.0
        %5823 = vmatprep.subr.mxu0 0.0
        %5824 = vmatpush1.msra.mxu0 0.0
        %5825 = vmatprep.subr.mxu0 0.0
        %5826 = vmatpush1.msra.mxu0 0.0
        %5827 = vmatprep.subr.mxu0 0.0
        %5828 = vmatpush1.msra.mxu0 0.0
        %5829 = vmatprep.subr.mxu0 0.0
        %5830 = vmatpush1.msra.mxu0 0.0
        %5831 = vmatprep.subr.mxu0 0.0
        %5832 = vmatpush1.msra.mxu0 0.0
        %5833 = vmatprep.subr.mxu0 0.0
        %5834 = vmatpush1.msra.mxu0 0.0
        %5835 = vmatprep.subr.mxu0 0.0
        %5836 = vmatpush1.msra.mxu0 0.0
        %5837 = vmatprep.subr.mxu0 0.0
        %5838 = vmatpush1.msra.mxu0 0.0
        %5839 = vmatprep.subr.mxu0 0.0
        %5840 = vmatpush1.msra.mxu0 0.0
        %5841 = vmatprep.subr.mxu0 0.0
        %5842 = vmatpush1.msra.mxu0 0.0
        %5843 = vmatprep.subr.mxu0 0.0
        %5844 = vmatpush1.msra.mxu0 0.0
        %5845 = vmatprep.subr.mxu0 0.0
        %5846 = vmatpush1.msra.mxu0 %v5364
        %5847 = vmatprep.subr.mxu0 0.0
        %5848 = vmatpush1.msra.mxu0 %v5363
        %5849 = vmatprep.subr.mxu0 0.0
        %5850 = vmatpush2.msra.mxu0 0.0
        %5851 = vmatprep.subr.mxu0 0.0
        %5852 = vmatpush2.msra.mxu0 0.0
        %5853 = vmatprep.subr.mxu0 0.0
        %5854 = vmatpush2.msra.mxu0 0.0
        %5855 = vmatprep.subr.mxu0 0.0
        %5856 = vmatpush2.msra.mxu0 0.0
        %5857 = vmatprep.subr.mxu0 0.0
        %5858 = vmatpush2.msra.mxu0 0.0
        %5859 = vmatprep.subr.mxu0 0.0
        %5860 = vmatpush2.msra.mxu0 0.0
        %5861 = vmatprep.subr.mxu0 0.0
        %5862 = vmatpush2.msra.mxu0 0.0
        %5863 = vmatprep.subr.mxu0 0.0
        %5864 = vmatpush2.msra.mxu0 0.0
        %5865 = vmatprep.subr.mxu0 0.0
        %5866 = vmatpush2.msra.mxu0 0.0
        %5867 = vmatprep.subr.mxu0 0.0
        %5868 = vmatpush2.msra.mxu0 0.0
        %5869 = vmatprep.subr.mxu0 0.0
        %5870 = vmatpush2.msra.mxu0 0.0
        %5871 = vmatprep.subr.mxu0 0.0
        %5872 = vmatpush2.msra.mxu0 0.0
        %5873 = vmatprep.subr.mxu0 0.0
        %5874 = vmatpush2.msra.mxu0 0.0
        %5875 = vmatprep.subr.mxu0 0.0
        %5876 = vmatpush2.msra.mxu0 0.0
        %5877 = vmatprep.subr.mxu0 0.0
        %5878 = vmatpush2.msra.mxu0 0.0
        %5879 = vmatprep.subr.mxu0 0.0
        %5880 = vmatpush2.msra.mxu0 0.0
        %5881 = vmatprep.mubr.f32.mxu0 0.0
        %5882 = vmatmul.mubr.f32.gmra.mxu0 %v1143
        %v5883 = vpop.f32.mrf.mxu0
        %v5884 = vadd.f32 %v5363, %v5883
        %v5885 = vpop.f32.mrf.mxu0
        %5886 = vmatprep.mubr.f32.mxu0 0.0
        %5887 = vmatmul.mubr.f32.gmra.mxu0 %v1146
        %v5888 = vpop.f32.mrf.mxu0
        %v5889 = vadd.f32 %v5364, %v5888
        %v5890 = vpop.f32.mrf.mxu0
        %5891 = vdwg.mxu0
        %5892 = vmatprep.subr.mxu0 0.0
        %5893 = vmatpush1.msra.mxu0 0.0
        %5894 = vmatprep.subr.mxu0 0.0
        %5895 = vmatpush1.msra.mxu0 0.0
        %5896 = vmatprep.subr.mxu0 0.0
        %5897 = vmatpush1.msra.mxu0 0.0
        %5898 = vmatprep.subr.mxu0 0.0
        %5899 = vmatpush1.msra.mxu0 0.0
        %5900 = vmatprep.subr.mxu0 0.0
        %5901 = vmatpush1.msra.mxu0 0.0
        %5902 = vmatprep.subr.mxu0 0.0
        %5903 = vmatpush1.msra.mxu0 0.0
        %5904 = vmatprep.subr.mxu0 0.0
        %5905 = vmatpush1.msra.mxu0 0.0
        %5906 = vmatprep.subr.mxu0 0.0
        %5907 = vmatpush1.msra.mxu0 0.0
        %5908 = vmatprep.subr.mxu0 0.0
        %5909 = vmatpush1.msra.mxu0 0.0
        %5910 = vmatprep.subr.mxu0 0.0
        %5911 = vmatpush1.msra.mxu0 0.0
        %5912 = vmatprep.subr.mxu0 0.0
        %5913 = vmatpush1.msra.mxu0 0.0
        %5914 = vmatprep.subr.mxu0 0.0
        %5915 = vmatpush1.msra.mxu0 0.0
        %5916 = vmatprep.subr.mxu0 0.0
        %5917 = vmatpush1.msra.mxu0 0.0
        %5918 = vmatprep.subr.mxu0 0.0
        %5919 = vmatpush1.msra.mxu0 0.0
        %5920 = vmatprep.subr.mxu0 0.0
        %5921 = vmatpush1.msra.mxu0 %v5366
        %5922 = vmatprep.subr.mxu0 0.0
        %5923 = vmatpush1.msra.mxu0 %v5365
        %5924 = vmatprep.subr.mxu0 0.0
        %5925 = vmatpush2.msra.mxu0 0.0
        %5926 = vmatprep.subr.mxu0 0.0
        %5927 = vmatpush2.msra.mxu0 0.0
        %5928 = vmatprep.subr.mxu0 0.0
        %5929 = vmatpush2.msra.mxu0 0.0
        %5930 = vmatprep.subr.mxu0 0.0
        %5931 = vmatpush2.msra.mxu0 0.0
        %5932 = vmatprep.subr.mxu0 0.0
        %5933 = vmatpush2.msra.mxu0 0.0
        %5934 = vmatprep.subr.mxu0 0.0
        %5935 = vmatpush2.msra.mxu0 0.0
        %5936 = vmatprep.subr.mxu0 0.0
        %5937 = vmatpush2.msra.mxu0 0.0
        %5938 = vmatprep.subr.mxu0 0.0
        %5939 = vmatpush2.msra.mxu0 0.0
        %5940 = vmatprep.subr.mxu0 0.0
        %5941 = vmatpush2.msra.mxu0 0.0
        %5942 = vmatprep.subr.mxu0 0.0
        %5943 = vmatpush2.msra.mxu0 0.0
        %5944 = vmatprep.subr.mxu0 0.0
        %5945 = vmatpush2.msra.mxu0 0.0
        %5946 = vmatprep.subr.mxu0 0.0
        %5947 = vmatpush2.msra.mxu0 0.0
        %5948 = vmatprep.subr.mxu0 0.0
        %5949 = vmatpush2.msra.mxu0 0.0
        %5950 = vmatprep.subr.mxu0 0.0
        %5951 = vmatpush2.msra.mxu0 0.0
        %5952 = vmatprep.subr.mxu0 0.0
        %5953 = vmatpush2.msra.mxu0 0.0
        %5954 = vmatprep.subr.mxu0 0.0
        %5955 = vmatpush2.msra.mxu0 0.0
        %5956 = vmatprep.mubr.f32.mxu0 0.0
        %5957 = vmatmul.mubr.f32.gmra.mxu0 %v1224
        %v5958 = vpop.f32.mrf.mxu0
        %v5959 = vadd.f32 %v5365, %v5958
        %v5960 = vpop.f32.mrf.mxu0
        %5961 = vmatprep.mubr.f32.mxu0 0.0
        %5962 = vmatmul.mubr.f32.gmra.mxu0 %v1227
        %v5963 = vpop.f32.mrf.mxu0
        %v5964 = vadd.f32 %v5366, %v5963
        %v5965 = vpop.f32.mrf.mxu0
        %5966 = vdwg.mxu0
        %v5967 = vmul.f32 %v639, %v5434
        %v5968 = vmul.f32 %v640, %v5439
        %v5969 = vmul.f32 %v641, %v5509
        %v5970 = vmul.f32 %v642, %v5514
        %v5971 = vmul.f32 %v643, %v5584
        %v5972 = vmul.f32 %v644, %v5589
        %v5973 = vmul.f32 %v645, %v5659
        %v5974 = vmul.f32 %v646, %v5664
        %v5975 = vmul.f32 %v647, %v5734
        %v5976 = vmul.f32 %v648, %v5739
        %v5977 = vmul.f32 %v649, %v5809
        %v5978 = vmul.f32 %v650, %v5814
        %v5979 = vmul.f32 %v651, %v5884
        %v5980 = vmul.f32 %v652, %v5889
        %v5981 = vmul.f32 %v653, %v5959
        %v5982 = vmul.f32 %v654, %v5964
        %s5983 = scalar_lea.vmem [#allocation12], 256
        %v5984 = vld [vmem:[%s5983] sm:$0xff]
        %v5985 = vld [vmem:[%s5983 + $0x8] sm:$0xff]
        %v5986 = vld [vmem:[%s5983 + $0x10] sm:$0xff]
        %v5987 = vld [vmem:[%s5983 + $0x18] sm:$0xff]
        %v5988 = vld [vmem:[%s5983 + $0x20] sm:$0xff]
        %v5989 = vld [vmem:[%s5983 + $0x28] sm:$0xff]
        %v5990 = vld [vmem:[%s5983 + $0x30] sm:$0xff]
        %v5991 = vld [vmem:[%s5983 + $0x38] sm:$0xff]
        %v5992 = vld [vmem:[%s5983 + $0x40] sm:$0xff]
        %v5993 = vld [vmem:[%s5983 + $0x48] sm:$0xff]
        %v5994 = vld [vmem:[%s5983 + $0x50] sm:$0xff]
        %v5995 = vld [vmem:[%s5983 + $0x58] sm:$0xff]
        %v5996 = vld [vmem:[%s5983 + $0x60] sm:$0xff]
        %v5997 = vld [vmem:[%s5983 + $0x68] sm:$0xff]
        %v5998 = vld [vmem:[%s5983 + $0x70] sm:$0xff]
        %v5999 = vld [vmem:[%s5983 + $0x78] sm:$0xff]
        %s6000 = scalar_lea.vmem %s8, 2
        %v6001 = vld [vmem:[%s6000] sm:$0x1]
        %v6003 = vlaneseq
        %v6004 = vshrl.u32 %v6003, 7
        %v6005 = vsub.s32 0, %v6004
        %v6006 = vrot.slane %v6001, %v6005
        %6008 = vmatprep.subr.mxu0 0.0
        %6009 = vmatpush1.msra.mxu0 %v5999
        %6010 = vmatprep.subr.mxu0 0.0
        %6011 = vmatpush1.msra.mxu0 %v5998
        %6012 = vmatprep.subr.mxu0 0.0
        %6013 = vmatpush1.msra.mxu0 %v5997
        %6014 = vmatprep.subr.mxu0 0.0
        %6015 = vmatpush1.msra.mxu0 %v5996
        %6016 = vmatprep.subr.mxu0 0.0
        %6017 = vmatpush1.msra.mxu0 %v5995
        %6018 = vmatprep.subr.mxu0 0.0
        %6019 = vmatpush1.msra.mxu0 %v5994
        %6020 = vmatprep.subr.mxu0 0.0
        %6021 = vmatpush1.msra.mxu0 %v5993
        %6022 = vmatprep.subr.mxu0 0.0
        %6023 = vmatpush1.msra.mxu0 %v5992
        %6024 = vmatprep.subr.mxu0 0.0
        %6025 = vmatpush1.msra.mxu0 %v5991
        %6026 = vmatprep.subr.mxu0 0.0
        %6027 = vmatpush1.msra.mxu0 %v5990
        %6028 = vmatprep.subr.mxu0 0.0
        %6029 = vmatpush1.msra.mxu0 %v5989
        %6030 = vmatprep.subr.mxu0 0.0
        %6031 = vmatpush1.msra.mxu0 %v5988
        %6032 = vmatprep.subr.mxu0 0.0
        %6033 = vmatpush1.msra.mxu0 %v5987
        %6034 = vmatprep.subr.mxu0 0.0
        %6035 = vmatpush1.msra.mxu0 %v5986
        %6036 = vmatprep.subr.mxu0 0.0
        %6037 = vmatpush1.msra.mxu0 %v5985
        %6038 = vmatprep.subr.mxu0 0.0
        %6039 = vmatpush1.msra.mxu0 %v5984
        %6040 = vmatprep.subr.mxu0 0.0
        %6041 = vmatpush2.msra.mxu0 0.0
        %6042 = vmatprep.subr.mxu0 0.0
        %6043 = vmatpush2.msra.mxu0 0.0
        %6044 = vmatprep.subr.mxu0 0.0
        %6045 = vmatpush2.msra.mxu0 0.0
        %6046 = vmatprep.subr.mxu0 0.0
        %6047 = vmatpush2.msra.mxu0 0.0
        %6048 = vmatprep.subr.mxu0 0.0
        %6049 = vmatpush2.msra.mxu0 0.0
        %6050 = vmatprep.subr.mxu0 0.0
        %6051 = vmatpush2.msra.mxu0 0.0
        %6052 = vmatprep.subr.mxu0 0.0
        %6053 = vmatpush2.msra.mxu0 0.0
        %6054 = vmatprep.subr.mxu0 0.0
        %6055 = vmatpush2.msra.mxu0 0.0
        %6056 = vmatprep.subr.mxu0 0.0
        %6057 = vmatpush2.msra.mxu0 0.0
        %6058 = vmatprep.subr.mxu0 0.0
        %6059 = vmatpush2.msra.mxu0 0.0
        %6060 = vmatprep.subr.mxu0 0.0
        %6061 = vmatpush2.msra.mxu0 0.0
        %6062 = vmatprep.subr.mxu0 0.0
        %6063 = vmatpush2.msra.mxu0 0.0
        %6064 = vmatprep.subr.mxu0 0.0
        %6065 = vmatpush2.msra.mxu0 0.0
        %6066 = vmatprep.subr.mxu0 0.0
        %6067 = vmatpush2.msra.mxu0 0.0
        %6068 = vmatprep.subr.mxu0 0.0
        %6069 = vmatpush2.msra.mxu0 0.0
        %6070 = vmatprep.subr.mxu0 0.0
        %6071 = vmatpush2.msra.mxu0 0.0
        %6072 = vmatprep.mubr.f32.mxu0 0.0
        %6073 = vmatmul.mubr.f32.gmra.mxu0 %v5967
        %v6074 = vpop.f32.mrf.mxu0
        %v6075 = vadd.f32 %v6006, %v6074
        %v6076 = vpop.f32.mrf.mxu0
        %6077 = vmatprep.mubr.f32.mxu0 0.0
        %6078 = vmatmul.mubr.f32.gmra.mxu0 %v5968
        %v6079 = vpop.f32.mrf.mxu0
        %v6080 = vadd.f32 %v6006, %v6079
        %v6081 = vpop.f32.mrf.mxu0
        %6082 = vmatprep.mubr.f32.mxu0 0.0
        %6083 = vmatmul.mubr.f32.gmra.mxu0 %v5969
        %v6084 = vpop.f32.mrf.mxu0
        %v6085 = vadd.f32 %v6006, %v6084
        %v6086 = vpop.f32.mrf.mxu0
        %6087 = vmatprep.mubr.f32.mxu0 0.0
        %6088 = vmatmul.mubr.f32.gmra.mxu0 %v5970
        %v6089 = vpop.f32.mrf.mxu0
        %v6090 = vadd.f32 %v6006, %v6089
        %v6091 = vpop.f32.mrf.mxu0
        %6092 = vmatprep.mubr.f32.mxu0 0.0
        %6093 = vmatmul.mubr.f32.gmra.mxu0 %v5971
        %v6094 = vpop.f32.mrf.mxu0
        %v6095 = vadd.f32 %v6006, %v6094
        %v6096 = vpop.f32.mrf.mxu0
        %6097 = vmatprep.mubr.f32.mxu0 0.0
        %6098 = vmatmul.mubr.f32.gmra.mxu0 %v5972
        %v6099 = vpop.f32.mrf.mxu0
        %v6100 = vadd.f32 %v6006, %v6099
        %v6101 = vpop.f32.mrf.mxu0
        %6102 = vmatprep.mubr.f32.mxu0 0.0
        %6103 = vmatmul.mubr.f32.gmra.mxu0 %v5973
        %v6104 = vpop.f32.mrf.mxu0
        %v6105 = vadd.f32 %v6006, %v6104
        %v6106 = vpop.f32.mrf.mxu0
        %6107 = vmatprep.mubr.f32.mxu0 0.0
        %6108 = vmatmul.mubr.f32.gmra.mxu0 %v5974
        %v6109 = vpop.f32.mrf.mxu0
        %v6110 = vadd.f32 %v6006, %v6109
        %v6111 = vpop.f32.mrf.mxu0
        %6112 = vmatprep.mubr.f32.mxu0 0.0
        %6113 = vmatmul.mubr.f32.gmra.mxu0 %v5975
        %v6114 = vpop.f32.mrf.mxu0
        %v6115 = vadd.f32 %v6006, %v6114
        %v6116 = vpop.f32.mrf.mxu0
        %6117 = vmatprep.mubr.f32.mxu0 0.0
        %6118 = vmatmul.mubr.f32.gmra.mxu0 %v5976
        %v6119 = vpop.f32.mrf.mxu0
        %v6120 = vadd.f32 %v6006, %v6119
        %v6121 = vpop.f32.mrf.mxu0
        %6122 = vmatprep.mubr.f32.mxu0 0.0
        %6123 = vmatmul.mubr.f32.gmra.mxu0 %v5977
        %v6124 = vpop.f32.mrf.mxu0
        %v6125 = vadd.f32 %v6006, %v6124
        %v6126 = vpop.f32.mrf.mxu0
        %6127 = vmatprep.mubr.f32.mxu0 0.0
        %6128 = vmatmul.mubr.f32.gmra.mxu0 %v5978
        %v6129 = vpop.f32.mrf.mxu0
        %v6130 = vadd.f32 %v6006, %v6129
        %v6131 = vpop.f32.mrf.mxu0
        %6132 = vmatprep.mubr.f32.mxu0 0.0
        %6133 = vmatmul.mubr.f32.gmra.mxu0 %v5979
        %v6134 = vpop.f32.mrf.mxu0
        %v6135 = vadd.f32 %v6006, %v6134
        %v6136 = vpop.f32.mrf.mxu0
        %6137 = vmatprep.mubr.f32.mxu0 0.0
        %6138 = vmatmul.mubr.f32.gmra.mxu0 %v5980
        %v6139 = vpop.f32.mrf.mxu0
        %v6140 = vadd.f32 %v6006, %v6139
        %v6141 = vpop.f32.mrf.mxu0
        %6142 = vmatprep.mubr.f32.mxu0 0.0
        %6143 = vmatmul.mubr.f32.gmra.mxu0 %v5981
        %v6144 = vpop.f32.mrf.mxu0
        %v6145 = vadd.f32 %v6006, %v6144
        %v6146 = vpop.f32.mrf.mxu0
        %6147 = vmatprep.mubr.f32.mxu0 0.0
        %6148 = vmatmul.mubr.f32.gmra.mxu0 %v5982
        %v6149 = vpop.f32.mrf.mxu0
        %v6150 = vadd.f32 %v6006, %v6149
        %v6151 = vpop.f32.mrf.mxu0
        %6152 = vdwg.mxu0
        %v6153 = vmax.f32 %v6075, 0.0
        %v6154 = vmax.f32 %v6080, 0.0
        %v6155 = vmax.f32 %v6085, 0.0
        %v6156 = vmax.f32 %v6090, 0.0
        %v6157 = vmax.f32 %v6095, 0.0
        %v6158 = vmax.f32 %v6100, 0.0
        %v6159 = vmax.f32 %v6105, 0.0
        %v6160 = vmax.f32 %v6110, 0.0
        %v6161 = vmax.f32 %v6115, 0.0
        %v6162 = vmax.f32 %v6120, 0.0
        %v6163 = vmax.f32 %v6125, 0.0
        %v6164 = vmax.f32 %v6130, 0.0
        %v6165 = vmax.f32 %v6135, 0.0
        %v6166 = vmax.f32 %v6140, 0.0
        %v6167 = vmax.f32 %v6145, 0.0
        %v6168 = vmax.f32 %v6150, 0.0
        %v6169 = vadd.f32 %v3701, %v3702
        %v6170 = vrot.slane %v6169, 4
        %v6171 = vadd.f32 %v6169, %v6170
        %v6172 = vrot.slane %v6171, 2
        %v6173 = vadd.f32 %v6171, %v6172
        %v6174 = vrot.slane %v6173, 1
        %v6175 = vadd.f32 %v6173, %v6174
        %v6176 = vadd.f32 %v3703, %v3704
        %v6177 = vrot.slane %v6176, 4
        %v6178 = vadd.f32 %v6176, %v6177
        %v6179 = vrot.slane %v6178, 2
        %v6180 = vadd.f32 %v6178, %v6179
        %v6181 = vrot.slane %v6180, 1
        %v6182 = vadd.f32 %v6180, %v6181
        %v6183 = vadd.f32 %v3705, %v3706
        %v6184 = vrot.slane %v6183, 4
        %v6185 = vadd.f32 %v6183, %v6184
        %v6186 = vrot.slane %v6185, 2
        %v6187 = vadd.f32 %v6185, %v6186
        %v6188 = vrot.slane %v6187, 1
        %v6189 = vadd.f32 %v6187, %v6188
        %v6190 = vadd.f32 %v3707, %v3708
        %v6191 = vrot.slane %v6190, 4
        %v6192 = vadd.f32 %v6190, %v6191
        %v6193 = vrot.slane %v6192, 2
        %v6194 = vadd.f32 %v6192, %v6193
        %v6195 = vrot.slane %v6194, 1
        %v6196 = vadd.f32 %v6194, %v6195
        %v6197 = vadd.f32 %v3709, %v3710
        %v6198 = vrot.slane %v6197, 4
        %v6199 = vadd.f32 %v6197, %v6198
        %v6200 = vrot.slane %v6199, 2
        %v6201 = vadd.f32 %v6199, %v6200
        %v6202 = vrot.slane %v6201, 1
        %v6203 = vadd.f32 %v6201, %v6202
        %v6204 = vadd.f32 %v3711, %v3712
        %v6205 = vrot.slane %v6204, 4
        %v6206 = vadd.f32 %v6204, %v6205
        %v6207 = vrot.slane %v6206, 2
        %v6208 = vadd.f32 %v6206, %v6207
        %v6209 = vrot.slane %v6208, 1
        %v6210 = vadd.f32 %v6208, %v6209
        %v6211 = vadd.f32 %v3713, %v3714
        %v6212 = vrot.slane %v6211, 4
        %v6213 = vadd.f32 %v6211, %v6212
        %v6214 = vrot.slane %v6213, 2
        %v6215 = vadd.f32 %v6213, %v6214
        %v6216 = vrot.slane %v6215, 1
        %v6217 = vadd.f32 %v6215, %v6216
        %v6218 = vadd.f32 %v3715, %v3716
        %v6219 = vrot.slane %v6218, 4
        %v6220 = vadd.f32 %v6218, %v6219
        %v6221 = vrot.slane %v6220, 2
        %v6222 = vadd.f32 %v6220, %v6221
        %v6223 = vrot.slane %v6222, 1
        %v6224 = vadd.f32 %v6222, %v6223
        %v6225 = vmul.f32 %v6175, 0.0625
        %v6226 = vmul.f32 %v6182, 0.0625
        %v6227 = vmul.f32 %v6189, 0.0625
        %v6228 = vmul.f32 %v6196, 0.0625
        %v6229 = vmul.f32 %v6203, 0.0625
        %v6230 = vmul.f32 %v6210, 0.0625
        %v6231 = vmul.f32 %v6217, 0.0625
        %v6232 = vmul.f32 %v6224, 0.0625
        %v6233 = vadd.f32 %v6153, %v6154
        %v6234 = vrot.slane %v6233, 4
        %v6235 = vadd.f32 %v6233, %v6234
        %v6236 = vrot.slane %v6235, 2
        %v6237 = vadd.f32 %v6235, %v6236
        %v6238 = vrot.slane %v6237, 1
        %v6239 = vadd.f32 %v6237, %v6238
        %v6240 = vadd.f32 %v6155, %v6156
        %v6241 = vrot.slane %v6240, 4
        %v6242 = vadd.f32 %v6240, %v6241
        %v6243 = vrot.slane %v6242, 2
        %v6244 = vadd.f32 %v6242, %v6243
        %v6245 = vrot.slane %v6244, 1
        %v6246 = vadd.f32 %v6244, %v6245
        %v6247 = vadd.f32 %v6157, %v6158
        %v6248 = vrot.slane %v6247, 4
        %v6249 = vadd.f32 %v6247, %v6248
        %v6250 = vrot.slane %v6249, 2
        %v6251 = vadd.f32 %v6249, %v6250
        %v6252 = vrot.slane %v6251, 1
        %v6253 = vadd.f32 %v6251, %v6252
        %v6254 = vadd.f32 %v6159, %v6160
        %v6255 = vrot.slane %v6254, 4
        %v6256 = vadd.f32 %v6254, %v6255
        %v6257 = vrot.slane %v6256, 2
        %v6258 = vadd.f32 %v6256, %v6257
        %v6259 = vrot.slane %v6258, 1
        %v6260 = vadd.f32 %v6258, %v6259
        %v6261 = vadd.f32 %v6161, %v6162
        %v6262 = vrot.slane %v6261, 4
        %v6263 = vadd.f32 %v6261, %v6262
        %v6264 = vrot.slane %v6263, 2
        %v6265 = vadd.f32 %v6263, %v6264
        %v6266 = vrot.slane %v6265, 1
        %v6267 = vadd.f32 %v6265, %v6266
        %v6268 = vadd.f32 %v6163, %v6164
        %v6269 = vrot.slane %v6268, 4
        %v6270 = vadd.f32 %v6268, %v6269
        %v6271 = vrot.slane %v6270, 2
        %v6272 = vadd.f32 %v6270, %v6271
        %v6273 = vrot.slane %v6272, 1
        %v6274 = vadd.f32 %v6272, %v6273
        %v6275 = vadd.f32 %v6165, %v6166
        %v6276 = vrot.slane %v6275, 4
        %v6277 = vadd.f32 %v6275, %v6276
        %v6278 = vrot.slane %v6277, 2
        %v6279 = vadd.f32 %v6277, %v6278
        %v6280 = vrot.slane %v6279, 1
        %v6281 = vadd.f32 %v6279, %v6280
        %v6282 = vadd.f32 %v6167, %v6168
        %v6283 = vrot.slane %v6282, 4
        %v6284 = vadd.f32 %v6282, %v6283
        %v6285 = vrot.slane %v6284, 2
        %v6286 = vadd.f32 %v6284, %v6285
        %v6287 = vrot.slane %v6286, 1
        %v6288 = vadd.f32 %v6286, %v6287
        %v6289 = vmul.f32 %v6239, 0.0625
        %v6290 = vmul.f32 %v6246, 0.0625
        %v6291 = vmul.f32 %v6253, 0.0625
        %v6292 = vmul.f32 %v6260, 0.0625
        %v6293 = vmul.f32 %v6267, 0.0625
        %v6294 = vmul.f32 %v6274, 0.0625
        %v6295 = vmul.f32 %v6281, 0.0625
        %v6296 = vmul.f32 %v6288, 0.0625
        %v6297 = vld [vmem:[#allocation13] sm:$0xff]
        %v6298 = vld [vmem:[#allocation13 + $0x8] sm:$0xff]
        %v6299 = vld [vmem:[#allocation13 + $0x10] sm:$0xff]
        %v6300 = vld [vmem:[#allocation13 + $0x18] sm:$0xff]
        %v6301 = vld [vmem:[#allocation13 + $0x20] sm:$0xff]
        %v6302 = vld [vmem:[#allocation13 + $0x28] sm:$0xff]
        %v6303 = vld [vmem:[#allocation13 + $0x30] sm:$0xff]
        %v6304 = vld [vmem:[#allocation13 + $0x38] sm:$0xff]
        %v6305 = vld [vmem:[#allocation13 + $0x40] sm:$0xff]
        %v6306 = vld [vmem:[#allocation13 + $0x48] sm:$0xff]
        %v6307 = vld [vmem:[#allocation13 + $0x50] sm:$0xff]
        %v6308 = vld [vmem:[#allocation13 + $0x58] sm:$0xff]
        %v6309 = vld [vmem:[#allocation13 + $0x60] sm:$0xff]
        %v6310 = vld [vmem:[#allocation13 + $0x68] sm:$0xff]
        %v6311 = vld [vmem:[#allocation13 + $0x70] sm:$0xff]
        %v6312 = vld [vmem:[#allocation13 + $0x78] sm:$0xff]
        %v6313 = vld [vmem:[#allocation15] sm:$0xff]
        %v6314 = vld [vmem:[#allocation15 + $0x8] sm:$0xff]
        %v6315 = vld [vmem:[#allocation15 + $0x10] sm:$0xff]
        %v6316 = vld [vmem:[#allocation15 + $0x18] sm:$0xff]
        %v6317 = vld [vmem:[#allocation15 + $0x20] sm:$0xff]
        %v6318 = vld [vmem:[#allocation15 + $0x28] sm:$0xff]
        %v6319 = vld [vmem:[#allocation15 + $0x30] sm:$0xff]
        %v6320 = vld [vmem:[#allocation15 + $0x38] sm:$0xff]
        %v6321 = vld [vmem:[#allocation15 + $0x40] sm:$0xff]
        %v6322 = vld [vmem:[#allocation15 + $0x48] sm:$0xff]
        %v6323 = vld [vmem:[#allocation15 + $0x50] sm:$0xff]
        %v6324 = vld [vmem:[#allocation15 + $0x58] sm:$0xff]
        %v6325 = vld [vmem:[#allocation15 + $0x60] sm:$0xff]
        %v6326 = vld [vmem:[#allocation15 + $0x68] sm:$0xff]
        %v6327 = vld [vmem:[#allocation15 + $0x70] sm:$0xff]
        %v6328 = vld [vmem:[#allocation15 + $0x78] sm:$0xff]
        %vm6337 = vcmask 1041409
        %v6338 = vsel %vm6337, %v6290, %v6289
        %vm6339 = vcmask 1042434
        %v6340 = vsel %vm6339, %v6291, %v6338
        %vm6341 = vcmask 1043459
        %v6342 = vsel %vm6341, %v6292, %v6340
        %vm6343 = vcmask 1044484
        %v6344 = vsel %vm6343, %v6293, %v6342
        %vm6345 = vcmask 1045509
        %v6346 = vsel %vm6345, %v6294, %v6344
        %vm6347 = vcmask 1046534
        %v6348 = vsel %vm6347, %v6295, %v6346
        %vm6349 = vcmask 1047559
        %v6350 = vsel %vm6349, %v6296, %v6348
        %6352 = vmatprep.subr.mxu0 0.0
        %6353 = vmatpush1.msra.mxu0 %v6328
        %6354 = vmatprep.subr.mxu0 0.0
        %6355 = vmatpush1.msra.mxu0 %v6327
        %6356 = vmatprep.subr.mxu0 0.0
        %6357 = vmatpush1.msra.mxu0 %v6326
        %6358 = vmatprep.subr.mxu0 0.0
        %6359 = vmatpush1.msra.mxu0 %v6325
        %6360 = vmatprep.subr.mxu0 0.0
        %6361 = vmatpush1.msra.mxu0 %v6324
        %6362 = vmatprep.subr.mxu0 0.0
        %6363 = vmatpush1.msra.mxu0 %v6323
        %6364 = vmatprep.subr.mxu0 0.0
        %6365 = vmatpush1.msra.mxu0 %v6322
        %6366 = vmatprep.subr.mxu0 0.0
        %6367 = vmatpush1.msra.mxu0 %v6321
        %6368 = vmatprep.subr.mxu0 0.0
        %6369 = vmatpush1.msra.mxu0 %v6320
        %6370 = vmatprep.subr.mxu0 0.0
        %6371 = vmatpush1.msra.mxu0 %v6319
        %6372 = vmatprep.subr.mxu0 0.0
        %6373 = vmatpush1.msra.mxu0 %v6318
        %6374 = vmatprep.subr.mxu0 0.0
        %6375 = vmatpush1.msra.mxu0 %v6317
        %6376 = vmatprep.subr.mxu0 0.0
        %6377 = vmatpush1.msra.mxu0 %v6316
        %6378 = vmatprep.subr.mxu0 0.0
        %6379 = vmatpush1.msra.mxu0 %v6315
        %6380 = vmatprep.subr.mxu0 0.0
        %6381 = vmatpush1.msra.mxu0 %v6314
        %6382 = vmatprep.subr.mxu0 0.0
        %6383 = vmatpush1.msra.mxu0 %v6313
        %6384 = vmatprep.subr.mxu0 0.0
        %6385 = vmatpush2.msra.mxu0 0.0
        %6386 = vmatprep.subr.mxu0 0.0
        %6387 = vmatpush2.msra.mxu0 0.0
        %6388 = vmatprep.subr.mxu0 0.0
        %6389 = vmatpush2.msra.mxu0 0.0
        %6390 = vmatprep.subr.mxu0 0.0
        %6391 = vmatpush2.msra.mxu0 0.0
        %6392 = vmatprep.subr.mxu0 0.0
        %6393 = vmatpush2.msra.mxu0 0.0
        %6394 = vmatprep.subr.mxu0 0.0
        %6395 = vmatpush2.msra.mxu0 0.0
        %6396 = vmatprep.subr.mxu0 0.0
        %6397 = vmatpush2.msra.mxu0 0.0
        %6398 = vmatprep.subr.mxu0 0.0
        %6399 = vmatpush2.msra.mxu0 0.0
        %6400 = vmatprep.subr.mxu0 0.0
        %6401 = vmatpush2.msra.mxu0 0.0
        %6402 = vmatprep.subr.mxu0 0.0
        %6403 = vmatpush2.msra.mxu0 0.0
        %6404 = vmatprep.subr.mxu0 0.0
        %6405 = vmatpush2.msra.mxu0 0.0
        %6406 = vmatprep.subr.mxu0 0.0
        %6407 = vmatpush2.msra.mxu0 0.0
        %6408 = vmatprep.subr.mxu0 0.0
        %6409 = vmatpush2.msra.mxu0 0.0
        %6410 = vmatprep.subr.mxu0 0.0
        %6411 = vmatpush2.msra.mxu0 0.0
        %6412 = vmatprep.subr.mxu0 0.0
        %6413 = vmatpush2.msra.mxu0 0.0
        %6414 = vmatprep.subr.mxu0 0.0
        %6415 = vmatpush2.msra.mxu0 0.0
        %6416 = vmatprep.mubr.f32.mxu0 0.0
        %6417 = vmatmul.mubr.f32.gmra.mxu0 %v6350
        %v6418 = vpop.f32.mrf.mxu0
        %v6419 = vadd.f32 0.0, %v6418
        %v6420 = vpop.f32.mrf.mxu0
        %6421 = vdwg.mxu0
        %v6430 = vsel %vm6337, %v6226, %v6225
        %v6431 = vsel %vm6339, %v6227, %v6430
        %v6432 = vsel %vm6341, %v6228, %v6431
        %v6433 = vsel %vm6343, %v6229, %v6432
        %v6434 = vsel %vm6345, %v6230, %v6433
        %v6435 = vsel %vm6347, %v6231, %v6434
        %v6436 = vsel %vm6349, %v6232, %v6435
        %6438 = vmatprep.subr.mxu0 0.0
        %6439 = vmatpush1.msra.mxu0 %v6312
        %6440 = vmatprep.subr.mxu0 0.0
        %6441 = vmatpush1.msra.mxu0 %v6311
        %6442 = vmatprep.subr.mxu0 0.0
        %6443 = vmatpush1.msra.mxu0 %v6310
        %6444 = vmatprep.subr.mxu0 0.0
        %6445 = vmatpush1.msra.mxu0 %v6309
        %6446 = vmatprep.subr.mxu0 0.0
        %6447 = vmatpush1.msra.mxu0 %v6308
        %6448 = vmatprep.subr.mxu0 0.0
        %6449 = vmatpush1.msra.mxu0 %v6307
        %6450 = vmatprep.subr.mxu0 0.0
        %6451 = vmatpush1.msra.mxu0 %v6306
        %6452 = vmatprep.subr.mxu0 0.0
        %6453 = vmatpush1.msra.mxu0 %v6305
        %6454 = vmatprep.subr.mxu0 0.0
        %6455 = vmatpush1.msra.mxu0 %v6304
        %6456 = vmatprep.subr.mxu0 0.0
        %6457 = vmatpush1.msra.mxu0 %v6303
        %6458 = vmatprep.subr.mxu0 0.0
        %6459 = vmatpush1.msra.mxu0 %v6302
        %6460 = vmatprep.subr.mxu0 0.0
        %6461 = vmatpush1.msra.mxu0 %v6301
        %6462 = vmatprep.subr.mxu0 0.0
        %6463 = vmatpush1.msra.mxu0 %v6300
        %6464 = vmatprep.subr.mxu0 0.0
        %6465 = vmatpush1.msra.mxu0 %v6299
        %6466 = vmatprep.subr.mxu0 0.0
        %6467 = vmatpush1.msra.mxu0 %v6298
        %6468 = vmatprep.subr.mxu0 0.0
        %6469 = vmatpush1.msra.mxu0 %v6297
        %6470 = vmatprep.subr.mxu0 0.0
        %6471 = vmatpush2.msra.mxu0 0.0
        %6472 = vmatprep.subr.mxu0 0.0
        %6473 = vmatpush2.msra.mxu0 0.0
        %6474 = vmatprep.subr.mxu0 0.0
        %6475 = vmatpush2.msra.mxu0 0.0
        %6476 = vmatprep.subr.mxu0 0.0
        %6477 = vmatpush2.msra.mxu0 0.0
        %6478 = vmatprep.subr.mxu0 0.0
        %6479 = vmatpush2.msra.mxu0 0.0
        %6480 = vmatprep.subr.mxu0 0.0
        %6481 = vmatpush2.msra.mxu0 0.0
        %6482 = vmatprep.subr.mxu0 0.0
        %6483 = vmatpush2.msra.mxu0 0.0
        %6484 = vmatprep.subr.mxu0 0.0
        %6485 = vmatpush2.msra.mxu0 0.0
        %6486 = vmatprep.subr.mxu0 0.0
        %6487 = vmatpush2.msra.mxu0 0.0
        %6488 = vmatprep.subr.mxu0 0.0
        %6489 = vmatpush2.msra.mxu0 0.0
        %6490 = vmatprep.subr.mxu0 0.0
        %6491 = vmatpush2.msra.mxu0 0.0
        %6492 = vmatprep.subr.mxu0 0.0
        %6493 = vmatpush2.msra.mxu0 0.0
        %6494 = vmatprep.subr.mxu0 0.0
        %6495 = vmatpush2.msra.mxu0 0.0
        %6496 = vmatprep.subr.mxu0 0.0
        %6497 = vmatpush2.msra.mxu0 0.0
        %6498 = vmatprep.subr.mxu0 0.0
        %6499 = vmatpush2.msra.mxu0 0.0
        %6500 = vmatprep.subr.mxu0 0.0
        %6501 = vmatpush2.msra.mxu0 0.0
        %6502 = vmatprep.mubr.f32.mxu0 0.0
        %6503 = vmatmul.mubr.f32.gmra.mxu0 %v6436
        %v6504 = vpop.f32.mrf.mxu0
        %v6505 = vadd.f32 %v6419, %v6504
        %v6506 = vpop.f32.mrf.mxu0
        %6507 = vdwg.mxu0
        %v6508 = vld [vmem:[%s11] sm:$0x1]
        %v6510 = vlaneseq
        %v6511 = vshrl.u32 %v6510, 7
        %v6512 = vsub.s32 0, %v6511
        %v6513 = vrot.slane %v6508, %v6512
        %v6515 = vadd.f32 %v6505, %v6513
        %6516 = vst [vmem:[%s523] sm:$0xff] %v6515
        %s6517 = sand.u32 %s287, 1
        %s6518 = scalar_lea.sflag [#allocation6], %s6517
        %s6519 = sand.u32 %s287, 1
        %s6520 = smul.addr %s6519, 8
        %s6521 = scalar_lea.vmem [#allocation16], %s6520
        // Predicated region
        $region93: #{tpu_custom_call.1} parent=63 // pred_check
          %p6522 = pneg %p297
        $region94: #{tpu_custom_call.1} parent=63 // pred_check_branch
          %6524 = sbr.rel (%p6522) target = $region96
        $region95: #{tpu_custom_call.1} parent=63 // pred_region
          %s6526 = ssub.s32 128, 128
          %6527 = vsyncadd %s6518, %s6526
          %s6528 = smul.addr %s38, 128
          %s6529 = scalar_lea.hbm %s12, %s6528
          %s6531 = sshll.u32 %s6521, 4
          %s6532 = int_to_ptr.vmem [resolvable:$true] %s6531
          %6534 = dma.vmem_to_hbm [thread:$0]  %s6532, 128, %s6529, %s6518
        $region96: #{tpu_custom_call.1} parent=63 // pred_fallthru
          _
      $region64: #{tpu_custom_call.1} parent=5 // pred_fallthru
        _
      %p6535 = scmp.le.s32.totalorder 2, %s33
      // Predicated region
      $region97: #{tpu_custom_call.1} parent=5 // pred_check
        %p6536 = pneg %p6535
      $region98: #{tpu_custom_call.1} parent=5 // pred_check_branch
        %6538 = sbr.rel (%p6536) target = $region100
      $region99: #{tpu_custom_call.1} parent=5 // pred_region
        %s6539 = ssub.s32 %s33, 2
        // Predicated region
        $region101: #{tpu_custom_call.1} parent=99 // pred_check
          %p6540 = pneg %p303
        $region102: #{tpu_custom_call.1} parent=99 // pred_check_branch
          %6542 = sbr.rel (%p6540) target = $region104
        $region103: #{tpu_custom_call.1} parent=99 // pred_region
          %s6543 = sand.u32 %s288, 1
          %s6544 = scalar_lea.sflag [#allocation6], %s6543
          %s6545 = sand.u32 %s288, 1
          %s6546 = smul.addr %s6545, 8
          %s6547 = scalar_lea.vmem [#allocation16], %s6546
          %6548 = dma.done %s6544, 128
        $region104: #{tpu_custom_call.1} parent=99 // pred_fallthru
          _
      $region100: #{tpu_custom_call.1} parent=5 // pred_fallthru
        _
    $region6: #{tpu_custom_call.1} parent=1 // loop_footer
      %s37 = sadd.s32 1, %s33
    $region7: #{tpu_custom_call.1} parent=1 // loop_footer_branch
      %32 = sbr.rel target = $region3
    $region8: #{tpu_custom_call.1} parent=1 // loop_exit
      _
    %6549 = vsyncpa [#allocation5], 1
    %s6550 = scalar_lea.sflag [#allocation5], 1
    %6551 = vsyncpa %s6550, 1
    %6552 = vsyncpa [#allocation8], 1
    %s6553 = scalar_lea.sflag [#allocation8], 1
    %6554 = vsyncpa %s6553, 1
    %6555 = vsyncpa [#allocation11], 1
    %6556 = vsyncpa [#allocation14], 1
    %6557 = vsyncpa [#allocation6], 1
    %s6558 = scalar_lea.sflag [#allocation6], 1
    %6559 = vsyncpa %s6558, 1

</llo_original>
